<compile_context>
chip_gen: v5e
topology: v5e:2x2
jax: 0.10.0
libtpu: 0.0.40
codegen_flags: <defaults>
</compile_context>

<pallas_src>
import functools
import math

import jax
import jax.numpy as jnp
from jax.experimental import pallas as pl
from jax.experimental.pallas import tpu as pltpu


# ------------------------------------------------------------ in-kernel ops --

def _linear(x_f32, w_bf16, b_f32, relu=False):
    """y = x @ W + b with bf16 MXU operands and f32 accumulation/epilogue."""
    y = jnp.dot(x_f32.astype(jnp.bfloat16), w_bf16,
                preferred_element_type=jnp.float32) + b_f32
    if relu:
        y = jnp.maximum(y, 0.0)
    return y


def _layernorm(x, g, b, eps=1e-5):
    # PyTorch LayerNorm: biased variance, eps inside rsqrt. All f32.
    mean = jnp.mean(x, axis=-1, keepdims=True)
    xc = x - mean
    var = jnp.mean(xc * xc, axis=-1, keepdims=True)
    return xc * jax.lax.rsqrt(var + eps) * g + b


def _softmax_lastdim(s):
    # Row always contains at least one valid entry (no masking anywhere).
    m = jnp.max(s, axis=-1, keepdims=True)
    p = jnp.exp(s - m)
    return p * pl.reciprocal(jnp.sum(p, axis=-1, keepdims=True), approx=True)


# --------------------------------------------------------------- the kernel --

def adapter_kernel(
        xb_ref, xs_ref,
        in_w_ref, in_b_ref, out_w_ref, out_b_ref,
        l1_w_ref, l1_b_ref, l2_w_ref, l2_b_ref,
        ln1_g_ref, ln1_b_ref, ln2_g_ref, ln2_b_ref,
        q_w_ref, q_b_ref, k_w_ref, k_b_ref,
        o1_w_ref, o1_b_ref, o2_w_ref, o2_b_ref,
        fc_w_ref, fc_b_ref,
        out_ref, out_te_ref, out_llm_ref,
        *, depth, nhead, seq, adapter_weight):
    M, E = xb_ref.shape
    S = seq
    B = M // S
    d = E // nhead
    enc_scale = 1.0 / math.sqrt(d)     # nn.MultiheadAttention: 1/sqrt(head_dim)
    att_scale = 1.0 / math.sqrt(E)     # custom Attention: 1/sqrt(hidden_size)

    xb = xb_ref[...]                   # (M, E) f32, b-major rows (row = b*S + s)
    xs = xs_ref[...]                   # (M, E) f32, s-major rows (row = s*B + b)

    # ---------------- transformer encoder: `depth` post-norm layers ----------
    # Runs b-major so each batch element is a contiguous (S, E) block; head
    # splits are static lane slices of register values, heads concatenated once.
    h = xb
    for l in range(depth):
        qkv = _linear(h, in_w_ref[l], in_b_ref[l])               # (M, 3E) f32
        q3 = qkv[:, :E].reshape(B, S, E).astype(jnp.bfloat16)
        k3 = qkv[:, E:2 * E].reshape(B, S, E).astype(jnp.bfloat16)
        v3 = qkv[:, 2 * E:].reshape(B, S, E).astype(jnp.bfloat16)
        heads = []
        for n in range(nhead):
            sl = slice(n * d, (n + 1) * d)
            s_n = jnp.einsum('bqd,bkd->bqk', q3[..., sl], k3[..., sl],
                             preferred_element_type=jnp.float32) * enc_scale
            p_n = _softmax_lastdim(s_n)                          # (B, S, S) f32
            heads.append(jnp.einsum('bqk,bkd->bqd',
                                    p_n.astype(jnp.bfloat16), v3[..., sl],
                                    preferred_element_type=jnp.float32))
        attn = jnp.concatenate(heads, axis=-1).reshape(M, E)     # (M, E) f32
        attn = _linear(attn, out_w_ref[l], out_b_ref[l])         # out_proj
        h1 = _layernorm(h + attn, ln1_g_ref[l], ln1_b_ref[l])    # norm1
        ff = _linear(h1, l1_w_ref[l], l1_b_ref[l], relu=True)    # FFN
        ff = _linear(ff, l2_w_ref[l], l2_b_ref[l])
        h = _layernorm(h1 + ff, ln2_g_ref[l], ln2_b_ref[l])      # norm2

    # Switch to s-major (row = s*B + b): one small in-kernel transpose, then
    # every output is written directly in the module's (S, B, E) row order.
    h_s = jnp.transpose(h.reshape(B, S, E), (1, 0, 2)).reshape(M, E)
    out_te_ref[...] = h_s

    # ---------------- custom Attention(query=out_te, key=x, value=x) ---------
    # PyTorch does batched matmul over the leading S dim -> attention over the
    # batch dim at each sequence position: S independent (B, B) score blocks.
    q = _linear(h_s, q_w_ref[...], q_b_ref[...])                 # (M, E)
    k = _linear(xs, k_w_ref[...], k_b_ref[...])                  # (M, E)
    q3 = q.reshape(S, B, E).astype(jnp.bfloat16)
    k3 = k.reshape(S, B, E).astype(jnp.bfloat16)
    v3 = xs.reshape(S, B, E).astype(jnp.bfloat16)                # V = value = x
    sc = jnp.einsum('sqe,ske->sqk', q3, k3,
                    preferred_element_type=jnp.float32) * att_scale   # (S, B, B)
    p = _softmax_lastdim(sc)
    wv = jnp.einsum('sqk,ske->sqe', p.astype(jnp.bfloat16), v3,
                    preferred_element_type=jnp.float32).reshape(M, E) + xs
    o1 = _linear(wv, o1_w_ref[...], o1_b_ref[...], relu=True)
    out_att = _linear(o1, o2_w_ref[...], o2_b_ref[...]) + wv     # + wv residual

    # ---------------- fc (zero-init weight) + adapter mix --------------------
    out_llm = _linear(out_att, fc_w_ref[...], fc_b_ref[...])
    out_llm_ref[...] = out_llm
    out_ref[...] = adapter_weight * out_llm + (1.0 - adapter_weight) * xs


# ------------------------------------------------------------------ wrapper --

def adapter_forward(x, params, *, adapter_weight=0.01, nhead=8):
    S, B, E = x.shape
    assert E % nhead == 0
    M = S * B
    depth = params['in_w'].shape[0]

    xs = x.reshape(M, E)                               # s-major flat (row = s*B + b)
    xb = jnp.transpose(x, (1, 0, 2)).reshape(M, E)     # b-major flat (row = b*S + s)

    kern = functools.partial(adapter_kernel, depth=depth, nhead=nhead, seq=S,
                             adapter_weight=adapter_weight)

    out2d, te2d, llm2d = pl.pallas_call(
        kern,
        out_shape=(jax.ShapeDtypeStruct((M, E), jnp.float32),) * 3,
        compiler_params=pltpu.CompilerParams(
            vmem_limit_bytes=8 * 1024 * 1024),         # ~1-2 MiB actually used
    )(xb, xs,
      params['in_w'], params['in_b'], params['out_w'], params['out_b'],
      params['l1_w'], params['l1_b'], params['l2_w'], params['l2_b'],
      params['ln1_g'], params['ln1_b'], params['ln2_g'], params['ln2_b'],
      params['att_q_w'], params['att_q_b'], params['att_k_w'], params['att_k_b'],
      params['att_o1_w'], params['att_o1_b'], params['att_o2_w'], params['att_o2_b'],
      params['fc_w'], params['fc_b'])

    rs = lambda t: t.reshape(S, B, E)                  # already in module row order
    return rs(out2d), rs(te2d), rs(llm2d)


# --------------------------------------------------------------- parameters --

def _dense_init(key, fan_in, fan_out, zero_weight=False):
    kw, kb = jax.random.split(key)
    bound = 1.0 / math.sqrt(fan_in)
    if zero_weight:
        w = jnp.zeros((fan_in, fan_out), jnp.float32)
    else:
        w = jax.random.uniform(kw, (fan_in, fan_out), jnp.float32, -bound, bound)
    b = jax.random.uniform(kb, (1, fan_out), jnp.float32, -bound, bound)
    # Weights stored as W^T (in, out), cast ONCE to bf16 (halves weight DMA).
    # NOTE: when loading real PyTorch checkpoints, transpose nn.Linear.weight
    # and keep MultiheadAttention.in_proj_weight's q/k/v row-stacking in mind.
    return w.astype(jnp.bfloat16), b


def init_adapter_params(key, E, FF, depth):
    names = ('in_w', 'in_b', 'out_w', 'out_b', 'l1_w', 'l1_b', 'l2_w', 'l2_b',
             'ln1_g', 'ln1_b', 'ln2_g', 'ln2_b')
    stacks = {k: [] for k in names}
    for _ in range(depth):
        key, k0, k1, k2, k3 = jax.random.split(key, 5)
        w, b = _dense_init(k0, E, 3 * E); stacks['in_w'].append(w); stacks['in_b'].append(b)
        w, b = _dense_init(k1, E, E);     stacks['out_w'].append(w); stacks['out_b'].append(b)
        w, b = _dense_init(k2, E, FF);    stacks['l1_w'].append(w); stacks['l1_b'].append(b)
        w, b = _dense_init(k3, FF, E);    stacks['l2_w'].append(w); stacks['l2_b'].append(b)
        stacks['ln1_g'].append(jnp.ones((1, E), jnp.float32))
        stacks['ln1_b'].append(jnp.zeros((1, E), jnp.float32))
        stacks['ln2_g'].append(jnp.ones((1, E), jnp.float32))
        stacks['ln2_b'].append(jnp.zeros((1, E), jnp.float32))
    params = {k: jnp.stack(v) for k, v in stacks.items()}   # leading depth axis

    key, kq, kk, ko1, ko2, kfc = jax.random.split(key, 6)
    params['att_q_w'], params['att_q_b'] = _dense_init(kq, E, E)
    params['att_k_w'], params['att_k_b'] = _dense_init(kk, E, E)
    # Attention.value_layer is never used in the reference forward (V = value).
    params['att_o1_w'], params['att_o1_b'] = _dense_init(ko1, E, E)
    params['att_o2_w'], params['att_o2_b'] = _dense_init(ko2, E, E)
    params['fc_w'], params['fc_b'] = _dense_init(kfc, E, E, zero_weight=True)  # nn.init.zeros_
    return params


# -------------------------------------------------------------------- main --

if __name__ == "__main__":
    # Small shapes consistent with the module: E divisible by nhead=8 and a
    # multiple of 128 so every matmul / HBM store is lane-dense.
    S, B, E, FF, depth, nhead = 8, 4, 128, 256, 2, 8
    adapter_weight = 0.01

    key = jax.random.PRNGKey(0)
    kx, kp = jax.random.split(key)
    x = jax.random.normal(kx, (S, B, E), jnp.float32)
    params = init_adapter_params(kp, E, FF, depth)

    fwd = jax.jit(functools.partial(adapter_forward,
                                    adapter_weight=adapter_weight, nhead=nhead))
    out, out_te, out_llm = fwd(x, params)
    jax.block_until_ready((out, out_te, out_llm))

    assert out.shape == (S, B, E)
    assert out_te.shape == (S, B, E)
    assert out_llm.shape == (S, B, E)
    assert bool(jnp.all(jnp.isfinite(out)))
    assert bool(jnp.all(jnp.isfinite(out_te)))
    assert bool(jnp.all(jnp.isfinite(out_llm)))
    print("KERNEL_OK")
</pallas_src>

<mosaic_0001>
module attributes {stable_mosaic.version = 11 : i64} {
  func.func @adapter_kernel(%arg0: memref<32x128xf32, #tpu.memory_space<vmem>>, %arg1: memref<32x128xf32, #tpu.memory_space<vmem>>, %arg2: memref<2x128x384xbf16, #tpu.memory_space<vmem>>, %arg3: memref<2x1x384xf32, #tpu.memory_space<vmem>>, %arg4: memref<2x128x128xbf16, #tpu.memory_space<vmem>>, %arg5: memref<2x1x128xf32, #tpu.memory_space<vmem>>, %arg6: memref<2x128x256xbf16, #tpu.memory_space<vmem>>, %arg7: memref<2x1x256xf32, #tpu.memory_space<vmem>>, %arg8: memref<2x256x128xbf16, #tpu.memory_space<vmem>>, %arg9: memref<2x1x128xf32, #tpu.memory_space<vmem>>, %arg10: memref<2x1x128xf32, #tpu.memory_space<vmem>>, %arg11: memref<2x1x128xf32, #tpu.memory_space<vmem>>, %arg12: memref<2x1x128xf32, #tpu.memory_space<vmem>>, %arg13: memref<2x1x128xf32, #tpu.memory_space<vmem>>, %arg14: memref<128x128xbf16, #tpu.memory_space<vmem>>, %arg15: memref<1x128xf32, #tpu.memory_space<vmem>>, %arg16: memref<128x128xbf16, #tpu.memory_space<vmem>>, %arg17: memref<1x128xf32, #tpu.memory_space<vmem>>, %arg18: memref<128x128xbf16, #tpu.memory_space<vmem>>, %arg19: memref<1x128xf32, #tpu.memory_space<vmem>>, %arg20: memref<128x128xbf16, #tpu.memory_space<vmem>>, %arg21: memref<1x128xf32, #tpu.memory_space<vmem>>, %arg22: memref<128x128xbf16, #tpu.memory_space<vmem>>, %arg23: memref<1x128xf32, #tpu.memory_space<vmem>>, %arg24: memref<32x128xf32, #tpu.memory_space<vmem>>, %arg25: memref<32x128xf32, #tpu.memory_space<vmem>>, %arg26: memref<32x128xf32, #tpu.memory_space<vmem>>) attributes {dimension_semantics = [], scalar_prefetch = 0 : i64, scratch_operands = 0 : i64, tpu.core_type = #tpu.core_type<tc>} {
    %c0 = arith.constant 0 : index
    %c0_0 = arith.constant 0 : index
    %0 = vector.load %arg0[%c0, %c0_0] : memref<32x128xf32, #tpu.memory_space<vmem>>, vector<32x128xf32>
    %c0_1 = arith.constant 0 : index
    %c0_2 = arith.constant 0 : index
    %1 = vector.load %arg1[%c0_1, %c0_2] : memref<32x128xf32, #tpu.memory_space<vmem>>, vector<32x128xf32>
    %c0_3 = arith.constant 0 : index
    %c0_4 = arith.constant 0 : index
    %c0_5 = arith.constant 0 : index
    %2 = vector.load %arg2[%c0_3, %c0_4, %c0_5] : memref<2x128x384xbf16, #tpu.memory_space<vmem>>, vector<1x128x384xbf16>
    %3 = vector.shape_cast %2 : vector<1x128x384xbf16> to vector<128x384xbf16>
    %c0_6 = arith.constant 0 : index
    %c0_7 = arith.constant 0 : index
    %c0_8 = arith.constant 0 : index
    %4 = vector.load %arg3[%c0_6, %c0_7, %c0_8] : memref<2x1x384xf32, #tpu.memory_space<vmem>>, vector<1x1x384xf32>
    %5 = vector.shape_cast %4 : vector<1x1x384xf32> to vector<1x384xf32>
    %6 = arith.truncf %0 : vector<32x128xf32> to vector<32x128xbf16>
    %cst = arith.constant dense<0.000000e+00> : vector<32x384xf32>
    %7 = tpu.matmul %6, %3, %cst {dimension_numbers = #tpu.dot_dimension_numbers<[1], [0], [0], [1], [0, 0, 1, 1], [], []>} : vector<32x128xbf16>, vector<128x384xbf16>, vector<32x384xf32> -> vector<32x384xf32>
    %8 = vector.broadcast %5 : vector<1x384xf32> to vector<32x384xf32>
    %9 = arith.addf %7, %8 : vector<32x384xf32>
    %10 = vector.extract_strided_slice %9 {offsets = [0, 0], sizes = [32, 128], strides = [1, 1]} : vector<32x384xf32> to vector<32x128xf32>
    %11 = vector.shape_cast %10 : vector<32x128xf32> to vector<4x8x128xf32>
    %12 = arith.truncf %11 : vector<4x8x128xf32> to vector<4x8x128xbf16>
    %13 = vector.extract_strided_slice %9 {offsets = [0, 128], sizes = [32, 128], strides = [1, 1]} : vector<32x384xf32> to vector<32x128xf32>
    %14 = vector.shape_cast %13 : vector<32x128xf32> to vector<4x8x128xf32>
    %15 = arith.truncf %14 : vector<4x8x128xf32> to vector<4x8x128xbf16>
    %16 = vector.extract_strided_slice %9 {offsets = [0, 256], sizes = [32, 128], strides = [1, 1]} : vector<32x384xf32> to vector<32x128xf32>
    %17 = vector.shape_cast %16 : vector<32x128xf32> to vector<4x8x128xf32>
    %18 = arith.truncf %17 : vector<4x8x128xf32> to vector<4x8x128xbf16>
    %19 = vector.extract_strided_slice %12 {offsets = [0, 0, 0], sizes = [4, 8, 16], strides = [1, 1, 1]} : vector<4x8x128xbf16> to vector<4x8x16xbf16>
    %20 = vector.extract_strided_slice %15 {offsets = [0, 0, 0], sizes = [4, 8, 16], strides = [1, 1, 1]} : vector<4x8x128xbf16> to vector<4x8x16xbf16>
    "tpu.trace_start"() <{level = 10 : i32, message = "bqd,bkd->bqk"}> : () -> ()
    %cst_9 = arith.constant dense<0.000000e+00> : vector<4x8x8xf32>
    %21 = tpu.matmul %19, %20, %cst_9 {dimension_numbers = #tpu.dot_dimension_numbers<[2], [2], [1], [1], [0, 0, 0, 1, 1, 1], [0], [0]>} : vector<4x8x16xbf16>, vector<4x8x16xbf16>, vector<4x8x8xf32> -> vector<4x8x8xf32>
    "tpu.trace_stop"() : () -> ()
    %cst_10 = arith.constant 2.500000e-01 : f32
    %22 = vector.broadcast %cst_10 : f32 to vector<4x8x8xf32>
    %23 = arith.mulf %21, %22 : vector<4x8x8xf32>
    %cst_11 = arith.constant dense<0xFF800000> : vector<4x8xf32>
    %24 = vector.multi_reduction <maximumf>, %23, %cst_11 [2] : vector<4x8x8xf32> to vector<4x8xf32>
    %25 = vector.shape_cast %24 : vector<4x8xf32> to vector<4x8x1xf32>
    %26 = vector.broadcast %25 : vector<4x8x1xf32> to vector<4x8x8xf32>
    %27 = arith.subf %23, %26 : vector<4x8x8xf32>
    %28 = math.exp %27 : vector<4x8x8xf32>
    %cst_12 = arith.constant dense<0.000000e+00> : vector<4x8xf32>
    %29 = vector.multi_reduction <add>, %28, %cst_12 [2] : vector<4x8x8xf32> to vector<4x8xf32>
    %30 = vector.shape_cast %29 : vector<4x8xf32> to vector<4x8x1xf32>
    %31 = tpu.reciprocal %30 {approx = true} : vector<4x8x1xf32> -> vector<4x8x1xf32>
    %32 = vector.broadcast %31 : vector<4x8x1xf32> to vector<4x8x8xf32>
    %33 = arith.mulf %28, %32 : vector<4x8x8xf32>
    %34 = arith.truncf %33 : vector<4x8x8xf32> to vector<4x8x8xbf16>
    %35 = vector.extract_strided_slice %18 {offsets = [0, 0, 0], sizes = [4, 8, 16], strides = [1, 1, 1]} : vector<4x8x128xbf16> to vector<4x8x16xbf16>
    "tpu.trace_start"() <{level = 10 : i32, message = "bqk,bkd->bqd"}> : () -> ()
    %cst_13 = arith.constant dense<0.000000e+00> : vector<4x8x16xf32>
    %36 = tpu.matmul %34, %35, %cst_13 {dimension_numbers = #tpu.dot_dimension_numbers<[2], [1], [1], [2], [0, 0, 0, 1, 1, 2], [0], [0]>} : vector<4x8x8xbf16>, vector<4x8x16xbf16>, vector<4x8x16xf32> -> vector<4x8x16xf32>
    "tpu.trace_stop"() : () -> ()
    %37 = vector.extract_strided_slice %12 {offsets = [0, 0, 16], sizes = [4, 8, 16], strides = [1, 1, 1]} : vector<4x8x128xbf16> to vector<4x8x16xbf16>
    %38 = vector.extract_strided_slice %15 {offsets = [0, 0, 16], sizes = [4, 8, 16], strides = [1, 1, 1]} : vector<4x8x128xbf16> to vector<4x8x16xbf16>
    "tpu.trace_start"() <{level = 10 : i32, message = "bqd,bkd->bqk"}> : () -> ()
    %cst_14 = arith.constant dense<0.000000e+00> : vector<4x8x8xf32>
    %39 = tpu.matmul %37, %38, %cst_14 {dimension_numbers = #tpu.dot_dimension_numbers<[2], [2], [1], [1], [0, 0, 0, 1, 1, 1], [0], [0]>} : vector<4x8x16xbf16>, vector<4x8x16xbf16>, vector<4x8x8xf32> -> vector<4x8x8xf32>
    "tpu.trace_stop"() : () -> ()
    %cst_15 = arith.constant 2.500000e-01 : f32
    %40 = vector.broadcast %cst_15 : f32 to vector<4x8x8xf32>
    %41 = arith.mulf %39, %40 : vector<4x8x8xf32>
    %cst_16 = arith.constant dense<0xFF800000> : vector<4x8xf32>
    %42 = vector.multi_reduction <maximumf>, %41, %cst_16 [2] : vector<4x8x8xf32> to vector<4x8xf32>
    %43 = vector.shape_cast %42 : vector<4x8xf32> to vector<4x8x1xf32>
    %44 = vector.broadcast %43 : vector<4x8x1xf32> to vector<4x8x8xf32>
    %45 = arith.subf %41, %44 : vector<4x8x8xf32>
    %46 = math.exp %45 : vector<4x8x8xf32>
    %cst_17 = arith.constant dense<0.000000e+00> : vector<4x8xf32>
    %47 = vector.multi_reduction <add>, %46, %cst_17 [2] : vector<4x8x8xf32> to vector<4x8xf32>
    %48 = vector.shape_cast %47 : vector<4x8xf32> to vector<4x8x1xf32>
    %49 = tpu.reciprocal %48 {approx = true} : vector<4x8x1xf32> -> vector<4x8x1xf32>
    %50 = vector.broadcast %49 : vector<4x8x1xf32> to vector<4x8x8xf32>
    %51 = arith.mulf %46, %50 : vector<4x8x8xf32>
    %52 = arith.truncf %51 : vector<4x8x8xf32> to vector<4x8x8xbf16>
    %53 = vector.extract_strided_slice %18 {offsets = [0, 0, 16], sizes = [4, 8, 16], strides = [1, 1, 1]} : vector<4x8x128xbf16> to vector<4x8x16xbf16>
    "tpu.trace_start"() <{level = 10 : i32, message = "bqk,bkd->bqd"}> : () -> ()
    %cst_18 = arith.constant dense<0.000000e+00> : vector<4x8x16xf32>
    %54 = tpu.matmul %52, %53, %cst_18 {dimension_numbers = #tpu.dot_dimension_numbers<[2], [1], [1], [2], [0, 0, 0, 1, 1, 2], [0], [0]>} : vector<4x8x8xbf16>, vector<4x8x16xbf16>, vector<4x8x16xf32> -> vector<4x8x16xf32>
    "tpu.trace_stop"() : () -> ()
    %55 = vector.extract_strided_slice %12 {offsets = [0, 0, 32], sizes = [4, 8, 16], strides = [1, 1, 1]} : vector<4x8x128xbf16> to vector<4x8x16xbf16>
    %56 = vector.extract_strided_slice %15 {offsets = [0, 0, 32], sizes = [4, 8, 16], strides = [1, 1, 1]} : vector<4x8x128xbf16> to vector<4x8x16xbf16>
    "tpu.trace_start"() <{level = 10 : i32, message = "bqd,bkd->bqk"}> : () -> ()
    %cst_19 = arith.constant dense<0.000000e+00> : vector<4x8x8xf32>
    %57 = tpu.matmul %55, %56, %cst_19 {dimension_numbers = #tpu.dot_dimension_numbers<[2], [2], [1], [1], [0, 0, 0, 1, 1, 1], [0], [0]>} : vector<4x8x16xbf16>, vector<4x8x16xbf16>, vector<4x8x8xf32> -> vector<4x8x8xf32>
    "tpu.trace_stop"() : () -> ()
    %cst_20 = arith.constant 2.500000e-01 : f32
    %58 = vector.broadcast %cst_20 : f32 to vector<4x8x8xf32>
    %59 = arith.mulf %57, %58 : vector<4x8x8xf32>
    %cst_21 = arith.constant dense<0xFF800000> : vector<4x8xf32>
    %60 = vector.multi_reduction <maximumf>, %59, %cst_21 [2] : vector<4x8x8xf32> to vector<4x8xf32>
    %61 = vector.shape_cast %60 : vector<4x8xf32> to vector<4x8x1xf32>
    %62 = vector.broadcast %61 : vector<4x8x1xf32> to vector<4x8x8xf32>
    %63 = arith.subf %59, %62 : vector<4x8x8xf32>
    %64 = math.exp %63 : vector<4x8x8xf32>
    %cst_22 = arith.constant dense<0.000000e+00> : vector<4x8xf32>
    %65 = vector.multi_reduction <add>, %64, %cst_22 [2] : vector<4x8x8xf32> to vector<4x8xf32>
    %66 = vector.shape_cast %65 : vector<4x8xf32> to vector<4x8x1xf32>
    %67 = tpu.reciprocal %66 {approx = true} : vector<4x8x1xf32> -> vector<4x8x1xf32>
    %68 = vector.broadcast %67 : vector<4x8x1xf32> to vector<4x8x8xf32>
    %69 = arith.mulf %64, %68 : vector<4x8x8xf32>
    %70 = arith.truncf %69 : vector<4x8x8xf32> to vector<4x8x8xbf16>
    %71 = vector.extract_strided_slice %18 {offsets = [0, 0, 32], sizes = [4, 8, 16], strides = [1, 1, 1]} : vector<4x8x128xbf16> to vector<4x8x16xbf16>
    "tpu.trace_start"() <{level = 10 : i32, message = "bqk,bkd->bqd"}> : () -> ()
    %cst_23 = arith.constant dense<0.000000e+00> : vector<4x8x16xf32>
    %72 = tpu.matmul %70, %71, %cst_23 {dimension_numbers = #tpu.dot_dimension_numbers<[2], [1], [1], [2], [0, 0, 0, 1, 1, 2], [0], [0]>} : vector<4x8x8xbf16>, vector<4x8x16xbf16>, vector<4x8x16xf32> -> vector<4x8x16xf32>
    "tpu.trace_stop"() : () -> ()
    %73 = vector.extract_strided_slice %12 {offsets = [0, 0, 48], sizes = [4, 8, 16], strides = [1, 1, 1]} : vector<4x8x128xbf16> to vector<4x8x16xbf16>
    %74 = vector.extract_strided_slice %15 {offsets = [0, 0, 48], sizes = [4, 8, 16], strides = [1, 1, 1]} : vector<4x8x128xbf16> to vector<4x8x16xbf16>
    "tpu.trace_start"() <{level = 10 : i32, message = "bqd,bkd->bqk"}> : () -> ()
    %cst_24 = arith.constant dense<0.000000e+00> : vector<4x8x8xf32>
    %75 = tpu.matmul %73, %74, %cst_24 {dimension_numbers = #tpu.dot_dimension_numbers<[2], [2], [1], [1], [0, 0, 0, 1, 1, 1], [0], [0]>} : vector<4x8x16xbf16>, vector<4x8x16xbf16>, vector<4x8x8xf32> -> vector<4x8x8xf32>
    "tpu.trace_stop"() : () -> ()
    %cst_25 = arith.constant 2.500000e-01 : f32
    %76 = vector.broadcast %cst_25 : f32 to vector<4x8x8xf32>
    %77 = arith.mulf %75, %76 : vector<4x8x8xf32>
    %cst_26 = arith.constant dense<0xFF800000> : vector<4x8xf32>
    %78 = vector.multi_reduction <maximumf>, %77, %cst_26 [2] : vector<4x8x8xf32> to vector<4x8xf32>
    %79 = vector.shape_cast %78 : vector<4x8xf32> to vector<4x8x1xf32>
    %80 = vector.broadcast %79 : vector<4x8x1xf32> to vector<4x8x8xf32>
    %81 = arith.subf %77, %80 : vector<4x8x8xf32>
    %82 = math.exp %81 : vector<4x8x8xf32>
    %cst_27 = arith.constant dense<0.000000e+00> : vector<4x8xf32>
    %83 = vector.multi_reduction <add>, %82, %cst_27 [2] : vector<4x8x8xf32> to vector<4x8xf32>
    %84 = vector.shape_cast %83 : vector<4x8xf32> to vector<4x8x1xf32>
    %85 = tpu.reciprocal %84 {approx = true} : vector<4x8x1xf32> -> vector<4x8x1xf32>
    %86 = vector.broadcast %85 : vector<4x8x1xf32> to vector<4x8x8xf32>
    %87 = arith.mulf %82, %86 : vector<4x8x8xf32>
    %88 = arith.truncf %87 : vector<4x8x8xf32> to vector<4x8x8xbf16>
    %89 = vector.extract_strided_slice %18 {offsets = [0, 0, 48], sizes = [4, 8, 16], strides = [1, 1, 1]} : vector<4x8x128xbf16> to vector<4x8x16xbf16>
    "tpu.trace_start"() <{level = 10 : i32, message = "bqk,bkd->bqd"}> : () -> ()
    %cst_28 = arith.constant dense<0.000000e+00> : vector<4x8x16xf32>
    %90 = tpu.matmul %88, %89, %cst_28 {dimension_numbers = #tpu.dot_dimension_numbers<[2], [1], [1], [2], [0, 0, 0, 1, 1, 2], [0], [0]>} : vector<4x8x8xbf16>, vector<4x8x16xbf16>, vector<4x8x16xf32> -> vector<4x8x16xf32>
    "tpu.trace_stop"() : () -> ()
    %91 = vector.extract_strided_slice %12 {offsets = [0, 0, 64], sizes = [4, 8, 16], strides = [1, 1, 1]} : vector<4x8x128xbf16> to vector<4x8x16xbf16>
    %92 = vector.extract_strided_slice %15 {offsets = [0, 0, 64], sizes = [4, 8, 16], strides = [1, 1, 1]} : vector<4x8x128xbf16> to vector<4x8x16xbf16>
    "tpu.trace_start"() <{level = 10 : i32, message = "bqd,bkd->bqk"}> : () -> ()
    %cst_29 = arith.constant dense<0.000000e+00> : vector<4x8x8xf32>
    %93 = tpu.matmul %91, %92, %cst_29 {dimension_numbers = #tpu.dot_dimension_numbers<[2], [2], [1], [1], [0, 0, 0, 1, 1, 1], [0], [0]>} : vector<4x8x16xbf16>, vector<4x8x16xbf16>, vector<4x8x8xf32> -> vector<4x8x8xf32>
    "tpu.trace_stop"() : () -> ()
    %cst_30 = arith.constant 2.500000e-01 : f32
    %94 = vector.broadcast %cst_30 : f32 to vector<4x8x8xf32>
    %95 = arith.mulf %93, %94 : vector<4x8x8xf32>
    %cst_31 = arith.constant dense<0xFF800000> : vector<4x8xf32>
    %96 = vector.multi_reduction <maximumf>, %95, %cst_31 [2] : vector<4x8x8xf32> to vector<4x8xf32>
    %97 = vector.shape_cast %96 : vector<4x8xf32> to vector<4x8x1xf32>
    %98 = vector.broadcast %97 : vector<4x8x1xf32> to vector<4x8x8xf32>
    %99 = arith.subf %95, %98 : vector<4x8x8xf32>
    %100 = math.exp %99 : vector<4x8x8xf32>
    %cst_32 = arith.constant dense<0.000000e+00> : vector<4x8xf32>
    %101 = vector.multi_reduction <add>, %100, %cst_32 [2] : vector<4x8x8xf32> to vector<4x8xf32>
    %102 = vector.shape_cast %101 : vector<4x8xf32> to vector<4x8x1xf32>
    %103 = tpu.reciprocal %102 {approx = true} : vector<4x8x1xf32> -> vector<4x8x1xf32>
    %104 = vector.broadcast %103 : vector<4x8x1xf32> to vector<4x8x8xf32>
    %105 = arith.mulf %100, %104 : vector<4x8x8xf32>
    %106 = arith.truncf %105 : vector<4x8x8xf32> to vector<4x8x8xbf16>
    %107 = vector.extract_strided_slice %18 {offsets = [0, 0, 64], sizes = [4, 8, 16], strides = [1, 1, 1]} : vector<4x8x128xbf16> to vector<4x8x16xbf16>
    "tpu.trace_start"() <{level = 10 : i32, message = "bqk,bkd->bqd"}> : () -> ()
    %cst_33 = arith.constant dense<0.000000e+00> : vector<4x8x16xf32>
    %108 = tpu.matmul %106, %107, %cst_33 {dimension_numbers = #tpu.dot_dimension_numbers<[2], [1], [1], [2], [0, 0, 0, 1, 1, 2], [0], [0]>} : vector<4x8x8xbf16>, vector<4x8x16xbf16>, vector<4x8x16xf32> -> vector<4x8x16xf32>
    "tpu.trace_stop"() : () -> ()
    %109 = vector.extract_strided_slice %12 {offsets = [0, 0, 80], sizes = [4, 8, 16], strides = [1, 1, 1]} : vector<4x8x128xbf16> to vector<4x8x16xbf16>
    %110 = vector.extract_strided_slice %15 {offsets = [0, 0, 80], sizes = [4, 8, 16], strides = [1, 1, 1]} : vector<4x8x128xbf16> to vector<4x8x16xbf16>
    "tpu.trace_start"() <{level = 10 : i32, message = "bqd,bkd->bqk"}> : () -> ()
    %cst_34 = arith.constant dense<0.000000e+00> : vector<4x8x8xf32>
    %111 = tpu.matmul %109, %110, %cst_34 {dimension_numbers = #tpu.dot_dimension_numbers<[2], [2], [1], [1], [0, 0, 0, 1, 1, 1], [0], [0]>} : vector<4x8x16xbf16>, vector<4x8x16xbf16>, vector<4x8x8xf32> -> vector<4x8x8xf32>
    "tpu.trace_stop"() : () -> ()
    %cst_35 = arith.constant 2.500000e-01 : f32
    %112 = vector.broadcast %cst_35 : f32 to vector<4x8x8xf32>
    %113 = arith.mulf %111, %112 : vector<4x8x8xf32>
    %cst_36 = arith.constant dense<0xFF800000> : vector<4x8xf32>
    %114 = vector.multi_reduction <maximumf>, %113, %cst_36 [2] : vector<4x8x8xf32> to vector<4x8xf32>
    %115 = vector.shape_cast %114 : vector<4x8xf32> to vector<4x8x1xf32>
    %116 = vector.broadcast %115 : vector<4x8x1xf32> to vector<4x8x8xf32>
    %117 = arith.subf %113, %116 : vector<4x8x8xf32>
    %118 = math.exp %117 : vector<4x8x8xf32>
    %cst_37 = arith.constant dense<0.000000e+00> : vector<4x8xf32>
    %119 = vector.multi_reduction <add>, %118, %cst_37 [2] : vector<4x8x8xf32> to vector<4x8xf32>
    %120 = vector.shape_cast %119 : vector<4x8xf32> to vector<4x8x1xf32>
    %121 = tpu.reciprocal %120 {approx = true} : vector<4x8x1xf32> -> vector<4x8x1xf32>
    %122 = vector.broadcast %121 : vector<4x8x1xf32> to vector<4x8x8xf32>
    %123 = arith.mulf %118, %122 : vector<4x8x8xf32>
    %124 = arith.truncf %123 : vector<4x8x8xf32> to vector<4x8x8xbf16>
    %125 = vector.extract_strided_slice %18 {offsets = [0, 0, 80], sizes = [4, 8, 16], strides = [1, 1, 1]} : vector<4x8x128xbf16> to vector<4x8x16xbf16>
    "tpu.trace_start"() <{level = 10 : i32, message = "bqk,bkd->bqd"}> : () -> ()
    %cst_38 = arith.constant dense<0.000000e+00> : vector<4x8x16xf32>
    %126 = tpu.matmul %124, %125, %cst_38 {dimension_numbers = #tpu.dot_dimension_numbers<[2], [1], [1], [2], [0, 0, 0, 1, 1, 2], [0], [0]>} : vector<4x8x8xbf16>, vector<4x8x16xbf16>, vector<4x8x16xf32> -> vector<4x8x16xf32>
    "tpu.trace_stop"() : () -> ()
    %127 = vector.extract_strided_slice %12 {offsets = [0, 0, 96], sizes = [4, 8, 16], strides = [1, 1, 1]} : vector<4x8x128xbf16> to vector<4x8x16xbf16>
    %128 = vector.extract_strided_slice %15 {offsets = [0, 0, 96], sizes = [4, 8, 16], strides = [1, 1, 1]} : vector<4x8x128xbf16> to vector<4x8x16xbf16>
    "tpu.trace_start"() <{level = 10 : i32, message = "bqd,bkd->bqk"}> : () -> ()
    %cst_39 = arith.constant dense<0.000000e+00> : vector<4x8x8xf32>
    %129 = tpu.matmul %127, %128, %cst_39 {dimension_numbers = #tpu.dot_dimension_numbers<[2], [2], [1], [1], [0, 0, 0, 1, 1, 1], [0], [0]>} : vector<4x8x16xbf16>, vector<4x8x16xbf16>, vector<4x8x8xf32> -> vector<4x8x8xf32>
    "tpu.trace_stop"() : () -> ()
    %cst_40 = arith.constant 2.500000e-01 : f32
    %130 = vector.broadcast %cst_40 : f32 to vector<4x8x8xf32>
    %131 = arith.mulf %129, %130 : vector<4x8x8xf32>
    %cst_41 = arith.constant dense<0xFF800000> : vector<4x8xf32>
    %132 = vector.multi_reduction <maximumf>, %131, %cst_41 [2] : vector<4x8x8xf32> to vector<4x8xf32>
    %133 = vector.shape_cast %132 : vector<4x8xf32> to vector<4x8x1xf32>
    %134 = vector.broadcast %133 : vector<4x8x1xf32> to vector<4x8x8xf32>
    %135 = arith.subf %131, %134 : vector<4x8x8xf32>
    %136 = math.exp %135 : vector<4x8x8xf32>
    %cst_42 = arith.constant dense<0.000000e+00> : vector<4x8xf32>
    %137 = vector.multi_reduction <add>, %136, %cst_42 [2] : vector<4x8x8xf32> to vector<4x8xf32>
    %138 = vector.shape_cast %137 : vector<4x8xf32> to vector<4x8x1xf32>
    %139 = tpu.reciprocal %138 {approx = true} : vector<4x8x1xf32> -> vector<4x8x1xf32>
    %140 = vector.broadcast %139 : vector<4x8x1xf32> to vector<4x8x8xf32>
    %141 = arith.mulf %136, %140 : vector<4x8x8xf32>
    %142 = arith.truncf %141 : vector<4x8x8xf32> to vector<4x8x8xbf16>
    %143 = vector.extract_strided_slice %18 {offsets = [0, 0, 96], sizes = [4, 8, 16], strides = [1, 1, 1]} : vector<4x8x128xbf16> to vector<4x8x16xbf16>
    "tpu.trace_start"() <{level = 10 : i32, message = "bqk,bkd->bqd"}> : () -> ()
    %cst_43 = arith.constant dense<0.000000e+00> : vector<4x8x16xf32>
    %144 = tpu.matmul %142, %143, %cst_43 {dimension_numbers = #tpu.dot_dimension_numbers<[2], [1], [1], [2], [0, 0, 0, 1, 1, 2], [0], [0]>} : vector<4x8x8xbf16>, vector<4x8x16xbf16>, vector<4x8x16xf32> -> vector<4x8x16xf32>
    "tpu.trace_stop"() : () -> ()
    %145 = vector.extract_strided_slice %12 {offsets = [0, 0, 112], sizes = [4, 8, 16], strides = [1, 1, 1]} : vector<4x8x128xbf16> to vector<4x8x16xbf16>
    %146 = vector.extract_strided_slice %15 {offsets = [0, 0, 112], sizes = [4, 8, 16], strides = [1, 1, 1]} : vector<4x8x128xbf16> to vector<4x8x16xbf16>
    "tpu.trace_start"() <{level = 10 : i32, message = "bqd,bkd->bqk"}> : () -> ()
    %cst_44 = arith.constant dense<0.000000e+00> : vector<4x8x8xf32>
    %147 = tpu.matmul %145, %146, %cst_44 {dimension_numbers = #tpu.dot_dimension_numbers<[2], [2], [1], [1], [0, 0, 0, 1, 1, 1], [0], [0]>} : vector<4x8x16xbf16>, vector<4x8x16xbf16>, vector<4x8x8xf32> -> vector<4x8x8xf32>
    "tpu.trace_stop"() : () -> ()
    %cst_45 = arith.constant 2.500000e-01 : f32
    %148 = vector.broadcast %cst_45 : f32 to vector<4x8x8xf32>
    %149 = arith.mulf %147, %148 : vector<4x8x8xf32>
    %cst_46 = arith.constant dense<0xFF800000> : vector<4x8xf32>
    %150 = vector.multi_reduction <maximumf>, %149, %cst_46 [2] : vector<4x8x8xf32> to vector<4x8xf32>
    %151 = vector.shape_cast %150 : vector<4x8xf32> to vector<4x8x1xf32>
    %152 = vector.broadcast %151 : vector<4x8x1xf32> to vector<4x8x8xf32>
    %153 = arith.subf %149, %152 : vector<4x8x8xf32>
    %154 = math.exp %153 : vector<4x8x8xf32>
    %cst_47 = arith.constant dense<0.000000e+00> : vector<4x8xf32>
    %155 = vector.multi_reduction <add>, %154, %cst_47 [2] : vector<4x8x8xf32> to vector<4x8xf32>
    %156 = vector.shape_cast %155 : vector<4x8xf32> to vector<4x8x1xf32>
    %157 = tpu.reciprocal %156 {approx = true} : vector<4x8x1xf32> -> vector<4x8x1xf32>
    %158 = vector.broadcast %157 : vector<4x8x1xf32> to vector<4x8x8xf32>
    %159 = arith.mulf %154, %158 : vector<4x8x8xf32>
    %160 = arith.truncf %159 : vector<4x8x8xf32> to vector<4x8x8xbf16>
    %161 = vector.extract_strided_slice %18 {offsets = [0, 0, 112], sizes = [4, 8, 16], strides = [1, 1, 1]} : vector<4x8x128xbf16> to vector<4x8x16xbf16>
    "tpu.trace_start"() <{level = 10 : i32, message = "bqk,bkd->bqd"}> : () -> ()
    %cst_48 = arith.constant dense<0.000000e+00> : vector<4x8x16xf32>
    %162 = tpu.matmul %160, %161, %cst_48 {dimension_numbers = #tpu.dot_dimension_numbers<[2], [1], [1], [2], [0, 0, 0, 1, 1, 2], [0], [0]>} : vector<4x8x8xbf16>, vector<4x8x16xbf16>, vector<4x8x16xf32> -> vector<4x8x16xf32>
    "tpu.trace_stop"() : () -> ()
    %163 = tpu.concatenate %36, %54, %72, %90, %108, %126, %144, %162 in 2 : vector<4x8x16xf32>, vector<4x8x16xf32>, vector<4x8x16xf32>, vector<4x8x16xf32>, vector<4x8x16xf32>, vector<4x8x16xf32>, vector<4x8x16xf32>, vector<4x8x16xf32> -> vector<4x8x128xf32>
    %164 = vector.shape_cast %163 : vector<4x8x128xf32> to vector<32x128xf32>
    %c0_49 = arith.constant 0 : index
    %c0_50 = arith.constant 0 : index
    %c0_51 = arith.constant 0 : index
    %165 = vector.load %arg4[%c0_49, %c0_50, %c0_51] : memref<2x128x128xbf16, #tpu.memory_space<vmem>>, vector<1x128x128xbf16>
    %166 = vector.shape_cast %165 : vector<1x128x128xbf16> to vector<128x128xbf16>
    %c0_52 = arith.constant 0 : index
    %c0_53 = arith.constant 0 : index
    %c0_54 = arith.constant 0 : index
    %167 = vector.load %arg5[%c0_52, %c0_53, %c0_54] : memref<2x1x128xf32, #tpu.memory_space<vmem>>, vector<1x1x128xf32>
    %168 = vector.shape_cast %167 : vector<1x1x128xf32> to vector<1x128xf32>
    %169 = arith.truncf %164 : vector<32x128xf32> to vector<32x128xbf16>
    %cst_55 = arith.constant dense<0.000000e+00> : vector<32x128xf32>
    %170 = tpu.matmul %169, %166, %cst_55 {dimension_numbers = #tpu.dot_dimension_numbers<[1], [0], [0], [1], [0, 0, 1, 1], [], []>} : vector<32x128xbf16>, vector<128x128xbf16>, vector<32x128xf32> -> vector<32x128xf32>
    %171 = vector.broadcast %168 : vector<1x128xf32> to vector<32x128xf32>
    %172 = arith.addf %170, %171 : vector<32x128xf32>
    %173 = arith.addf %0, %172 : vector<32x128xf32>
    %c0_56 = arith.constant 0 : index
    %c0_57 = arith.constant 0 : index
    %c0_58 = arith.constant 0 : index
    %174 = vector.load %arg10[%c0_56, %c0_57, %c0_58] : memref<2x1x128xf32, #tpu.memory_space<vmem>>, vector<1x1x128xf32>
    %175 = vector.shape_cast %174 : vector<1x1x128xf32> to vector<1x128xf32>
    %c0_59 = arith.constant 0 : index
    %c0_60 = arith.constant 0 : index
    %c0_61 = arith.constant 0 : index
    %176 = vector.load %arg11[%c0_59, %c0_60, %c0_61] : memref<2x1x128xf32, #tpu.memory_space<vmem>>, vector<1x1x128xf32>
    %177 = vector.shape_cast %176 : vector<1x1x128xf32> to vector<1x128xf32>
    %cst_62 = arith.constant dense<0.000000e+00> : vector<32xf32>
    %178 = vector.multi_reduction <add>, %173, %cst_62 [1] : vector<32x128xf32> to vector<32xf32>
    %179 = vector.shape_cast %178 : vector<32xf32> to vector<32x1xf32>
    %cst_63 = arith.constant 1.280000e+02 : f32
    %180 = vector.broadcast %cst_63 : f32 to vector<32x1xf32>
    %181 = arith.divf %179, %180 : vector<32x1xf32>
    %182 = vector.broadcast %181 : vector<32x1xf32> to vector<32x128xf32>
    %183 = arith.subf %173, %182 : vector<32x128xf32>
    %184 = arith.mulf %183, %183 : vector<32x128xf32>
    %cst_64 = arith.constant dense<0.000000e+00> : vector<32xf32>
    %185 = vector.multi_reduction <add>, %184, %cst_64 [1] : vector<32x128xf32> to vector<32xf32>
    %186 = vector.shape_cast %185 : vector<32xf32> to vector<32x1xf32>
    %cst_65 = arith.constant 1.280000e+02 : f32
    %187 = vector.broadcast %cst_65 : f32 to vector<32x1xf32>
    %188 = arith.divf %186, %187 : vector<32x1xf32>
    %cst_66 = arith.constant 9.99999974E-6 : f32
    %189 = vector.broadcast %cst_66 : f32 to vector<32x1xf32>
    %190 = arith.addf %188, %189 : vector<32x1xf32>
    %191 = math.rsqrt %190 : vector<32x1xf32>
    %192 = vector.broadcast %191 : vector<32x1xf32> to vector<32x128xf32>
    %193 = arith.mulf %183, %192 : vector<32x128xf32>
    %194 = vector.broadcast %175 : vector<1x128xf32> to vector<32x128xf32>
    %195 = arith.mulf %193, %194 : vector<32x128xf32>
    %196 = vector.broadcast %177 : vector<1x128xf32> to vector<32x128xf32>
    %197 = arith.addf %195, %196 : vector<32x128xf32>
    %c0_67 = arith.constant 0 : index
    %c0_68 = arith.constant 0 : index
    %c0_69 = arith.constant 0 : index
    %198 = vector.load %arg6[%c0_67, %c0_68, %c0_69] : memref<2x128x256xbf16, #tpu.memory_space<vmem>>, vector<1x128x256xbf16>
    %199 = vector.shape_cast %198 : vector<1x128x256xbf16> to vector<128x256xbf16>
    %c0_70 = arith.constant 0 : index
    %c0_71 = arith.constant 0 : index
    %c0_72 = arith.constant 0 : index
    %200 = vector.load %arg7[%c0_70, %c0_71, %c0_72] : memref<2x1x256xf32, #tpu.memory_space<vmem>>, vector<1x1x256xf32>
    %201 = vector.shape_cast %200 : vector<1x1x256xf32> to vector<1x256xf32>
    %202 = arith.truncf %197 : vector<32x128xf32> to vector<32x128xbf16>
    %cst_73 = arith.constant dense<0.000000e+00> : vector<32x256xf32>
    %203 = tpu.matmul %202, %199, %cst_73 {dimension_numbers = #tpu.dot_dimension_numbers<[1], [0], [0], [1], [0, 0, 1, 1], [], []>} : vector<32x128xbf16>, vector<128x256xbf16>, vector<32x256xf32> -> vector<32x256xf32>
    %204 = vector.broadcast %201 : vector<1x256xf32> to vector<32x256xf32>
    %205 = arith.addf %203, %204 : vector<32x256xf32>
    %cst_74 = arith.constant 0.000000e+00 : f32
    %206 = vector.broadcast %cst_74 : f32 to vector<32x256xf32>
    %207 = arith.maximumf %205, %206 : vector<32x256xf32>
    %c0_75 = arith.constant 0 : index
    %c0_76 = arith.constant 0 : index
    %c0_77 = arith.constant 0 : index
    %208 = vector.load %arg8[%c0_75, %c0_76, %c0_77] : memref<2x256x128xbf16, #tpu.memory_space<vmem>>, vector<1x256x128xbf16>
    %209 = vector.shape_cast %208 : vector<1x256x128xbf16> to vector<256x128xbf16>
    %c0_78 = arith.constant 0 : index
    %c0_79 = arith.constant 0 : index
    %c0_80 = arith.constant 0 : index
    %210 = vector.load %arg9[%c0_78, %c0_79, %c0_80] : memref<2x1x128xf32, #tpu.memory_space<vmem>>, vector<1x1x128xf32>
    %211 = vector.shape_cast %210 : vector<1x1x128xf32> to vector<1x128xf32>
    %212 = arith.truncf %207 : vector<32x256xf32> to vector<32x256xbf16>
    %cst_81 = arith.constant dense<0.000000e+00> : vector<32x128xf32>
    %213 = tpu.matmul %212, %209, %cst_81 {dimension_numbers = #tpu.dot_dimension_numbers<[1], [0], [0], [1], [0, 0, 1, 1], [], []>} : vector<32x256xbf16>, vector<256x128xbf16>, vector<32x128xf32> -> vector<32x128xf32>
    %214 = vector.broadcast %211 : vector<1x128xf32> to vector<32x128xf32>
    %215 = arith.addf %213, %214 : vector<32x128xf32>
    %216 = arith.addf %197, %215 : vector<32x128xf32>
    %c0_82 = arith.constant 0 : index
    %c0_83 = arith.constant 0 : index
    %c0_84 = arith.constant 0 : index
    %217 = vector.load %arg12[%c0_82, %c0_83, %c0_84] : memref<2x1x128xf32, #tpu.memory_space<vmem>>, vector<1x1x128xf32>
    %218 = vector.shape_cast %217 : vector<1x1x128xf32> to vector<1x128xf32>
    %c0_85 = arith.constant 0 : index
    %c0_86 = arith.constant 0 : index
    %c0_87 = arith.constant 0 : index
    %219 = vector.load %arg13[%c0_85, %c0_86, %c0_87] : memref<2x1x128xf32, #tpu.memory_space<vmem>>, vector<1x1x128xf32>
    %220 = vector.shape_cast %219 : vector<1x1x128xf32> to vector<1x128xf32>
    %cst_88 = arith.constant dense<0.000000e+00> : vector<32xf32>
    %221 = vector.multi_reduction <add>, %216, %cst_88 [1] : vector<32x128xf32> to vector<32xf32>
    %222 = vector.shape_cast %221 : vector<32xf32> to vector<32x1xf32>
    %cst_89 = arith.constant 1.280000e+02 : f32
    %223 = vector.broadcast %cst_89 : f32 to vector<32x1xf32>
    %224 = arith.divf %222, %223 : vector<32x1xf32>
    %225 = vector.broadcast %224 : vector<32x1xf32> to vector<32x128xf32>
    %226 = arith.subf %216, %225 : vector<32x128xf32>
    %227 = arith.mulf %226, %226 : vector<32x128xf32>
    %cst_90 = arith.constant dense<0.000000e+00> : vector<32xf32>
    %228 = vector.multi_reduction <add>, %227, %cst_90 [1] : vector<32x128xf32> to vector<32xf32>
    %229 = vector.shape_cast %228 : vector<32xf32> to vector<32x1xf32>
    %cst_91 = arith.constant 1.280000e+02 : f32
    %230 = vector.broadcast %cst_91 : f32 to vector<32x1xf32>
    %231 = arith.divf %229, %230 : vector<32x1xf32>
    %cst_92 = arith.constant 9.99999974E-6 : f32
    %232 = vector.broadcast %cst_92 : f32 to vector<32x1xf32>
    %233 = arith.addf %231, %232 : vector<32x1xf32>
    %234 = math.rsqrt %233 : vector<32x1xf32>
    %235 = vector.broadcast %234 : vector<32x1xf32> to vector<32x128xf32>
    %236 = arith.mulf %226, %235 : vector<32x128xf32>
    %237 = vector.broadcast %218 : vector<1x128xf32> to vector<32x128xf32>
    %238 = arith.mulf %236, %237 : vector<32x128xf32>
    %239 = vector.broadcast %220 : vector<1x128xf32> to vector<32x128xf32>
    %240 = arith.addf %238, %239 : vector<32x128xf32>
    %c1 = arith.constant 1 : index
    %c0_93 = arith.constant 0 : index
    %c0_94 = arith.constant 0 : index
    %241 = vector.load %arg2[%c1, %c0_93, %c0_94] : memref<2x128x384xbf16, #tpu.memory_space<vmem>>, vector<1x128x384xbf16>
    %242 = vector.shape_cast %241 : vector<1x128x384xbf16> to vector<128x384xbf16>
    %c1_95 = arith.constant 1 : index
    %c0_96 = arith.constant 0 : index
    %c0_97 = arith.constant 0 : index
    %243 = vector.load %arg3[%c1_95, %c0_96, %c0_97] : memref<2x1x384xf32, #tpu.memory_space<vmem>>, vector<1x1x384xf32>
    %244 = vector.shape_cast %243 : vector<1x1x384xf32> to vector<1x384xf32>
    %245 = arith.truncf %240 : vector<32x128xf32> to vector<32x128xbf16>
    %cst_98 = arith.constant dense<0.000000e+00> : vector<32x384xf32>
    %246 = tpu.matmul %245, %242, %cst_98 {dimension_numbers = #tpu.dot_dimension_numbers<[1], [0], [0], [1], [0, 0, 1, 1], [], []>} : vector<32x128xbf16>, vector<128x384xbf16>, vector<32x384xf32> -> vector<32x384xf32>
    %247 = vector.broadcast %244 : vector<1x384xf32> to vector<32x384xf32>
    %248 = arith.addf %246, %247 : vector<32x384xf32>
    %249 = vector.extract_strided_slice %248 {offsets = [0, 0], sizes = [32, 128], strides = [1, 1]} : vector<32x384xf32> to vector<32x128xf32>
    %250 = vector.shape_cast %249 : vector<32x128xf32> to vector<4x8x128xf32>
    %251 = arith.truncf %250 : vector<4x8x128xf32> to vector<4x8x128xbf16>
    %252 = vector.extract_strided_slice %248 {offsets = [0, 128], sizes = [32, 128], strides = [1, 1]} : vector<32x384xf32> to vector<32x128xf32>
    %253 = vector.shape_cast %252 : vector<32x128xf32> to vector<4x8x128xf32>
    %254 = arith.truncf %253 : vector<4x8x128xf32> to vector<4x8x128xbf16>
    %255 = vector.extract_strided_slice %248 {offsets = [0, 256], sizes = [32, 128], strides = [1, 1]} : vector<32x384xf32> to vector<32x128xf32>
    %256 = vector.shape_cast %255 : vector<32x128xf32> to vector<4x8x128xf32>
    %257 = arith.truncf %256 : vector<4x8x128xf32> to vector<4x8x128xbf16>
    %258 = vector.extract_strided_slice %251 {offsets = [0, 0, 0], sizes = [4, 8, 16], strides = [1, 1, 1]} : vector<4x8x128xbf16> to vector<4x8x16xbf16>
    %259 = vector.extract_strided_slice %254 {offsets = [0, 0, 0], sizes = [4, 8, 16], strides = [1, 1, 1]} : vector<4x8x128xbf16> to vector<4x8x16xbf16>
    "tpu.trace_start"() <{level = 10 : i32, message = "bqd,bkd->bqk"}> : () -> ()
    %cst_99 = arith.constant dense<0.000000e+00> : vector<4x8x8xf32>
    %260 = tpu.matmul %258, %259, %cst_99 {dimension_numbers = #tpu.dot_dimension_numbers<[2], [2], [1], [1], [0, 0, 0, 1, 1, 1], [0], [0]>} : vector<4x8x16xbf16>, vector<4x8x16xbf16>, vector<4x8x8xf32> -> vector<4x8x8xf32>
    "tpu.trace_stop"() : () -> ()
    %cst_100 = arith.constant 2.500000e-01 : f32
    %261 = vector.broadcast %cst_100 : f32 to vector<4x8x8xf32>
    %262 = arith.mulf %260, %261 : vector<4x8x8xf32>
    %cst_101 = arith.constant dense<0xFF800000> : vector<4x8xf32>
    %263 = vector.multi_reduction <maximumf>, %262, %cst_101 [2] : vector<4x8x8xf32> to vector<4x8xf32>
    %264 = vector.shape_cast %263 : vector<4x8xf32> to vector<4x8x1xf32>
    %265 = vector.broadcast %264 : vector<4x8x1xf32> to vector<4x8x8xf32>
    %266 = arith.subf %262, %265 : vector<4x8x8xf32>
    %267 = math.exp %266 : vector<4x8x8xf32>
    %cst_102 = arith.constant dense<0.000000e+00> : vector<4x8xf32>
    %268 = vector.multi_reduction <add>, %267, %cst_102 [2] : vector<4x8x8xf32> to vector<4x8xf32>
    %269 = vector.shape_cast %268 : vector<4x8xf32> to vector<4x8x1xf32>
    %270 = tpu.reciprocal %269 {approx = true} : vector<4x8x1xf32> -> vector<4x8x1xf32>
    %271 = vector.broadcast %270 : vector<4x8x1xf32> to vector<4x8x8xf32>
    %272 = arith.mulf %267, %271 : vector<4x8x8xf32>
    %273 = arith.truncf %272 : vector<4x8x8xf32> to vector<4x8x8xbf16>
    %274 = vector.extract_strided_slice %257 {offsets = [0, 0, 0], sizes = [4, 8, 16], strides = [1, 1, 1]} : vector<4x8x128xbf16> to vector<4x8x16xbf16>
    "tpu.trace_start"() <{level = 10 : i32, message = "bqk,bkd->bqd"}> : () -> ()
    %cst_103 = arith.constant dense<0.000000e+00> : vector<4x8x16xf32>
    %275 = tpu.matmul %273, %274, %cst_103 {dimension_numbers = #tpu.dot_dimension_numbers<[2], [1], [1], [2], [0, 0, 0, 1, 1, 2], [0], [0]>} : vector<4x8x8xbf16>, vector<4x8x16xbf16>, vector<4x8x16xf32> -> vector<4x8x16xf32>
    "tpu.trace_stop"() : () -> ()
    %276 = vector.extract_strided_slice %251 {offsets = [0, 0, 16], sizes = [4, 8, 16], strides = [1, 1, 1]} : vector<4x8x128xbf16> to vector<4x8x16xbf16>
    %277 = vector.extract_strided_slice %254 {offsets = [0, 0, 16], sizes = [4, 8, 16], strides = [1, 1, 1]} : vector<4x8x128xbf16> to vector<4x8x16xbf16>
    "tpu.trace_start"() <{level = 10 : i32, message = "bqd,bkd->bqk"}> : () -> ()
    %cst_104 = arith.constant dense<0.000000e+00> : vector<4x8x8xf32>
    %278 = tpu.matmul %276, %277, %cst_104 {dimension_numbers = #tpu.dot_dimension_numbers<[2], [2], [1], [1], [0, 0, 0, 1, 1, 1], [0], [0]>} : vector<4x8x16xbf16>, vector<4x8x16xbf16>, vector<4x8x8xf32> -> vector<4x8x8xf32>
    "tpu.trace_stop"() : () -> ()
    %cst_105 = arith.constant 2.500000e-01 : f32
    %279 = vector.broadcast %cst_105 : f32 to vector<4x8x8xf32>
    %280 = arith.mulf %278, %279 : vector<4x8x8xf32>
    %cst_106 = arith.constant dense<0xFF800000> : vector<4x8xf32>
    %281 = vector.multi_reduction <maximumf>, %280, %cst_106 [2] : vector<4x8x8xf32> to vector<4x8xf32>
    %282 = vector.shape_cast %281 : vector<4x8xf32> to vector<4x8x1xf32>
    %283 = vector.broadcast %282 : vector<4x8x1xf32> to vector<4x8x8xf32>
    %284 = arith.subf %280, %283 : vector<4x8x8xf32>
    %285 = math.exp %284 : vector<4x8x8xf32>
    %cst_107 = arith.constant dense<0.000000e+00> : vector<4x8xf32>
    %286 = vector.multi_reduction <add>, %285, %cst_107 [2] : vector<4x8x8xf32> to vector<4x8xf32>
    %287 = vector.shape_cast %286 : vector<4x8xf32> to vector<4x8x1xf32>
    %288 = tpu.reciprocal %287 {approx = true} : vector<4x8x1xf32> -> vector<4x8x1xf32>
    %289 = vector.broadcast %288 : vector<4x8x1xf32> to vector<4x8x8xf32>
    %290 = arith.mulf %285, %289 : vector<4x8x8xf32>
    %291 = arith.truncf %290 : vector<4x8x8xf32> to vector<4x8x8xbf16>
    %292 = vector.extract_strided_slice %257 {offsets = [0, 0, 16], sizes = [4, 8, 16], strides = [1, 1, 1]} : vector<4x8x128xbf16> to vector<4x8x16xbf16>
    "tpu.trace_start"() <{level = 10 : i32, message = "bqk,bkd->bqd"}> : () -> ()
    %cst_108 = arith.constant dense<0.000000e+00> : vector<4x8x16xf32>
    %293 = tpu.matmul %291, %292, %cst_108 {dimension_numbers = #tpu.dot_dimension_numbers<[2], [1], [1], [2], [0, 0, 0, 1, 1, 2], [0], [0]>} : vector<4x8x8xbf16>, vector<4x8x16xbf16>, vector<4x8x16xf32> -> vector<4x8x16xf32>
    "tpu.trace_stop"() : () -> ()
    %294 = vector.extract_strided_slice %251 {offsets = [0, 0, 32], sizes = [4, 8, 16], strides = [1, 1, 1]} : vector<4x8x128xbf16> to vector<4x8x16xbf16>
    %295 = vector.extract_strided_slice %254 {offsets = [0, 0, 32], sizes = [4, 8, 16], strides = [1, 1, 1]} : vector<4x8x128xbf16> to vector<4x8x16xbf16>
    "tpu.trace_start"() <{level = 10 : i32, message = "bqd,bkd->bqk"}> : () -> ()
    %cst_109 = arith.constant dense<0.000000e+00> : vector<4x8x8xf32>
    %296 = tpu.matmul %294, %295, %cst_109 {dimension_numbers = #tpu.dot_dimension_numbers<[2], [2], [1], [1], [0, 0, 0, 1, 1, 1], [0], [0]>} : vector<4x8x16xbf16>, vector<4x8x16xbf16>, vector<4x8x8xf32> -> vector<4x8x8xf32>
    "tpu.trace_stop"() : () -> ()
    %cst_110 = arith.constant 2.500000e-01 : f32
    %297 = vector.broadcast %cst_110 : f32 to vector<4x8x8xf32>
    %298 = arith.mulf %296, %297 : vector<4x8x8xf32>
    %cst_111 = arith.constant dense<0xFF800000> : vector<4x8xf32>
    %299 = vector.multi_reduction <maximumf>, %298, %cst_111 [2] : vector<4x8x8xf32> to vector<4x8xf32>
    %300 = vector.shape_cast %299 : vector<4x8xf32> to vector<4x8x1xf32>
    %301 = vector.broadcast %300 : vector<4x8x1xf32> to vector<4x8x8xf32>
    %302 = arith.subf %298, %301 : vector<4x8x8xf32>
    %303 = math.exp %302 : vector<4x8x8xf32>
    %cst_112 = arith.constant dense<0.000000e+00> : vector<4x8xf32>
    %304 = vector.multi_reduction <add>, %303, %cst_112 [2] : vector<4x8x8xf32> to vector<4x8xf32>
    %305 = vector.shape_cast %304 : vector<4x8xf32> to vector<4x8x1xf32>
    %306 = tpu.reciprocal %305 {approx = true} : vector<4x8x1xf32> -> vector<4x8x1xf32>
    %307 = vector.broadcast %306 : vector<4x8x1xf32> to vector<4x8x8xf32>
    %308 = arith.mulf %303, %307 : vector<4x8x8xf32>
    %309 = arith.truncf %308 : vector<4x8x8xf32> to vector<4x8x8xbf16>
    %310 = vector.extract_strided_slice %257 {offsets = [0, 0, 32], sizes = [4, 8, 16], strides = [1, 1, 1]} : vector<4x8x128xbf16> to vector<4x8x16xbf16>
    "tpu.trace_start"() <{level = 10 : i32, message = "bqk,bkd->bqd"}> : () -> ()
    %cst_113 = arith.constant dense<0.000000e+00> : vector<4x8x16xf32>
    %311 = tpu.matmul %309, %310, %cst_113 {dimension_numbers = #tpu.dot_dimension_numbers<[2], [1], [1], [2], [0, 0, 0, 1, 1, 2], [0], [0]>} : vector<4x8x8xbf16>, vector<4x8x16xbf16>, vector<4x8x16xf32> -> vector<4x8x16xf32>
    "tpu.trace_stop"() : () -> ()
    %312 = vector.extract_strided_slice %251 {offsets = [0, 0, 48], sizes = [4, 8, 16], strides = [1, 1, 1]} : vector<4x8x128xbf16> to vector<4x8x16xbf16>
    %313 = vector.extract_strided_slice %254 {offsets = [0, 0, 48], sizes = [4, 8, 16], strides = [1, 1, 1]} : vector<4x8x128xbf16> to vector<4x8x16xbf16>
    "tpu.trace_start"() <{level = 10 : i32, message = "bqd,bkd->bqk"}> : () -> ()
    %cst_114 = arith.constant dense<0.000000e+00> : vector<4x8x8xf32>
    %314 = tpu.matmul %312, %313, %cst_114 {dimension_numbers = #tpu.dot_dimension_numbers<[2], [2], [1], [1], [0, 0, 0, 1, 1, 1], [0], [0]>} : vector<4x8x16xbf16>, vector<4x8x16xbf16>, vector<4x8x8xf32> -> vector<4x8x8xf32>
    "tpu.trace_stop"() : () -> ()
    %cst_115 = arith.constant 2.500000e-01 : f32
    %315 = vector.broadcast %cst_115 : f32 to vector<4x8x8xf32>
    %316 = arith.mulf %314, %315 : vector<4x8x8xf32>
    %cst_116 = arith.constant dense<0xFF800000> : vector<4x8xf32>
    %317 = vector.multi_reduction <maximumf>, %316, %cst_116 [2] : vector<4x8x8xf32> to vector<4x8xf32>
    %318 = vector.shape_cast %317 : vector<4x8xf32> to vector<4x8x1xf32>
    %319 = vector.broadcast %318 : vector<4x8x1xf32> to vector<4x8x8xf32>
    %320 = arith.subf %316, %319 : vector<4x8x8xf32>
    %321 = math.exp %320 : vector<4x8x8xf32>
    %cst_117 = arith.constant dense<0.000000e+00> : vector<4x8xf32>
    %322 = vector.multi_reduction <add>, %321, %cst_117 [2] : vector<4x8x8xf32> to vector<4x8xf32>
    %323 = vector.shape_cast %322 : vector<4x8xf32> to vector<4x8x1xf32>
    %324 = tpu.reciprocal %323 {approx = true} : vector<4x8x1xf32> -> vector<4x8x1xf32>
    %325 = vector.broadcast %324 : vector<4x8x1xf32> to vector<4x8x8xf32>
    %326 = arith.mulf %321, %325 : vector<4x8x8xf32>
    %327 = arith.truncf %326 : vector<4x8x8xf32> to vector<4x8x8xbf16>
    %328 = vector.extract_strided_slice %257 {offsets = [0, 0, 48], sizes = [4, 8, 16], strides = [1, 1, 1]} : vector<4x8x128xbf16> to vector<4x8x16xbf16>
    "tpu.trace_start"() <{level = 10 : i32, message = "bqk,bkd->bqd"}> : () -> ()
    %cst_118 = arith.constant dense<0.000000e+00> : vector<4x8x16xf32>
    %329 = tpu.matmul %327, %328, %cst_118 {dimension_numbers = #tpu.dot_dimension_numbers<[2], [1], [1], [2], [0, 0, 0, 1, 1, 2], [0], [0]>} : vector<4x8x8xbf16>, vector<4x8x16xbf16>, vector<4x8x16xf32> -> vector<4x8x16xf32>
    "tpu.trace_stop"() : () -> ()
    %330 = vector.extract_strided_slice %251 {offsets = [0, 0, 64], sizes = [4, 8, 16], strides = [1, 1, 1]} : vector<4x8x128xbf16> to vector<4x8x16xbf16>
    %331 = vector.extract_strided_slice %254 {offsets = [0, 0, 64], sizes = [4, 8, 16], strides = [1, 1, 1]} : vector<4x8x128xbf16> to vector<4x8x16xbf16>
    "tpu.trace_start"() <{level = 10 : i32, message = "bqd,bkd->bqk"}> : () -> ()
    %cst_119 = arith.constant dense<0.000000e+00> : vector<4x8x8xf32>
    %332 = tpu.matmul %330, %331, %cst_119 {dimension_numbers = #tpu.dot_dimension_numbers<[2], [2], [1], [1], [0, 0, 0, 1, 1, 1], [0], [0]>} : vector<4x8x16xbf16>, vector<4x8x16xbf16>, vector<4x8x8xf32> -> vector<4x8x8xf32>
    "tpu.trace_stop"() : () -> ()
    %cst_120 = arith.constant 2.500000e-01 : f32
    %333 = vector.broadcast %cst_120 : f32 to vector<4x8x8xf32>
    %334 = arith.mulf %332, %333 : vector<4x8x8xf32>
    %cst_121 = arith.constant dense<0xFF800000> : vector<4x8xf32>
    %335 = vector.multi_reduction <maximumf>, %334, %cst_121 [2] : vector<4x8x8xf32> to vector<4x8xf32>
    %336 = vector.shape_cast %335 : vector<4x8xf32> to vector<4x8x1xf32>
    %337 = vector.broadcast %336 : vector<4x8x1xf32> to vector<4x8x8xf32>
    %338 = arith.subf %334, %337 : vector<4x8x8xf32>
    %339 = math.exp %338 : vector<4x8x8xf32>
    %cst_122 = arith.constant dense<0.000000e+00> : vector<4x8xf32>
    %340 = vector.multi_reduction <add>, %339, %cst_122 [2] : vector<4x8x8xf32> to vector<4x8xf32>
    %341 = vector.shape_cast %340 : vector<4x8xf32> to vector<4x8x1xf32>
    %342 = tpu.reciprocal %341 {approx = true} : vector<4x8x1xf32> -> vector<4x8x1xf32>
    %343 = vector.broadcast %342 : vector<4x8x1xf32> to vector<4x8x8xf32>
    %344 = arith.mulf %339, %343 : vector<4x8x8xf32>
    %345 = arith.truncf %344 : vector<4x8x8xf32> to vector<4x8x8xbf16>
    %346 = vector.extract_strided_slice %257 {offsets = [0, 0, 64], sizes = [4, 8, 16], strides = [1, 1, 1]} : vector<4x8x128xbf16> to vector<4x8x16xbf16>
    "tpu.trace_start"() <{level = 10 : i32, message = "bqk,bkd->bqd"}> : () -> ()
    %cst_123 = arith.constant dense<0.000000e+00> : vector<4x8x16xf32>
    %347 = tpu.matmul %345, %346, %cst_123 {dimension_numbers = #tpu.dot_dimension_numbers<[2], [1], [1], [2], [0, 0, 0, 1, 1, 2], [0], [0]>} : vector<4x8x8xbf16>, vector<4x8x16xbf16>, vector<4x8x16xf32> -> vector<4x8x16xf32>
    "tpu.trace_stop"() : () -> ()
    %348 = vector.extract_strided_slice %251 {offsets = [0, 0, 80], sizes = [4, 8, 16], strides = [1, 1, 1]} : vector<4x8x128xbf16> to vector<4x8x16xbf16>
    %349 = vector.extract_strided_slice %254 {offsets = [0, 0, 80], sizes = [4, 8, 16], strides = [1, 1, 1]} : vector<4x8x128xbf16> to vector<4x8x16xbf16>
    "tpu.trace_start"() <{level = 10 : i32, message = "bqd,bkd->bqk"}> : () -> ()
    %cst_124 = arith.constant dense<0.000000e+00> : vector<4x8x8xf32>
    %350 = tpu.matmul %348, %349, %cst_124 {dimension_numbers = #tpu.dot_dimension_numbers<[2], [2], [1], [1], [0, 0, 0, 1, 1, 1], [0], [0]>} : vector<4x8x16xbf16>, vector<4x8x16xbf16>, vector<4x8x8xf32> -> vector<4x8x8xf32>
    "tpu.trace_stop"() : () -> ()
    %cst_125 = arith.constant 2.500000e-01 : f32
    %351 = vector.broadcast %cst_125 : f32 to vector<4x8x8xf32>
    %352 = arith.mulf %350, %351 : vector<4x8x8xf32>
    %cst_126 = arith.constant dense<0xFF800000> : vector<4x8xf32>
    %353 = vector.multi_reduction <maximumf>, %352, %cst_126 [2] : vector<4x8x8xf32> to vector<4x8xf32>
    %354 = vector.shape_cast %353 : vector<4x8xf32> to vector<4x8x1xf32>
    %355 = vector.broadcast %354 : vector<4x8x1xf32> to vector<4x8x8xf32>
    %356 = arith.subf %352, %355 : vector<4x8x8xf32>
    %357 = math.exp %356 : vector<4x8x8xf32>
    %cst_127 = arith.constant dense<0.000000e+00> : vector<4x8xf32>
    %358 = vector.multi_reduction <add>, %357, %cst_127 [2] : vector<4x8x8xf32> to vector<4x8xf32>
    %359 = vector.shape_cast %358 : vector<4x8xf32> to vector<4x8x1xf32>
    %360 = tpu.reciprocal %359 {approx = true} : vector<4x8x1xf32> -> vector<4x8x1xf32>
    %361 = vector.broadcast %360 : vector<4x8x1xf32> to vector<4x8x8xf32>
    %362 = arith.mulf %357, %361 : vector<4x8x8xf32>
    %363 = arith.truncf %362 : vector<4x8x8xf32> to vector<4x8x8xbf16>
    %364 = vector.extract_strided_slice %257 {offsets = [0, 0, 80], sizes = [4, 8, 16], strides = [1, 1, 1]} : vector<4x8x128xbf16> to vector<4x8x16xbf16>
    "tpu.trace_start"() <{level = 10 : i32, message = "bqk,bkd->bqd"}> : () -> ()
    %cst_128 = arith.constant dense<0.000000e+00> : vector<4x8x16xf32>
    %365 = tpu.matmul %363, %364, %cst_128 {dimension_numbers = #tpu.dot_dimension_numbers<[2], [1], [1], [2], [0, 0, 0, 1, 1, 2], [0], [0]>} : vector<4x8x8xbf16>, vector<4x8x16xbf16>, vector<4x8x16xf32> -> vector<4x8x16xf32>
    "tpu.trace_stop"() : () -> ()
    %366 = vector.extract_strided_slice %251 {offsets = [0, 0, 96], sizes = [4, 8, 16], strides = [1, 1, 1]} : vector<4x8x128xbf16> to vector<4x8x16xbf16>
    %367 = vector.extract_strided_slice %254 {offsets = [0, 0, 96], sizes = [4, 8, 16], strides = [1, 1, 1]} : vector<4x8x128xbf16> to vector<4x8x16xbf16>
    "tpu.trace_start"() <{level = 10 : i32, message = "bqd,bkd->bqk"}> : () -> ()
    %cst_129 = arith.constant dense<0.000000e+00> : vector<4x8x8xf32>
    %368 = tpu.matmul %366, %367, %cst_129 {dimension_numbers = #tpu.dot_dimension_numbers<[2], [2], [1], [1], [0, 0, 0, 1, 1, 1], [0], [0]>} : vector<4x8x16xbf16>, vector<4x8x16xbf16>, vector<4x8x8xf32> -> vector<4x8x8xf32>
    "tpu.trace_stop"() : () -> ()
    %cst_130 = arith.constant 2.500000e-01 : f32
    %369 = vector.broadcast %cst_130 : f32 to vector<4x8x8xf32>
    %370 = arith.mulf %368, %369 : vector<4x8x8xf32>
    %cst_131 = arith.constant dense<0xFF800000> : vector<4x8xf32>
    %371 = vector.multi_reduction <maximumf>, %370, %cst_131 [2] : vector<4x8x8xf32> to vector<4x8xf32>
    %372 = vector.shape_cast %371 : vector<4x8xf32> to vector<4x8x1xf32>
    %373 = vector.broadcast %372 : vector<4x8x1xf32> to vector<4x8x8xf32>
    %374 = arith.subf %370, %373 : vector<4x8x8xf32>
    %375 = math.exp %374 : vector<4x8x8xf32>
    %cst_132 = arith.constant dense<0.000000e+00> : vector<4x8xf32>
    %376 = vector.multi_reduction <add>, %375, %cst_132 [2] : vector<4x8x8xf32> to vector<4x8xf32>
    %377 = vector.shape_cast %376 : vector<4x8xf32> to vector<4x8x1xf32>
    %378 = tpu.reciprocal %377 {approx = true} : vector<4x8x1xf32> -> vector<4x8x1xf32>
    %379 = vector.broadcast %378 : vector<4x8x1xf32> to vector<4x8x8xf32>
    %380 = arith.mulf %375, %379 : vector<4x8x8xf32>
    %381 = arith.truncf %380 : vector<4x8x8xf32> to vector<4x8x8xbf16>
    %382 = vector.extract_strided_slice %257 {offsets = [0, 0, 96], sizes = [4, 8, 16], strides = [1, 1, 1]} : vector<4x8x128xbf16> to vector<4x8x16xbf16>
    "tpu.trace_start"() <{level = 10 : i32, message = "bqk,bkd->bqd"}> : () -> ()
    %cst_133 = arith.constant dense<0.000000e+00> : vector<4x8x16xf32>
    %383 = tpu.matmul %381, %382, %cst_133 {dimension_numbers = #tpu.dot_dimension_numbers<[2], [1], [1], [2], [0, 0, 0, 1, 1, 2], [0], [0]>} : vector<4x8x8xbf16>, vector<4x8x16xbf16>, vector<4x8x16xf32> -> vector<4x8x16xf32>
    "tpu.trace_stop"() : () -> ()
    %384 = vector.extract_strided_slice %251 {offsets = [0, 0, 112], sizes = [4, 8, 16], strides = [1, 1, 1]} : vector<4x8x128xbf16> to vector<4x8x16xbf16>
    %385 = vector.extract_strided_slice %254 {offsets = [0, 0, 112], sizes = [4, 8, 16], strides = [1, 1, 1]} : vector<4x8x128xbf16> to vector<4x8x16xbf16>
    "tpu.trace_start"() <{level = 10 : i32, message = "bqd,bkd->bqk"}> : () -> ()
    %cst_134 = arith.constant dense<0.000000e+00> : vector<4x8x8xf32>
    %386 = tpu.matmul %384, %385, %cst_134 {dimension_numbers = #tpu.dot_dimension_numbers<[2], [2], [1], [1], [0, 0, 0, 1, 1, 1], [0], [0]>} : vector<4x8x16xbf16>, vector<4x8x16xbf16>, vector<4x8x8xf32> -> vector<4x8x8xf32>
    "tpu.trace_stop"() : () -> ()
    %cst_135 = arith.constant 2.500000e-01 : f32
    %387 = vector.broadcast %cst_135 : f32 to vector<4x8x8xf32>
    %388 = arith.mulf %386, %387 : vector<4x8x8xf32>
    %cst_136 = arith.constant dense<0xFF800000> : vector<4x8xf32>
    %389 = vector.multi_reduction <maximumf>, %388, %cst_136 [2] : vector<4x8x8xf32> to vector<4x8xf32>
    %390 = vector.shape_cast %389 : vector<4x8xf32> to vector<4x8x1xf32>
    %391 = vector.broadcast %390 : vector<4x8x1xf32> to vector<4x8x8xf32>
    %392 = arith.subf %388, %391 : vector<4x8x8xf32>
    %393 = math.exp %392 : vector<4x8x8xf32>
    %cst_137 = arith.constant dense<0.000000e+00> : vector<4x8xf32>
    %394 = vector.multi_reduction <add>, %393, %cst_137 [2] : vector<4x8x8xf32> to vector<4x8xf32>
    %395 = vector.shape_cast %394 : vector<4x8xf32> to vector<4x8x1xf32>
    %396 = tpu.reciprocal %395 {approx = true} : vector<4x8x1xf32> -> vector<4x8x1xf32>
    %397 = vector.broadcast %396 : vector<4x8x1xf32> to vector<4x8x8xf32>
    %398 = arith.mulf %393, %397 : vector<4x8x8xf32>
    %399 = arith.truncf %398 : vector<4x8x8xf32> to vector<4x8x8xbf16>
    %400 = vector.extract_strided_slice %257 {offsets = [0, 0, 112], sizes = [4, 8, 16], strides = [1, 1, 1]} : vector<4x8x128xbf16> to vector<4x8x16xbf16>
    "tpu.trace_start"() <{level = 10 : i32, message = "bqk,bkd->bqd"}> : () -> ()
    %cst_138 = arith.constant dense<0.000000e+00> : vector<4x8x16xf32>
    %401 = tpu.matmul %399, %400, %cst_138 {dimension_numbers = #tpu.dot_dimension_numbers<[2], [1], [1], [2], [0, 0, 0, 1, 1, 2], [0], [0]>} : vector<4x8x8xbf16>, vector<4x8x16xbf16>, vector<4x8x16xf32> -> vector<4x8x16xf32>
    "tpu.trace_stop"() : () -> ()
    %402 = tpu.concatenate %275, %293, %311, %329, %347, %365, %383, %401 in 2 : vector<4x8x16xf32>, vector<4x8x16xf32>, vector<4x8x16xf32>, vector<4x8x16xf32>, vector<4x8x16xf32>, vector<4x8x16xf32>, vector<4x8x16xf32>, vector<4x8x16xf32> -> vector<4x8x128xf32>
    %403 = vector.shape_cast %402 : vector<4x8x128xf32> to vector<32x128xf32>
    %c1_139 = arith.constant 1 : index
    %c0_140 = arith.constant 0 : index
    %c0_141 = arith.constant 0 : index
    %404 = vector.load %arg4[%c1_139, %c0_140, %c0_141] : memref<2x128x128xbf16, #tpu.memory_space<vmem>>, vector<1x128x128xbf16>
    %405 = vector.shape_cast %404 : vector<1x128x128xbf16> to vector<128x128xbf16>
    %c1_142 = arith.constant 1 : index
    %c0_143 = arith.constant 0 : index
    %c0_144 = arith.constant 0 : index
    %406 = vector.load %arg5[%c1_142, %c0_143, %c0_144] : memref<2x1x128xf32, #tpu.memory_space<vmem>>, vector<1x1x128xf32>
    %407 = vector.shape_cast %406 : vector<1x1x128xf32> to vector<1x128xf32>
    %408 = arith.truncf %403 : vector<32x128xf32> to vector<32x128xbf16>
    %cst_145 = arith.constant dense<0.000000e+00> : vector<32x128xf32>
    %409 = tpu.matmul %408, %405, %cst_145 {dimension_numbers = #tpu.dot_dimension_numbers<[1], [0], [0], [1], [0, 0, 1, 1], [], []>} : vector<32x128xbf16>, vector<128x128xbf16>, vector<32x128xf32> -> vector<32x128xf32>
    %410 = vector.broadcast %407 : vector<1x128xf32> to vector<32x128xf32>
    %411 = arith.addf %409, %410 : vector<32x128xf32>
    %412 = arith.addf %240, %411 : vector<32x128xf32>
    %c1_146 = arith.constant 1 : index
    %c0_147 = arith.constant 0 : index
    %c0_148 = arith.constant 0 : index
    %413 = vector.load %arg10[%c1_146, %c0_147, %c0_148] : memref<2x1x128xf32, #tpu.memory_space<vmem>>, vector<1x1x128xf32>
    %414 = vector.shape_cast %413 : vector<1x1x128xf32> to vector<1x128xf32>
    %c1_149 = arith.constant 1 : index
    %c0_150 = arith.constant 0 : index
    %c0_151 = arith.constant 0 : index
    %415 = vector.load %arg11[%c1_149, %c0_150, %c0_151] : memref<2x1x128xf32, #tpu.memory_space<vmem>>, vector<1x1x128xf32>
    %416 = vector.shape_cast %415 : vector<1x1x128xf32> to vector<1x128xf32>
    %cst_152 = arith.constant dense<0.000000e+00> : vector<32xf32>
    %417 = vector.multi_reduction <add>, %412, %cst_152 [1] : vector<32x128xf32> to vector<32xf32>
    %418 = vector.shape_cast %417 : vector<32xf32> to vector<32x1xf32>
    %cst_153 = arith.constant 1.280000e+02 : f32
    %419 = vector.broadcast %cst_153 : f32 to vector<32x1xf32>
    %420 = arith.divf %418, %419 : vector<32x1xf32>
    %421 = vector.broadcast %420 : vector<32x1xf32> to vector<32x128xf32>
    %422 = arith.subf %412, %421 : vector<32x128xf32>
    %423 = arith.mulf %422, %422 : vector<32x128xf32>
    %cst_154 = arith.constant dense<0.000000e+00> : vector<32xf32>
    %424 = vector.multi_reduction <add>, %423, %cst_154 [1] : vector<32x128xf32> to vector<32xf32>
    %425 = vector.shape_cast %424 : vector<32xf32> to vector<32x1xf32>
    %cst_155 = arith.constant 1.280000e+02 : f32
    %426 = vector.broadcast %cst_155 : f32 to vector<32x1xf32>
    %427 = arith.divf %425, %426 : vector<32x1xf32>
    %cst_156 = arith.constant 9.99999974E-6 : f32
    %428 = vector.broadcast %cst_156 : f32 to vector<32x1xf32>
    %429 = arith.addf %427, %428 : vector<32x1xf32>
    %430 = math.rsqrt %429 : vector<32x1xf32>
    %431 = vector.broadcast %430 : vector<32x1xf32> to vector<32x128xf32>
    %432 = arith.mulf %422, %431 : vector<32x128xf32>
    %433 = vector.broadcast %414 : vector<1x128xf32> to vector<32x128xf32>
    %434 = arith.mulf %432, %433 : vector<32x128xf32>
    %435 = vector.broadcast %416 : vector<1x128xf32> to vector<32x128xf32>
    %436 = arith.addf %434, %435 : vector<32x128xf32>
    %c1_157 = arith.constant 1 : index
    %c0_158 = arith.constant 0 : index
    %c0_159 = arith.constant 0 : index
    %437 = vector.load %arg6[%c1_157, %c0_158, %c0_159] : memref<2x128x256xbf16, #tpu.memory_space<vmem>>, vector<1x128x256xbf16>
    %438 = vector.shape_cast %437 : vector<1x128x256xbf16> to vector<128x256xbf16>
    %c1_160 = arith.constant 1 : index
    %c0_161 = arith.constant 0 : index
    %c0_162 = arith.constant 0 : index
    %439 = vector.load %arg7[%c1_160, %c0_161, %c0_162] : memref<2x1x256xf32, #tpu.memory_space<vmem>>, vector<1x1x256xf32>
    %440 = vector.shape_cast %439 : vector<1x1x256xf32> to vector<1x256xf32>
    %441 = arith.truncf %436 : vector<32x128xf32> to vector<32x128xbf16>
    %cst_163 = arith.constant dense<0.000000e+00> : vector<32x256xf32>
    %442 = tpu.matmul %441, %438, %cst_163 {dimension_numbers = #tpu.dot_dimension_numbers<[1], [0], [0], [1], [0, 0, 1, 1], [], []>} : vector<32x128xbf16>, vector<128x256xbf16>, vector<32x256xf32> -> vector<32x256xf32>
    %443 = vector.broadcast %440 : vector<1x256xf32> to vector<32x256xf32>
    %444 = arith.addf %442, %443 : vector<32x256xf32>
    %cst_164 = arith.constant 0.000000e+00 : f32
    %445 = vector.broadcast %cst_164 : f32 to vector<32x256xf32>
    %446 = arith.maximumf %444, %445 : vector<32x256xf32>
    %c1_165 = arith.constant 1 : index
    %c0_166 = arith.constant 0 : index
    %c0_167 = arith.constant 0 : index
    %447 = vector.load %arg8[%c1_165, %c0_166, %c0_167] : memref<2x256x128xbf16, #tpu.memory_space<vmem>>, vector<1x256x128xbf16>
    %448 = vector.shape_cast %447 : vector<1x256x128xbf16> to vector<256x128xbf16>
    %c1_168 = arith.constant 1 : index
    %c0_169 = arith.constant 0 : index
    %c0_170 = arith.constant 0 : index
    %449 = vector.load %arg9[%c1_168, %c0_169, %c0_170] : memref<2x1x128xf32, #tpu.memory_space<vmem>>, vector<1x1x128xf32>
    %450 = vector.shape_cast %449 : vector<1x1x128xf32> to vector<1x128xf32>
    %451 = arith.truncf %446 : vector<32x256xf32> to vector<32x256xbf16>
    %cst_171 = arith.constant dense<0.000000e+00> : vector<32x128xf32>
    %452 = tpu.matmul %451, %448, %cst_171 {dimension_numbers = #tpu.dot_dimension_numbers<[1], [0], [0], [1], [0, 0, 1, 1], [], []>} : vector<32x256xbf16>, vector<256x128xbf16>, vector<32x128xf32> -> vector<32x128xf32>
    %453 = vector.broadcast %450 : vector<1x128xf32> to vector<32x128xf32>
    %454 = arith.addf %452, %453 : vector<32x128xf32>
    %455 = arith.addf %436, %454 : vector<32x128xf32>
    %c1_172 = arith.constant 1 : index
    %c0_173 = arith.constant 0 : index
    %c0_174 = arith.constant 0 : index
    %456 = vector.load %arg12[%c1_172, %c0_173, %c0_174] : memref<2x1x128xf32, #tpu.memory_space<vmem>>, vector<1x1x128xf32>
    %457 = vector.shape_cast %456 : vector<1x1x128xf32> to vector<1x128xf32>
    %c1_175 = arith.constant 1 : index
    %c0_176 = arith.constant 0 : index
    %c0_177 = arith.constant 0 : index
    %458 = vector.load %arg13[%c1_175, %c0_176, %c0_177] : memref<2x1x128xf32, #tpu.memory_space<vmem>>, vector<1x1x128xf32>
    %459 = vector.shape_cast %458 : vector<1x1x128xf32> to vector<1x128xf32>
    %cst_178 = arith.constant dense<0.000000e+00> : vector<32xf32>
    %460 = vector.multi_reduction <add>, %455, %cst_178 [1] : vector<32x128xf32> to vector<32xf32>
    %461 = vector.shape_cast %460 : vector<32xf32> to vector<32x1xf32>
    %cst_179 = arith.constant 1.280000e+02 : f32
    %462 = vector.broadcast %cst_179 : f32 to vector<32x1xf32>
    %463 = arith.divf %461, %462 : vector<32x1xf32>
    %464 = vector.broadcast %463 : vector<32x1xf32> to vector<32x128xf32>
    %465 = arith.subf %455, %464 : vector<32x128xf32>
    %466 = arith.mulf %465, %465 : vector<32x128xf32>
    %cst_180 = arith.constant dense<0.000000e+00> : vector<32xf32>
    %467 = vector.multi_reduction <add>, %466, %cst_180 [1] : vector<32x128xf32> to vector<32xf32>
    %468 = vector.shape_cast %467 : vector<32xf32> to vector<32x1xf32>
    %cst_181 = arith.constant 1.280000e+02 : f32
    %469 = vector.broadcast %cst_181 : f32 to vector<32x1xf32>
    %470 = arith.divf %468, %469 : vector<32x1xf32>
    %cst_182 = arith.constant 9.99999974E-6 : f32
    %471 = vector.broadcast %cst_182 : f32 to vector<32x1xf32>
    %472 = arith.addf %470, %471 : vector<32x1xf32>
    %473 = math.rsqrt %472 : vector<32x1xf32>
    %474 = vector.broadcast %473 : vector<32x1xf32> to vector<32x128xf32>
    %475 = arith.mulf %465, %474 : vector<32x128xf32>
    %476 = vector.broadcast %457 : vector<1x128xf32> to vector<32x128xf32>
    %477 = arith.mulf %475, %476 : vector<32x128xf32>
    %478 = vector.broadcast %459 : vector<1x128xf32> to vector<32x128xf32>
    %479 = arith.addf %477, %478 : vector<32x128xf32>
    %480 = vector.shape_cast %479 : vector<32x128xf32> to vector<4x8x128xf32>
    %481 = tpu.transpose %480, [1, 0, 2] : vector<4x8x128xf32> -> vector<8x4x128xf32>
    %482 = vector.shape_cast %481 : vector<8x4x128xf32> to vector<32x128xf32>
    %c0_183 = arith.constant 0 : index
    %c0_184 = arith.constant 0 : index
    %483 = vector.load %arg25[%c0_183, %c0_184] : memref<32x128xf32, #tpu.memory_space<vmem>>, vector<32x128xf32>
    tpu.vector_store %arg25[%c0_183, %c0_184], %482 {strides = array<i32>} : memref<32x128xf32, #tpu.memory_space<vmem>>, vector<32x128xf32>,
    %c0_185 = arith.constant 0 : index
    %c0_186 = arith.constant 0 : index
    %484 = vector.load %arg14[%c0_185, %c0_186] : memref<128x128xbf16, #tpu.memory_space<vmem>>, vector<128x128xbf16>
    %c0_187 = arith.constant 0 : index
    %c0_188 = arith.constant 0 : index
    %485 = vector.load %arg15[%c0_187, %c0_188] : memref<1x128xf32, #tpu.memory_space<vmem>>, vector<1x128xf32>
    %486 = arith.truncf %482 : vector<32x128xf32> to vector<32x128xbf16>
    %cst_189 = arith.constant dense<0.000000e+00> : vector<32x128xf32>
    %487 = tpu.matmul %486, %484, %cst_189 {dimension_numbers = #tpu.dot_dimension_numbers<[1], [0], [0], [1], [0, 0, 1, 1], [], []>} : vector<32x128xbf16>, vector<128x128xbf16>, vector<32x128xf32> -> vector<32x128xf32>
    %488 = vector.broadcast %485 : vector<1x128xf32> to vector<32x128xf32>
    %489 = arith.addf %487, %488 : vector<32x128xf32>
    %c0_190 = arith.constant 0 : index
    %c0_191 = arith.constant 0 : index
    %490 = vector.load %arg16[%c0_190, %c0_191] : memref<128x128xbf16, #tpu.memory_space<vmem>>, vector<128x128xbf16>
    %c0_192 = arith.constant 0 : index
    %c0_193 = arith.constant 0 : index
    %491 = vector.load %arg17[%c0_192, %c0_193] : memref<1x128xf32, #tpu.memory_space<vmem>>, vector<1x128xf32>
    %492 = arith.truncf %1 : vector<32x128xf32> to vector<32x128xbf16>
    %cst_194 = arith.constant dense<0.000000e+00> : vector<32x128xf32>
    %493 = tpu.matmul %492, %490, %cst_194 {dimension_numbers = #tpu.dot_dimension_numbers<[1], [0], [0], [1], [0, 0, 1, 1], [], []>} : vector<32x128xbf16>, vector<128x128xbf16>, vector<32x128xf32> -> vector<32x128xf32>
    %494 = vector.broadcast %491 : vector<1x128xf32> to vector<32x128xf32>
    %495 = arith.addf %493, %494 : vector<32x128xf32>
    %496 = vector.shape_cast %489 : vector<32x128xf32> to vector<8x4x128xf32>
    %497 = arith.truncf %496 : vector<8x4x128xf32> to vector<8x4x128xbf16>
    %498 = vector.shape_cast %495 : vector<32x128xf32> to vector<8x4x128xf32>
    %499 = arith.truncf %498 : vector<8x4x128xf32> to vector<8x4x128xbf16>
    %500 = vector.shape_cast %1 : vector<32x128xf32> to vector<8x4x128xf32>
    %501 = arith.truncf %500 : vector<8x4x128xf32> to vector<8x4x128xbf16>
    "tpu.trace_start"() <{level = 10 : i32, message = "sqe,ske->sqk"}> : () -> ()
    %cst_195 = arith.constant dense<0.000000e+00> : vector<8x4x4xf32>
    %502 = tpu.matmul %497, %499, %cst_195 {dimension_numbers = #tpu.dot_dimension_numbers<[2], [2], [1], [1], [0, 0, 0, 1, 1, 1], [0], [0]>} : vector<8x4x128xbf16>, vector<8x4x128xbf16>, vector<8x4x4xf32> -> vector<8x4x4xf32>
    "tpu.trace_stop"() : () -> ()
    %cst_196 = arith.constant 0.0883883461 : f32
    %503 = vector.broadcast %cst_196 : f32 to vector<8x4x4xf32>
    %504 = arith.mulf %502, %503 : vector<8x4x4xf32>
    %cst_197 = arith.constant dense<0xFF800000> : vector<8x4xf32>
    %505 = vector.multi_reduction <maximumf>, %504, %cst_197 [2] : vector<8x4x4xf32> to vector<8x4xf32>
    %506 = vector.shape_cast %505 : vector<8x4xf32> to vector<8x4x1xf32>
    %507 = vector.broadcast %506 : vector<8x4x1xf32> to vector<8x4x4xf32>
    %508 = arith.subf %504, %507 : vector<8x4x4xf32>
    %509 = math.exp %508 : vector<8x4x4xf32>
    %cst_198 = arith.constant dense<0.000000e+00> : vector<8x4xf32>
    %510 = vector.multi_reduction <add>, %509, %cst_198 [2] : vector<8x4x4xf32> to vector<8x4xf32>
    %511 = vector.shape_cast %510 : vector<8x4xf32> to vector<8x4x1xf32>
    %512 = tpu.reciprocal %511 {approx = true} : vector<8x4x1xf32> -> vector<8x4x1xf32>
    %513 = vector.broadcast %512 : vector<8x4x1xf32> to vector<8x4x4xf32>
    %514 = arith.mulf %509, %513 : vector<8x4x4xf32>
    %515 = arith.truncf %514 : vector<8x4x4xf32> to vector<8x4x4xbf16>
    "tpu.trace_start"() <{level = 10 : i32, message = "sqk,ske->sqe"}> : () -> ()
    %cst_199 = arith.constant dense<0.000000e+00> : vector<8x4x128xf32>
    %516 = tpu.matmul %515, %501, %cst_199 {dimension_numbers = #tpu.dot_dimension_numbers<[2], [1], [1], [2], [0, 0, 0, 1, 1, 2], [0], [0]>} : vector<8x4x4xbf16>, vector<8x4x128xbf16>, vector<8x4x128xf32> -> vector<8x4x128xf32>
    "tpu.trace_stop"() : () -> ()
    %517 = vector.shape_cast %516 : vector<8x4x128xf32> to vector<32x128xf32>
    %518 = arith.addf %517, %1 : vector<32x128xf32>
    %c0_200 = arith.constant 0 : index
    %c0_201 = arith.constant 0 : index
    %519 = vector.load %arg18[%c0_200, %c0_201] : memref<128x128xbf16, #tpu.memory_space<vmem>>, vector<128x128xbf16>
    %c0_202 = arith.constant 0 : index
    %c0_203 = arith.constant 0 : index
    %520 = vector.load %arg19[%c0_202, %c0_203] : memref<1x128xf32, #tpu.memory_space<vmem>>, vector<1x128xf32>
    %521 = arith.truncf %518 : vector<32x128xf32> to vector<32x128xbf16>
    %cst_204 = arith.constant dense<0.000000e+00> : vector<32x128xf32>
    %522 = tpu.matmul %521, %519, %cst_204 {dimension_numbers = #tpu.dot_dimension_numbers<[1], [0], [0], [1], [0, 0, 1, 1], [], []>} : vector<32x128xbf16>, vector<128x128xbf16>, vector<32x128xf32> -> vector<32x128xf32>
    %523 = vector.broadcast %520 : vector<1x128xf32> to vector<32x128xf32>
    %524 = arith.addf %522, %523 : vector<32x128xf32>
    %cst_205 = arith.constant 0.000000e+00 : f32
    %525 = vector.broadcast %cst_205 : f32 to vector<32x128xf32>
    %526 = arith.maximumf %524, %525 : vector<32x128xf32>
    %c0_206 = arith.constant 0 : index
    %c0_207 = arith.constant 0 : index
    %527 = vector.load %arg20[%c0_206, %c0_207] : memref<128x128xbf16, #tpu.memory_space<vmem>>, vector<128x128xbf16>
    %c0_208 = arith.constant 0 : index
    %c0_209 = arith.constant 0 : index
    %528 = vector.load %arg21[%c0_208, %c0_209] : memref<1x128xf32, #tpu.memory_space<vmem>>, vector<1x128xf32>
    %529 = arith.truncf %526 : vector<32x128xf32> to vector<32x128xbf16>
    %cst_210 = arith.constant dense<0.000000e+00> : vector<32x128xf32>
    %530 = tpu.matmul %529, %527, %cst_210 {dimension_numbers = #tpu.dot_dimension_numbers<[1], [0], [0], [1], [0, 0, 1, 1], [], []>} : vector<32x128xbf16>, vector<128x128xbf16>, vector<32x128xf32> -> vector<32x128xf32>
    %531 = vector.broadcast %528 : vector<1x128xf32> to vector<32x128xf32>
    %532 = arith.addf %530, %531 : vector<32x128xf32>
    %533 = arith.addf %532, %518 : vector<32x128xf32>
    %c0_211 = arith.constant 0 : index
    %c0_212 = arith.constant 0 : index
    %534 = vector.load %arg22[%c0_211, %c0_212] : memref<128x128xbf16, #tpu.memory_space<vmem>>, vector<128x128xbf16>
    %c0_213 = arith.constant 0 : index
    %c0_214 = arith.constant 0 : index
    %535 = vector.load %arg23[%c0_213, %c0_214] : memref<1x128xf32, #tpu.memory_space<vmem>>, vector<1x128xf32>
    %536 = arith.truncf %533 : vector<32x128xf32> to vector<32x128xbf16>
    %cst_215 = arith.constant dense<0.000000e+00> : vector<32x128xf32>
    %537 = tpu.matmul %536, %534, %cst_215 {dimension_numbers = #tpu.dot_dimension_numbers<[1], [0], [0], [1], [0, 0, 1, 1], [], []>} : vector<32x128xbf16>, vector<128x128xbf16>, vector<32x128xf32> -> vector<32x128xf32>
    %538 = vector.broadcast %535 : vector<1x128xf32> to vector<32x128xf32>
    %539 = arith.addf %537, %538 : vector<32x128xf32>
    %c0_216 = arith.constant 0 : index
    %c0_217 = arith.constant 0 : index
    %540 = vector.load %arg26[%c0_216, %c0_217] : memref<32x128xf32, #tpu.memory_space<vmem>>, vector<32x128xf32>
    tpu.vector_store %arg26[%c0_216, %c0_217], %539 {strides = array<i32>} : memref<32x128xf32, #tpu.memory_space<vmem>>, vector<32x128xf32>,
    %cst_218 = arith.constant 0.00999999977 : f32
    %541 = vector.broadcast %cst_218 : f32 to vector<32x128xf32>
    %542 = arith.mulf %541, %539 : vector<32x128xf32>
    %cst_219 = arith.constant 9.900000e-01 : f32
    %543 = vector.broadcast %cst_219 : f32 to vector<32x128xf32>
    %544 = arith.mulf %543, %1 : vector<32x128xf32>
    %545 = arith.addf %542, %544 : vector<32x128xf32>
    %c0_220 = arith.constant 0 : index
    %c0_221 = arith.constant 0 : index
    %546 = vector.load %arg24[%c0_220, %c0_221] : memref<32x128xf32, #tpu.memory_space<vmem>>, vector<32x128xf32>
    tpu.vector_store %arg24[%c0_220, %c0_221], %545 {strides = array<i32>} : memref<32x128xf32, #tpu.memory_space<vmem>>, vector<32x128xf32>,
    return
  }
}

</mosaic_0001>

<llo_original>
// kernel: adapter_forward.1
$region0: #{adapter_forward.1}
  #allocation0 [shape = 'u32[]', space=smem, size = 0x4, offset = 0x4, fixed_abs, tag = 'smem constant byte address 0x4 - core index']
  #allocation1 [shape = 'u32[72,128]{1,0:T(1,128)}', space=vmem, size = 0x9000, scoped, tag = 'internal scratch']
  %s0 = inlined_call_operand.vmem [shape: f32[32,128], index: 0, kind: input, shape index: {}]
  %s1 = inlined_call_operand.vmem [shape: f32[32,128], index: 1, kind: input, shape index: {}]
  %s2 = inlined_call_operand.hbm [shape: bf16[2,128,384], index: 2, kind: input, shape index: {}]
  %s3 = inlined_call_operand.vmem [shape: f32[2,1,384], index: 3, kind: input, shape index: {}]
  %s4 = inlined_call_operand.hbm [shape: bf16[2,128,128], index: 4, kind: input, shape index: {}]
  %s5 = inlined_call_operand.vmem [shape: f32[2,1,128], index: 5, kind: input, shape index: {}]
  %s6 = inlined_call_operand.hbm [shape: bf16[2,128,256], index: 6, kind: input, shape index: {}]
  %s7 = inlined_call_operand.vmem [shape: f32[2,1,256], index: 7, kind: input, shape index: {}]
  %s8 = inlined_call_operand.hbm [shape: bf16[2,256,128], index: 8, kind: input, shape index: {}]
  %s9 = inlined_call_operand.vmem [shape: f32[2,1,128], index: 9, kind: input, shape index: {}]
  %s10 = inlined_call_operand.vmem [shape: f32[2,1,128], index: 10, kind: input, shape index: {}]
  %s11 = inlined_call_operand.vmem [shape: f32[2,1,128], index: 11, kind: input, shape index: {}]
  %s12 = inlined_call_operand.vmem [shape: f32[2,1,128], index: 12, kind: input, shape index: {}]
  %s13 = inlined_call_operand.vmem [shape: f32[2,1,128], index: 13, kind: input, shape index: {}]
  %s14 = inlined_call_operand.hbm [shape: bf16[128,128], index: 14, kind: input, shape index: {}]
  %s15 = inlined_call_operand.vmem [shape: f32[1,128], index: 15, kind: input, shape index: {}]
  %s16 = inlined_call_operand.hbm [shape: bf16[128,128], index: 16, kind: input, shape index: {}]
  %s17 = inlined_call_operand.vmem [shape: f32[1,128], index: 17, kind: input, shape index: {}]
  %s18 = inlined_call_operand.hbm [shape: bf16[128,128], index: 18, kind: input, shape index: {}]
  %s19 = inlined_call_operand.vmem [shape: f32[1,128], index: 19, kind: input, shape index: {}]
  %s20 = inlined_call_operand.hbm [shape: bf16[128,128], index: 20, kind: input, shape index: {}]
  %s21 = inlined_call_operand.vmem [shape: f32[1,128], index: 21, kind: input, shape index: {}]
  %s22 = inlined_call_operand.hbm [shape: bf16[128,128], index: 22, kind: input, shape index: {}]
  %s23 = inlined_call_operand.vmem [shape: f32[1,128], index: 23, kind: input, shape index: {}]
  %s24 = inlined_call_operand.hbm [shape: f32[32,128], index: 24, kind: output, shape index: {0}]
  %s25 = inlined_call_operand.hbm [shape: f32[32,128], index: 25, kind: output, shape index: {1}]
  %s26 = inlined_call_operand.hbm [shape: f32[32,128], index: 26, kind: output, shape index: {2}]
  %27 = xla_tuple %s24, %s25, %s26
  %s28 = sld [smem:[#allocation0]]
  $region158: #{adapter_forward.1} parent=0
    _
  %s30 = ssub.s32 1, %s28
  %s31 = scalar_select 0, %s30, %s28
  $region1: #{adapter_forward.1} parent=0
    #allocation2 [shape = 'u8[196608]{0}', space=vmem, size = 0x30000, scoped, tag = 'input window, operand 2, single buffered']
    #allocation3 [shape = 's32[1]{0}', space=sflag, size = 0x4, scoped, tag = 'scoped memory for adapter_forward.1']
    #allocation4 [shape = 's32[1]{0}', space=sflag, size = 0x4, scoped, tag = 'scoped memory for adapter_forward.1']
    #allocation5 [shape = 'u8[65536]{0}', space=vmem, size = 0x10000, scoped, tag = 'input window, operand 4, single buffered']
    #allocation6 [shape = 's32[1]{0}', space=sflag, size = 0x4, scoped, tag = 'scoped memory for adapter_forward.1']
    #allocation7 [shape = 'u8[131072]{0}', space=vmem, size = 0x20000, scoped, tag = 'input window, operand 6, single buffered']
    #allocation8 [shape = 'u8[131072]{0}', space=vmem, size = 0x20000, scoped, tag = 'input window, operand 8, single buffered']
    #allocation9 [shape = 's32[1]{0}', space=sflag, size = 0x4, scoped, tag = 'scoped memory for adapter_forward.1']
    #allocation10 [shape = 'u8[32768]{0}', space=vmem, size = 0x8000, scoped, tag = 'input window, operand 14, single buffered']
    #allocation11 [shape = 'u8[32768]{0}', space=vmem, size = 0x8000, scoped, tag = 'input window, operand 16, single buffered']
    #allocation12 [shape = 's32[1]{0}', space=sflag, size = 0x4, scoped, tag = 'scoped memory for adapter_forward.1']
    #allocation13 [shape = 'u8[32768]{0}', space=vmem, size = 0x8000, scoped, tag = 'input window, operand 18, single buffered']
    #allocation14 [shape = 'u8[32768]{0}', space=vmem, size = 0x8000, scoped, tag = 'input window, operand 20, single buffered']
    #allocation15 [shape = 's32[1]{0}', space=sflag, size = 0x4, scoped, tag = 'scoped memory for adapter_forward.1']
    #allocation16 [shape = 'u8[32768]{0}', space=vmem, size = 0x8000, scoped, tag = 'input window, operand 22, single buffered']
    #allocation17 [shape = 'u8[16384]{0}', space=vmem, size = 0x4000, scoped, tag = 'output window, operand 0, single buffered']
    #allocation18 [shape = 'u8[16384]{0}', space=vmem, size = 0x4000, scoped, tag = 'output window, operand 1, single buffered']
    #allocation19 [shape = 's32[1]{0}', space=sflag, size = 0x4, scoped, tag = 'scoped memory for adapter_forward.1']
    #allocation20 [shape = 'u8[16384]{0}', space=vmem, size = 0x4000, scoped, tag = 'output window, operand 2, single buffered']
    %32 = vsyncpa [#allocation3], 0
    %33 = vsyncpa [#allocation6], 0
    %34 = vsyncpa [#allocation9], 0
    %35 = vsyncpa [#allocation12], 0
    %36 = vsyncpa [#allocation15], 0
    %37 = vsyncpa [#allocation4], 0
    %38 = vsyncpa [#allocation19], 0
    // Predicated region
    $region2: #{adapter_forward.1} parent=1 // pred_check
      _
    $region3: #{adapter_forward.1} parent=1 // pred_check_branch
      %40 = sbr.rel (0) target = $region5
    $region4: #{adapter_forward.1} parent=1 // pred_region
      _
    $region5: #{adapter_forward.1} parent=1 // pred_fallthru
      _
    // Predicated region
    $region6: #{adapter_forward.1} parent=1 // pred_check
      _
    $region7: #{adapter_forward.1} parent=1 // pred_check_branch
      %42 = sbr.rel (0) target = $region9
    $region8: #{adapter_forward.1} parent=1 // pred_region
      _
    $region9: #{adapter_forward.1} parent=1 // pred_fallthru
      _
    // Predicated region
    $region10: #{adapter_forward.1} parent=1 // pred_check
      _
    $region11: #{adapter_forward.1} parent=1 // pred_check_branch
      %44 = sbr.rel (0) target = $region13
    $region12: #{adapter_forward.1} parent=1 // pred_region
      %46 = vsyncadd [#allocation3], 0
      %s47 = sshll.u32 %s2, 4
      %s48 = int_to_ptr.hbm [resolvable:$true] %s47
      %s49 = sshll.u32 [#allocation2], 4
      %s50 = int_to_ptr.vmem [resolvable:$true] %s49
      %55 = dma.hbm_to_vmem [thread:$0]  %s48, 6144, %s50, [#allocation3], 192, 192, 12
    $region13: #{adapter_forward.1} parent=1 // pred_fallthru
      _
    // Predicated region
    $region14: #{adapter_forward.1} parent=1 // pred_check
      _
    $region15: #{adapter_forward.1} parent=1 // pred_check_branch
      %57 = sbr.rel (0) target = $region17
    $region16: #{adapter_forward.1} parent=1 // pred_region
      _
    $region17: #{adapter_forward.1} parent=1 // pred_fallthru
      _
    // Predicated region
    $region18: #{adapter_forward.1} parent=1 // pred_check
      _
    $region19: #{adapter_forward.1} parent=1 // pred_check_branch
      %59 = sbr.rel (0) target = $region21
    $region20: #{adapter_forward.1} parent=1 // pred_region
      %61 = vsyncadd [#allocation6], 0
      %s62 = sshll.u32 %s4, 4
      %s63 = int_to_ptr.hbm [resolvable:$true] %s62
      %s64 = sshll.u32 [#allocation5], 4
      %s65 = int_to_ptr.vmem [resolvable:$true] %s64
      %70 = dma.hbm_to_vmem [thread:$0]  %s63, 2048, %s65, [#allocation6], 64, 64, 4
    $region21: #{adapter_forward.1} parent=1 // pred_fallthru
      _
    // Predicated region
    $region22: #{adapter_forward.1} parent=1 // pred_check
      _
    $region23: #{adapter_forward.1} parent=1 // pred_check_branch
      %72 = sbr.rel (0) target = $region25
    $region24: #{adapter_forward.1} parent=1 // pred_region
      _
    $region25: #{adapter_forward.1} parent=1 // pred_fallthru
      _
    // Predicated region
    $region26: #{adapter_forward.1} parent=1 // pred_check
      _
    $region27: #{adapter_forward.1} parent=1 // pred_check_branch
      %74 = sbr.rel (0) target = $region29
    $region28: #{adapter_forward.1} parent=1 // pred_region
      %76 = vsyncadd [#allocation6], 0
      %s77 = sshll.u32 %s6, 4
      %s78 = int_to_ptr.hbm [resolvable:$true] %s77
      %s79 = sshll.u32 [#allocation7], 4
      %s80 = int_to_ptr.vmem [resolvable:$true] %s79
      %85 = dma.hbm_to_vmem [thread:$0]  %s78, 4096, %s80, [#allocation6], 128, 128, 8
    $region29: #{adapter_forward.1} parent=1 // pred_fallthru
      _
    // Predicated region
    $region30: #{adapter_forward.1} parent=1 // pred_check
      _
    $region31: #{adapter_forward.1} parent=1 // pred_check_branch
      %87 = sbr.rel (0) target = $region33
    $region32: #{adapter_forward.1} parent=1 // pred_region
      _
    $region33: #{adapter_forward.1} parent=1 // pred_fallthru
      _
    // Predicated region
    $region34: #{adapter_forward.1} parent=1 // pred_check
      _
    $region35: #{adapter_forward.1} parent=1 // pred_check_branch
      %89 = sbr.rel (0) target = $region37
    $region36: #{adapter_forward.1} parent=1 // pred_region
      %91 = vsyncadd [#allocation9], 0
      %s92 = sshll.u32 %s8, 4
      %s93 = int_to_ptr.hbm [resolvable:$true] %s92
      %s94 = sshll.u32 [#allocation8], 4
      %s95 = int_to_ptr.vmem [resolvable:$true] %s94
      %100 = dma.hbm_to_vmem [thread:$0]  %s93, 4096, %s95, [#allocation9], 64, 64, 4
    $region37: #{adapter_forward.1} parent=1 // pred_fallthru
      _
    // Predicated region
    $region38: #{adapter_forward.1} parent=1 // pred_check
      _
    $region39: #{adapter_forward.1} parent=1 // pred_check_branch
      %102 = sbr.rel (0) target = $region41
    $region40: #{adapter_forward.1} parent=1 // pred_region
      _
    $region41: #{adapter_forward.1} parent=1 // pred_fallthru
      _
    // Predicated region
    $region42: #{adapter_forward.1} parent=1 // pred_check
      _
    $region43: #{adapter_forward.1} parent=1 // pred_check_branch
      %104 = sbr.rel (0) target = $region45
    $region44: #{adapter_forward.1} parent=1 // pred_region
      _
    $region45: #{adapter_forward.1} parent=1 // pred_fallthru
      _
    // Predicated region
    $region46: #{adapter_forward.1} parent=1 // pred_check
      _
    $region47: #{adapter_forward.1} parent=1 // pred_check_branch
      %106 = sbr.rel (0) target = $region49
    $region48: #{adapter_forward.1} parent=1 // pred_region
      _
    $region49: #{adapter_forward.1} parent=1 // pred_fallthru
      _
    // Predicated region
    $region50: #{adapter_forward.1} parent=1 // pred_check
      _
    $region51: #{adapter_forward.1} parent=1 // pred_check_branch
      %108 = sbr.rel (0) target = $region53
    $region52: #{adapter_forward.1} parent=1 // pred_region
      _
    $region53: #{adapter_forward.1} parent=1 // pred_fallthru
      _
    // Predicated region
    $region54: #{adapter_forward.1} parent=1 // pred_check
      _
    $region55: #{adapter_forward.1} parent=1 // pred_check_branch
      %110 = sbr.rel (0) target = $region57
    $region56: #{adapter_forward.1} parent=1 // pred_region
      _
    $region57: #{adapter_forward.1} parent=1 // pred_fallthru
      _
    // Predicated region
    $region58: #{adapter_forward.1} parent=1 // pred_check
      _
    $region59: #{adapter_forward.1} parent=1 // pred_check_branch
      %112 = sbr.rel (0) target = $region61
    $region60: #{adapter_forward.1} parent=1 // pred_region
      %114 = vsyncadd [#allocation9], 0
      %s115 = sshll.u32 %s14, 4
      %s116 = int_to_ptr.hbm [resolvable:$true] %s115
      %s117 = sshll.u32 [#allocation10], 4
      %s118 = int_to_ptr.vmem [resolvable:$true] %s117
      %123 = dma.hbm_to_vmem [thread:$0]  %s116, 1024, %s118, [#allocation9], 64, 64, 4
    $region61: #{adapter_forward.1} parent=1 // pred_fallthru
      _
    // Predicated region
    $region62: #{adapter_forward.1} parent=1 // pred_check
      _
    $region63: #{adapter_forward.1} parent=1 // pred_check_branch
      %125 = sbr.rel (0) target = $region65
    $region64: #{adapter_forward.1} parent=1 // pred_region
      _
    $region65: #{adapter_forward.1} parent=1 // pred_fallthru
      _
    // Predicated region
    $region66: #{adapter_forward.1} parent=1 // pred_check
      _
    $region67: #{adapter_forward.1} parent=1 // pred_check_branch
      %127 = sbr.rel (0) target = $region69
    $region68: #{adapter_forward.1} parent=1 // pred_region
      %129 = vsyncadd [#allocation12], 0
      %s130 = sshll.u32 %s16, 4
      %s131 = int_to_ptr.hbm [resolvable:$true] %s130
      %s132 = sshll.u32 [#allocation11], 4
      %s133 = int_to_ptr.vmem [resolvable:$true] %s132
      %138 = dma.hbm_to_vmem [thread:$0]  %s131, 1024, %s133, [#allocation12], 64, 64, 4
    $region69: #{adapter_forward.1} parent=1 // pred_fallthru
      _
    // Predicated region
    $region70: #{adapter_forward.1} parent=1 // pred_check
      _
    $region71: #{adapter_forward.1} parent=1 // pred_check_branch
      %140 = sbr.rel (0) target = $region73
    $region72: #{adapter_forward.1} parent=1 // pred_region
      _
    $region73: #{adapter_forward.1} parent=1 // pred_fallthru
      _
    // Predicated region
    $region74: #{adapter_forward.1} parent=1 // pred_check
      _
    $region75: #{adapter_forward.1} parent=1 // pred_check_branch
      %142 = sbr.rel (0) target = $region77
    $region76: #{adapter_forward.1} parent=1 // pred_region
      %144 = vsyncadd [#allocation12], 0
      %s145 = sshll.u32 %s18, 4
      %s146 = int_to_ptr.hbm [resolvable:$true] %s145
      %s147 = sshll.u32 [#allocation13], 4
      %s148 = int_to_ptr.vmem [resolvable:$true] %s147
      %153 = dma.hbm_to_vmem [thread:$0]  %s146, 1024, %s148, [#allocation12], 64, 64, 4
    $region77: #{adapter_forward.1} parent=1 // pred_fallthru
      _
    // Predicated region
    $region78: #{adapter_forward.1} parent=1 // pred_check
      _
    $region79: #{adapter_forward.1} parent=1 // pred_check_branch
      %155 = sbr.rel (0) target = $region81
    $region80: #{adapter_forward.1} parent=1 // pred_region
      _
    $region81: #{adapter_forward.1} parent=1 // pred_fallthru
      _
    // Predicated region
    $region82: #{adapter_forward.1} parent=1 // pred_check
      _
    $region83: #{adapter_forward.1} parent=1 // pred_check_branch
      %157 = sbr.rel (0) target = $region85
    $region84: #{adapter_forward.1} parent=1 // pred_region
      %159 = vsyncadd [#allocation15], 0
      %s160 = sshll.u32 %s20, 4
      %s161 = int_to_ptr.hbm [resolvable:$true] %s160
      %s162 = sshll.u32 [#allocation14], 4
      %s163 = int_to_ptr.vmem [resolvable:$true] %s162
      %168 = dma.hbm_to_vmem [thread:$0]  %s161, 1024, %s163, [#allocation15], 64, 64, 4
    $region85: #{adapter_forward.1} parent=1 // pred_fallthru
      _
    // Predicated region
    $region86: #{adapter_forward.1} parent=1 // pred_check
      _
    $region87: #{adapter_forward.1} parent=1 // pred_check_branch
      %170 = sbr.rel (0) target = $region89
    $region88: #{adapter_forward.1} parent=1 // pred_region
      _
    $region89: #{adapter_forward.1} parent=1 // pred_fallthru
      _
    // Predicated region
    $region90: #{adapter_forward.1} parent=1 // pred_check
      _
    $region91: #{adapter_forward.1} parent=1 // pred_check_branch
      %172 = sbr.rel (0) target = $region93
    $region92: #{adapter_forward.1} parent=1 // pred_region
      %174 = vsyncadd [#allocation15], 0
      %s175 = sshll.u32 %s22, 4
      %s176 = int_to_ptr.hbm [resolvable:$true] %s175
      %s177 = sshll.u32 [#allocation16], 4
      %s178 = int_to_ptr.vmem [resolvable:$true] %s177
      %183 = dma.hbm_to_vmem [thread:$0]  %s176, 1024, %s178, [#allocation15], 64, 64, 4
    $region93: #{adapter_forward.1} parent=1 // pred_fallthru
      _
    // Predicated region
    $region94: #{adapter_forward.1} parent=1 // pred_check
      _
    $region95: #{adapter_forward.1} parent=1 // pred_check_branch
      %185 = sbr.rel (0) target = $region97
    $region96: #{adapter_forward.1} parent=1 // pred_region
      _
    $region97: #{adapter_forward.1} parent=1 // pred_fallthru
      _
    // Predicated region
    $region98: #{adapter_forward.1} parent=1 // pred_check
      _
    $region99: #{adapter_forward.1} parent=1 // pred_check_branch
      %187 = sbr.rel (0) target = $region101
    $region100: #{adapter_forward.1} parent=1 // pred_region
      %189 = dma.done [#allocation3], 6144
    $region101: #{adapter_forward.1} parent=1 // pred_fallthru
      _
    // Predicated region
    $region102: #{adapter_forward.1} parent=1 // pred_check
      _
    $region103: #{adapter_forward.1} parent=1 // pred_check_branch
      %191 = sbr.rel (0) target = $region105
    $region104: #{adapter_forward.1} parent=1 // pred_region
      %193 = dma.done [#allocation6], 2048
    $region105: #{adapter_forward.1} parent=1 // pred_fallthru
      _
    // Predicated region
    $region106: #{adapter_forward.1} parent=1 // pred_check
      _
    $region107: #{adapter_forward.1} parent=1 // pred_check_branch
      %195 = sbr.rel (0) target = $region109
    $region108: #{adapter_forward.1} parent=1 // pred_region
      %197 = dma.done [#allocation6], 4096
    $region109: #{adapter_forward.1} parent=1 // pred_fallthru
      _
    // Predicated region
    $region110: #{adapter_forward.1} parent=1 // pred_check
      _
    $region111: #{adapter_forward.1} parent=1 // pred_check_branch
      %199 = sbr.rel (0) target = $region113
    $region112: #{adapter_forward.1} parent=1 // pred_region
      %201 = dma.done [#allocation9], 4096
    $region113: #{adapter_forward.1} parent=1 // pred_fallthru
      _
    // Predicated region
    $region114: #{adapter_forward.1} parent=1 // pred_check
      _
    $region115: #{adapter_forward.1} parent=1 // pred_check_branch
      %203 = sbr.rel (0) target = $region117
    $region116: #{adapter_forward.1} parent=1 // pred_region
      %205 = dma.done [#allocation9], 1024
    $region117: #{adapter_forward.1} parent=1 // pred_fallthru
      _
    // Predicated region
    $region118: #{adapter_forward.1} parent=1 // pred_check
      _
    $region119: #{adapter_forward.1} parent=1 // pred_check_branch
      %207 = sbr.rel (0) target = $region121
    $region120: #{adapter_forward.1} parent=1 // pred_region
      %209 = dma.done [#allocation12], 1024
    $region121: #{adapter_forward.1} parent=1 // pred_fallthru
      _
    // Predicated region
    $region122: #{adapter_forward.1} parent=1 // pred_check
      _
    $region123: #{adapter_forward.1} parent=1 // pred_check_branch
      %211 = sbr.rel (0) target = $region125
    $region124: #{adapter_forward.1} parent=1 // pred_region
      %213 = dma.done [#allocation12], 1024
    $region125: #{adapter_forward.1} parent=1 // pred_fallthru
      _
    // Predicated region
    $region126: #{adapter_forward.1} parent=1 // pred_check
      _
    $region127: #{adapter_forward.1} parent=1 // pred_check_branch
      %215 = sbr.rel (0) target = $region129
    $region128: #{adapter_forward.1} parent=1 // pred_region
      %217 = dma.done [#allocation15], 1024
    $region129: #{adapter_forward.1} parent=1 // pred_fallthru
      _
    // Predicated region
    $region130: #{adapter_forward.1} parent=1 // pred_check
      _
    $region131: #{adapter_forward.1} parent=1 // pred_check_branch
      %219 = sbr.rel (0) target = $region133
    $region132: #{adapter_forward.1} parent=1 // pred_region
      %221 = dma.done [#allocation15], 1024
    $region133: #{adapter_forward.1} parent=1 // pred_fallthru
      _
    %v223 = vld [vmem:[%s0] sm:$0xff]
    %v224 = vld [vmem:[%s0 + $0x8] sm:$0xff]
    %v225 = vld [vmem:[%s0 + $0x10] sm:$0xff]
    %v226 = vld [vmem:[%s0 + $0x18] sm:$0xff]
    %v227 = vld [vmem:[%s1] sm:$0xff]
    %v228 = vld [vmem:[%s1 + $0x8] sm:$0xff]
    %v229 = vld [vmem:[%s1 + $0x10] sm:$0xff]
    %v230 = vld [vmem:[%s1 + $0x18] sm:$0xff]
    %v231 = vld [vmem:[#allocation2] sm:$0xff]
    %v232 = vld [vmem:[#allocation2 + $0x8] sm:$0xf]
    %v233 = vld [vmem:[#allocation2 + $0xc] sm:$0xff]
    %v234 = vld [vmem:[#allocation2 + $0x14] sm:$0xf]
    %v235 = vld [vmem:[#allocation2 + $0x18] sm:$0xff]
    %v236 = vld [vmem:[#allocation2 + $0x20] sm:$0xf]
    %v237 = vld [vmem:[#allocation2 + $0x24] sm:$0xff]
    %v238 = vld [vmem:[#allocation2 + $0x2c] sm:$0xf]
    %v239 = vld [vmem:[#allocation2 + $0x30] sm:$0xff]
    %v240 = vld [vmem:[#allocation2 + $0x38] sm:$0xf]
    %v241 = vld [vmem:[#allocation2 + $0x3c] sm:$0xff]
    %v242 = vld [vmem:[#allocation2 + $0x44] sm:$0xf]
    %v243 = vld [vmem:[#allocation2 + $0x48] sm:$0xff]
    %v244 = vld [vmem:[#allocation2 + $0x50] sm:$0xf]
    %v245 = vld [vmem:[#allocation2 + $0x54] sm:$0xff]
    %v246 = vld [vmem:[#allocation2 + $0x5c] sm:$0xf]
    %v247 = vld [vmem:[#allocation2 + $0x60] sm:$0xff]
    %v248 = vld [vmem:[#allocation2 + $0x68] sm:$0xf]
    %v249 = vld [vmem:[#allocation2 + $0x6c] sm:$0xff]
    %v250 = vld [vmem:[#allocation2 + $0x74] sm:$0xf]
    %v251 = vld [vmem:[#allocation2 + $0x78] sm:$0xff]
    %v252 = vld [vmem:[#allocation2 + $0x80] sm:$0xf]
    %v253 = vld [vmem:[#allocation2 + $0x84] sm:$0xff]
    %v254 = vld [vmem:[#allocation2 + $0x8c] sm:$0xf]
    %v255 = vld [vmem:[#allocation2 + $0x90] sm:$0xff]
    %v256 = vld [vmem:[#allocation2 + $0x98] sm:$0xf]
    %v257 = vld [vmem:[#allocation2 + $0x9c] sm:$0xff]
    %v258 = vld [vmem:[#allocation2 + $0xa4] sm:$0xf]
    %v259 = vld [vmem:[#allocation2 + $0xa8] sm:$0xff]
    %v260 = vld [vmem:[#allocation2 + $0xb0] sm:$0xf]
    %v261 = vld [vmem:[#allocation2 + $0xb4] sm:$0xff]
    %v262 = vld [vmem:[#allocation2 + $0xbc] sm:$0xf]
    %v263 = vld [vmem:[%s3] sm:$0x7]
    %v264 = vpack.c.bf16 %v224, %v223
    %v265 = vpack.c.bf16 %v226, %v225
    %v267 = vperm.slane %v263, 0
    %v268 = vperm.slane %v263, 1
    %v269 = vperm.slane %v263, 2
    %v305 = vunpack.c.l.b16 %v231
    %v306 = vunpack.c.h.b16 %v231
    %v307 = vunpack.c.l.b16 %v232
    %v308 = vunpack.c.l.b16 %v233
    %v309 = vunpack.c.h.b16 %v233
    %v310 = vunpack.c.l.b16 %v234
    %v311 = vunpack.c.l.b16 %v235
    %v312 = vunpack.c.h.b16 %v235
    %v313 = vunpack.c.l.b16 %v236
    %v314 = vunpack.c.l.b16 %v237
    %v315 = vunpack.c.h.b16 %v237
    %v316 = vunpack.c.l.b16 %v238
    %v317 = vunpack.c.l.b16 %v239
    %v318 = vunpack.c.h.b16 %v239
    %v319 = vunpack.c.l.b16 %v240
    %v320 = vunpack.c.l.b16 %v241
    %v321 = vunpack.c.h.b16 %v241
    %v322 = vunpack.c.l.b16 %v242
    %v323 = vunpack.c.l.b16 %v243
    %v324 = vunpack.c.h.b16 %v243
    %v325 = vunpack.c.l.b16 %v244
    %v326 = vunpack.c.l.b16 %v245
    %v327 = vunpack.c.h.b16 %v245
    %v328 = vunpack.c.l.b16 %v246
    %v329 = vunpack.c.l.b16 %v247
    %v330 = vunpack.c.h.b16 %v247
    %v331 = vunpack.c.l.b16 %v248
    %v332 = vunpack.c.l.b16 %v249
    %v333 = vunpack.c.h.b16 %v249
    %v334 = vunpack.c.l.b16 %v250
    %v335 = vunpack.c.l.b16 %v251
    %v336 = vunpack.c.h.b16 %v251
    %v337 = vunpack.c.l.b16 %v252
    %v338 = vunpack.c.l.b16 %v253
    %v339 = vunpack.c.h.b16 %v253
    %v340 = vunpack.c.l.b16 %v254
    %v341 = vunpack.c.l.b16 %v255
    %v342 = vunpack.c.h.b16 %v255
    %v343 = vunpack.c.l.b16 %v256
    %v344 = vunpack.c.l.b16 %v257
    %v345 = vunpack.c.h.b16 %v257
    %v346 = vunpack.c.l.b16 %v258
    %v347 = vunpack.c.l.b16 %v259
    %v348 = vunpack.c.h.b16 %v259
    %v349 = vunpack.c.l.b16 %v260
    %v350 = vunpack.c.l.b16 %v261
    %v351 = vunpack.c.h.b16 %v261
    %v352 = vunpack.c.l.b16 %v262
    %v353 = vpack.c.b16 %v308, %v305
    %v354 = vpack.c.b16 %v309, %v306
    %v355 = vpack.c.b16 %v310, %v307
    %v356 = vpack.c.b16 %v314, %v311
    %v357 = vpack.c.b16 %v315, %v312
    %v358 = vpack.c.b16 %v316, %v313
    %v359 = vpack.c.b16 %v320, %v317
    %v360 = vpack.c.b16 %v321, %v318
    %v361 = vpack.c.b16 %v322, %v319
    %v362 = vpack.c.b16 %v326, %v323
    %v363 = vpack.c.b16 %v327, %v324
    %v364 = vpack.c.b16 %v328, %v325
    %v365 = vpack.c.b16 %v332, %v329
    %v366 = vpack.c.b16 %v333, %v330
    %v367 = vpack.c.b16 %v334, %v331
    %v368 = vpack.c.b16 %v338, %v335
    %v369 = vpack.c.b16 %v339, %v336
    %v370 = vpack.c.b16 %v340, %v337
    %v371 = vpack.c.b16 %v344, %v341
    %v372 = vpack.c.b16 %v345, %v342
    %v373 = vpack.c.b16 %v346, %v343
    %v374 = vpack.c.b16 %v350, %v347
    %v375 = vpack.c.b16 %v351, %v348
    %v376 = vpack.c.b16 %v352, %v349
    %401 = vmatpush.bf16.msra.mxu0 %v374
    %402 = vmatpush.bf16.msra.mxu0 %v371
    %403 = vmatpush.bf16.msra.mxu0 %v368
    %404 = vmatpush.bf16.msra.mxu0 %v365
    %405 = vmatpush.bf16.msra.mxu0 %v362
    %406 = vmatpush.bf16.msra.mxu0 %v359
    %407 = vmatpush.bf16.msra.mxu0 %v356
    %408 = vmatpush.bf16.msra.mxu0 %v353
    %409 = vmatmul.bf16.gmra.mxu0 %v264
    %v410 = vpop.f32.mrf.mxu0
    %v411 = vadd.f32 %v267, %v410
    %v412 = vpop.f32.mrf.mxu0
    %v413 = vadd.f32 %v267, %v412
    %414 = vmatmul.bf16.gmra.mxu0 %v265
    %v415 = vpop.f32.mrf.mxu0
    %v416 = vadd.f32 %v267, %v415
    %v417 = vpop.f32.mrf.mxu0
    %v418 = vadd.f32 %v267, %v417
    %419 = vdwg.mxu0
    %420 = vmatpush.bf16.msra.mxu0 %v375
    %421 = vmatpush.bf16.msra.mxu0 %v372
    %422 = vmatpush.bf16.msra.mxu0 %v369
    %423 = vmatpush.bf16.msra.mxu0 %v366
    %424 = vmatpush.bf16.msra.mxu0 %v363
    %425 = vmatpush.bf16.msra.mxu0 %v360
    %426 = vmatpush.bf16.msra.mxu0 %v357
    %427 = vmatpush.bf16.msra.mxu0 %v354
    %428 = vmatmul.bf16.gmra.mxu0 %v264
    %v429 = vpop.f32.mrf.mxu0
    %v430 = vadd.f32 %v268, %v429
    %v431 = vpop.f32.mrf.mxu0
    %v432 = vadd.f32 %v268, %v431
    %433 = vmatmul.bf16.gmra.mxu0 %v265
    %v434 = vpop.f32.mrf.mxu0
    %v435 = vadd.f32 %v268, %v434
    %v436 = vpop.f32.mrf.mxu0
    %v437 = vadd.f32 %v268, %v436
    %438 = vdwg.mxu0
    %439 = vmatpush.bf16.msra.mxu0 %v376
    %440 = vmatpush.bf16.msra.mxu0 %v373
    %441 = vmatpush.bf16.msra.mxu0 %v370
    %442 = vmatpush.bf16.msra.mxu0 %v367
    %443 = vmatpush.bf16.msra.mxu0 %v364
    %444 = vmatpush.bf16.msra.mxu0 %v361
    %445 = vmatpush.bf16.msra.mxu0 %v358
    %446 = vmatpush.bf16.msra.mxu0 %v355
    %447 = vmatmul.bf16.gmra.mxu0 %v264
    %v448 = vpop.f32.mrf.mxu0
    %v449 = vadd.f32 %v269, %v448
    %v450 = vpop.f32.mrf.mxu0
    %v451 = vadd.f32 %v269, %v450
    %452 = vmatmul.bf16.gmra.mxu0 %v265
    %v453 = vpop.f32.mrf.mxu0
    %v454 = vadd.f32 %v269, %v453
    %v455 = vpop.f32.mrf.mxu0
    %v456 = vadd.f32 %v269, %v455
    %457 = vdwg.mxu0
    %v458 = vpack.c.bf16 %v411, %v411
    %v459 = vpack.c.bf16 %v413, %v413
    %v460 = vpack.c.bf16 %v416, %v416
    %v461 = vpack.c.bf16 %v418, %v418
    %v462 = vpack.c.bf16 %v430, %v430
    %v463 = vpack.c.bf16 %v432, %v432
    %v464 = vpack.c.bf16 %v435, %v435
    %v465 = vpack.c.bf16 %v437, %v437
    %v466 = vpack.c.bf16 %v449, %v449
    %v467 = vpack.c.bf16 %v451, %v451
    %v468 = vpack.c.bf16 %v454, %v454
    %v469 = vpack.c.bf16 %v456, %v456
    %vm470 = vcmask 130048
    %v472 = vsel %vm470, %v458, 0
    %v475 = vsel %vm470, %v462, 0
    %477 = vmatpush.bf16.xpose.msra.mxu0 0
    %478 = vmatpush.bf16.xpose.msra.mxu0 0
    %479 = vmatpush.bf16.xpose.msra.mxu0 0
    %480 = vmatpush.bf16.xpose.msra.mxu0 0
    %481 = vmatpush.bf16.xpose.msra.mxu0 0
    %482 = vmatpush.bf16.xpose.msra.mxu0 0
    %483 = vmatpush.bf16.xpose.msra.mxu0 0
    %484 = vmatpush.bf16.xpose.msra.mxu0 %v475
    %485 = vmatmul.bf16.gmra.mxu0 %v472
    %v486 = vpop.f32.mrf.mxu0
    %v487 = vadd.f32 0.0, %v486
    %v488 = vpop.f32.mrf.mxu0
    %489 = vdwg.mxu0
    %v491 = vsel %vm470, %v459, 0
    %v494 = vsel %vm470, %v463, 0
    %496 = vmatpush.bf16.xpose.msra.mxu0 0
    %497 = vmatpush.bf16.xpose.msra.mxu0 0
    %498 = vmatpush.bf16.xpose.msra.mxu0 0
    %499 = vmatpush.bf16.xpose.msra.mxu0 0
    %500 = vmatpush.bf16.xpose.msra.mxu0 0
    %501 = vmatpush.bf16.xpose.msra.mxu0 0
    %502 = vmatpush.bf16.xpose.msra.mxu0 0
    %503 = vmatpush.bf16.xpose.msra.mxu0 %v494
    %504 = vmatmul.bf16.gmra.mxu0 %v491
    %v505 = vpop.f32.mrf.mxu0
    %v506 = vadd.f32 0.0, %v505
    %v507 = vpop.f32.mrf.mxu0
    %508 = vdwg.mxu0
    %v510 = vsel %vm470, %v460, 0
    %v513 = vsel %vm470, %v464, 0
    %515 = vmatpush.bf16.xpose.msra.mxu0 0
    %516 = vmatpush.bf16.xpose.msra.mxu0 0
    %517 = vmatpush.bf16.xpose.msra.mxu0 0
    %518 = vmatpush.bf16.xpose.msra.mxu0 0
    %519 = vmatpush.bf16.xpose.msra.mxu0 0
    %520 = vmatpush.bf16.xpose.msra.mxu0 0
    %521 = vmatpush.bf16.xpose.msra.mxu0 0
    %522 = vmatpush.bf16.xpose.msra.mxu0 %v513
    %523 = vmatmul.bf16.gmra.mxu0 %v510
    %v524 = vpop.f32.mrf.mxu0
    %v525 = vadd.f32 0.0, %v524
    %v526 = vpop.f32.mrf.mxu0
    %527 = vdwg.mxu0
    %v529 = vsel %vm470, %v461, 0
    %v532 = vsel %vm470, %v465, 0
    %534 = vmatpush.bf16.xpose.msra.mxu0 0
    %535 = vmatpush.bf16.xpose.msra.mxu0 0
    %536 = vmatpush.bf16.xpose.msra.mxu0 0
    %537 = vmatpush.bf16.xpose.msra.mxu0 0
    %538 = vmatpush.bf16.xpose.msra.mxu0 0
    %539 = vmatpush.bf16.xpose.msra.mxu0 0
    %540 = vmatpush.bf16.xpose.msra.mxu0 0
    %541 = vmatpush.bf16.xpose.msra.mxu0 %v532
    %542 = vmatmul.bf16.gmra.mxu0 %v529
    %v543 = vpop.f32.mrf.mxu0
    %v544 = vadd.f32 0.0, %v543
    %v545 = vpop.f32.mrf.mxu0
    %546 = vdwg.mxu0
    %v547 = vmul.f32 %v487, 0.25
    %v548 = vmul.f32 %v506, 0.25
    %v549 = vmul.f32 %v525, 0.25
    %v550 = vmul.f32 %v544, 0.25
    %vm551 = vcmask 64512
    %v552 = vsel %vm551, %v547, -inf
    %553 = vmax.xlane.f32.xlu0 %v552
    %v554 = vpop.xlane.xlu0 %553
    %v555 = vsel %vm551, %v548, -inf
    %556 = vmax.xlane.f32.xlu0 %v555
    %v557 = vpop.xlane.xlu0 %556
    %v558 = vsel %vm551, %v549, -inf
    %559 = vmax.xlane.f32.xlu0 %v558
    %v560 = vpop.xlane.xlu0 %559
    %v561 = vsel %vm551, %v550, -inf
    %562 = vmax.xlane.f32.xlu0 %v561
    %v563 = vpop.xlane.xlu0 %562
    %v564 = vsub.f32 %v547, %v554
    %v565 = vsub.f32 %v548, %v557
    %v566 = vsub.f32 %v549, %v560
    %v567 = vsub.f32 %v550, %v563
    %v568 = vmul.f32 %v564, 1.442695
    %v569 = vpow.pop %v568
    %v570 = vmul.f32 %v565, 1.442695
    %v571 = vpow.pop %v570
    %v572 = vmul.f32 %v566, 1.442695
    %v573 = vpow.pop %v572
    %v574 = vmul.f32 %v567, 1.442695
    %v575 = vpow.pop %v574
    %v576 = vsel %vm551, %v569, 0.0
    %577 = vadd.xlane.f32.xlu0 %v576
    %v578 = vpop.xlane.xlu0 %577
    %v579 = vsel %vm551, %v571, 0.0
    %580 = vadd.xlane.f32.xlu0 %v579
    %v581 = vpop.xlane.xlu0 %580
    %v582 = vsel %vm551, %v573, 0.0
    %583 = vadd.xlane.f32.xlu0 %v582
    %v584 = vpop.xlane.xlu0 %583
    %v585 = vsel %vm551, %v575, 0.0
    %586 = vadd.xlane.f32.xlu0 %v585
    %v587 = vpop.xlane.xlu0 %586
    %v588 = vrcp.pop %v578
    %v589 = vrcp.pop %v581
    %v590 = vrcp.pop %v584
    %v591 = vrcp.pop %v587
    %v592 = vmul.f32 %v569, %v588
    %v593 = vmul.f32 %v571, %v589
    %v594 = vmul.f32 %v573, %v590
    %v595 = vmul.f32 %v575, %v591
    %v596 = vpack.c.bf16 %v592, %v592
    %v597 = vpack.c.bf16 %v593, %v593
    %v598 = vpack.c.bf16 %v594, %v594
    %v599 = vpack.c.bf16 %v595, %v595
    %v601 = vsel %vm551, %v596, 0
    %vm603 = vcmask 1043456
    %v605 = vsel %vm603, %v466, 0
    %607 = vmatpush.bf16.msra.mxu0 0
    %608 = vmatpush.bf16.msra.mxu0 0
    %609 = vmatpush.bf16.msra.mxu0 0
    %610 = vmatpush.bf16.msra.mxu0 0
    %611 = vmatpush.bf16.msra.mxu0 0
    %612 = vmatpush.bf16.msra.mxu0 0
    %613 = vmatpush.bf16.msra.mxu0 0
    %614 = vmatpush.bf16.msra.mxu0 %v605
    %615 = vmatmul.bf16.gmra.mxu0 %v601
    %v616 = vpop.f32.mrf.mxu0
    %v617 = vadd.f32 0.0, %v616
    %v618 = vpop.f32.mrf.mxu0
    %619 = vdwg.mxu0
    %v621 = vsel %vm551, %v597, 0
    %v624 = vsel %vm603, %v467, 0
    %626 = vmatpush.bf16.msra.mxu0 0
    %627 = vmatpush.bf16.msra.mxu0 0
    %628 = vmatpush.bf16.msra.mxu0 0
    %629 = vmatpush.bf16.msra.mxu0 0
    %630 = vmatpush.bf16.msra.mxu0 0
    %631 = vmatpush.bf16.msra.mxu0 0
    %632 = vmatpush.bf16.msra.mxu0 0
    %633 = vmatpush.bf16.msra.mxu0 %v624
    %634 = vmatmul.bf16.gmra.mxu0 %v621
    %v635 = vpop.f32.mrf.mxu0
    %v636 = vadd.f32 0.0, %v635
    %v637 = vpop.f32.mrf.mxu0
    %638 = vdwg.mxu0
    %v640 = vsel %vm551, %v598, 0
    %v643 = vsel %vm603, %v468, 0
    %645 = vmatpush.bf16.msra.mxu0 0
    %646 = vmatpush.bf16.msra.mxu0 0
    %647 = vmatpush.bf16.msra.mxu0 0
    %648 = vmatpush.bf16.msra.mxu0 0
    %649 = vmatpush.bf16.msra.mxu0 0
    %650 = vmatpush.bf16.msra.mxu0 0
    %651 = vmatpush.bf16.msra.mxu0 0
    %652 = vmatpush.bf16.msra.mxu0 %v643
    %653 = vmatmul.bf16.gmra.mxu0 %v640
    %v654 = vpop.f32.mrf.mxu0
    %v655 = vadd.f32 0.0, %v654
    %v656 = vpop.f32.mrf.mxu0
    %657 = vdwg.mxu0
    %v659 = vsel %vm551, %v599, 0
    %v662 = vsel %vm603, %v469, 0
    %664 = vmatpush.bf16.msra.mxu0 0
    %665 = vmatpush.bf16.msra.mxu0 0
    %666 = vmatpush.bf16.msra.mxu0 0
    %667 = vmatpush.bf16.msra.mxu0 0
    %668 = vmatpush.bf16.msra.mxu0 0
    %669 = vmatpush.bf16.msra.mxu0 0
    %670 = vmatpush.bf16.msra.mxu0 0
    %671 = vmatpush.bf16.msra.mxu0 %v662
    %672 = vmatmul.bf16.gmra.mxu0 %v659
    %v673 = vpop.f32.mrf.mxu0
    %v674 = vadd.f32 0.0, %v673
    %v675 = vpop.f32.mrf.mxu0
    %676 = vdwg.mxu0
    %v678 = vunpack.c.l.b16 %v458
    %v679 = vpack.c.b16 %v678, %v678
    %680 = vrot.lane.b32.xlu0 %v679, 112
    %v681 = vpop.permute.xlu0 %680
    %v683 = vunpack.c.l.b16 %v462
    %v684 = vpack.c.b16 %v683, %v683
    %685 = vrot.lane.b32.xlu0 %v684, 112
    %v686 = vpop.permute.xlu0 %685
    %v688 = vsel %vm470, %v681, 0
    %v691 = vsel %vm470, %v686, 0
    %693 = vmatpush.bf16.xpose.msra.mxu0 0
    %694 = vmatpush.bf16.xpose.msra.mxu0 0
    %695 = vmatpush.bf16.xpose.msra.mxu0 0
    %696 = vmatpush.bf16.xpose.msra.mxu0 0
    %697 = vmatpush.bf16.xpose.msra.mxu0 0
    %698 = vmatpush.bf16.xpose.msra.mxu0 0
    %699 = vmatpush.bf16.xpose.msra.mxu0 0
    %700 = vmatpush.bf16.xpose.msra.mxu0 %v691
    %701 = vmatmul.bf16.gmra.mxu0 %v688
    %v702 = vpop.f32.mrf.mxu0
    %v703 = vadd.f32 0.0, %v702
    %v704 = vpop.f32.mrf.mxu0
    %705 = vdwg.mxu0
    %v707 = vunpack.c.l.b16 %v459
    %v708 = vpack.c.b16 %v707, %v707
    %709 = vrot.lane.b32.xlu0 %v708, 112
    %v710 = vpop.permute.xlu0 %709
    %v712 = vunpack.c.l.b16 %v463
    %v713 = vpack.c.b16 %v712, %v712
    %714 = vrot.lane.b32.xlu0 %v713, 112
    %v715 = vpop.permute.xlu0 %714
    %v717 = vsel %vm470, %v710, 0
    %v720 = vsel %vm470, %v715, 0
    %722 = vmatpush.bf16.xpose.msra.mxu0 0
    %723 = vmatpush.bf16.xpose.msra.mxu0 0
    %724 = vmatpush.bf16.xpose.msra.mxu0 0
    %725 = vmatpush.bf16.xpose.msra.mxu0 0
    %726 = vmatpush.bf16.xpose.msra.mxu0 0
    %727 = vmatpush.bf16.xpose.msra.mxu0 0
    %728 = vmatpush.bf16.xpose.msra.mxu0 0
    %729 = vmatpush.bf16.xpose.msra.mxu0 %v720
    %730 = vmatmul.bf16.gmra.mxu0 %v717
    %v731 = vpop.f32.mrf.mxu0
    %v732 = vadd.f32 0.0, %v731
    %v733 = vpop.f32.mrf.mxu0
    %734 = vdwg.mxu0
    %v736 = vunpack.c.l.b16 %v460
    %v737 = vpack.c.b16 %v736, %v736
    %738 = vrot.lane.b32.xlu0 %v737, 112
    %v739 = vpop.permute.xlu0 %738
    %v741 = vunpack.c.l.b16 %v464
    %v742 = vpack.c.b16 %v741, %v741
    %743 = vrot.lane.b32.xlu0 %v742, 112
    %v744 = vpop.permute.xlu0 %743
    %v746 = vsel %vm470, %v739, 0
    %v749 = vsel %vm470, %v744, 0
    %751 = vmatpush.bf16.xpose.msra.mxu0 0
    %752 = vmatpush.bf16.xpose.msra.mxu0 0
    %753 = vmatpush.bf16.xpose.msra.mxu0 0
    %754 = vmatpush.bf16.xpose.msra.mxu0 0
    %755 = vmatpush.bf16.xpose.msra.mxu0 0
    %756 = vmatpush.bf16.xpose.msra.mxu0 0
    %757 = vmatpush.bf16.xpose.msra.mxu0 0
    %758 = vmatpush.bf16.xpose.msra.mxu0 %v749
    %759 = vmatmul.bf16.gmra.mxu0 %v746
    %v760 = vpop.f32.mrf.mxu0
    %v761 = vadd.f32 0.0, %v760
    %v762 = vpop.f32.mrf.mxu0
    %763 = vdwg.mxu0
    %v765 = vunpack.c.l.b16 %v461
    %v766 = vpack.c.b16 %v765, %v765
    %767 = vrot.lane.b32.xlu0 %v766, 112
    %v768 = vpop.permute.xlu0 %767
    %v770 = vunpack.c.l.b16 %v465
    %v771 = vpack.c.b16 %v770, %v770
    %772 = vrot.lane.b32.xlu0 %v771, 112
    %v773 = vpop.permute.xlu0 %772
    %v775 = vsel %vm470, %v768, 0
    %v778 = vsel %vm470, %v773, 0
    %780 = vmatpush.bf16.xpose.msra.mxu0 0
    %781 = vmatpush.bf16.xpose.msra.mxu0 0
    %782 = vmatpush.bf16.xpose.msra.mxu0 0
    %783 = vmatpush.bf16.xpose.msra.mxu0 0
    %784 = vmatpush.bf16.xpose.msra.mxu0 0
    %785 = vmatpush.bf16.xpose.msra.mxu0 0
    %786 = vmatpush.bf16.xpose.msra.mxu0 0
    %787 = vmatpush.bf16.xpose.msra.mxu0 %v778
    %788 = vmatmul.bf16.gmra.mxu0 %v775
    %v789 = vpop.f32.mrf.mxu0
    %v790 = vadd.f32 0.0, %v789
    %v791 = vpop.f32.mrf.mxu0
    %792 = vdwg.mxu0
    %v793 = vmul.f32 %v703, 0.25
    %v794 = vmul.f32 %v732, 0.25
    %v795 = vmul.f32 %v761, 0.25
    %v796 = vmul.f32 %v790, 0.25
    %v797 = vsel %vm551, %v793, -inf
    %798 = vmax.xlane.f32.xlu0 %v797
    %v799 = vpop.xlane.xlu0 %798
    %v800 = vsel %vm551, %v794, -inf
    %801 = vmax.xlane.f32.xlu0 %v800
    %v802 = vpop.xlane.xlu0 %801
    %v803 = vsel %vm551, %v795, -inf
    %804 = vmax.xlane.f32.xlu0 %v803
    %v805 = vpop.xlane.xlu0 %804
    %v806 = vsel %vm551, %v796, -inf
    %807 = vmax.xlane.f32.xlu0 %v806
    %v808 = vpop.xlane.xlu0 %807
    %v809 = vsub.f32 %v793, %v799
    %v810 = vsub.f32 %v794, %v802
    %v811 = vsub.f32 %v795, %v805
    %v812 = vsub.f32 %v796, %v808
    %v813 = vmul.f32 %v809, 1.442695
    %v814 = vpow.pop %v813
    %v815 = vmul.f32 %v810, 1.442695
    %v816 = vpow.pop %v815
    %v817 = vmul.f32 %v811, 1.442695
    %v818 = vpow.pop %v817
    %v819 = vmul.f32 %v812, 1.442695
    %v820 = vpow.pop %v819
    %v821 = vsel %vm551, %v814, 0.0
    %822 = vadd.xlane.f32.xlu0 %v821
    %v823 = vpop.xlane.xlu0 %822
    %v824 = vsel %vm551, %v816, 0.0
    %825 = vadd.xlane.f32.xlu0 %v824
    %v826 = vpop.xlane.xlu0 %825
    %v827 = vsel %vm551, %v818, 0.0
    %828 = vadd.xlane.f32.xlu0 %v827
    %v829 = vpop.xlane.xlu0 %828
    %v830 = vsel %vm551, %v820, 0.0
    %831 = vadd.xlane.f32.xlu0 %v830
    %v832 = vpop.xlane.xlu0 %831
    %v833 = vrcp.pop %v823
    %v834 = vrcp.pop %v826
    %v835 = vrcp.pop %v829
    %v836 = vrcp.pop %v832
    %v837 = vmul.f32 %v814, %v833
    %v838 = vmul.f32 %v816, %v834
    %v839 = vmul.f32 %v818, %v835
    %v840 = vmul.f32 %v820, %v836
    %v841 = vpack.c.bf16 %v837, %v837
    %v842 = vpack.c.bf16 %v838, %v838
    %v843 = vpack.c.bf16 %v839, %v839
    %v844 = vpack.c.bf16 %v840, %v840
    %v846 = vunpack.c.l.b16 %v466
    %v847 = vpack.c.b16 %v846, %v846
    %848 = vrot.lane.b32.xlu0 %v847, 112
    %v849 = vpop.permute.xlu0 %848
    %v851 = vsel %vm551, %v841, 0
    %v854 = vsel %vm603, %v849, 0
    %856 = vmatpush.bf16.msra.mxu0 0
    %857 = vmatpush.bf16.msra.mxu0 0
    %858 = vmatpush.bf16.msra.mxu0 0
    %859 = vmatpush.bf16.msra.mxu0 0
    %860 = vmatpush.bf16.msra.mxu0 0
    %861 = vmatpush.bf16.msra.mxu0 0
    %862 = vmatpush.bf16.msra.mxu0 0
    %863 = vmatpush.bf16.msra.mxu0 %v854
    %864 = vmatmul.bf16.gmra.mxu0 %v851
    %v865 = vpop.f32.mrf.mxu0
    %v866 = vadd.f32 0.0, %v865
    %v867 = vpop.f32.mrf.mxu0
    %868 = vdwg.mxu0
    %v870 = vunpack.c.l.b16 %v467
    %v871 = vpack.c.b16 %v870, %v870
    %872 = vrot.lane.b32.xlu0 %v871, 112
    %v873 = vpop.permute.xlu0 %872
    %v875 = vsel %vm551, %v842, 0
    %v878 = vsel %vm603, %v873, 0
    %880 = vmatpush.bf16.msra.mxu0 0
    %881 = vmatpush.bf16.msra.mxu0 0
    %882 = vmatpush.bf16.msra.mxu0 0
    %883 = vmatpush.bf16.msra.mxu0 0
    %884 = vmatpush.bf16.msra.mxu0 0
    %885 = vmatpush.bf16.msra.mxu0 0
    %886 = vmatpush.bf16.msra.mxu0 0
    %887 = vmatpush.bf16.msra.mxu0 %v878
    %888 = vmatmul.bf16.gmra.mxu0 %v875
    %v889 = vpop.f32.mrf.mxu0
    %v890 = vadd.f32 0.0, %v889
    %v891 = vpop.f32.mrf.mxu0
    %892 = vdwg.mxu0
    %v894 = vunpack.c.l.b16 %v468
    %v895 = vpack.c.b16 %v894, %v894
    %896 = vrot.lane.b32.xlu0 %v895, 112
    %v897 = vpop.permute.xlu0 %896
    %v899 = vsel %vm551, %v843, 0
    %v902 = vsel %vm603, %v897, 0
    %904 = vmatpush.bf16.msra.mxu0 0
    %905 = vmatpush.bf16.msra.mxu0 0
    %906 = vmatpush.bf16.msra.mxu0 0
    %907 = vmatpush.bf16.msra.mxu0 0
    %908 = vmatpush.bf16.msra.mxu0 0
    %909 = vmatpush.bf16.msra.mxu0 0
    %910 = vmatpush.bf16.msra.mxu0 0
    %911 = vmatpush.bf16.msra.mxu0 %v902
    %912 = vmatmul.bf16.gmra.mxu0 %v899
    %v913 = vpop.f32.mrf.mxu0
    %v914 = vadd.f32 0.0, %v913
    %v915 = vpop.f32.mrf.mxu0
    %916 = vdwg.mxu0
    %v918 = vunpack.c.l.b16 %v469
    %v919 = vpack.c.b16 %v918, %v918
    %920 = vrot.lane.b32.xlu0 %v919, 112
    %v921 = vpop.permute.xlu0 %920
    %v923 = vsel %vm551, %v844, 0
    %v926 = vsel %vm603, %v921, 0
    %928 = vmatpush.bf16.msra.mxu0 0
    %929 = vmatpush.bf16.msra.mxu0 0
    %930 = vmatpush.bf16.msra.mxu0 0
    %931 = vmatpush.bf16.msra.mxu0 0
    %932 = vmatpush.bf16.msra.mxu0 0
    %933 = vmatpush.bf16.msra.mxu0 0
    %934 = vmatpush.bf16.msra.mxu0 0
    %935 = vmatpush.bf16.msra.mxu0 %v926
    %936 = vmatmul.bf16.gmra.mxu0 %v923
    %v937 = vpop.f32.mrf.mxu0
    %v938 = vadd.f32 0.0, %v937
    %v939 = vpop.f32.mrf.mxu0
    %940 = vdwg.mxu0
    %941 = vrot.lane.b32.xlu0 %v679, 96
    %v942 = vpop.permute.xlu0 %941
    %943 = vrot.lane.b32.xlu0 %v684, 96
    %v944 = vpop.permute.xlu0 %943
    %v946 = vsel %vm470, %v942, 0
    %v949 = vsel %vm470, %v944, 0
    %951 = vmatpush.bf16.xpose.msra.mxu0 0
    %952 = vmatpush.bf16.xpose.msra.mxu0 0
    %953 = vmatpush.bf16.xpose.msra.mxu0 0
    %954 = vmatpush.bf16.xpose.msra.mxu0 0
    %955 = vmatpush.bf16.xpose.msra.mxu0 0
    %956 = vmatpush.bf16.xpose.msra.mxu0 0
    %957 = vmatpush.bf16.xpose.msra.mxu0 0
    %958 = vmatpush.bf16.xpose.msra.mxu0 %v949
    %959 = vmatmul.bf16.gmra.mxu0 %v946
    %v960 = vpop.f32.mrf.mxu0
    %v961 = vadd.f32 0.0, %v960
    %v962 = vpop.f32.mrf.mxu0
    %963 = vdwg.mxu0
    %964 = vrot.lane.b32.xlu0 %v708, 96
    %v965 = vpop.permute.xlu0 %964
    %966 = vrot.lane.b32.xlu0 %v713, 96
    %v967 = vpop.permute.xlu0 %966
    %v969 = vsel %vm470, %v965, 0
    %v972 = vsel %vm470, %v967, 0
    %974 = vmatpush.bf16.xpose.msra.mxu0 0
    %975 = vmatpush.bf16.xpose.msra.mxu0 0
    %976 = vmatpush.bf16.xpose.msra.mxu0 0
    %977 = vmatpush.bf16.xpose.msra.mxu0 0
    %978 = vmatpush.bf16.xpose.msra.mxu0 0
    %979 = vmatpush.bf16.xpose.msra.mxu0 0
    %980 = vmatpush.bf16.xpose.msra.mxu0 0
    %981 = vmatpush.bf16.xpose.msra.mxu0 %v972
    %982 = vmatmul.bf16.gmra.mxu0 %v969
    %v983 = vpop.f32.mrf.mxu0
    %v984 = vadd.f32 0.0, %v983
    %v985 = vpop.f32.mrf.mxu0
    %986 = vdwg.mxu0
    %987 = vrot.lane.b32.xlu0 %v737, 96
    %v988 = vpop.permute.xlu0 %987
    %989 = vrot.lane.b32.xlu0 %v742, 96
    %v990 = vpop.permute.xlu0 %989
    %v992 = vsel %vm470, %v988, 0
    %v995 = vsel %vm470, %v990, 0
    %997 = vmatpush.bf16.xpose.msra.mxu0 0
    %998 = vmatpush.bf16.xpose.msra.mxu0 0
    %999 = vmatpush.bf16.xpose.msra.mxu0 0
    %1000 = vmatpush.bf16.xpose.msra.mxu0 0
    %1001 = vmatpush.bf16.xpose.msra.mxu0 0
    %1002 = vmatpush.bf16.xpose.msra.mxu0 0
    %1003 = vmatpush.bf16.xpose.msra.mxu0 0
    %1004 = vmatpush.bf16.xpose.msra.mxu0 %v995
    %1005 = vmatmul.bf16.gmra.mxu0 %v992
    %v1006 = vpop.f32.mrf.mxu0
    %v1007 = vadd.f32 0.0, %v1006
    %v1008 = vpop.f32.mrf.mxu0
    %1009 = vdwg.mxu0
    %1010 = vrot.lane.b32.xlu0 %v766, 96
    %v1011 = vpop.permute.xlu0 %1010
    %1012 = vrot.lane.b32.xlu0 %v771, 96
    %v1013 = vpop.permute.xlu0 %1012
    %v1015 = vsel %vm470, %v1011, 0
    %v1018 = vsel %vm470, %v1013, 0
    %1020 = vmatpush.bf16.xpose.msra.mxu0 0
    %1021 = vmatpush.bf16.xpose.msra.mxu0 0
    %1022 = vmatpush.bf16.xpose.msra.mxu0 0
    %1023 = vmatpush.bf16.xpose.msra.mxu0 0
    %1024 = vmatpush.bf16.xpose.msra.mxu0 0
    %1025 = vmatpush.bf16.xpose.msra.mxu0 0
    %1026 = vmatpush.bf16.xpose.msra.mxu0 0
    %1027 = vmatpush.bf16.xpose.msra.mxu0 %v1018
    %1028 = vmatmul.bf16.gmra.mxu0 %v1015
    %v1029 = vpop.f32.mrf.mxu0
    %v1030 = vadd.f32 0.0, %v1029
    %v1031 = vpop.f32.mrf.mxu0
    %1032 = vdwg.mxu0
    %v1033 = vmul.f32 %v961, 0.25
    %v1034 = vmul.f32 %v984, 0.25
    %v1035 = vmul.f32 %v1007, 0.25
    %v1036 = vmul.f32 %v1030, 0.25
    %v1037 = vsel %vm551, %v1033, -inf
    %1038 = vmax.xlane.f32.xlu0 %v1037
    %v1039 = vpop.xlane.xlu0 %1038
    %v1040 = vsel %vm551, %v1034, -inf
    %1041 = vmax.xlane.f32.xlu0 %v1040
    %v1042 = vpop.xlane.xlu0 %1041
    %v1043 = vsel %vm551, %v1035, -inf
    %1044 = vmax.xlane.f32.xlu0 %v1043
    %v1045 = vpop.xlane.xlu0 %1044
    %v1046 = vsel %vm551, %v1036, -inf
    %1047 = vmax.xlane.f32.xlu0 %v1046
    %v1048 = vpop.xlane.xlu0 %1047
    %v1049 = vsub.f32 %v1033, %v1039
    %v1050 = vsub.f32 %v1034, %v1042
    %v1051 = vsub.f32 %v1035, %v1045
    %v1052 = vsub.f32 %v1036, %v1048
    %v1053 = vmul.f32 %v1049, 1.442695
    %v1054 = vpow.pop %v1053
    %v1055 = vmul.f32 %v1050, 1.442695
    %v1056 = vpow.pop %v1055
    %v1057 = vmul.f32 %v1051, 1.442695
    %v1058 = vpow.pop %v1057
    %v1059 = vmul.f32 %v1052, 1.442695
    %v1060 = vpow.pop %v1059
    %v1061 = vsel %vm551, %v1054, 0.0
    %1062 = vadd.xlane.f32.xlu0 %v1061
    %v1063 = vpop.xlane.xlu0 %1062
    %v1064 = vsel %vm551, %v1056, 0.0
    %1065 = vadd.xlane.f32.xlu0 %v1064
    %v1066 = vpop.xlane.xlu0 %1065
    %v1067 = vsel %vm551, %v1058, 0.0
    %1068 = vadd.xlane.f32.xlu0 %v1067
    %v1069 = vpop.xlane.xlu0 %1068
    %v1070 = vsel %vm551, %v1060, 0.0
    %1071 = vadd.xlane.f32.xlu0 %v1070
    %v1072 = vpop.xlane.xlu0 %1071
    %v1073 = vrcp.pop %v1063
    %v1074 = vrcp.pop %v1066
    %v1075 = vrcp.pop %v1069
    %v1076 = vrcp.pop %v1072
    %v1077 = vmul.f32 %v1054, %v1073
    %v1078 = vmul.f32 %v1056, %v1074
    %v1079 = vmul.f32 %v1058, %v1075
    %v1080 = vmul.f32 %v1060, %v1076
    %v1081 = vpack.c.bf16 %v1077, %v1077
    %v1082 = vpack.c.bf16 %v1078, %v1078
    %v1083 = vpack.c.bf16 %v1079, %v1079
    %v1084 = vpack.c.bf16 %v1080, %v1080
    %1085 = vrot.lane.b32.xlu0 %v847, 96
    %v1086 = vpop.permute.xlu0 %1085
    %v1088 = vsel %vm551, %v1081, 0
    %v1091 = vsel %vm603, %v1086, 0
    %1093 = vmatpush.bf16.msra.mxu0 0
    %1094 = vmatpush.bf16.msra.mxu0 0
    %1095 = vmatpush.bf16.msra.mxu0 0
    %1096 = vmatpush.bf16.msra.mxu0 0
    %1097 = vmatpush.bf16.msra.mxu0 0
    %1098 = vmatpush.bf16.msra.mxu0 0
    %1099 = vmatpush.bf16.msra.mxu0 0
    %1100 = vmatpush.bf16.msra.mxu0 %v1091
    %1101 = vmatmul.bf16.gmra.mxu0 %v1088
    %v1102 = vpop.f32.mrf.mxu0
    %v1103 = vadd.f32 0.0, %v1102
    %v1104 = vpop.f32.mrf.mxu0
    %1105 = vdwg.mxu0
    %1106 = vrot.lane.b32.xlu0 %v871, 96
    %v1107 = vpop.permute.xlu0 %1106
    %v1109 = vsel %vm551, %v1082, 0
    %v1112 = vsel %vm603, %v1107, 0
    %1114 = vmatpush.bf16.msra.mxu0 0
    %1115 = vmatpush.bf16.msra.mxu0 0
    %1116 = vmatpush.bf16.msra.mxu0 0
    %1117 = vmatpush.bf16.msra.mxu0 0
    %1118 = vmatpush.bf16.msra.mxu0 0
    %1119 = vmatpush.bf16.msra.mxu0 0
    %1120 = vmatpush.bf16.msra.mxu0 0
    %1121 = vmatpush.bf16.msra.mxu0 %v1112
    %1122 = vmatmul.bf16.gmra.mxu0 %v1109
    %v1123 = vpop.f32.mrf.mxu0
    %v1124 = vadd.f32 0.0, %v1123
    %v1125 = vpop.f32.mrf.mxu0
    %1126 = vdwg.mxu0
    %1127 = vrot.lane.b32.xlu0 %v895, 96
    %v1128 = vpop.permute.xlu0 %1127
    %v1130 = vsel %vm551, %v1083, 0
    %v1133 = vsel %vm603, %v1128, 0
    %1135 = vmatpush.bf16.msra.mxu0 0
    %1136 = vmatpush.bf16.msra.mxu0 0
    %1137 = vmatpush.bf16.msra.mxu0 0
    %1138 = vmatpush.bf16.msra.mxu0 0
    %1139 = vmatpush.bf16.msra.mxu0 0
    %1140 = vmatpush.bf16.msra.mxu0 0
    %1141 = vmatpush.bf16.msra.mxu0 0
    %1142 = vmatpush.bf16.msra.mxu0 %v1133
    %1143 = vmatmul.bf16.gmra.mxu0 %v1130
    %v1144 = vpop.f32.mrf.mxu0
    %v1145 = vadd.f32 0.0, %v1144
    %v1146 = vpop.f32.mrf.mxu0
    %1147 = vdwg.mxu0
    %1148 = vrot.lane.b32.xlu0 %v919, 96
    %v1149 = vpop.permute.xlu0 %1148
    %v1151 = vsel %vm551, %v1084, 0
    %v1154 = vsel %vm603, %v1149, 0
    %1156 = vmatpush.bf16.msra.mxu0 0
    %1157 = vmatpush.bf16.msra.mxu0 0
    %1158 = vmatpush.bf16.msra.mxu0 0
    %1159 = vmatpush.bf16.msra.mxu0 0
    %1160 = vmatpush.bf16.msra.mxu0 0
    %1161 = vmatpush.bf16.msra.mxu0 0
    %1162 = vmatpush.bf16.msra.mxu0 0
    %1163 = vmatpush.bf16.msra.mxu0 %v1154
    %1164 = vmatmul.bf16.gmra.mxu0 %v1151
    %v1165 = vpop.f32.mrf.mxu0
    %v1166 = vadd.f32 0.0, %v1165
    %v1167 = vpop.f32.mrf.mxu0
    %1168 = vdwg.mxu0
    %1169 = vrot.lane.b32.xlu0 %v679, 80
    %v1170 = vpop.permute.xlu0 %1169
    %1171 = vrot.lane.b32.xlu0 %v684, 80
    %v1172 = vpop.permute.xlu0 %1171
    %v1174 = vsel %vm470, %v1170, 0
    %v1177 = vsel %vm470, %v1172, 0
    %1179 = vmatpush.bf16.xpose.msra.mxu0 0
    %1180 = vmatpush.bf16.xpose.msra.mxu0 0
    %1181 = vmatpush.bf16.xpose.msra.mxu0 0
    %1182 = vmatpush.bf16.xpose.msra.mxu0 0
    %1183 = vmatpush.bf16.xpose.msra.mxu0 0
    %1184 = vmatpush.bf16.xpose.msra.mxu0 0
    %1185 = vmatpush.bf16.xpose.msra.mxu0 0
    %1186 = vmatpush.bf16.xpose.msra.mxu0 %v1177
    %1187 = vmatmul.bf16.gmra.mxu0 %v1174
    %v1188 = vpop.f32.mrf.mxu0
    %v1189 = vadd.f32 0.0, %v1188
    %v1190 = vpop.f32.mrf.mxu0
    %1191 = vdwg.mxu0
    %1192 = vrot.lane.b32.xlu0 %v708, 80
    %v1193 = vpop.permute.xlu0 %1192
    %1194 = vrot.lane.b32.xlu0 %v713, 80
    %v1195 = vpop.permute.xlu0 %1194
    %v1197 = vsel %vm470, %v1193, 0
    %v1200 = vsel %vm470, %v1195, 0
    %1202 = vmatpush.bf16.xpose.msra.mxu0 0
    %1203 = vmatpush.bf16.xpose.msra.mxu0 0
    %1204 = vmatpush.bf16.xpose.msra.mxu0 0
    %1205 = vmatpush.bf16.xpose.msra.mxu0 0
    %1206 = vmatpush.bf16.xpose.msra.mxu0 0
    %1207 = vmatpush.bf16.xpose.msra.mxu0 0
    %1208 = vmatpush.bf16.xpose.msra.mxu0 0
    %1209 = vmatpush.bf16.xpose.msra.mxu0 %v1200
    %1210 = vmatmul.bf16.gmra.mxu0 %v1197
    %v1211 = vpop.f32.mrf.mxu0
    %v1212 = vadd.f32 0.0, %v1211
    %v1213 = vpop.f32.mrf.mxu0
    %1214 = vdwg.mxu0
    %1215 = vrot.lane.b32.xlu0 %v737, 80
    %v1216 = vpop.permute.xlu0 %1215
    %1217 = vrot.lane.b32.xlu0 %v742, 80
    %v1218 = vpop.permute.xlu0 %1217
    %v1220 = vsel %vm470, %v1216, 0
    %v1223 = vsel %vm470, %v1218, 0
    %1225 = vmatpush.bf16.xpose.msra.mxu0 0
    %1226 = vmatpush.bf16.xpose.msra.mxu0 0
    %1227 = vmatpush.bf16.xpose.msra.mxu0 0
    %1228 = vmatpush.bf16.xpose.msra.mxu0 0
    %1229 = vmatpush.bf16.xpose.msra.mxu0 0
    %1230 = vmatpush.bf16.xpose.msra.mxu0 0
    %1231 = vmatpush.bf16.xpose.msra.mxu0 0
    %1232 = vmatpush.bf16.xpose.msra.mxu0 %v1223
    %1233 = vmatmul.bf16.gmra.mxu0 %v1220
    %v1234 = vpop.f32.mrf.mxu0
    %v1235 = vadd.f32 0.0, %v1234
    %v1236 = vpop.f32.mrf.mxu0
    %1237 = vdwg.mxu0
    %1238 = vrot.lane.b32.xlu0 %v766, 80
    %v1239 = vpop.permute.xlu0 %1238
    %1240 = vrot.lane.b32.xlu0 %v771, 80
    %v1241 = vpop.permute.xlu0 %1240
    %v1243 = vsel %vm470, %v1239, 0
    %v1246 = vsel %vm470, %v1241, 0
    %1248 = vmatpush.bf16.xpose.msra.mxu0 0
    %1249 = vmatpush.bf16.xpose.msra.mxu0 0
    %1250 = vmatpush.bf16.xpose.msra.mxu0 0
    %1251 = vmatpush.bf16.xpose.msra.mxu0 0
    %1252 = vmatpush.bf16.xpose.msra.mxu0 0
    %1253 = vmatpush.bf16.xpose.msra.mxu0 0
    %1254 = vmatpush.bf16.xpose.msra.mxu0 0
    %1255 = vmatpush.bf16.xpose.msra.mxu0 %v1246
    %1256 = vmatmul.bf16.gmra.mxu0 %v1243
    %v1257 = vpop.f32.mrf.mxu0
    %v1258 = vadd.f32 0.0, %v1257
    %v1259 = vpop.f32.mrf.mxu0
    %1260 = vdwg.mxu0
    %v1261 = vmul.f32 %v1189, 0.25
    %v1262 = vmul.f32 %v1212, 0.25
    %v1263 = vmul.f32 %v1235, 0.25
    %v1264 = vmul.f32 %v1258, 0.25
    %v1265 = vsel %vm551, %v1261, -inf
    %1266 = vmax.xlane.f32.xlu0 %v1265
    %v1267 = vpop.xlane.xlu0 %1266
    %v1268 = vsel %vm551, %v1262, -inf
    %1269 = vmax.xlane.f32.xlu0 %v1268
    %v1270 = vpop.xlane.xlu0 %1269
    %v1271 = vsel %vm551, %v1263, -inf
    %1272 = vmax.xlane.f32.xlu0 %v1271
    %v1273 = vpop.xlane.xlu0 %1272
    %v1274 = vsel %vm551, %v1264, -inf
    %1275 = vmax.xlane.f32.xlu0 %v1274
    %v1276 = vpop.xlane.xlu0 %1275
    %v1277 = vsub.f32 %v1261, %v1267
    %v1278 = vsub.f32 %v1262, %v1270
    %v1279 = vsub.f32 %v1263, %v1273
    %v1280 = vsub.f32 %v1264, %v1276
    %v1281 = vmul.f32 %v1277, 1.442695
    %v1282 = vpow.pop %v1281
    %v1283 = vmul.f32 %v1278, 1.442695
    %v1284 = vpow.pop %v1283
    %v1285 = vmul.f32 %v1279, 1.442695
    %v1286 = vpow.pop %v1285
    %v1287 = vmul.f32 %v1280, 1.442695
    %v1288 = vpow.pop %v1287
    %v1289 = vsel %vm551, %v1282, 0.0
    %1290 = vadd.xlane.f32.xlu0 %v1289
    %v1291 = vpop.xlane.xlu0 %1290
    %v1292 = vsel %vm551, %v1284, 0.0
    %1293 = vadd.xlane.f32.xlu0 %v1292
    %v1294 = vpop.xlane.xlu0 %1293
    %v1295 = vsel %vm551, %v1286, 0.0
    %1296 = vadd.xlane.f32.xlu0 %v1295
    %v1297 = vpop.xlane.xlu0 %1296
    %v1298 = vsel %vm551, %v1288, 0.0
    %1299 = vadd.xlane.f32.xlu0 %v1298
    %v1300 = vpop.xlane.xlu0 %1299
    %v1301 = vrcp.pop %v1291
    %v1302 = vrcp.pop %v1294
    %v1303 = vrcp.pop %v1297
    %v1304 = vrcp.pop %v1300
    %v1305 = vmul.f32 %v1282, %v1301
    %v1306 = vmul.f32 %v1284, %v1302
    %v1307 = vmul.f32 %v1286, %v1303
    %v1308 = vmul.f32 %v1288, %v1304
    %v1309 = vpack.c.bf16 %v1305, %v1305
    %v1310 = vpack.c.bf16 %v1306, %v1306
    %v1311 = vpack.c.bf16 %v1307, %v1307
    %v1312 = vpack.c.bf16 %v1308, %v1308
    %1313 = vrot.lane.b32.xlu0 %v847, 80
    %v1314 = vpop.permute.xlu0 %1313
    %v1316 = vsel %vm551, %v1309, 0
    %v1319 = vsel %vm603, %v1314, 0
    %1321 = vmatpush.bf16.msra.mxu0 0
    %1322 = vmatpush.bf16.msra.mxu0 0
    %1323 = vmatpush.bf16.msra.mxu0 0
    %1324 = vmatpush.bf16.msra.mxu0 0
    %1325 = vmatpush.bf16.msra.mxu0 0
    %1326 = vmatpush.bf16.msra.mxu0 0
    %1327 = vmatpush.bf16.msra.mxu0 0
    %1328 = vmatpush.bf16.msra.mxu0 %v1319
    %1329 = vmatmul.bf16.gmra.mxu0 %v1316
    %v1330 = vpop.f32.mrf.mxu0
    %v1331 = vadd.f32 0.0, %v1330
    %v1332 = vpop.f32.mrf.mxu0
    %1333 = vdwg.mxu0
    %1334 = vrot.lane.b32.xlu0 %v871, 80
    %v1335 = vpop.permute.xlu0 %1334
    %v1337 = vsel %vm551, %v1310, 0
    %v1340 = vsel %vm603, %v1335, 0
    %1342 = vmatpush.bf16.msra.mxu0 0
    %1343 = vmatpush.bf16.msra.mxu0 0
    %1344 = vmatpush.bf16.msra.mxu0 0
    %1345 = vmatpush.bf16.msra.mxu0 0
    %1346 = vmatpush.bf16.msra.mxu0 0
    %1347 = vmatpush.bf16.msra.mxu0 0
    %1348 = vmatpush.bf16.msra.mxu0 0
    %1349 = vmatpush.bf16.msra.mxu0 %v1340
    %1350 = vmatmul.bf16.gmra.mxu0 %v1337
    %v1351 = vpop.f32.mrf.mxu0
    %v1352 = vadd.f32 0.0, %v1351
    %v1353 = vpop.f32.mrf.mxu0
    %1354 = vdwg.mxu0
    %1355 = vrot.lane.b32.xlu0 %v895, 80
    %v1356 = vpop.permute.xlu0 %1355
    %v1358 = vsel %vm551, %v1311, 0
    %v1361 = vsel %vm603, %v1356, 0
    %1363 = vmatpush.bf16.msra.mxu0 0
    %1364 = vmatpush.bf16.msra.mxu0 0
    %1365 = vmatpush.bf16.msra.mxu0 0
    %1366 = vmatpush.bf16.msra.mxu0 0
    %1367 = vmatpush.bf16.msra.mxu0 0
    %1368 = vmatpush.bf16.msra.mxu0 0
    %1369 = vmatpush.bf16.msra.mxu0 0
    %1370 = vmatpush.bf16.msra.mxu0 %v1361
    %1371 = vmatmul.bf16.gmra.mxu0 %v1358
    %v1372 = vpop.f32.mrf.mxu0
    %v1373 = vadd.f32 0.0, %v1372
    %v1374 = vpop.f32.mrf.mxu0
    %1375 = vdwg.mxu0
    %1376 = vrot.lane.b32.xlu0 %v919, 80
    %v1377 = vpop.permute.xlu0 %1376
    %v1379 = vsel %vm551, %v1312, 0
    %v1382 = vsel %vm603, %v1377, 0
    %1384 = vmatpush.bf16.msra.mxu0 0
    %1385 = vmatpush.bf16.msra.mxu0 0
    %1386 = vmatpush.bf16.msra.mxu0 0
    %1387 = vmatpush.bf16.msra.mxu0 0
    %1388 = vmatpush.bf16.msra.mxu0 0
    %1389 = vmatpush.bf16.msra.mxu0 0
    %1390 = vmatpush.bf16.msra.mxu0 0
    %1391 = vmatpush.bf16.msra.mxu0 %v1382
    %1392 = vmatmul.bf16.gmra.mxu0 %v1379
    %v1393 = vpop.f32.mrf.mxu0
    %v1394 = vadd.f32 0.0, %v1393
    %v1395 = vpop.f32.mrf.mxu0
    %1396 = vdwg.mxu0
    %1397 = vrot.lane.b32.xlu0 %v679, 64
    %v1398 = vpop.permute.xlu0 %1397
    %1399 = vrot.lane.b32.xlu0 %v684, 64
    %v1400 = vpop.permute.xlu0 %1399
    %v1402 = vsel %vm470, %v1398, 0
    %v1405 = vsel %vm470, %v1400, 0
    %1407 = vmatpush.bf16.xpose.msra.mxu0 0
    %1408 = vmatpush.bf16.xpose.msra.mxu0 0
    %1409 = vmatpush.bf16.xpose.msra.mxu0 0
    %1410 = vmatpush.bf16.xpose.msra.mxu0 0
    %1411 = vmatpush.bf16.xpose.msra.mxu0 0
    %1412 = vmatpush.bf16.xpose.msra.mxu0 0
    %1413 = vmatpush.bf16.xpose.msra.mxu0 0
    %1414 = vmatpush.bf16.xpose.msra.mxu0 %v1405
    %1415 = vmatmul.bf16.gmra.mxu0 %v1402
    %v1416 = vpop.f32.mrf.mxu0
    %v1417 = vadd.f32 0.0, %v1416
    %v1418 = vpop.f32.mrf.mxu0
    %1419 = vdwg.mxu0
    %1420 = vrot.lane.b32.xlu0 %v708, 64
    %v1421 = vpop.permute.xlu0 %1420
    %1422 = vrot.lane.b32.xlu0 %v713, 64
    %v1423 = vpop.permute.xlu0 %1422
    %v1425 = vsel %vm470, %v1421, 0
    %v1428 = vsel %vm470, %v1423, 0
    %1430 = vmatpush.bf16.xpose.msra.mxu0 0
    %1431 = vmatpush.bf16.xpose.msra.mxu0 0
    %1432 = vmatpush.bf16.xpose.msra.mxu0 0
    %1433 = vmatpush.bf16.xpose.msra.mxu0 0
    %1434 = vmatpush.bf16.xpose.msra.mxu0 0
    %1435 = vmatpush.bf16.xpose.msra.mxu0 0
    %1436 = vmatpush.bf16.xpose.msra.mxu0 0
    %1437 = vmatpush.bf16.xpose.msra.mxu0 %v1428
    %1438 = vmatmul.bf16.gmra.mxu0 %v1425
    %v1439 = vpop.f32.mrf.mxu0
    %v1440 = vadd.f32 0.0, %v1439
    %v1441 = vpop.f32.mrf.mxu0
    %1442 = vdwg.mxu0
    %1443 = vrot.lane.b32.xlu0 %v737, 64
    %v1444 = vpop.permute.xlu0 %1443
    %1445 = vrot.lane.b32.xlu0 %v742, 64
    %v1446 = vpop.permute.xlu0 %1445
    %v1448 = vsel %vm470, %v1444, 0
    %v1451 = vsel %vm470, %v1446, 0
    %1453 = vmatpush.bf16.xpose.msra.mxu0 0
    %1454 = vmatpush.bf16.xpose.msra.mxu0 0
    %1455 = vmatpush.bf16.xpose.msra.mxu0 0
    %1456 = vmatpush.bf16.xpose.msra.mxu0 0
    %1457 = vmatpush.bf16.xpose.msra.mxu0 0
    %1458 = vmatpush.bf16.xpose.msra.mxu0 0
    %1459 = vmatpush.bf16.xpose.msra.mxu0 0
    %1460 = vmatpush.bf16.xpose.msra.mxu0 %v1451
    %1461 = vmatmul.bf16.gmra.mxu0 %v1448
    %v1462 = vpop.f32.mrf.mxu0
    %v1463 = vadd.f32 0.0, %v1462
    %v1464 = vpop.f32.mrf.mxu0
    %1465 = vdwg.mxu0
    %1466 = vrot.lane.b32.xlu0 %v766, 64
    %v1467 = vpop.permute.xlu0 %1466
    %1468 = vrot.lane.b32.xlu0 %v771, 64
    %v1469 = vpop.permute.xlu0 %1468
    %v1471 = vsel %vm470, %v1467, 0
    %v1474 = vsel %vm470, %v1469, 0
    %1476 = vmatpush.bf16.xpose.msra.mxu0 0
    %1477 = vmatpush.bf16.xpose.msra.mxu0 0
    %1478 = vmatpush.bf16.xpose.msra.mxu0 0
    %1479 = vmatpush.bf16.xpose.msra.mxu0 0
    %1480 = vmatpush.bf16.xpose.msra.mxu0 0
    %1481 = vmatpush.bf16.xpose.msra.mxu0 0
    %1482 = vmatpush.bf16.xpose.msra.mxu0 0
    %1483 = vmatpush.bf16.xpose.msra.mxu0 %v1474
    %1484 = vmatmul.bf16.gmra.mxu0 %v1471
    %v1485 = vpop.f32.mrf.mxu0
    %v1486 = vadd.f32 0.0, %v1485
    %v1487 = vpop.f32.mrf.mxu0
    %1488 = vdwg.mxu0
    %v1489 = vmul.f32 %v1417, 0.25
    %v1490 = vmul.f32 %v1440, 0.25
    %v1491 = vmul.f32 %v1463, 0.25
    %v1492 = vmul.f32 %v1486, 0.25
    %v1493 = vsel %vm551, %v1489, -inf
    %1494 = vmax.xlane.f32.xlu0 %v1493
    %v1495 = vpop.xlane.xlu0 %1494
    %v1496 = vsel %vm551, %v1490, -inf
    %1497 = vmax.xlane.f32.xlu0 %v1496
    %v1498 = vpop.xlane.xlu0 %1497
    %v1499 = vsel %vm551, %v1491, -inf
    %1500 = vmax.xlane.f32.xlu0 %v1499
    %v1501 = vpop.xlane.xlu0 %1500
    %v1502 = vsel %vm551, %v1492, -inf
    %1503 = vmax.xlane.f32.xlu0 %v1502
    %v1504 = vpop.xlane.xlu0 %1503
    %v1505 = vsub.f32 %v1489, %v1495
    %v1506 = vsub.f32 %v1490, %v1498
    %v1507 = vsub.f32 %v1491, %v1501
    %v1508 = vsub.f32 %v1492, %v1504
    %v1509 = vmul.f32 %v1505, 1.442695
    %v1510 = vpow.pop %v1509
    %v1511 = vmul.f32 %v1506, 1.442695
    %v1512 = vpow.pop %v1511
    %v1513 = vmul.f32 %v1507, 1.442695
    %v1514 = vpow.pop %v1513
    %v1515 = vmul.f32 %v1508, 1.442695
    %v1516 = vpow.pop %v1515
    %v1517 = vsel %vm551, %v1510, 0.0
    %1518 = vadd.xlane.f32.xlu0 %v1517
    %v1519 = vpop.xlane.xlu0 %1518
    %v1520 = vsel %vm551, %v1512, 0.0
    %1521 = vadd.xlane.f32.xlu0 %v1520
    %v1522 = vpop.xlane.xlu0 %1521
    %v1523 = vsel %vm551, %v1514, 0.0
    %1524 = vadd.xlane.f32.xlu0 %v1523
    %v1525 = vpop.xlane.xlu0 %1524
    %v1526 = vsel %vm551, %v1516, 0.0
    %1527 = vadd.xlane.f32.xlu0 %v1526
    %v1528 = vpop.xlane.xlu0 %1527
    %v1529 = vrcp.pop %v1519
    %v1530 = vrcp.pop %v1522
    %v1531 = vrcp.pop %v1525
    %v1532 = vrcp.pop %v1528
    %v1533 = vmul.f32 %v1510, %v1529
    %v1534 = vmul.f32 %v1512, %v1530
    %v1535 = vmul.f32 %v1514, %v1531
    %v1536 = vmul.f32 %v1516, %v1532
    %v1537 = vpack.c.bf16 %v1533, %v1533
    %v1538 = vpack.c.bf16 %v1534, %v1534
    %v1539 = vpack.c.bf16 %v1535, %v1535
    %v1540 = vpack.c.bf16 %v1536, %v1536
    %1541 = vrot.lane.b32.xlu0 %v847, 64
    %v1542 = vpop.permute.xlu0 %1541
    %v1544 = vsel %vm551, %v1537, 0
    %v1547 = vsel %vm603, %v1542, 0
    %1549 = vmatpush.bf16.msra.mxu0 0
    %1550 = vmatpush.bf16.msra.mxu0 0
    %1551 = vmatpush.bf16.msra.mxu0 0
    %1552 = vmatpush.bf16.msra.mxu0 0
    %1553 = vmatpush.bf16.msra.mxu0 0
    %1554 = vmatpush.bf16.msra.mxu0 0
    %1555 = vmatpush.bf16.msra.mxu0 0
    %1556 = vmatpush.bf16.msra.mxu0 %v1547
    %1557 = vmatmul.bf16.gmra.mxu0 %v1544
    %v1558 = vpop.f32.mrf.mxu0
    %v1559 = vadd.f32 0.0, %v1558
    %v1560 = vpop.f32.mrf.mxu0
    %1561 = vdwg.mxu0
    %1562 = vrot.lane.b32.xlu0 %v871, 64
    %v1563 = vpop.permute.xlu0 %1562
    %v1565 = vsel %vm551, %v1538, 0
    %v1568 = vsel %vm603, %v1563, 0
    %1570 = vmatpush.bf16.msra.mxu0 0
    %1571 = vmatpush.bf16.msra.mxu0 0
    %1572 = vmatpush.bf16.msra.mxu0 0
    %1573 = vmatpush.bf16.msra.mxu0 0
    %1574 = vmatpush.bf16.msra.mxu0 0
    %1575 = vmatpush.bf16.msra.mxu0 0
    %1576 = vmatpush.bf16.msra.mxu0 0
    %1577 = vmatpush.bf16.msra.mxu0 %v1568
    %1578 = vmatmul.bf16.gmra.mxu0 %v1565
    %v1579 = vpop.f32.mrf.mxu0
    %v1580 = vadd.f32 0.0, %v1579
    %v1581 = vpop.f32.mrf.mxu0
    %1582 = vdwg.mxu0
    %1583 = vrot.lane.b32.xlu0 %v895, 64
    %v1584 = vpop.permute.xlu0 %1583
    %v1586 = vsel %vm551, %v1539, 0
    %v1589 = vsel %vm603, %v1584, 0
    %1591 = vmatpush.bf16.msra.mxu0 0
    %1592 = vmatpush.bf16.msra.mxu0 0
    %1593 = vmatpush.bf16.msra.mxu0 0
    %1594 = vmatpush.bf16.msra.mxu0 0
    %1595 = vmatpush.bf16.msra.mxu0 0
    %1596 = vmatpush.bf16.msra.mxu0 0
    %1597 = vmatpush.bf16.msra.mxu0 0
    %1598 = vmatpush.bf16.msra.mxu0 %v1589
    %1599 = vmatmul.bf16.gmra.mxu0 %v1586
    %v1600 = vpop.f32.mrf.mxu0
    %v1601 = vadd.f32 0.0, %v1600
    %v1602 = vpop.f32.mrf.mxu0
    %1603 = vdwg.mxu0
    %1604 = vrot.lane.b32.xlu0 %v919, 64
    %v1605 = vpop.permute.xlu0 %1604
    %v1607 = vsel %vm551, %v1540, 0
    %v1610 = vsel %vm603, %v1605, 0
    %1612 = vmatpush.bf16.msra.mxu0 0
    %1613 = vmatpush.bf16.msra.mxu0 0
    %1614 = vmatpush.bf16.msra.mxu0 0
    %1615 = vmatpush.bf16.msra.mxu0 0
    %1616 = vmatpush.bf16.msra.mxu0 0
    %1617 = vmatpush.bf16.msra.mxu0 0
    %1618 = vmatpush.bf16.msra.mxu0 0
    %1619 = vmatpush.bf16.msra.mxu0 %v1610
    %1620 = vmatmul.bf16.gmra.mxu0 %v1607
    %v1621 = vpop.f32.mrf.mxu0
    %v1622 = vadd.f32 0.0, %v1621
    %v1623 = vpop.f32.mrf.mxu0
    %1624 = vdwg.mxu0
    %1625 = vrot.lane.b32.xlu0 %v679, 48
    %v1626 = vpop.permute.xlu0 %1625
    %1627 = vrot.lane.b32.xlu0 %v684, 48
    %v1628 = vpop.permute.xlu0 %1627
    %v1630 = vsel %vm470, %v1626, 0
    %v1633 = vsel %vm470, %v1628, 0
    %1635 = vmatpush.bf16.xpose.msra.mxu0 0
    %1636 = vmatpush.bf16.xpose.msra.mxu0 0
    %1637 = vmatpush.bf16.xpose.msra.mxu0 0
    %1638 = vmatpush.bf16.xpose.msra.mxu0 0
    %1639 = vmatpush.bf16.xpose.msra.mxu0 0
    %1640 = vmatpush.bf16.xpose.msra.mxu0 0
    %1641 = vmatpush.bf16.xpose.msra.mxu0 0
    %1642 = vmatpush.bf16.xpose.msra.mxu0 %v1633
    %1643 = vmatmul.bf16.gmra.mxu0 %v1630
    %v1644 = vpop.f32.mrf.mxu0
    %v1645 = vadd.f32 0.0, %v1644
    %v1646 = vpop.f32.mrf.mxu0
    %1647 = vdwg.mxu0
    %1648 = vrot.lane.b32.xlu0 %v708, 48
    %v1649 = vpop.permute.xlu0 %1648
    %1650 = vrot.lane.b32.xlu0 %v713, 48
    %v1651 = vpop.permute.xlu0 %1650
    %v1653 = vsel %vm470, %v1649, 0
    %v1656 = vsel %vm470, %v1651, 0
    %1658 = vmatpush.bf16.xpose.msra.mxu0 0
    %1659 = vmatpush.bf16.xpose.msra.mxu0 0
    %1660 = vmatpush.bf16.xpose.msra.mxu0 0
    %1661 = vmatpush.bf16.xpose.msra.mxu0 0
    %1662 = vmatpush.bf16.xpose.msra.mxu0 0
    %1663 = vmatpush.bf16.xpose.msra.mxu0 0
    %1664 = vmatpush.bf16.xpose.msra.mxu0 0
    %1665 = vmatpush.bf16.xpose.msra.mxu0 %v1656
    %1666 = vmatmul.bf16.gmra.mxu0 %v1653
    %v1667 = vpop.f32.mrf.mxu0
    %v1668 = vadd.f32 0.0, %v1667
    %v1669 = vpop.f32.mrf.mxu0
    %1670 = vdwg.mxu0
    %1671 = vrot.lane.b32.xlu0 %v737, 48
    %v1672 = vpop.permute.xlu0 %1671
    %1673 = vrot.lane.b32.xlu0 %v742, 48
    %v1674 = vpop.permute.xlu0 %1673
    %v1676 = vsel %vm470, %v1672, 0
    %v1679 = vsel %vm470, %v1674, 0
    %1681 = vmatpush.bf16.xpose.msra.mxu0 0
    %1682 = vmatpush.bf16.xpose.msra.mxu0 0
    %1683 = vmatpush.bf16.xpose.msra.mxu0 0
    %1684 = vmatpush.bf16.xpose.msra.mxu0 0
    %1685 = vmatpush.bf16.xpose.msra.mxu0 0
    %1686 = vmatpush.bf16.xpose.msra.mxu0 0
    %1687 = vmatpush.bf16.xpose.msra.mxu0 0
    %1688 = vmatpush.bf16.xpose.msra.mxu0 %v1679
    %1689 = vmatmul.bf16.gmra.mxu0 %v1676
    %v1690 = vpop.f32.mrf.mxu0
    %v1691 = vadd.f32 0.0, %v1690
    %v1692 = vpop.f32.mrf.mxu0
    %1693 = vdwg.mxu0
    %1694 = vrot.lane.b32.xlu0 %v766, 48
    %v1695 = vpop.permute.xlu0 %1694
    %1696 = vrot.lane.b32.xlu0 %v771, 48
    %v1697 = vpop.permute.xlu0 %1696
    %v1699 = vsel %vm470, %v1695, 0
    %v1702 = vsel %vm470, %v1697, 0
    %1704 = vmatpush.bf16.xpose.msra.mxu0 0
    %1705 = vmatpush.bf16.xpose.msra.mxu0 0
    %1706 = vmatpush.bf16.xpose.msra.mxu0 0
    %1707 = vmatpush.bf16.xpose.msra.mxu0 0
    %1708 = vmatpush.bf16.xpose.msra.mxu0 0
    %1709 = vmatpush.bf16.xpose.msra.mxu0 0
    %1710 = vmatpush.bf16.xpose.msra.mxu0 0
    %1711 = vmatpush.bf16.xpose.msra.mxu0 %v1702
    %1712 = vmatmul.bf16.gmra.mxu0 %v1699
    %v1713 = vpop.f32.mrf.mxu0
    %v1714 = vadd.f32 0.0, %v1713
    %v1715 = vpop.f32.mrf.mxu0
    %1716 = vdwg.mxu0
    %v1717 = vmul.f32 %v1645, 0.25
    %v1718 = vmul.f32 %v1668, 0.25
    %v1719 = vmul.f32 %v1691, 0.25
    %v1720 = vmul.f32 %v1714, 0.25
    %v1721 = vsel %vm551, %v1717, -inf
    %1722 = vmax.xlane.f32.xlu0 %v1721
    %v1723 = vpop.xlane.xlu0 %1722
    %v1724 = vsel %vm551, %v1718, -inf
    %1725 = vmax.xlane.f32.xlu0 %v1724
    %v1726 = vpop.xlane.xlu0 %1725
    %v1727 = vsel %vm551, %v1719, -inf
    %1728 = vmax.xlane.f32.xlu0 %v1727
    %v1729 = vpop.xlane.xlu0 %1728
    %v1730 = vsel %vm551, %v1720, -inf
    %1731 = vmax.xlane.f32.xlu0 %v1730
    %v1732 = vpop.xlane.xlu0 %1731
    %v1733 = vsub.f32 %v1717, %v1723
    %v1734 = vsub.f32 %v1718, %v1726
    %v1735 = vsub.f32 %v1719, %v1729
    %v1736 = vsub.f32 %v1720, %v1732
    %v1737 = vmul.f32 %v1733, 1.442695
    %v1738 = vpow.pop %v1737
    %v1739 = vmul.f32 %v1734, 1.442695
    %v1740 = vpow.pop %v1739
    %v1741 = vmul.f32 %v1735, 1.442695
    %v1742 = vpow.pop %v1741
    %v1743 = vmul.f32 %v1736, 1.442695
    %v1744 = vpow.pop %v1743
    %v1745 = vsel %vm551, %v1738, 0.0
    %1746 = vadd.xlane.f32.xlu0 %v1745
    %v1747 = vpop.xlane.xlu0 %1746
    %v1748 = vsel %vm551, %v1740, 0.0
    %1749 = vadd.xlane.f32.xlu0 %v1748
    %v1750 = vpop.xlane.xlu0 %1749
    %v1751 = vsel %vm551, %v1742, 0.0
    %1752 = vadd.xlane.f32.xlu0 %v1751
    %v1753 = vpop.xlane.xlu0 %1752
    %v1754 = vsel %vm551, %v1744, 0.0
    %1755 = vadd.xlane.f32.xlu0 %v1754
    %v1756 = vpop.xlane.xlu0 %1755
    %v1757 = vrcp.pop %v1747
    %v1758 = vrcp.pop %v1750
    %v1759 = vrcp.pop %v1753
    %v1760 = vrcp.pop %v1756
    %v1761 = vmul.f32 %v1738, %v1757
    %v1762 = vmul.f32 %v1740, %v1758
    %v1763 = vmul.f32 %v1742, %v1759
    %v1764 = vmul.f32 %v1744, %v1760
    %v1765 = vpack.c.bf16 %v1761, %v1761
    %v1766 = vpack.c.bf16 %v1762, %v1762
    %v1767 = vpack.c.bf16 %v1763, %v1763
    %v1768 = vpack.c.bf16 %v1764, %v1764
    %1769 = vrot.lane.b32.xlu0 %v847, 48
    %v1770 = vpop.permute.xlu0 %1769
    %v1772 = vsel %vm551, %v1765, 0
    %v1775 = vsel %vm603, %v1770, 0
    %1777 = vmatpush.bf16.msra.mxu0 0
    %1778 = vmatpush.bf16.msra.mxu0 0
    %1779 = vmatpush.bf16.msra.mxu0 0
    %1780 = vmatpush.bf16.msra.mxu0 0
    %1781 = vmatpush.bf16.msra.mxu0 0
    %1782 = vmatpush.bf16.msra.mxu0 0
    %1783 = vmatpush.bf16.msra.mxu0 0
    %1784 = vmatpush.bf16.msra.mxu0 %v1775
    %1785 = vmatmul.bf16.gmra.mxu0 %v1772
    %v1786 = vpop.f32.mrf.mxu0
    %v1787 = vadd.f32 0.0, %v1786
    %v1788 = vpop.f32.mrf.mxu0
    %1789 = vdwg.mxu0
    %1790 = vrot.lane.b32.xlu0 %v871, 48
    %v1791 = vpop.permute.xlu0 %1790
    %v1793 = vsel %vm551, %v1766, 0
    %v1796 = vsel %vm603, %v1791, 0
    %1798 = vmatpush.bf16.msra.mxu0 0
    %1799 = vmatpush.bf16.msra.mxu0 0
    %1800 = vmatpush.bf16.msra.mxu0 0
    %1801 = vmatpush.bf16.msra.mxu0 0
    %1802 = vmatpush.bf16.msra.mxu0 0
    %1803 = vmatpush.bf16.msra.mxu0 0
    %1804 = vmatpush.bf16.msra.mxu0 0
    %1805 = vmatpush.bf16.msra.mxu0 %v1796
    %1806 = vmatmul.bf16.gmra.mxu0 %v1793
    %v1807 = vpop.f32.mrf.mxu0
    %v1808 = vadd.f32 0.0, %v1807
    %v1809 = vpop.f32.mrf.mxu0
    %1810 = vdwg.mxu0
    %1811 = vrot.lane.b32.xlu0 %v895, 48
    %v1812 = vpop.permute.xlu0 %1811
    %v1814 = vsel %vm551, %v1767, 0
    %v1817 = vsel %vm603, %v1812, 0
    %1819 = vmatpush.bf16.msra.mxu0 0
    %1820 = vmatpush.bf16.msra.mxu0 0
    %1821 = vmatpush.bf16.msra.mxu0 0
    %1822 = vmatpush.bf16.msra.mxu0 0
    %1823 = vmatpush.bf16.msra.mxu0 0
    %1824 = vmatpush.bf16.msra.mxu0 0
    %1825 = vmatpush.bf16.msra.mxu0 0
    %1826 = vmatpush.bf16.msra.mxu0 %v1817
    %1827 = vmatmul.bf16.gmra.mxu0 %v1814
    %v1828 = vpop.f32.mrf.mxu0
    %v1829 = vadd.f32 0.0, %v1828
    %v1830 = vpop.f32.mrf.mxu0
    %1831 = vdwg.mxu0
    %1832 = vrot.lane.b32.xlu0 %v919, 48
    %v1833 = vpop.permute.xlu0 %1832
    %v1835 = vsel %vm551, %v1768, 0
    %v1838 = vsel %vm603, %v1833, 0
    %1840 = vmatpush.bf16.msra.mxu0 0
    %1841 = vmatpush.bf16.msra.mxu0 0
    %1842 = vmatpush.bf16.msra.mxu0 0
    %1843 = vmatpush.bf16.msra.mxu0 0
    %1844 = vmatpush.bf16.msra.mxu0 0
    %1845 = vmatpush.bf16.msra.mxu0 0
    %1846 = vmatpush.bf16.msra.mxu0 0
    %1847 = vmatpush.bf16.msra.mxu0 %v1838
    %1848 = vmatmul.bf16.gmra.mxu0 %v1835
    %v1849 = vpop.f32.mrf.mxu0
    %v1850 = vadd.f32 0.0, %v1849
    %v1851 = vpop.f32.mrf.mxu0
    %1852 = vdwg.mxu0
    %1853 = vrot.lane.b32.xlu0 %v679, 32
    %v1854 = vpop.permute.xlu0 %1853
    %1855 = vrot.lane.b32.xlu0 %v684, 32
    %v1856 = vpop.permute.xlu0 %1855
    %v1858 = vsel %vm470, %v1854, 0
    %v1861 = vsel %vm470, %v1856, 0
    %1863 = vmatpush.bf16.xpose.msra.mxu0 0
    %1864 = vmatpush.bf16.xpose.msra.mxu0 0
    %1865 = vmatpush.bf16.xpose.msra.mxu0 0
    %1866 = vmatpush.bf16.xpose.msra.mxu0 0
    %1867 = vmatpush.bf16.xpose.msra.mxu0 0
    %1868 = vmatpush.bf16.xpose.msra.mxu0 0
    %1869 = vmatpush.bf16.xpose.msra.mxu0 0
    %1870 = vmatpush.bf16.xpose.msra.mxu0 %v1861
    %1871 = vmatmul.bf16.gmra.mxu0 %v1858
    %v1872 = vpop.f32.mrf.mxu0
    %v1873 = vadd.f32 0.0, %v1872
    %v1874 = vpop.f32.mrf.mxu0
    %1875 = vdwg.mxu0
    %1876 = vrot.lane.b32.xlu0 %v708, 32
    %v1877 = vpop.permute.xlu0 %1876
    %1878 = vrot.lane.b32.xlu0 %v713, 32
    %v1879 = vpop.permute.xlu0 %1878
    %v1881 = vsel %vm470, %v1877, 0
    %v1884 = vsel %vm470, %v1879, 0
    %1886 = vmatpush.bf16.xpose.msra.mxu0 0
    %1887 = vmatpush.bf16.xpose.msra.mxu0 0
    %1888 = vmatpush.bf16.xpose.msra.mxu0 0
    %1889 = vmatpush.bf16.xpose.msra.mxu0 0
    %1890 = vmatpush.bf16.xpose.msra.mxu0 0
    %1891 = vmatpush.bf16.xpose.msra.mxu0 0
    %1892 = vmatpush.bf16.xpose.msra.mxu0 0
    %1893 = vmatpush.bf16.xpose.msra.mxu0 %v1884
    %1894 = vmatmul.bf16.gmra.mxu0 %v1881
    %v1895 = vpop.f32.mrf.mxu0
    %v1896 = vadd.f32 0.0, %v1895
    %v1897 = vpop.f32.mrf.mxu0
    %1898 = vdwg.mxu0
    %1899 = vrot.lane.b32.xlu0 %v737, 32
    %v1900 = vpop.permute.xlu0 %1899
    %1901 = vrot.lane.b32.xlu0 %v742, 32
    %v1902 = vpop.permute.xlu0 %1901
    %v1904 = vsel %vm470, %v1900, 0
    %v1907 = vsel %vm470, %v1902, 0
    %1909 = vmatpush.bf16.xpose.msra.mxu0 0
    %1910 = vmatpush.bf16.xpose.msra.mxu0 0
    %1911 = vmatpush.bf16.xpose.msra.mxu0 0
    %1912 = vmatpush.bf16.xpose.msra.mxu0 0
    %1913 = vmatpush.bf16.xpose.msra.mxu0 0
    %1914 = vmatpush.bf16.xpose.msra.mxu0 0
    %1915 = vmatpush.bf16.xpose.msra.mxu0 0
    %1916 = vmatpush.bf16.xpose.msra.mxu0 %v1907
    %1917 = vmatmul.bf16.gmra.mxu0 %v1904
    %v1918 = vpop.f32.mrf.mxu0
    %v1919 = vadd.f32 0.0, %v1918
    %v1920 = vpop.f32.mrf.mxu0
    %1921 = vdwg.mxu0
    %1922 = vrot.lane.b32.xlu0 %v766, 32
    %v1923 = vpop.permute.xlu0 %1922
    %1924 = vrot.lane.b32.xlu0 %v771, 32
    %v1925 = vpop.permute.xlu0 %1924
    %v1927 = vsel %vm470, %v1923, 0
    %v1930 = vsel %vm470, %v1925, 0
    %1932 = vmatpush.bf16.xpose.msra.mxu0 0
    %1933 = vmatpush.bf16.xpose.msra.mxu0 0
    %1934 = vmatpush.bf16.xpose.msra.mxu0 0
    %1935 = vmatpush.bf16.xpose.msra.mxu0 0
    %1936 = vmatpush.bf16.xpose.msra.mxu0 0
    %1937 = vmatpush.bf16.xpose.msra.mxu0 0
    %1938 = vmatpush.bf16.xpose.msra.mxu0 0
    %1939 = vmatpush.bf16.xpose.msra.mxu0 %v1930
    %1940 = vmatmul.bf16.gmra.mxu0 %v1927
    %v1941 = vpop.f32.mrf.mxu0
    %v1942 = vadd.f32 0.0, %v1941
    %v1943 = vpop.f32.mrf.mxu0
    %1944 = vdwg.mxu0
    %v1945 = vmul.f32 %v1873, 0.25
    %v1946 = vmul.f32 %v1896, 0.25
    %v1947 = vmul.f32 %v1919, 0.25
    %v1948 = vmul.f32 %v1942, 0.25
    %v1949 = vsel %vm551, %v1945, -inf
    %1950 = vmax.xlane.f32.xlu0 %v1949
    %v1951 = vpop.xlane.xlu0 %1950
    %v1952 = vsel %vm551, %v1946, -inf
    %1953 = vmax.xlane.f32.xlu0 %v1952
    %v1954 = vpop.xlane.xlu0 %1953
    %v1955 = vsel %vm551, %v1947, -inf
    %1956 = vmax.xlane.f32.xlu0 %v1955
    %v1957 = vpop.xlane.xlu0 %1956
    %v1958 = vsel %vm551, %v1948, -inf
    %1959 = vmax.xlane.f32.xlu0 %v1958
    %v1960 = vpop.xlane.xlu0 %1959
    %v1961 = vsub.f32 %v1945, %v1951
    %v1962 = vsub.f32 %v1946, %v1954
    %v1963 = vsub.f32 %v1947, %v1957
    %v1964 = vsub.f32 %v1948, %v1960
    %v1965 = vmul.f32 %v1961, 1.442695
    %v1966 = vpow.pop %v1965
    %v1967 = vmul.f32 %v1962, 1.442695
    %v1968 = vpow.pop %v1967
    %v1969 = vmul.f32 %v1963, 1.442695
    %v1970 = vpow.pop %v1969
    %v1971 = vmul.f32 %v1964, 1.442695
    %v1972 = vpow.pop %v1971
    %v1973 = vsel %vm551, %v1966, 0.0
    %1974 = vadd.xlane.f32.xlu0 %v1973
    %v1975 = vpop.xlane.xlu0 %1974
    %v1976 = vsel %vm551, %v1968, 0.0
    %1977 = vadd.xlane.f32.xlu0 %v1976
    %v1978 = vpop.xlane.xlu0 %1977
    %v1979 = vsel %vm551, %v1970, 0.0
    %1980 = vadd.xlane.f32.xlu0 %v1979
    %v1981 = vpop.xlane.xlu0 %1980
    %v1982 = vsel %vm551, %v1972, 0.0
    %1983 = vadd.xlane.f32.xlu0 %v1982
    %v1984 = vpop.xlane.xlu0 %1983
    %v1985 = vrcp.pop %v1975
    %v1986 = vrcp.pop %v1978
    %v1987 = vrcp.pop %v1981
    %v1988 = vrcp.pop %v1984
    %v1989 = vmul.f32 %v1966, %v1985
    %v1990 = vmul.f32 %v1968, %v1986
    %v1991 = vmul.f32 %v1970, %v1987
    %v1992 = vmul.f32 %v1972, %v1988
    %v1993 = vpack.c.bf16 %v1989, %v1989
    %v1994 = vpack.c.bf16 %v1990, %v1990
    %v1995 = vpack.c.bf16 %v1991, %v1991
    %v1996 = vpack.c.bf16 %v1992, %v1992
    %1997 = vrot.lane.b32.xlu0 %v847, 32
    %v1998 = vpop.permute.xlu0 %1997
    %v2000 = vsel %vm551, %v1993, 0
    %v2003 = vsel %vm603, %v1998, 0
    %2005 = vmatpush.bf16.msra.mxu0 0
    %2006 = vmatpush.bf16.msra.mxu0 0
    %2007 = vmatpush.bf16.msra.mxu0 0
    %2008 = vmatpush.bf16.msra.mxu0 0
    %2009 = vmatpush.bf16.msra.mxu0 0
    %2010 = vmatpush.bf16.msra.mxu0 0
    %2011 = vmatpush.bf16.msra.mxu0 0
    %2012 = vmatpush.bf16.msra.mxu0 %v2003
    %2013 = vmatmul.bf16.gmra.mxu0 %v2000
    %v2014 = vpop.f32.mrf.mxu0
    %v2015 = vadd.f32 0.0, %v2014
    %v2016 = vpop.f32.mrf.mxu0
    %2017 = vdwg.mxu0
    %2018 = vrot.lane.b32.xlu0 %v871, 32
    %v2019 = vpop.permute.xlu0 %2018
    %v2021 = vsel %vm551, %v1994, 0
    %v2024 = vsel %vm603, %v2019, 0
    %2026 = vmatpush.bf16.msra.mxu0 0
    %2027 = vmatpush.bf16.msra.mxu0 0
    %2028 = vmatpush.bf16.msra.mxu0 0
    %2029 = vmatpush.bf16.msra.mxu0 0
    %2030 = vmatpush.bf16.msra.mxu0 0
    %2031 = vmatpush.bf16.msra.mxu0 0
    %2032 = vmatpush.bf16.msra.mxu0 0
    %2033 = vmatpush.bf16.msra.mxu0 %v2024
    %2034 = vmatmul.bf16.gmra.mxu0 %v2021
    %v2035 = vpop.f32.mrf.mxu0
    %v2036 = vadd.f32 0.0, %v2035
    %v2037 = vpop.f32.mrf.mxu0
    %2038 = vdwg.mxu0
    %2039 = vrot.lane.b32.xlu0 %v895, 32
    %v2040 = vpop.permute.xlu0 %2039
    %v2042 = vsel %vm551, %v1995, 0
    %v2045 = vsel %vm603, %v2040, 0
    %2047 = vmatpush.bf16.msra.mxu0 0
    %2048 = vmatpush.bf16.msra.mxu0 0
    %2049 = vmatpush.bf16.msra.mxu0 0
    %2050 = vmatpush.bf16.msra.mxu0 0
    %2051 = vmatpush.bf16.msra.mxu0 0
    %2052 = vmatpush.bf16.msra.mxu0 0
    %2053 = vmatpush.bf16.msra.mxu0 0
    %2054 = vmatpush.bf16.msra.mxu0 %v2045
    %2055 = vmatmul.bf16.gmra.mxu0 %v2042
    %v2056 = vpop.f32.mrf.mxu0
    %v2057 = vadd.f32 0.0, %v2056
    %v2058 = vpop.f32.mrf.mxu0
    %2059 = vdwg.mxu0
    %2060 = vrot.lane.b32.xlu0 %v919, 32
    %v2061 = vpop.permute.xlu0 %2060
    %v2063 = vsel %vm551, %v1996, 0
    %v2066 = vsel %vm603, %v2061, 0
    %2068 = vmatpush.bf16.msra.mxu0 0
    %2069 = vmatpush.bf16.msra.mxu0 0
    %2070 = vmatpush.bf16.msra.mxu0 0
    %2071 = vmatpush.bf16.msra.mxu0 0
    %2072 = vmatpush.bf16.msra.mxu0 0
    %2073 = vmatpush.bf16.msra.mxu0 0
    %2074 = vmatpush.bf16.msra.mxu0 0
    %2075 = vmatpush.bf16.msra.mxu0 %v2066
    %2076 = vmatmul.bf16.gmra.mxu0 %v2063
    %v2077 = vpop.f32.mrf.mxu0
    %v2078 = vadd.f32 0.0, %v2077
    %v2079 = vpop.f32.mrf.mxu0
    %2080 = vdwg.mxu0
    %2081 = vrot.lane.b32.xlu0 %v679, 16
    %v2082 = vpop.permute.xlu0 %2081
    %2083 = vrot.lane.b32.xlu0 %v684, 16
    %v2084 = vpop.permute.xlu0 %2083
    %v2086 = vsel %vm470, %v2082, 0
    %v2089 = vsel %vm470, %v2084, 0
    %2091 = vmatpush.bf16.xpose.msra.mxu0 0
    %2092 = vmatpush.bf16.xpose.msra.mxu0 0
    %2093 = vmatpush.bf16.xpose.msra.mxu0 0
    %2094 = vmatpush.bf16.xpose.msra.mxu0 0
    %2095 = vmatpush.bf16.xpose.msra.mxu0 0
    %2096 = vmatpush.bf16.xpose.msra.mxu0 0
    %2097 = vmatpush.bf16.xpose.msra.mxu0 0
    %2098 = vmatpush.bf16.xpose.msra.mxu0 %v2089
    %2099 = vmatmul.bf16.gmra.mxu0 %v2086
    %v2100 = vpop.f32.mrf.mxu0
    %v2101 = vadd.f32 0.0, %v2100
    %v2102 = vpop.f32.mrf.mxu0
    %2103 = vdwg.mxu0
    %2104 = vrot.lane.b32.xlu0 %v708, 16
    %v2105 = vpop.permute.xlu0 %2104
    %2106 = vrot.lane.b32.xlu0 %v713, 16
    %v2107 = vpop.permute.xlu0 %2106
    %v2109 = vsel %vm470, %v2105, 0
    %v2112 = vsel %vm470, %v2107, 0
    %2114 = vmatpush.bf16.xpose.msra.mxu0 0
    %2115 = vmatpush.bf16.xpose.msra.mxu0 0
    %2116 = vmatpush.bf16.xpose.msra.mxu0 0
    %2117 = vmatpush.bf16.xpose.msra.mxu0 0
    %2118 = vmatpush.bf16.xpose.msra.mxu0 0
    %2119 = vmatpush.bf16.xpose.msra.mxu0 0
    %2120 = vmatpush.bf16.xpose.msra.mxu0 0
    %2121 = vmatpush.bf16.xpose.msra.mxu0 %v2112
    %2122 = vmatmul.bf16.gmra.mxu0 %v2109
    %v2123 = vpop.f32.mrf.mxu0
    %v2124 = vadd.f32 0.0, %v2123
    %v2125 = vpop.f32.mrf.mxu0
    %2126 = vdwg.mxu0
    %2127 = vrot.lane.b32.xlu0 %v737, 16
    %v2128 = vpop.permute.xlu0 %2127
    %2129 = vrot.lane.b32.xlu0 %v742, 16
    %v2130 = vpop.permute.xlu0 %2129
    %v2132 = vsel %vm470, %v2128, 0
    %v2135 = vsel %vm470, %v2130, 0
    %2137 = vmatpush.bf16.xpose.msra.mxu0 0
    %2138 = vmatpush.bf16.xpose.msra.mxu0 0
    %2139 = vmatpush.bf16.xpose.msra.mxu0 0
    %2140 = vmatpush.bf16.xpose.msra.mxu0 0
    %2141 = vmatpush.bf16.xpose.msra.mxu0 0
    %2142 = vmatpush.bf16.xpose.msra.mxu0 0
    %2143 = vmatpush.bf16.xpose.msra.mxu0 0
    %2144 = vmatpush.bf16.xpose.msra.mxu0 %v2135
    %2145 = vmatmul.bf16.gmra.mxu0 %v2132
    %v2146 = vpop.f32.mrf.mxu0
    %v2147 = vadd.f32 0.0, %v2146
    %v2148 = vpop.f32.mrf.mxu0
    %2149 = vdwg.mxu0
    %2150 = vrot.lane.b32.xlu0 %v766, 16
    %v2151 = vpop.permute.xlu0 %2150
    %2152 = vrot.lane.b32.xlu0 %v771, 16
    %v2153 = vpop.permute.xlu0 %2152
    %v2155 = vsel %vm470, %v2151, 0
    %v2158 = vsel %vm470, %v2153, 0
    %2160 = vmatpush.bf16.xpose.msra.mxu0 0
    %2161 = vmatpush.bf16.xpose.msra.mxu0 0
    %2162 = vmatpush.bf16.xpose.msra.mxu0 0
    %2163 = vmatpush.bf16.xpose.msra.mxu0 0
    %2164 = vmatpush.bf16.xpose.msra.mxu0 0
    %2165 = vmatpush.bf16.xpose.msra.mxu0 0
    %2166 = vmatpush.bf16.xpose.msra.mxu0 0
    %2167 = vmatpush.bf16.xpose.msra.mxu0 %v2158
    %2168 = vmatmul.bf16.gmra.mxu0 %v2155
    %v2169 = vpop.f32.mrf.mxu0
    %v2170 = vadd.f32 0.0, %v2169
    %v2171 = vpop.f32.mrf.mxu0
    %2172 = vdwg.mxu0
    %v2173 = vmul.f32 %v2101, 0.25
    %v2174 = vmul.f32 %v2124, 0.25
    %v2175 = vmul.f32 %v2147, 0.25
    %v2176 = vmul.f32 %v2170, 0.25
    %v2177 = vsel %vm551, %v2173, -inf
    %2178 = vmax.xlane.f32.xlu0 %v2177
    %v2179 = vpop.xlane.xlu0 %2178
    %v2180 = vsel %vm551, %v2174, -inf
    %2181 = vmax.xlane.f32.xlu0 %v2180
    %v2182 = vpop.xlane.xlu0 %2181
    %v2183 = vsel %vm551, %v2175, -inf
    %2184 = vmax.xlane.f32.xlu0 %v2183
    %v2185 = vpop.xlane.xlu0 %2184
    %v2186 = vsel %vm551, %v2176, -inf
    %2187 = vmax.xlane.f32.xlu0 %v2186
    %v2188 = vpop.xlane.xlu0 %2187
    %v2189 = vsub.f32 %v2173, %v2179
    %v2190 = vsub.f32 %v2174, %v2182
    %v2191 = vsub.f32 %v2175, %v2185
    %v2192 = vsub.f32 %v2176, %v2188
    %v2193 = vmul.f32 %v2189, 1.442695
    %v2194 = vpow.pop %v2193
    %v2195 = vmul.f32 %v2190, 1.442695
    %v2196 = vpow.pop %v2195
    %v2197 = vmul.f32 %v2191, 1.442695
    %v2198 = vpow.pop %v2197
    %v2199 = vmul.f32 %v2192, 1.442695
    %v2200 = vpow.pop %v2199
    %v2201 = vsel %vm551, %v2194, 0.0
    %2202 = vadd.xlane.f32.xlu0 %v2201
    %v2203 = vpop.xlane.xlu0 %2202
    %v2204 = vsel %vm551, %v2196, 0.0
    %2205 = vadd.xlane.f32.xlu0 %v2204
    %v2206 = vpop.xlane.xlu0 %2205
    %v2207 = vsel %vm551, %v2198, 0.0
    %2208 = vadd.xlane.f32.xlu0 %v2207
    %v2209 = vpop.xlane.xlu0 %2208
    %v2210 = vsel %vm551, %v2200, 0.0
    %2211 = vadd.xlane.f32.xlu0 %v2210
    %v2212 = vpop.xlane.xlu0 %2211
    %v2213 = vrcp.pop %v2203
    %v2214 = vrcp.pop %v2206
    %v2215 = vrcp.pop %v2209
    %v2216 = vrcp.pop %v2212
    %v2217 = vmul.f32 %v2194, %v2213
    %v2218 = vmul.f32 %v2196, %v2214
    %v2219 = vmul.f32 %v2198, %v2215
    %v2220 = vmul.f32 %v2200, %v2216
    %v2221 = vpack.c.bf16 %v2217, %v2217
    %v2222 = vpack.c.bf16 %v2218, %v2218
    %v2223 = vpack.c.bf16 %v2219, %v2219
    %v2224 = vpack.c.bf16 %v2220, %v2220
    %2225 = vrot.lane.b32.xlu0 %v847, 16
    %v2226 = vpop.permute.xlu0 %2225
    %v2228 = vsel %vm551, %v2221, 0
    %v2231 = vsel %vm603, %v2226, 0
    %2233 = vmatpush.bf16.msra.mxu0 0
    %2234 = vmatpush.bf16.msra.mxu0 0
    %2235 = vmatpush.bf16.msra.mxu0 0
    %2236 = vmatpush.bf16.msra.mxu0 0
    %2237 = vmatpush.bf16.msra.mxu0 0
    %2238 = vmatpush.bf16.msra.mxu0 0
    %2239 = vmatpush.bf16.msra.mxu0 0
    %2240 = vmatpush.bf16.msra.mxu0 %v2231
    %2241 = vmatmul.bf16.gmra.mxu0 %v2228
    %v2242 = vpop.f32.mrf.mxu0
    %v2243 = vadd.f32 0.0, %v2242
    %v2244 = vpop.f32.mrf.mxu0
    %2245 = vdwg.mxu0
    %2246 = vrot.lane.b32.xlu0 %v871, 16
    %v2247 = vpop.permute.xlu0 %2246
    %v2249 = vsel %vm551, %v2222, 0
    %v2252 = vsel %vm603, %v2247, 0
    %2254 = vmatpush.bf16.msra.mxu0 0
    %2255 = vmatpush.bf16.msra.mxu0 0
    %2256 = vmatpush.bf16.msra.mxu0 0
    %2257 = vmatpush.bf16.msra.mxu0 0
    %2258 = vmatpush.bf16.msra.mxu0 0
    %2259 = vmatpush.bf16.msra.mxu0 0
    %2260 = vmatpush.bf16.msra.mxu0 0
    %2261 = vmatpush.bf16.msra.mxu0 %v2252
    %2262 = vmatmul.bf16.gmra.mxu0 %v2249
    %v2263 = vpop.f32.mrf.mxu0
    %v2264 = vadd.f32 0.0, %v2263
    %v2265 = vpop.f32.mrf.mxu0
    %2266 = vdwg.mxu0
    %2267 = vrot.lane.b32.xlu0 %v895, 16
    %v2268 = vpop.permute.xlu0 %2267
    %v2270 = vsel %vm551, %v2223, 0
    %v2273 = vsel %vm603, %v2268, 0
    %2275 = vmatpush.bf16.msra.mxu0 0
    %2276 = vmatpush.bf16.msra.mxu0 0
    %2277 = vmatpush.bf16.msra.mxu0 0
    %2278 = vmatpush.bf16.msra.mxu0 0
    %2279 = vmatpush.bf16.msra.mxu0 0
    %2280 = vmatpush.bf16.msra.mxu0 0
    %2281 = vmatpush.bf16.msra.mxu0 0
    %2282 = vmatpush.bf16.msra.mxu0 %v2273
    %2283 = vmatmul.bf16.gmra.mxu0 %v2270
    %v2284 = vpop.f32.mrf.mxu0
    %v2285 = vadd.f32 0.0, %v2284
    %v2286 = vpop.f32.mrf.mxu0
    %2287 = vdwg.mxu0
    %2288 = vrot.lane.b32.xlu0 %v919, 16
    %v2289 = vpop.permute.xlu0 %2288
    %v2291 = vsel %vm551, %v2224, 0
    %v2294 = vsel %vm603, %v2289, 0
    %2296 = vmatpush.bf16.msra.mxu0 0
    %2297 = vmatpush.bf16.msra.mxu0 0
    %2298 = vmatpush.bf16.msra.mxu0 0
    %2299 = vmatpush.bf16.msra.mxu0 0
    %2300 = vmatpush.bf16.msra.mxu0 0
    %2301 = vmatpush.bf16.msra.mxu0 0
    %2302 = vmatpush.bf16.msra.mxu0 0
    %2303 = vmatpush.bf16.msra.mxu0 %v2294
    %2304 = vmatmul.bf16.gmra.mxu0 %v2291
    %v2305 = vpop.f32.mrf.mxu0
    %v2306 = vadd.f32 0.0, %v2305
    %v2307 = vpop.f32.mrf.mxu0
    %2308 = vdwg.mxu0
    %2313 = vrot.lane.b32.xlu0 %v866, 16
    %v2314 = vpop.permute.xlu0 %2313
    %2315 = vrot.lane.b32.xlu0 %v890, 16
    %v2316 = vpop.permute.xlu0 %2315
    %2317 = vrot.lane.b32.xlu0 %v914, 16
    %v2318 = vpop.permute.xlu0 %2317
    %2319 = vrot.lane.b32.xlu0 %v938, 16
    %v2320 = vpop.permute.xlu0 %2319
    %2329 = vrot.lane.b32.xlu0 %v1103, 32
    %v2330 = vpop.permute.xlu0 %2329
    %2331 = vrot.lane.b32.xlu0 %v1124, 32
    %v2332 = vpop.permute.xlu0 %2331
    %2333 = vrot.lane.b32.xlu0 %v1145, 32
    %v2334 = vpop.permute.xlu0 %2333
    %2335 = vrot.lane.b32.xlu0 %v1166, 32
    %v2336 = vpop.permute.xlu0 %2335
    %2345 = vrot.lane.b32.xlu0 %v1331, 48
    %v2346 = vpop.permute.xlu0 %2345
    %2347 = vrot.lane.b32.xlu0 %v1352, 48
    %v2348 = vpop.permute.xlu0 %2347
    %2349 = vrot.lane.b32.xlu0 %v1373, 48
    %v2350 = vpop.permute.xlu0 %2349
    %2351 = vrot.lane.b32.xlu0 %v1394, 48
    %v2352 = vpop.permute.xlu0 %2351
    %2361 = vrot.lane.b32.xlu0 %v1559, 64
    %v2362 = vpop.permute.xlu0 %2361
    %2363 = vrot.lane.b32.xlu0 %v1580, 64
    %v2364 = vpop.permute.xlu0 %2363
    %2365 = vrot.lane.b32.xlu0 %v1601, 64
    %v2366 = vpop.permute.xlu0 %2365
    %2367 = vrot.lane.b32.xlu0 %v1622, 64
    %v2368 = vpop.permute.xlu0 %2367
    %2377 = vrot.lane.b32.xlu0 %v1787, 80
    %v2378 = vpop.permute.xlu0 %2377
    %2379 = vrot.lane.b32.xlu0 %v1808, 80
    %v2380 = vpop.permute.xlu0 %2379
    %2381 = vrot.lane.b32.xlu0 %v1829, 80
    %v2382 = vpop.permute.xlu0 %2381
    %2383 = vrot.lane.b32.xlu0 %v1850, 80
    %v2384 = vpop.permute.xlu0 %2383
    %2393 = vrot.lane.b32.xlu0 %v2015, 96
    %v2394 = vpop.permute.xlu0 %2393
    %2395 = vrot.lane.b32.xlu0 %v2036, 96
    %v2396 = vpop.permute.xlu0 %2395
    %2397 = vrot.lane.b32.xlu0 %v2057, 96
    %v2398 = vpop.permute.xlu0 %2397
    %2399 = vrot.lane.b32.xlu0 %v2078, 96
    %v2400 = vpop.permute.xlu0 %2399
    %2409 = vrot.lane.b32.xlu0 %v2243, 112
    %v2410 = vpop.permute.xlu0 %2409
    %2411 = vrot.lane.b32.xlu0 %v2264, 112
    %v2412 = vpop.permute.xlu0 %2411
    %2413 = vrot.lane.b32.xlu0 %v2285, 112
    %v2414 = vpop.permute.xlu0 %2413
    %2415 = vrot.lane.b32.xlu0 %v2306, 112
    %v2416 = vpop.permute.xlu0 %2415
    %v2421 = vsel %vm470, %v617, %v2314
    %v2422 = vsel %vm470, %v636, %v2316
    %v2423 = vsel %vm470, %v655, %v2318
    %v2424 = vsel %vm470, %v674, %v2320
    %vm2425 = vcmask 261120
    %v2426 = vsel %vm2425, %v2421, %v2330
    %v2427 = vsel %vm2425, %v2422, %v2332
    %v2428 = vsel %vm2425, %v2423, %v2334
    %v2429 = vsel %vm2425, %v2424, %v2336
    %vm2430 = vcmask 392192
    %v2431 = vsel %vm2430, %v2426, %v2346
    %v2432 = vsel %vm2430, %v2427, %v2348
    %v2433 = vsel %vm2430, %v2428, %v2350
    %v2434 = vsel %vm2430, %v2429, %v2352
    %vm2435 = vcmask 523264
    %v2436 = vsel %vm2435, %v2431, %v2362
    %v2437 = vsel %vm2435, %v2432, %v2364
    %v2438 = vsel %vm2435, %v2433, %v2366
    %v2439 = vsel %vm2435, %v2434, %v2368
    %vm2440 = vcmask 654336
    %v2441 = vsel %vm2440, %v2436, %v2378
    %v2442 = vsel %vm2440, %v2437, %v2380
    %v2443 = vsel %vm2440, %v2438, %v2382
    %v2444 = vsel %vm2440, %v2439, %v2384
    %vm2445 = vcmask 785408
    %v2446 = vsel %vm2445, %v2441, %v2394
    %v2447 = vsel %vm2445, %v2442, %v2396
    %v2448 = vsel %vm2445, %v2443, %v2398
    %v2449 = vsel %vm2445, %v2444, %v2400
    %vm2450 = vcmask 916480
    %v2451 = vsel %vm2450, %v2446, %v2410
    %v2452 = vsel %vm2450, %v2447, %v2412
    %v2453 = vsel %vm2450, %v2448, %v2414
    %v2454 = vsel %vm2450, %v2449, %v2416
    %v2455 = vld [vmem:[#allocation5] sm:$0xf]
    %v2456 = vld [vmem:[#allocation5 + $0x4] sm:$0xf]
    %v2457 = vld [vmem:[#allocation5 + $0x8] sm:$0xf]
    %v2458 = vld [vmem:[#allocation5 + $0xc] sm:$0xf]
    %v2459 = vld [vmem:[#allocation5 + $0x10] sm:$0xf]
    %v2460 = vld [vmem:[#allocation5 + $0x14] sm:$0xf]
    %v2461 = vld [vmem:[#allocation5 + $0x18] sm:$0xf]
    %v2462 = vld [vmem:[#allocation5 + $0x1c] sm:$0xf]
    %v2463 = vld [vmem:[#allocation5 + $0x20] sm:$0xf]
    %v2464 = vld [vmem:[#allocation5 + $0x24] sm:$0xf]
    %v2465 = vld [vmem:[#allocation5 + $0x28] sm:$0xf]
    %v2466 = vld [vmem:[#allocation5 + $0x2c] sm:$0xf]
    %v2467 = vld [vmem:[#allocation5 + $0x30] sm:$0xf]
    %v2468 = vld [vmem:[#allocation5 + $0x34] sm:$0xf]
    %v2469 = vld [vmem:[#allocation5 + $0x38] sm:$0xf]
    %v2470 = vld [vmem:[#allocation5 + $0x3c] sm:$0xf]
    %v2471 = vld [vmem:[%s5] sm:$0x1]
    %v2472 = vpack.c.bf16 %v2452, %v2451
    %v2473 = vpack.c.bf16 %v2454, %v2453
    %v2475 = vperm.slane %v2471, 0
    %v2493 = vunpack.c.l.b16 %v2455
    %v2494 = vunpack.c.l.b16 %v2456
    %v2495 = vunpack.c.l.b16 %v2457
    %v2496 = vunpack.c.l.b16 %v2458
    %v2497 = vunpack.c.l.b16 %v2459
    %v2498 = vunpack.c.l.b16 %v2460
    %v2499 = vunpack.c.l.b16 %v2461
    %v2500 = vunpack.c.l.b16 %v2462
    %v2501 = vunpack.c.l.b16 %v2463
    %v2502 = vunpack.c.l.b16 %v2464
    %v2503 = vunpack.c.l.b16 %v2465
    %v2504 = vunpack.c.l.b16 %v2466
    %v2505 = vunpack.c.l.b16 %v2467
    %v2506 = vunpack.c.l.b16 %v2468
    %v2507 = vunpack.c.l.b16 %v2469
    %v2508 = vunpack.c.l.b16 %v2470
    %v2509 = vpack.c.b16 %v2494, %v2493
    %v2510 = vpack.c.b16 %v2496, %v2495
    %v2511 = vpack.c.b16 %v2498, %v2497
    %v2512 = vpack.c.b16 %v2500, %v2499
    %v2513 = vpack.c.b16 %v2502, %v2501
    %v2514 = vpack.c.b16 %v2504, %v2503
    %v2515 = vpack.c.b16 %v2506, %v2505
    %v2516 = vpack.c.b16 %v2508, %v2507
    %2525 = vmatpush.bf16.msra.mxu0 %v2516
    %2526 = vmatpush.bf16.msra.mxu0 %v2515
    %2527 = vmatpush.bf16.msra.mxu0 %v2514
    %2528 = vmatpush.bf16.msra.mxu0 %v2513
    %2529 = vmatpush.bf16.msra.mxu0 %v2512
    %2530 = vmatpush.bf16.msra.mxu0 %v2511
    %2531 = vmatpush.bf16.msra.mxu0 %v2510
    %2532 = vmatpush.bf16.msra.mxu0 %v2509
    %2533 = vmatmul.bf16.gmra.mxu0 %v2472
    %v2534 = vpop.f32.mrf.mxu0
    %v2535 = vadd.f32 %v2475, %v2534
    %v2536 = vpop.f32.mrf.mxu0
    %v2537 = vadd.f32 %v2475, %v2536
    %2538 = vmatmul.bf16.gmra.mxu0 %v2473
    %v2539 = vpop.f32.mrf.mxu0
    %v2540 = vadd.f32 %v2475, %v2539
    %v2541 = vpop.f32.mrf.mxu0
    %v2542 = vadd.f32 %v2475, %v2541
    %2543 = vdwg.mxu0
    %v2544 = vadd.f32 %v223, %v2535
    %v2545 = vadd.f32 %v224, %v2537
    %v2546 = vadd.f32 %v225, %v2540
    %v2547 = vadd.f32 %v226, %v2542
    %v2548 = vld [vmem:[%s10] sm:$0x1]
    %v2549 = vld [vmem:[%s11] sm:$0x1]
    %2550 = vadd.xlane.f32.xlu0 %v2544
    %v2551 = vpop.xlane.xlu0 %2550
    %2552 = vadd.xlane.f32.xlu0 %v2545
    %v2553 = vpop.xlane.xlu0 %2552
    %2554 = vadd.xlane.f32.xlu0 %v2546
    %v2555 = vpop.xlane.xlu0 %2554
    %2556 = vadd.xlane.f32.xlu0 %v2547
    %v2557 = vpop.xlane.xlu0 %2556
    %v2558 = vrcp.pop 128.0
    %v2559 = vmul.f32 128.0, %v2558
    %v2560 = vsub.f32 1.0, %v2559
    %v2561 = vmul.f32 %v2558, %v2560
    %v2562 = vadd.f32 %v2558, %v2561
    %vm2563 = vweird.f32 %v2558
    %v2564 = vsel %vm2563, %v2558, %v2562
    %v2565 = vmul.f32 %v2551, %v2564
    %v2566 = vmul.f32 %v2553, %v2564
    %v2567 = vmul.f32 %v2555, %v2564
    %v2568 = vmul.f32 %v2557, %v2564
    %v2569 = vsub.f32 %v2544, %v2565
    %v2570 = vsub.f32 %v2545, %v2566
    %v2571 = vsub.f32 %v2546, %v2567
    %v2572 = vsub.f32 %v2547, %v2568
    %v2573 = vmul.f32 %v2569, %v2569
    %v2574 = vmul.f32 %v2570, %v2570
    %v2575 = vmul.f32 %v2571, %v2571
    %v2576 = vmul.f32 %v2572, %v2572
    %2577 = vadd.xlane.f32.xlu0 %v2573
    %v2578 = vpop.xlane.xlu0 %2577
    %2579 = vadd.xlane.f32.xlu0 %v2574
    %v2580 = vpop.xlane.xlu0 %2579
    %2581 = vadd.xlane.f32.xlu0 %v2575
    %v2582 = vpop.xlane.xlu0 %2581
    %2583 = vadd.xlane.f32.xlu0 %v2576
    %v2584 = vpop.xlane.xlu0 %2583
    %v2585 = vmul.f32 %v2578, %v2564
    %v2586 = vmul.f32 %v2580, %v2564
    %v2587 = vmul.f32 %v2582, %v2564
    %v2588 = vmul.f32 %v2584, %v2564
    %v2589 = vadd.f32 %v2585, 1e-05
    %v2590 = vadd.f32 %v2586, 1e-05
    %v2591 = vadd.f32 %v2587, 1e-05
    %v2592 = vadd.f32 %v2588, 1e-05
    %v2593 = vrsqrt.pop %v2589
    %v2594 = vmul.f32 %v2593, %v2589
    %v2595 = vmul.f32 %v2594, %v2593
    %v2596 = vmul.f32 0.5, %v2595
    %v2597 = vsub.f32 1.5, %v2596
    %v2598 = vmul.f32 %v2593, %v2597
    %vm2599 = vweird.f32 %v2589
    %vm2600 = vweird.f32 %v2593
    %vm2601 = vmor %vm2599, %vm2600
    %v2602 = vsel %vm2601, %v2593, %v2598
    %v2603 = vrsqrt.pop %v2590
    %v2604 = vmul.f32 %v2603, %v2590
    %v2605 = vmul.f32 %v2604, %v2603
    %v2606 = vmul.f32 0.5, %v2605
    %v2607 = vsub.f32 1.5, %v2606
    %v2608 = vmul.f32 %v2603, %v2607
    %vm2609 = vweird.f32 %v2590
    %vm2610 = vweird.f32 %v2603
    %vm2611 = vmor %vm2609, %vm2610
    %v2612 = vsel %vm2611, %v2603, %v2608
    %v2613 = vrsqrt.pop %v2591
    %v2614 = vmul.f32 %v2613, %v2591
    %v2615 = vmul.f32 %v2614, %v2613
    %v2616 = vmul.f32 0.5, %v2615
    %v2617 = vsub.f32 1.5, %v2616
    %v2618 = vmul.f32 %v2613, %v2617
    %vm2619 = vweird.f32 %v2591
    %vm2620 = vweird.f32 %v2613
    %vm2621 = vmor %vm2619, %vm2620
    %v2622 = vsel %vm2621, %v2613, %v2618
    %v2623 = vrsqrt.pop %v2592
    %v2624 = vmul.f32 %v2623, %v2592
    %v2625 = vmul.f32 %v2624, %v2623
    %v2626 = vmul.f32 0.5, %v2625
    %v2627 = vsub.f32 1.5, %v2626
    %v2628 = vmul.f32 %v2623, %v2627
    %vm2629 = vweird.f32 %v2592
    %vm2630 = vweird.f32 %v2623
    %vm2631 = vmor %vm2629, %vm2630
    %v2632 = vsel %vm2631, %v2623, %v2628
    %v2633 = vmul.f32 %v2569, %v2602
    %v2634 = vmul.f32 %v2570, %v2612
    %v2635 = vmul.f32 %v2571, %v2622
    %v2636 = vmul.f32 %v2572, %v2632
    %v2638 = vperm.slane %v2548, 0
    %v2640 = vmul.f32 %v2633, %v2638
    %v2641 = vmul.f32 %v2634, %v2638
    %v2642 = vmul.f32 %v2635, %v2638
    %v2643 = vmul.f32 %v2636, %v2638
    %v2645 = vperm.slane %v2549, 0
    %v2647 = vadd.f32 %v2640, %v2645
    %v2648 = vadd.f32 %v2641, %v2645
    %v2649 = vadd.f32 %v2642, %v2645
    %v2650 = vadd.f32 %v2643, %v2645
    %v2651 = vld [vmem:[#allocation7] sm:$0xff]
    %v2652 = vld [vmem:[#allocation7 + $0x8] sm:$0xff]
    %v2653 = vld [vmem:[#allocation7 + $0x10] sm:$0xff]
    %v2654 = vld [vmem:[#allocation7 + $0x18] sm:$0xff]
    %v2655 = vld [vmem:[#allocation7 + $0x20] sm:$0xff]
    %v2656 = vld [vmem:[#allocation7 + $0x28] sm:$0xff]
    %v2657 = vld [vmem:[#allocation7 + $0x30] sm:$0xff]
    %v2658 = vld [vmem:[#allocation7 + $0x38] sm:$0xff]
    %v2659 = vld [vmem:[#allocation7 + $0x40] sm:$0xff]
    %v2660 = vld [vmem:[#allocation7 + $0x48] sm:$0xff]
    %v2661 = vld [vmem:[#allocation7 + $0x50] sm:$0xff]
    %v2662 = vld [vmem:[#allocation7 + $0x58] sm:$0xff]
    %v2663 = vld [vmem:[#allocation7 + $0x60] sm:$0xff]
    %v2664 = vld [vmem:[#allocation7 + $0x68] sm:$0xff]
    %v2665 = vld [vmem:[#allocation7 + $0x70] sm:$0xff]
    %v2666 = vld [vmem:[#allocation7 + $0x78] sm:$0xff]
    %v2667 = vld [vmem:[%s7] sm:$0x3]
    %v2668 = vpack.c.bf16 %v2648, %v2647
    %v2669 = vpack.c.bf16 %v2650, %v2649
    %v2671 = vperm.slane %v2667, 0
    %v2672 = vperm.slane %v2667, 1
    %v2691 = vunpack.c.l.b16 %v2651
    %v2692 = vunpack.c.h.b16 %v2651
    %v2693 = vunpack.c.l.b16 %v2652
    %v2694 = vunpack.c.h.b16 %v2652
    %v2695 = vunpack.c.l.b16 %v2653
    %v2696 = vunpack.c.h.b16 %v2653
    %v2697 = vunpack.c.l.b16 %v2654
    %v2698 = vunpack.c.h.b16 %v2654
    %v2699 = vunpack.c.l.b16 %v2655
    %v2700 = vunpack.c.h.b16 %v2655
    %v2701 = vunpack.c.l.b16 %v2656
    %v2702 = vunpack.c.h.b16 %v2656
    %v2703 = vunpack.c.l.b16 %v2657
    %v2704 = vunpack.c.h.b16 %v2657
    %v2705 = vunpack.c.l.b16 %v2658
    %v2706 = vunpack.c.h.b16 %v2658
    %v2707 = vunpack.c.l.b16 %v2659
    %v2708 = vunpack.c.h.b16 %v2659
    %v2709 = vunpack.c.l.b16 %v2660
    %v2710 = vunpack.c.h.b16 %v2660
    %v2711 = vunpack.c.l.b16 %v2661
    %v2712 = vunpack.c.h.b16 %v2661
    %v2713 = vunpack.c.l.b16 %v2662
    %v2714 = vunpack.c.h.b16 %v2662
    %v2715 = vunpack.c.l.b16 %v2663
    %v2716 = vunpack.c.h.b16 %v2663
    %v2717 = vunpack.c.l.b16 %v2664
    %v2718 = vunpack.c.h.b16 %v2664
    %v2719 = vunpack.c.l.b16 %v2665
    %v2720 = vunpack.c.h.b16 %v2665
    %v2721 = vunpack.c.l.b16 %v2666
    %v2722 = vunpack.c.h.b16 %v2666
    %v2723 = vpack.c.b16 %v2693, %v2691
    %v2724 = vpack.c.b16 %v2694, %v2692
    %v2725 = vpack.c.b16 %v2697, %v2695
    %v2726 = vpack.c.b16 %v2698, %v2696
    %v2727 = vpack.c.b16 %v2701, %v2699
    %v2728 = vpack.c.b16 %v2702, %v2700
    %v2729 = vpack.c.b16 %v2705, %v2703
    %v2730 = vpack.c.b16 %v2706, %v2704
    %v2731 = vpack.c.b16 %v2709, %v2707
    %v2732 = vpack.c.b16 %v2710, %v2708
    %v2733 = vpack.c.b16 %v2713, %v2711
    %v2734 = vpack.c.b16 %v2714, %v2712
    %v2735 = vpack.c.b16 %v2717, %v2715
    %v2736 = vpack.c.b16 %v2718, %v2716
    %v2737 = vpack.c.b16 %v2721, %v2719
    %v2738 = vpack.c.b16 %v2722, %v2720
    %2755 = vmatpush.bf16.msra.mxu0 %v2737
    %2756 = vmatpush.bf16.msra.mxu0 %v2735
    %2757 = vmatpush.bf16.msra.mxu0 %v2733
    %2758 = vmatpush.bf16.msra.mxu0 %v2731
    %2759 = vmatpush.bf16.msra.mxu0 %v2729
    %2760 = vmatpush.bf16.msra.mxu0 %v2727
    %2761 = vmatpush.bf16.msra.mxu0 %v2725
    %2762 = vmatpush.bf16.msra.mxu0 %v2723
    %2763 = vmatmul.bf16.gmra.mxu0 %v2668
    %v2764 = vpop.f32.mrf.mxu0
    %v2765 = vadd.f32 %v2671, %v2764
    %v2766 = vpop.f32.mrf.mxu0
    %v2767 = vadd.f32 %v2671, %v2766
    %2768 = vmatmul.bf16.gmra.mxu0 %v2669
    %v2769 = vpop.f32.mrf.mxu0
    %v2770 = vadd.f32 %v2671, %v2769
    %v2771 = vpop.f32.mrf.mxu0
    %v2772 = vadd.f32 %v2671, %v2771
    %2773 = vdwg.mxu0
    %2774 = vmatpush.bf16.msra.mxu0 %v2738
    %2775 = vmatpush.bf16.msra.mxu0 %v2736
    %2776 = vmatpush.bf16.msra.mxu0 %v2734
    %2777 = vmatpush.bf16.msra.mxu0 %v2732
    %2778 = vmatpush.bf16.msra.mxu0 %v2730
    %2779 = vmatpush.bf16.msra.mxu0 %v2728
    %2780 = vmatpush.bf16.msra.mxu0 %v2726
    %2781 = vmatpush.bf16.msra.mxu0 %v2724
    %2782 = vmatmul.bf16.gmra.mxu0 %v2668
    %v2783 = vpop.f32.mrf.mxu0
    %v2784 = vadd.f32 %v2672, %v2783
    %v2785 = vpop.f32.mrf.mxu0
    %v2786 = vadd.f32 %v2672, %v2785
    %2787 = vmatmul.bf16.gmra.mxu0 %v2669
    %v2788 = vpop.f32.mrf.mxu0
    %v2789 = vadd.f32 %v2672, %v2788
    %v2790 = vpop.f32.mrf.mxu0
    %v2791 = vadd.f32 %v2672, %v2790
    %2792 = vdwg.mxu0
    %v2793 = vmax.f32 %v2765, 0.0
    %v2794 = vmax.f32 %v2784, 0.0
    %v2795 = vmax.f32 %v2767, 0.0
    %v2796 = vmax.f32 %v2786, 0.0
    %v2797 = vmax.f32 %v2770, 0.0
    %v2798 = vmax.f32 %v2789, 0.0
    %v2799 = vmax.f32 %v2772, 0.0
    %v2800 = vmax.f32 %v2791, 0.0
    %v2801 = vld [vmem:[#allocation8] sm:$0xf]
    %v2802 = vld [vmem:[#allocation8 + $0x4] sm:$0xf]
    %v2803 = vld [vmem:[#allocation8 + $0x8] sm:$0xf]
    %v2804 = vld [vmem:[#allocation8 + $0xc] sm:$0xf]
    %v2805 = vld [vmem:[#allocation8 + $0x10] sm:$0xf]
    %v2806 = vld [vmem:[#allocation8 + $0x14] sm:$0xf]
    %v2807 = vld [vmem:[#allocation8 + $0x18] sm:$0xf]
    %v2808 = vld [vmem:[#allocation8 + $0x1c] sm:$0xf]
    %v2809 = vld [vmem:[#allocation8 + $0x20] sm:$0xf]
    %v2810 = vld [vmem:[#allocation8 + $0x24] sm:$0xf]
    %v2811 = vld [vmem:[#allocation8 + $0x28] sm:$0xf]
    %v2812 = vld [vmem:[#allocation8 + $0x2c] sm:$0xf]
    %v2813 = vld [vmem:[#allocation8 + $0x30] sm:$0xf]
    %v2814 = vld [vmem:[#allocation8 + $0x34] sm:$0xf]
    %v2815 = vld [vmem:[#allocation8 + $0x38] sm:$0xf]
    %v2816 = vld [vmem:[#allocation8 + $0x3c] sm:$0xf]
    %v2817 = vld [vmem:[#allocation8 + $0x40] sm:$0xf]
    %v2818 = vld [vmem:[#allocation8 + $0x44] sm:$0xf]
    %v2819 = vld [vmem:[#allocation8 + $0x48] sm:$0xf]
    %v2820 = vld [vmem:[#allocation8 + $0x4c] sm:$0xf]
    %v2821 = vld [vmem:[#allocation8 + $0x50] sm:$0xf]
    %v2822 = vld [vmem:[#allocation8 + $0x54] sm:$0xf]
    %v2823 = vld [vmem:[#allocation8 + $0x58] sm:$0xf]
    %v2824 = vld [vmem:[#allocation8 + $0x5c] sm:$0xf]
    %v2825 = vld [vmem:[#allocation8 + $0x60] sm:$0xf]
    %v2826 = vld [vmem:[#allocation8 + $0x64] sm:$0xf]
    %v2827 = vld [vmem:[#allocation8 + $0x68] sm:$0xf]
    %v2828 = vld [vmem:[#allocation8 + $0x6c] sm:$0xf]
    %v2829 = vld [vmem:[#allocation8 + $0x70] sm:$0xf]
    %v2830 = vld [vmem:[#allocation8 + $0x74] sm:$0xf]
    %v2831 = vld [vmem:[#allocation8 + $0x78] sm:$0xf]
    %v2832 = vld [vmem:[#allocation8 + $0x7c] sm:$0xf]
    %v2833 = vld [vmem:[%s9] sm:$0x1]
    %v2834 = vpack.c.bf16 %v2795, %v2793
    %v2835 = vpack.c.bf16 %v2796, %v2794
    %v2836 = vpack.c.bf16 %v2799, %v2797
    %v2837 = vpack.c.bf16 %v2800, %v2798
    %v2839 = vperm.slane %v2833, 0
    %v2873 = vunpack.c.l.b16 %v2801
    %v2874 = vunpack.c.l.b16 %v2802
    %v2875 = vunpack.c.l.b16 %v2803
    %v2876 = vunpack.c.l.b16 %v2804
    %v2877 = vunpack.c.l.b16 %v2805
    %v2878 = vunpack.c.l.b16 %v2806
    %v2879 = vunpack.c.l.b16 %v2807
    %v2880 = vunpack.c.l.b16 %v2808
    %v2881 = vunpack.c.l.b16 %v2809
    %v2882 = vunpack.c.l.b16 %v2810
    %v2883 = vunpack.c.l.b16 %v2811
    %v2884 = vunpack.c.l.b16 %v2812
    %v2885 = vunpack.c.l.b16 %v2813
    %v2886 = vunpack.c.l.b16 %v2814
    %v2887 = vunpack.c.l.b16 %v2815
    %v2888 = vunpack.c.l.b16 %v2816
    %v2889 = vunpack.c.l.b16 %v2817
    %v2890 = vunpack.c.l.b16 %v2818
    %v2891 = vunpack.c.l.b16 %v2819
    %v2892 = vunpack.c.l.b16 %v2820
    %v2893 = vunpack.c.l.b16 %v2821
    %v2894 = vunpack.c.l.b16 %v2822
    %v2895 = vunpack.c.l.b16 %v2823
    %v2896 = vunpack.c.l.b16 %v2824
    %v2897 = vunpack.c.l.b16 %v2825
    %v2898 = vunpack.c.l.b16 %v2826
    %v2899 = vunpack.c.l.b16 %v2827
    %v2900 = vunpack.c.l.b16 %v2828
    %v2901 = vunpack.c.l.b16 %v2829
    %v2902 = vunpack.c.l.b16 %v2830
    %v2903 = vunpack.c.l.b16 %v2831
    %v2904 = vunpack.c.l.b16 %v2832
    %v2905 = vpack.c.b16 %v2874, %v2873
    %v2906 = vpack.c.b16 %v2876, %v2875
    %v2907 = vpack.c.b16 %v2878, %v2877
    %v2908 = vpack.c.b16 %v2880, %v2879
    %v2909 = vpack.c.b16 %v2882, %v2881
    %v2910 = vpack.c.b16 %v2884, %v2883
    %v2911 = vpack.c.b16 %v2886, %v2885
    %v2912 = vpack.c.b16 %v2888, %v2887
    %v2913 = vpack.c.b16 %v2890, %v2889
    %v2914 = vpack.c.b16 %v2892, %v2891
    %v2915 = vpack.c.b16 %v2894, %v2893
    %v2916 = vpack.c.b16 %v2896, %v2895
    %v2917 = vpack.c.b16 %v2898, %v2897
    %v2918 = vpack.c.b16 %v2900, %v2899
    %v2919 = vpack.c.b16 %v2902, %v2901
    %v2920 = vpack.c.b16 %v2904, %v2903
    %2937 = vmatpush.bf16.msra.mxu0 %v2912
    %2938 = vmatpush.bf16.msra.mxu0 %v2911
    %2939 = vmatpush.bf16.msra.mxu0 %v2910
    %2940 = vmatpush.bf16.msra.mxu0 %v2909
    %2941 = vmatpush.bf16.msra.mxu0 %v2908
    %2942 = vmatpush.bf16.msra.mxu0 %v2907
    %2943 = vmatpush.bf16.msra.mxu0 %v2906
    %2944 = vmatpush.bf16.msra.mxu0 %v2905
    %2945 = vmatmul.bf16.gmra.mxu0 %v2834
    %v2946 = vpop.f32.mrf.mxu0
    %v2947 = vadd.f32 %v2839, %v2946
    %v2948 = vpop.f32.mrf.mxu0
    %v2949 = vadd.f32 %v2839, %v2948
    %2950 = vmatmul.bf16.gmra.mxu0 %v2836
    %v2951 = vpop.f32.mrf.mxu0
    %v2952 = vadd.f32 %v2839, %v2951
    %v2953 = vpop.f32.mrf.mxu0
    %v2954 = vadd.f32 %v2839, %v2953
    %2955 = vdwg.mxu0
    %2956 = vmatpush.bf16.msra.mxu0 %v2920
    %2957 = vmatpush.bf16.msra.mxu0 %v2919
    %2958 = vmatpush.bf16.msra.mxu0 %v2918
    %2959 = vmatpush.bf16.msra.mxu0 %v2917
    %2960 = vmatpush.bf16.msra.mxu0 %v2916
    %2961 = vmatpush.bf16.msra.mxu0 %v2915
    %2962 = vmatpush.bf16.msra.mxu0 %v2914
    %2963 = vmatpush.bf16.msra.mxu0 %v2913
    %2964 = vmatmul.bf16.gmra.mxu0 %v2835
    %v2965 = vpop.f32.mrf.mxu0
    %v2966 = vadd.f32 %v2947, %v2965
    %v2967 = vpop.f32.mrf.mxu0
    %v2968 = vadd.f32 %v2949, %v2967
    %2969 = vmatmul.bf16.gmra.mxu0 %v2837
    %v2970 = vpop.f32.mrf.mxu0
    %v2971 = vadd.f32 %v2952, %v2970
    %v2972 = vpop.f32.mrf.mxu0
    %v2973 = vadd.f32 %v2954, %v2972
    %2974 = vdwg.mxu0
    %v2975 = vadd.f32 %v2647, %v2966
    %v2976 = vadd.f32 %v2648, %v2968
    %v2977 = vadd.f32 %v2649, %v2971
    %v2978 = vadd.f32 %v2650, %v2973
    %v2979 = vld [vmem:[%s12] sm:$0x1]
    %v2980 = vld [vmem:[%s13] sm:$0x1]
    %2981 = vadd.xlane.f32.xlu0 %v2975
    %v2982 = vpop.xlane.xlu0 %2981
    %2983 = vadd.xlane.f32.xlu0 %v2976
    %v2984 = vpop.xlane.xlu0 %2983
    %2985 = vadd.xlane.f32.xlu0 %v2977
    %v2986 = vpop.xlane.xlu0 %2985
    %2987 = vadd.xlane.f32.xlu0 %v2978
    %v2988 = vpop.xlane.xlu0 %2987
    %v2989 = vmul.f32 %v2982, %v2564
    %v2990 = vmul.f32 %v2984, %v2564
    %v2991 = vmul.f32 %v2986, %v2564
    %v2992 = vmul.f32 %v2988, %v2564
    %v2993 = vsub.f32 %v2975, %v2989
    %v2994 = vsub.f32 %v2976, %v2990
    %v2995 = vsub.f32 %v2977, %v2991
    %v2996 = vsub.f32 %v2978, %v2992
    %v2997 = vmul.f32 %v2993, %v2993
    %v2998 = vmul.f32 %v2994, %v2994
    %v2999 = vmul.f32 %v2995, %v2995
    %v3000 = vmul.f32 %v2996, %v2996
    %3001 = vadd.xlane.f32.xlu0 %v2997
    %v3002 = vpop.xlane.xlu0 %3001
    %3003 = vadd.xlane.f32.xlu0 %v2998
    %v3004 = vpop.xlane.xlu0 %3003
    %3005 = vadd.xlane.f32.xlu0 %v2999
    %v3006 = vpop.xlane.xlu0 %3005
    %3007 = vadd.xlane.f32.xlu0 %v3000
    %v3008 = vpop.xlane.xlu0 %3007
    %v3009 = vmul.f32 %v3002, %v2564
    %v3010 = vmul.f32 %v3004, %v2564
    %v3011 = vmul.f32 %v3006, %v2564
    %v3012 = vmul.f32 %v3008, %v2564
    %v3013 = vadd.f32 %v3009, 1e-05
    %v3014 = vadd.f32 %v3010, 1e-05
    %v3015 = vadd.f32 %v3011, 1e-05
    %v3016 = vadd.f32 %v3012, 1e-05
    %v3017 = vrsqrt.pop %v3013
    %v3018 = vmul.f32 %v3017, %v3013
    %v3019 = vmul.f32 %v3018, %v3017
    %v3020 = vmul.f32 0.5, %v3019
    %v3021 = vsub.f32 1.5, %v3020
    %v3022 = vmul.f32 %v3017, %v3021
    %vm3023 = vweird.f32 %v3013
    %vm3024 = vweird.f32 %v3017
    %vm3025 = vmor %vm3023, %vm3024
    %v3026 = vsel %vm3025, %v3017, %v3022
    %v3027 = vrsqrt.pop %v3014
    %v3028 = vmul.f32 %v3027, %v3014
    %v3029 = vmul.f32 %v3028, %v3027
    %v3030 = vmul.f32 0.5, %v3029
    %v3031 = vsub.f32 1.5, %v3030
    %v3032 = vmul.f32 %v3027, %v3031
    %vm3033 = vweird.f32 %v3014
    %vm3034 = vweird.f32 %v3027
    %vm3035 = vmor %vm3033, %vm3034
    %v3036 = vsel %vm3035, %v3027, %v3032
    %v3037 = vrsqrt.pop %v3015
    %v3038 = vmul.f32 %v3037, %v3015
    %v3039 = vmul.f32 %v3038, %v3037
    %v3040 = vmul.f32 0.5, %v3039
    %v3041 = vsub.f32 1.5, %v3040
    %v3042 = vmul.f32 %v3037, %v3041
    %vm3043 = vweird.f32 %v3015
    %vm3044 = vweird.f32 %v3037
    %vm3045 = vmor %vm3043, %vm3044
    %v3046 = vsel %vm3045, %v3037, %v3042
    %v3047 = vrsqrt.pop %v3016
    %v3048 = vmul.f32 %v3047, %v3016
    %v3049 = vmul.f32 %v3048, %v3047
    %v3050 = vmul.f32 0.5, %v3049
    %v3051 = vsub.f32 1.5, %v3050
    %v3052 = vmul.f32 %v3047, %v3051
    %vm3053 = vweird.f32 %v3016
    %vm3054 = vweird.f32 %v3047
    %vm3055 = vmor %vm3053, %vm3054
    %v3056 = vsel %vm3055, %v3047, %v3052
    %v3057 = vmul.f32 %v2993, %v3026
    %v3058 = vmul.f32 %v2994, %v3036
    %v3059 = vmul.f32 %v2995, %v3046
    %v3060 = vmul.f32 %v2996, %v3056
    %v3062 = vperm.slane %v2979, 0
    %v3064 = vmul.f32 %v3057, %v3062
    %v3065 = vmul.f32 %v3058, %v3062
    %v3066 = vmul.f32 %v3059, %v3062
    %v3067 = vmul.f32 %v3060, %v3062
    %v3069 = vperm.slane %v2980, 0
    %v3071 = vadd.f32 %v3064, %v3069
    %v3072 = vadd.f32 %v3065, %v3069
    %v3073 = vadd.f32 %v3066, %v3069
    %v3074 = vadd.f32 %v3067, %v3069
    %s3075 = scalar_lea.vmem [#allocation2], 192
    %v3076 = vld [vmem:[%s3075] sm:$0xff]
    %v3077 = vld [vmem:[%s3075 + $0x8] sm:$0xf]
    %v3078 = vld [vmem:[%s3075 + $0xc] sm:$0xff]
    %v3079 = vld [vmem:[%s3075 + $0x14] sm:$0xf]
    %v3080 = vld [vmem:[%s3075 + $0x18] sm:$0xff]
    %v3081 = vld [vmem:[%s3075 + $0x20] sm:$0xf]
    %v3082 = vld [vmem:[%s3075 + $0x24] sm:$0xff]
    %v3083 = vld [vmem:[%s3075 + $0x2c] sm:$0xf]
    %v3084 = vld [vmem:[%s3075 + $0x30] sm:$0xff]
    %v3085 = vld [vmem:[%s3075 + $0x38] sm:$0xf]
    %v3086 = vld [vmem:[%s3075 + $0x3c] sm:$0xff]
    %v3087 = vld [vmem:[%s3075 + $0x44] sm:$0xf]
    %v3088 = vld [vmem:[%s3075 + $0x48] sm:$0xff]
    %v3089 = vld [vmem:[%s3075 + $0x50] sm:$0xf]
    %v3090 = vld [vmem:[%s3075 + $0x54] sm:$0xff]
    %v3091 = vld [vmem:[%s3075 + $0x5c] sm:$0xf]
    %v3092 = vld [vmem:[%s3075 + $0x60] sm:$0xff]
    %v3093 = vld [vmem:[%s3075 + $0x68] sm:$0xf]
    %v3094 = vld [vmem:[%s3075 + $0x6c] sm:$0xff]
    %v3095 = vld [vmem:[%s3075 + $0x74] sm:$0xf]
    %v3096 = vld [vmem:[%s3075 + $0x78] sm:$0xff]
    %v3097 = vld [vmem:[%s3075 + $0x80] sm:$0xf]
    %v3098 = vld [vmem:[%s3075 + $0x84] sm:$0xff]
    %v3099 = vld [vmem:[%s3075 + $0x8c] sm:$0xf]
    %v3100 = vld [vmem:[%s3075 + $0x90] sm:$0xff]
    %v3101 = vld [vmem:[%s3075 + $0x98] sm:$0xf]
    %v3102 = vld [vmem:[%s3075 + $0x9c] sm:$0xff]
    %v3103 = vld [vmem:[%s3075 + $0xa4] sm:$0xf]
    %v3104 = vld [vmem:[%s3075 + $0xa8] sm:$0xff]
    %v3105 = vld [vmem:[%s3075 + $0xb0] sm:$0xf]
    %v3106 = vld [vmem:[%s3075 + $0xb4] sm:$0xff]
    %v3107 = vld [vmem:[%s3075 + $0xbc] sm:$0xf]
    %s3108 = scalar_lea.vmem %s3, 3
    %v3109 = vld [vmem:[%s3108] sm:$0x7]
    %v3110 = vpack.c.bf16 %v3072, %v3071
    %v3111 = vpack.c.bf16 %v3074, %v3073
    %v3113 = vperm.slane %v3109, 0
    %v3114 = vperm.slane %v3109, 1
    %v3115 = vperm.slane %v3109, 2
    %v3151 = vunpack.c.l.b16 %v3076
    %v3152 = vunpack.c.h.b16 %v3076
    %v3153 = vunpack.c.l.b16 %v3077
    %v3154 = vunpack.c.l.b16 %v3078
    %v3155 = vunpack.c.h.b16 %v3078
    %v3156 = vunpack.c.l.b16 %v3079
    %v3157 = vunpack.c.l.b16 %v3080
    %v3158 = vunpack.c.h.b16 %v3080
    %v3159 = vunpack.c.l.b16 %v3081
    %v3160 = vunpack.c.l.b16 %v3082
    %v3161 = vunpack.c.h.b16 %v3082
    %v3162 = vunpack.c.l.b16 %v3083
    %v3163 = vunpack.c.l.b16 %v3084
    %v3164 = vunpack.c.h.b16 %v3084
    %v3165 = vunpack.c.l.b16 %v3085
    %v3166 = vunpack.c.l.b16 %v3086
    %v3167 = vunpack.c.h.b16 %v3086
    %v3168 = vunpack.c.l.b16 %v3087
    %v3169 = vunpack.c.l.b16 %v3088
    %v3170 = vunpack.c.h.b16 %v3088
    %v3171 = vunpack.c.l.b16 %v3089
    %v3172 = vunpack.c.l.b16 %v3090
    %v3173 = vunpack.c.h.b16 %v3090
    %v3174 = vunpack.c.l.b16 %v3091
    %v3175 = vunpack.c.l.b16 %v3092
    %v3176 = vunpack.c.h.b16 %v3092
    %v3177 = vunpack.c.l.b16 %v3093
    %v3178 = vunpack.c.l.b16 %v3094
    %v3179 = vunpack.c.h.b16 %v3094
    %v3180 = vunpack.c.l.b16 %v3095
    %v3181 = vunpack.c.l.b16 %v3096
    %v3182 = vunpack.c.h.b16 %v3096
    %v3183 = vunpack.c.l.b16 %v3097
    %v3184 = vunpack.c.l.b16 %v3098
    %v3185 = vunpack.c.h.b16 %v3098
    %v3186 = vunpack.c.l.b16 %v3099
    %v3187 = vunpack.c.l.b16 %v3100
    %v3188 = vunpack.c.h.b16 %v3100
    %v3189 = vunpack.c.l.b16 %v3101
    %v3190 = vunpack.c.l.b16 %v3102
    %v3191 = vunpack.c.h.b16 %v3102
    %v3192 = vunpack.c.l.b16 %v3103
    %v3193 = vunpack.c.l.b16 %v3104
    %v3194 = vunpack.c.h.b16 %v3104
    %v3195 = vunpack.c.l.b16 %v3105
    %v3196 = vunpack.c.l.b16 %v3106
    %v3197 = vunpack.c.h.b16 %v3106
    %v3198 = vunpack.c.l.b16 %v3107
    %v3199 = vpack.c.b16 %v3154, %v3151
    %v3200 = vpack.c.b16 %v3155, %v3152
    %v3201 = vpack.c.b16 %v3156, %v3153
    %v3202 = vpack.c.b16 %v3160, %v3157
    %v3203 = vpack.c.b16 %v3161, %v3158
    %v3204 = vpack.c.b16 %v3162, %v3159
    %v3205 = vpack.c.b16 %v3166, %v3163
    %v3206 = vpack.c.b16 %v3167, %v3164
    %v3207 = vpack.c.b16 %v3168, %v3165
    %v3208 = vpack.c.b16 %v3172, %v3169
    %v3209 = vpack.c.b16 %v3173, %v3170
    %v3210 = vpack.c.b16 %v3174, %v3171
    %v3211 = vpack.c.b16 %v3178, %v3175
    %v3212 = vpack.c.b16 %v3179, %v3176
    %v3213 = vpack.c.b16 %v3180, %v3177
    %v3214 = vpack.c.b16 %v3184, %v3181
    %v3215 = vpack.c.b16 %v3185, %v3182
    %v3216 = vpack.c.b16 %v3186, %v3183
    %v3217 = vpack.c.b16 %v3190, %v3187
    %v3218 = vpack.c.b16 %v3191, %v3188
    %v3219 = vpack.c.b16 %v3192, %v3189
    %v3220 = vpack.c.b16 %v3196, %v3193
    %v3221 = vpack.c.b16 %v3197, %v3194
    %v3222 = vpack.c.b16 %v3198, %v3195
    %3247 = vmatpush.bf16.msra.mxu0 %v3220
    %3248 = vmatpush.bf16.msra.mxu0 %v3217
    %3249 = vmatpush.bf16.msra.mxu0 %v3214
    %3250 = vmatpush.bf16.msra.mxu0 %v3211
    %3251 = vmatpush.bf16.msra.mxu0 %v3208
    %3252 = vmatpush.bf16.msra.mxu0 %v3205
    %3253 = vmatpush.bf16.msra.mxu0 %v3202
    %3254 = vmatpush.bf16.msra.mxu0 %v3199
    %3255 = vmatmul.bf16.gmra.mxu0 %v3110
    %v3256 = vpop.f32.mrf.mxu0
    %v3257 = vadd.f32 %v3113, %v3256
    %v3258 = vpop.f32.mrf.mxu0
    %v3259 = vadd.f32 %v3113, %v3258
    %3260 = vmatmul.bf16.gmra.mxu0 %v3111
    %v3261 = vpop.f32.mrf.mxu0
    %v3262 = vadd.f32 %v3113, %v3261
    %v3263 = vpop.f32.mrf.mxu0
    %v3264 = vadd.f32 %v3113, %v3263
    %3265 = vdwg.mxu0
    %3266 = vmatpush.bf16.msra.mxu0 %v3221
    %3267 = vmatpush.bf16.msra.mxu0 %v3218
    %3268 = vmatpush.bf16.msra.mxu0 %v3215
    %3269 = vmatpush.bf16.msra.mxu0 %v3212
    %3270 = vmatpush.bf16.msra.mxu0 %v3209
    %3271 = vmatpush.bf16.msra.mxu0 %v3206
    %3272 = vmatpush.bf16.msra.mxu0 %v3203
    %3273 = vmatpush.bf16.msra.mxu0 %v3200
    %3274 = vmatmul.bf16.gmra.mxu0 %v3110
    %v3275 = vpop.f32.mrf.mxu0
    %v3276 = vadd.f32 %v3114, %v3275
    %v3277 = vpop.f32.mrf.mxu0
    %v3278 = vadd.f32 %v3114, %v3277
    %3279 = vmatmul.bf16.gmra.mxu0 %v3111
    %v3280 = vpop.f32.mrf.mxu0
    %v3281 = vadd.f32 %v3114, %v3280
    %v3282 = vpop.f32.mrf.mxu0
    %v3283 = vadd.f32 %v3114, %v3282
    %3284 = vdwg.mxu0
    %3285 = vmatpush.bf16.msra.mxu0 %v3222
    %3286 = vmatpush.bf16.msra.mxu0 %v3219
    %3287 = vmatpush.bf16.msra.mxu0 %v3216
    %3288 = vmatpush.bf16.msra.mxu0 %v3213
    %3289 = vmatpush.bf16.msra.mxu0 %v3210
    %3290 = vmatpush.bf16.msra.mxu0 %v3207
    %3291 = vmatpush.bf16.msra.mxu0 %v3204
    %3292 = vmatpush.bf16.msra.mxu0 %v3201
    %3293 = vmatmul.bf16.gmra.mxu0 %v3110
    %v3294 = vpop.f32.mrf.mxu0
    %v3295 = vadd.f32 %v3115, %v3294
    %v3296 = vpop.f32.mrf.mxu0
    %v3297 = vadd.f32 %v3115, %v3296
    %3298 = vmatmul.bf16.gmra.mxu0 %v3111
    %v3299 = vpop.f32.mrf.mxu0
    %v3300 = vadd.f32 %v3115, %v3299
    %v3301 = vpop.f32.mrf.mxu0
    %v3302 = vadd.f32 %v3115, %v3301
    %3303 = vdwg.mxu0
    %v3304 = vpack.c.bf16 %v3257, %v3257
    %v3305 = vpack.c.bf16 %v3259, %v3259
    %v3306 = vpack.c.bf16 %v3262, %v3262
    %v3307 = vpack.c.bf16 %v3264, %v3264
    %v3308 = vpack.c.bf16 %v3276, %v3276
    %v3309 = vpack.c.bf16 %v3278, %v3278
    %v3310 = vpack.c.bf16 %v3281, %v3281
    %v3311 = vpack.c.bf16 %v3283, %v3283
    %v3312 = vpack.c.bf16 %v3295, %v3295
    %v3313 = vpack.c.bf16 %v3297, %v3297
    %v3314 = vpack.c.bf16 %v3300, %v3300
    %v3315 = vpack.c.bf16 %v3302, %v3302
    %v3317 = vsel %vm470, %v3304, 0
    %v3320 = vsel %vm470, %v3308, 0
    %3322 = vmatpush.bf16.xpose.msra.mxu0 0
    %3323 = vmatpush.bf16.xpose.msra.mxu0 0
    %3324 = vmatpush.bf16.xpose.msra.mxu0 0
    %3325 = vmatpush.bf16.xpose.msra.mxu0 0
    %3326 = vmatpush.bf16.xpose.msra.mxu0 0
    %3327 = vmatpush.bf16.xpose.msra.mxu0 0
    %3328 = vmatpush.bf16.xpose.msra.mxu0 0
    %3329 = vmatpush.bf16.xpose.msra.mxu0 %v3320
    %3330 = vmatmul.bf16.gmra.mxu0 %v3317
    %v3331 = vpop.f32.mrf.mxu0
    %v3332 = vadd.f32 0.0, %v3331
    %v3333 = vpop.f32.mrf.mxu0
    %3334 = vdwg.mxu0
    %v3336 = vsel %vm470, %v3305, 0
    %v3339 = vsel %vm470, %v3309, 0
    %3341 = vmatpush.bf16.xpose.msra.mxu0 0
    %3342 = vmatpush.bf16.xpose.msra.mxu0 0
    %3343 = vmatpush.bf16.xpose.msra.mxu0 0
    %3344 = vmatpush.bf16.xpose.msra.mxu0 0
    %3345 = vmatpush.bf16.xpose.msra.mxu0 0
    %3346 = vmatpush.bf16.xpose.msra.mxu0 0
    %3347 = vmatpush.bf16.xpose.msra.mxu0 0
    %3348 = vmatpush.bf16.xpose.msra.mxu0 %v3339
    %3349 = vmatmul.bf16.gmra.mxu0 %v3336
    %v3350 = vpop.f32.mrf.mxu0
    %v3351 = vadd.f32 0.0, %v3350
    %v3352 = vpop.f32.mrf.mxu0
    %3353 = vdwg.mxu0
    %v3355 = vsel %vm470, %v3306, 0
    %v3358 = vsel %vm470, %v3310, 0
    %3360 = vmatpush.bf16.xpose.msra.mxu0 0
    %3361 = vmatpush.bf16.xpose.msra.mxu0 0
    %3362 = vmatpush.bf16.xpose.msra.mxu0 0
    %3363 = vmatpush.bf16.xpose.msra.mxu0 0
    %3364 = vmatpush.bf16.xpose.msra.mxu0 0
    %3365 = vmatpush.bf16.xpose.msra.mxu0 0
    %3366 = vmatpush.bf16.xpose.msra.mxu0 0
    %3367 = vmatpush.bf16.xpose.msra.mxu0 %v3358
    %3368 = vmatmul.bf16.gmra.mxu0 %v3355
    %v3369 = vpop.f32.mrf.mxu0
    %v3370 = vadd.f32 0.0, %v3369
    %v3371 = vpop.f32.mrf.mxu0
    %3372 = vdwg.mxu0
    %v3374 = vsel %vm470, %v3307, 0
    %v3377 = vsel %vm470, %v3311, 0
    %3379 = vmatpush.bf16.xpose.msra.mxu0 0
    %3380 = vmatpush.bf16.xpose.msra.mxu0 0
    %3381 = vmatpush.bf16.xpose.msra.mxu0 0
    %3382 = vmatpush.bf16.xpose.msra.mxu0 0
    %3383 = vmatpush.bf16.xpose.msra.mxu0 0
    %3384 = vmatpush.bf16.xpose.msra.mxu0 0
    %3385 = vmatpush.bf16.xpose.msra.mxu0 0
    %3386 = vmatpush.bf16.xpose.msra.mxu0 %v3377
    %3387 = vmatmul.bf16.gmra.mxu0 %v3374
    %v3388 = vpop.f32.mrf.mxu0
    %v3389 = vadd.f32 0.0, %v3388
    %v3390 = vpop.f32.mrf.mxu0
    %3391 = vdwg.mxu0
    %v3392 = vmul.f32 %v3332, 0.25
    %v3393 = vmul.f32 %v3351, 0.25
    %v3394 = vmul.f32 %v3370, 0.25
    %v3395 = vmul.f32 %v3389, 0.25
    %v3396 = vsel %vm551, %v3392, -inf
    %3397 = vmax.xlane.f32.xlu0 %v3396
    %v3398 = vpop.xlane.xlu0 %3397
    %v3399 = vsel %vm551, %v3393, -inf
    %3400 = vmax.xlane.f32.xlu0 %v3399
    %v3401 = vpop.xlane.xlu0 %3400
    %v3402 = vsel %vm551, %v3394, -inf
    %3403 = vmax.xlane.f32.xlu0 %v3402
    %v3404 = vpop.xlane.xlu0 %3403
    %v3405 = vsel %vm551, %v3395, -inf
    %3406 = vmax.xlane.f32.xlu0 %v3405
    %v3407 = vpop.xlane.xlu0 %3406
    %v3408 = vsub.f32 %v3392, %v3398
    %v3409 = vsub.f32 %v3393, %v3401
    %v3410 = vsub.f32 %v3394, %v3404
    %v3411 = vsub.f32 %v3395, %v3407
    %v3412 = vmul.f32 %v3408, 1.442695
    %v3413 = vpow.pop %v3412
    %v3414 = vmul.f32 %v3409, 1.442695
    %v3415 = vpow.pop %v3414
    %v3416 = vmul.f32 %v3410, 1.442695
    %v3417 = vpow.pop %v3416
    %v3418 = vmul.f32 %v3411, 1.442695
    %v3419 = vpow.pop %v3418
    %v3420 = vsel %vm551, %v3413, 0.0
    %3421 = vadd.xlane.f32.xlu0 %v3420
    %v3422 = vpop.xlane.xlu0 %3421
    %v3423 = vsel %vm551, %v3415, 0.0
    %3424 = vadd.xlane.f32.xlu0 %v3423
    %v3425 = vpop.xlane.xlu0 %3424
    %v3426 = vsel %vm551, %v3417, 0.0
    %3427 = vadd.xlane.f32.xlu0 %v3426
    %v3428 = vpop.xlane.xlu0 %3427
    %v3429 = vsel %vm551, %v3419, 0.0
    %3430 = vadd.xlane.f32.xlu0 %v3429
    %v3431 = vpop.xlane.xlu0 %3430
    %v3432 = vrcp.pop %v3422
    %v3433 = vrcp.pop %v3425
    %v3434 = vrcp.pop %v3428
    %v3435 = vrcp.pop %v3431
    %v3436 = vmul.f32 %v3413, %v3432
    %v3437 = vmul.f32 %v3415, %v3433
    %v3438 = vmul.f32 %v3417, %v3434
    %v3439 = vmul.f32 %v3419, %v3435
    %v3440 = vpack.c.bf16 %v3436, %v3436
    %v3441 = vpack.c.bf16 %v3437, %v3437
    %v3442 = vpack.c.bf16 %v3438, %v3438
    %v3443 = vpack.c.bf16 %v3439, %v3439
    %v3445 = vsel %vm551, %v3440, 0
    %v3448 = vsel %vm603, %v3312, 0
    %3450 = vmatpush.bf16.msra.mxu0 0
    %3451 = vmatpush.bf16.msra.mxu0 0
    %3452 = vmatpush.bf16.msra.mxu0 0
    %3453 = vmatpush.bf16.msra.mxu0 0
    %3454 = vmatpush.bf16.msra.mxu0 0
    %3455 = vmatpush.bf16.msra.mxu0 0
    %3456 = vmatpush.bf16.msra.mxu0 0
    %3457 = vmatpush.bf16.msra.mxu0 %v3448
    %3458 = vmatmul.bf16.gmra.mxu0 %v3445
    %v3459 = vpop.f32.mrf.mxu0
    %v3460 = vadd.f32 0.0, %v3459
    %v3461 = vpop.f32.mrf.mxu0
    %3462 = vdwg.mxu0
    %v3464 = vsel %vm551, %v3441, 0
    %v3467 = vsel %vm603, %v3313, 0
    %3469 = vmatpush.bf16.msra.mxu0 0
    %3470 = vmatpush.bf16.msra.mxu0 0
    %3471 = vmatpush.bf16.msra.mxu0 0
    %3472 = vmatpush.bf16.msra.mxu0 0
    %3473 = vmatpush.bf16.msra.mxu0 0
    %3474 = vmatpush.bf16.msra.mxu0 0
    %3475 = vmatpush.bf16.msra.mxu0 0
    %3476 = vmatpush.bf16.msra.mxu0 %v3467
    %3477 = vmatmul.bf16.gmra.mxu0 %v3464
    %v3478 = vpop.f32.mrf.mxu0
    %v3479 = vadd.f32 0.0, %v3478
    %v3480 = vpop.f32.mrf.mxu0
    %3481 = vdwg.mxu0
    %v3483 = vsel %vm551, %v3442, 0
    %v3486 = vsel %vm603, %v3314, 0
    %3488 = vmatpush.bf16.msra.mxu0 0
    %3489 = vmatpush.bf16.msra.mxu0 0
    %3490 = vmatpush.bf16.msra.mxu0 0
    %3491 = vmatpush.bf16.msra.mxu0 0
    %3492 = vmatpush.bf16.msra.mxu0 0
    %3493 = vmatpush.bf16.msra.mxu0 0
    %3494 = vmatpush.bf16.msra.mxu0 0
    %3495 = vmatpush.bf16.msra.mxu0 %v3486
    %3496 = vmatmul.bf16.gmra.mxu0 %v3483
    %v3497 = vpop.f32.mrf.mxu0
    %v3498 = vadd.f32 0.0, %v3497
    %v3499 = vpop.f32.mrf.mxu0
    %3500 = vdwg.mxu0
    %v3502 = vsel %vm551, %v3443, 0
    %v3505 = vsel %vm603, %v3315, 0
    %3507 = vmatpush.bf16.msra.mxu0 0
    %3508 = vmatpush.bf16.msra.mxu0 0
    %3509 = vmatpush.bf16.msra.mxu0 0
    %3510 = vmatpush.bf16.msra.mxu0 0
    %3511 = vmatpush.bf16.msra.mxu0 0
    %3512 = vmatpush.bf16.msra.mxu0 0
    %3513 = vmatpush.bf16.msra.mxu0 0
    %3514 = vmatpush.bf16.msra.mxu0 %v3505
    %3515 = vmatmul.bf16.gmra.mxu0 %v3502
    %v3516 = vpop.f32.mrf.mxu0
    %v3517 = vadd.f32 0.0, %v3516
    %v3518 = vpop.f32.mrf.mxu0
    %3519 = vdwg.mxu0
    %v3521 = vunpack.c.l.b16 %v3304
    %v3522 = vpack.c.b16 %v3521, %v3521
    %3523 = vrot.lane.b32.xlu0 %v3522, 112
    %v3524 = vpop.permute.xlu0 %3523
    %v3526 = vunpack.c.l.b16 %v3308
    %v3527 = vpack.c.b16 %v3526, %v3526
    %3528 = vrot.lane.b32.xlu0 %v3527, 112
    %v3529 = vpop.permute.xlu0 %3528
    %v3531 = vsel %vm470, %v3524, 0
    %v3534 = vsel %vm470, %v3529, 0
    %3536 = vmatpush.bf16.xpose.msra.mxu0 0
    %3537 = vmatpush.bf16.xpose.msra.mxu0 0
    %3538 = vmatpush.bf16.xpose.msra.mxu0 0
    %3539 = vmatpush.bf16.xpose.msra.mxu0 0
    %3540 = vmatpush.bf16.xpose.msra.mxu0 0
    %3541 = vmatpush.bf16.xpose.msra.mxu0 0
    %3542 = vmatpush.bf16.xpose.msra.mxu0 0
    %3543 = vmatpush.bf16.xpose.msra.mxu0 %v3534
    %3544 = vmatmul.bf16.gmra.mxu0 %v3531
    %v3545 = vpop.f32.mrf.mxu0
    %v3546 = vadd.f32 0.0, %v3545
    %v3547 = vpop.f32.mrf.mxu0
    %3548 = vdwg.mxu0
    %v3550 = vunpack.c.l.b16 %v3305
    %v3551 = vpack.c.b16 %v3550, %v3550
    %3552 = vrot.lane.b32.xlu0 %v3551, 112
    %v3553 = vpop.permute.xlu0 %3552
    %v3555 = vunpack.c.l.b16 %v3309
    %v3556 = vpack.c.b16 %v3555, %v3555
    %3557 = vrot.lane.b32.xlu0 %v3556, 112
    %v3558 = vpop.permute.xlu0 %3557
    %v3560 = vsel %vm470, %v3553, 0
    %v3563 = vsel %vm470, %v3558, 0
    %3565 = vmatpush.bf16.xpose.msra.mxu0 0
    %3566 = vmatpush.bf16.xpose.msra.mxu0 0
    %3567 = vmatpush.bf16.xpose.msra.mxu0 0
    %3568 = vmatpush.bf16.xpose.msra.mxu0 0
    %3569 = vmatpush.bf16.xpose.msra.mxu0 0
    %3570 = vmatpush.bf16.xpose.msra.mxu0 0
    %3571 = vmatpush.bf16.xpose.msra.mxu0 0
    %3572 = vmatpush.bf16.xpose.msra.mxu0 %v3563
    %3573 = vmatmul.bf16.gmra.mxu0 %v3560
    %v3574 = vpop.f32.mrf.mxu0
    %v3575 = vadd.f32 0.0, %v3574
    %v3576 = vpop.f32.mrf.mxu0
    %3577 = vdwg.mxu0
    %v3579 = vunpack.c.l.b16 %v3306
    %v3580 = vpack.c.b16 %v3579, %v3579
    %3581 = vrot.lane.b32.xlu0 %v3580, 112
    %v3582 = vpop.permute.xlu0 %3581
    %v3584 = vunpack.c.l.b16 %v3310
    %v3585 = vpack.c.b16 %v3584, %v3584
    %3586 = vrot.lane.b32.xlu0 %v3585, 112
    %v3587 = vpop.permute.xlu0 %3586
    %v3589 = vsel %vm470, %v3582, 0
    %v3592 = vsel %vm470, %v3587, 0
    %3594 = vmatpush.bf16.xpose.msra.mxu0 0
    %3595 = vmatpush.bf16.xpose.msra.mxu0 0
    %3596 = vmatpush.bf16.xpose.msra.mxu0 0
    %3597 = vmatpush.bf16.xpose.msra.mxu0 0
    %3598 = vmatpush.bf16.xpose.msra.mxu0 0
    %3599 = vmatpush.bf16.xpose.msra.mxu0 0
    %3600 = vmatpush.bf16.xpose.msra.mxu0 0
    %3601 = vmatpush.bf16.xpose.msra.mxu0 %v3592
    %3602 = vmatmul.bf16.gmra.mxu0 %v3589
    %v3603 = vpop.f32.mrf.mxu0
    %v3604 = vadd.f32 0.0, %v3603
    %v3605 = vpop.f32.mrf.mxu0
    %3606 = vdwg.mxu0
    %v3608 = vunpack.c.l.b16 %v3307
    %v3609 = vpack.c.b16 %v3608, %v3608
    %3610 = vrot.lane.b32.xlu0 %v3609, 112
    %v3611 = vpop.permute.xlu0 %3610
    %v3613 = vunpack.c.l.b16 %v3311
    %v3614 = vpack.c.b16 %v3613, %v3613
    %3615 = vrot.lane.b32.xlu0 %v3614, 112
    %v3616 = vpop.permute.xlu0 %3615
    %v3618 = vsel %vm470, %v3611, 0
    %v3621 = vsel %vm470, %v3616, 0
    %3623 = vmatpush.bf16.xpose.msra.mxu0 0
    %3624 = vmatpush.bf16.xpose.msra.mxu0 0
    %3625 = vmatpush.bf16.xpose.msra.mxu0 0
    %3626 = vmatpush.bf16.xpose.msra.mxu0 0
    %3627 = vmatpush.bf16.xpose.msra.mxu0 0
    %3628 = vmatpush.bf16.xpose.msra.mxu0 0
    %3629 = vmatpush.bf16.xpose.msra.mxu0 0
    %3630 = vmatpush.bf16.xpose.msra.mxu0 %v3621
    %3631 = vmatmul.bf16.gmra.mxu0 %v3618
    %v3632 = vpop.f32.mrf.mxu0
    %v3633 = vadd.f32 0.0, %v3632
    %v3634 = vpop.f32.mrf.mxu0
    %3635 = vdwg.mxu0
    %v3636 = vmul.f32 %v3546, 0.25
    %v3637 = vmul.f32 %v3575, 0.25
    %v3638 = vmul.f32 %v3604, 0.25
    %v3639 = vmul.f32 %v3633, 0.25
    %v3640 = vsel %vm551, %v3636, -inf
    %3641 = vmax.xlane.f32.xlu0 %v3640
    %v3642 = vpop.xlane.xlu0 %3641
    %v3643 = vsel %vm551, %v3637, -inf
    %3644 = vmax.xlane.f32.xlu0 %v3643
    %v3645 = vpop.xlane.xlu0 %3644
    %v3646 = vsel %vm551, %v3638, -inf
    %3647 = vmax.xlane.f32.xlu0 %v3646
    %v3648 = vpop.xlane.xlu0 %3647
    %v3649 = vsel %vm551, %v3639, -inf
    %3650 = vmax.xlane.f32.xlu0 %v3649
    %v3651 = vpop.xlane.xlu0 %3650
    %v3652 = vsub.f32 %v3636, %v3642
    %v3653 = vsub.f32 %v3637, %v3645
    %v3654 = vsub.f32 %v3638, %v3648
    %v3655 = vsub.f32 %v3639, %v3651
    %v3656 = vmul.f32 %v3652, 1.442695
    %v3657 = vpow.pop %v3656
    %v3658 = vmul.f32 %v3653, 1.442695
    %v3659 = vpow.pop %v3658
    %v3660 = vmul.f32 %v3654, 1.442695
    %v3661 = vpow.pop %v3660
    %v3662 = vmul.f32 %v3655, 1.442695
    %v3663 = vpow.pop %v3662
    %v3664 = vsel %vm551, %v3657, 0.0
    %3665 = vadd.xlane.f32.xlu0 %v3664
    %v3666 = vpop.xlane.xlu0 %3665
    %v3667 = vsel %vm551, %v3659, 0.0
    %3668 = vadd.xlane.f32.xlu0 %v3667
    %v3669 = vpop.xlane.xlu0 %3668
    %v3670 = vsel %vm551, %v3661, 0.0
    %3671 = vadd.xlane.f32.xlu0 %v3670
    %v3672 = vpop.xlane.xlu0 %3671
    %v3673 = vsel %vm551, %v3663, 0.0
    %3674 = vadd.xlane.f32.xlu0 %v3673
    %v3675 = vpop.xlane.xlu0 %3674
    %v3676 = vrcp.pop %v3666
    %v3677 = vrcp.pop %v3669
    %v3678 = vrcp.pop %v3672
    %v3679 = vrcp.pop %v3675
    %v3680 = vmul.f32 %v3657, %v3676
    %v3681 = vmul.f32 %v3659, %v3677
    %v3682 = vmul.f32 %v3661, %v3678
    %v3683 = vmul.f32 %v3663, %v3679
    %v3684 = vpack.c.bf16 %v3680, %v3680
    %v3685 = vpack.c.bf16 %v3681, %v3681
    %v3686 = vpack.c.bf16 %v3682, %v3682
    %v3687 = vpack.c.bf16 %v3683, %v3683
    %v3689 = vunpack.c.l.b16 %v3312
    %v3690 = vpack.c.b16 %v3689, %v3689
    %3691 = vrot.lane.b32.xlu0 %v3690, 112
    %v3692 = vpop.permute.xlu0 %3691
    %v3694 = vsel %vm551, %v3684, 0
    %v3697 = vsel %vm603, %v3692, 0
    %3699 = vmatpush.bf16.msra.mxu0 0
    %3700 = vmatpush.bf16.msra.mxu0 0
    %3701 = vmatpush.bf16.msra.mxu0 0
    %3702 = vmatpush.bf16.msra.mxu0 0
    %3703 = vmatpush.bf16.msra.mxu0 0
    %3704 = vmatpush.bf16.msra.mxu0 0
    %3705 = vmatpush.bf16.msra.mxu0 0
    %3706 = vmatpush.bf16.msra.mxu0 %v3697
    %3707 = vmatmul.bf16.gmra.mxu0 %v3694
    %v3708 = vpop.f32.mrf.mxu0
    %v3709 = vadd.f32 0.0, %v3708
    %v3710 = vpop.f32.mrf.mxu0
    %3711 = vdwg.mxu0
    %v3713 = vunpack.c.l.b16 %v3313
    %v3714 = vpack.c.b16 %v3713, %v3713
    %3715 = vrot.lane.b32.xlu0 %v3714, 112
    %v3716 = vpop.permute.xlu0 %3715
    %v3718 = vsel %vm551, %v3685, 0
    %v3721 = vsel %vm603, %v3716, 0
    %3723 = vmatpush.bf16.msra.mxu0 0
    %3724 = vmatpush.bf16.msra.mxu0 0
    %3725 = vmatpush.bf16.msra.mxu0 0
    %3726 = vmatpush.bf16.msra.mxu0 0
    %3727 = vmatpush.bf16.msra.mxu0 0
    %3728 = vmatpush.bf16.msra.mxu0 0
    %3729 = vmatpush.bf16.msra.mxu0 0
    %3730 = vmatpush.bf16.msra.mxu0 %v3721
    %3731 = vmatmul.bf16.gmra.mxu0 %v3718
    %v3732 = vpop.f32.mrf.mxu0
    %v3733 = vadd.f32 0.0, %v3732
    %v3734 = vpop.f32.mrf.mxu0
    %3735 = vdwg.mxu0
    %v3737 = vunpack.c.l.b16 %v3314
    %v3738 = vpack.c.b16 %v3737, %v3737
    %3739 = vrot.lane.b32.xlu0 %v3738, 112
    %v3740 = vpop.permute.xlu0 %3739
    %v3742 = vsel %vm551, %v3686, 0
    %v3745 = vsel %vm603, %v3740, 0
    %3747 = vmatpush.bf16.msra.mxu0 0
    %3748 = vmatpush.bf16.msra.mxu0 0
    %3749 = vmatpush.bf16.msra.mxu0 0
    %3750 = vmatpush.bf16.msra.mxu0 0
    %3751 = vmatpush.bf16.msra.mxu0 0
    %3752 = vmatpush.bf16.msra.mxu0 0
    %3753 = vmatpush.bf16.msra.mxu0 0
    %3754 = vmatpush.bf16.msra.mxu0 %v3745
    %3755 = vmatmul.bf16.gmra.mxu0 %v3742
    %v3756 = vpop.f32.mrf.mxu0
    %v3757 = vadd.f32 0.0, %v3756
    %v3758 = vpop.f32.mrf.mxu0
    %3759 = vdwg.mxu0
    %v3761 = vunpack.c.l.b16 %v3315
    %v3762 = vpack.c.b16 %v3761, %v3761
    %3763 = vrot.lane.b32.xlu0 %v3762, 112
    %v3764 = vpop.permute.xlu0 %3763
    %v3766 = vsel %vm551, %v3687, 0
    %v3769 = vsel %vm603, %v3764, 0
    %3771 = vmatpush.bf16.msra.mxu0 0
    %3772 = vmatpush.bf16.msra.mxu0 0
    %3773 = vmatpush.bf16.msra.mxu0 0
    %3774 = vmatpush.bf16.msra.mxu0 0
    %3775 = vmatpush.bf16.msra.mxu0 0
    %3776 = vmatpush.bf16.msra.mxu0 0
    %3777 = vmatpush.bf16.msra.mxu0 0
    %3778 = vmatpush.bf16.msra.mxu0 %v3769
    %3779 = vmatmul.bf16.gmra.mxu0 %v3766
    %v3780 = vpop.f32.mrf.mxu0
    %v3781 = vadd.f32 0.0, %v3780
    %v3782 = vpop.f32.mrf.mxu0
    %3783 = vdwg.mxu0
    %3784 = vrot.lane.b32.xlu0 %v3522, 96
    %v3785 = vpop.permute.xlu0 %3784
    %3786 = vrot.lane.b32.xlu0 %v3527, 96
    %v3787 = vpop.permute.xlu0 %3786
    %v3789 = vsel %vm470, %v3785, 0
    %v3792 = vsel %vm470, %v3787, 0
    %3794 = vmatpush.bf16.xpose.msra.mxu0 0
    %3795 = vmatpush.bf16.xpose.msra.mxu0 0
    %3796 = vmatpush.bf16.xpose.msra.mxu0 0
    %3797 = vmatpush.bf16.xpose.msra.mxu0 0
    %3798 = vmatpush.bf16.xpose.msra.mxu0 0
    %3799 = vmatpush.bf16.xpose.msra.mxu0 0
    %3800 = vmatpush.bf16.xpose.msra.mxu0 0
    %3801 = vmatpush.bf16.xpose.msra.mxu0 %v3792
    %3802 = vmatmul.bf16.gmra.mxu0 %v3789
    %v3803 = vpop.f32.mrf.mxu0
    %v3804 = vadd.f32 0.0, %v3803
    %v3805 = vpop.f32.mrf.mxu0
    %3806 = vdwg.mxu0
    %3807 = vrot.lane.b32.xlu0 %v3551, 96
    %v3808 = vpop.permute.xlu0 %3807
    %3809 = vrot.lane.b32.xlu0 %v3556, 96
    %v3810 = vpop.permute.xlu0 %3809
    %v3812 = vsel %vm470, %v3808, 0
    %v3815 = vsel %vm470, %v3810, 0
    %3817 = vmatpush.bf16.xpose.msra.mxu0 0
    %3818 = vmatpush.bf16.xpose.msra.mxu0 0
    %3819 = vmatpush.bf16.xpose.msra.mxu0 0
    %3820 = vmatpush.bf16.xpose.msra.mxu0 0
    %3821 = vmatpush.bf16.xpose.msra.mxu0 0
    %3822 = vmatpush.bf16.xpose.msra.mxu0 0
    %3823 = vmatpush.bf16.xpose.msra.mxu0 0
    %3824 = vmatpush.bf16.xpose.msra.mxu0 %v3815
    %3825 = vmatmul.bf16.gmra.mxu0 %v3812
    %v3826 = vpop.f32.mrf.mxu0
    %v3827 = vadd.f32 0.0, %v3826
    %v3828 = vpop.f32.mrf.mxu0
    %3829 = vdwg.mxu0
    %3830 = vrot.lane.b32.xlu0 %v3580, 96
    %v3831 = vpop.permute.xlu0 %3830
    %3832 = vrot.lane.b32.xlu0 %v3585, 96
    %v3833 = vpop.permute.xlu0 %3832
    %v3835 = vsel %vm470, %v3831, 0
    %v3838 = vsel %vm470, %v3833, 0
    %3840 = vmatpush.bf16.xpose.msra.mxu0 0
    %3841 = vmatpush.bf16.xpose.msra.mxu0 0
    %3842 = vmatpush.bf16.xpose.msra.mxu0 0
    %3843 = vmatpush.bf16.xpose.msra.mxu0 0
    %3844 = vmatpush.bf16.xpose.msra.mxu0 0
    %3845 = vmatpush.bf16.xpose.msra.mxu0 0
    %3846 = vmatpush.bf16.xpose.msra.mxu0 0
    %3847 = vmatpush.bf16.xpose.msra.mxu0 %v3838
    %3848 = vmatmul.bf16.gmra.mxu0 %v3835
    %v3849 = vpop.f32.mrf.mxu0
    %v3850 = vadd.f32 0.0, %v3849
    %v3851 = vpop.f32.mrf.mxu0
    %3852 = vdwg.mxu0
    %3853 = vrot.lane.b32.xlu0 %v3609, 96
    %v3854 = vpop.permute.xlu0 %3853
    %3855 = vrot.lane.b32.xlu0 %v3614, 96
    %v3856 = vpop.permute.xlu0 %3855
    %v3858 = vsel %vm470, %v3854, 0
    %v3861 = vsel %vm470, %v3856, 0
    %3863 = vmatpush.bf16.xpose.msra.mxu0 0
    %3864 = vmatpush.bf16.xpose.msra.mxu0 0
    %3865 = vmatpush.bf16.xpose.msra.mxu0 0
    %3866 = vmatpush.bf16.xpose.msra.mxu0 0
    %3867 = vmatpush.bf16.xpose.msra.mxu0 0
    %3868 = vmatpush.bf16.xpose.msra.mxu0 0
    %3869 = vmatpush.bf16.xpose.msra.mxu0 0
    %3870 = vmatpush.bf16.xpose.msra.mxu0 %v3861
    %3871 = vmatmul.bf16.gmra.mxu0 %v3858
    %v3872 = vpop.f32.mrf.mxu0
    %v3873 = vadd.f32 0.0, %v3872
    %v3874 = vpop.f32.mrf.mxu0
    %3875 = vdwg.mxu0
    %v3876 = vmul.f32 %v3804, 0.25
    %v3877 = vmul.f32 %v3827, 0.25
    %v3878 = vmul.f32 %v3850, 0.25
    %v3879 = vmul.f32 %v3873, 0.25
    %v3880 = vsel %vm551, %v3876, -inf
    %3881 = vmax.xlane.f32.xlu0 %v3880
    %v3882 = vpop.xlane.xlu0 %3881
    %v3883 = vsel %vm551, %v3877, -inf
    %3884 = vmax.xlane.f32.xlu0 %v3883
    %v3885 = vpop.xlane.xlu0 %3884
    %v3886 = vsel %vm551, %v3878, -inf
    %3887 = vmax.xlane.f32.xlu0 %v3886
    %v3888 = vpop.xlane.xlu0 %3887
    %v3889 = vsel %vm551, %v3879, -inf
    %3890 = vmax.xlane.f32.xlu0 %v3889
    %v3891 = vpop.xlane.xlu0 %3890
    %v3892 = vsub.f32 %v3876, %v3882
    %v3893 = vsub.f32 %v3877, %v3885
    %v3894 = vsub.f32 %v3878, %v3888
    %v3895 = vsub.f32 %v3879, %v3891
    %v3896 = vmul.f32 %v3892, 1.442695
    %v3897 = vpow.pop %v3896
    %v3898 = vmul.f32 %v3893, 1.442695
    %v3899 = vpow.pop %v3898
    %v3900 = vmul.f32 %v3894, 1.442695
    %v3901 = vpow.pop %v3900
    %v3902 = vmul.f32 %v3895, 1.442695
    %v3903 = vpow.pop %v3902
    %v3904 = vsel %vm551, %v3897, 0.0
    %3905 = vadd.xlane.f32.xlu0 %v3904
    %v3906 = vpop.xlane.xlu0 %3905
    %v3907 = vsel %vm551, %v3899, 0.0
    %3908 = vadd.xlane.f32.xlu0 %v3907
    %v3909 = vpop.xlane.xlu0 %3908
    %v3910 = vsel %vm551, %v3901, 0.0
    %3911 = vadd.xlane.f32.xlu0 %v3910
    %v3912 = vpop.xlane.xlu0 %3911
    %v3913 = vsel %vm551, %v3903, 0.0
    %3914 = vadd.xlane.f32.xlu0 %v3913
    %v3915 = vpop.xlane.xlu0 %3914
    %v3916 = vrcp.pop %v3906
    %v3917 = vrcp.pop %v3909
    %v3918 = vrcp.pop %v3912
    %v3919 = vrcp.pop %v3915
    %v3920 = vmul.f32 %v3897, %v3916
    %v3921 = vmul.f32 %v3899, %v3917
    %v3922 = vmul.f32 %v3901, %v3918
    %v3923 = vmul.f32 %v3903, %v3919
    %v3924 = vpack.c.bf16 %v3920, %v3920
    %v3925 = vpack.c.bf16 %v3921, %v3921
    %v3926 = vpack.c.bf16 %v3922, %v3922
    %v3927 = vpack.c.bf16 %v3923, %v3923
    %3928 = vrot.lane.b32.xlu0 %v3690, 96
    %v3929 = vpop.permute.xlu0 %3928
    %v3931 = vsel %vm551, %v3924, 0
    %v3934 = vsel %vm603, %v3929, 0
    %3936 = vmatpush.bf16.msra.mxu0 0
    %3937 = vmatpush.bf16.msra.mxu0 0
    %3938 = vmatpush.bf16.msra.mxu0 0
    %3939 = vmatpush.bf16.msra.mxu0 0
    %3940 = vmatpush.bf16.msra.mxu0 0
    %3941 = vmatpush.bf16.msra.mxu0 0
    %3942 = vmatpush.bf16.msra.mxu0 0
    %3943 = vmatpush.bf16.msra.mxu0 %v3934
    %3944 = vmatmul.bf16.gmra.mxu0 %v3931
    %v3945 = vpop.f32.mrf.mxu0
    %v3946 = vadd.f32 0.0, %v3945
    %v3947 = vpop.f32.mrf.mxu0
    %3948 = vdwg.mxu0
    %3949 = vrot.lane.b32.xlu0 %v3714, 96
    %v3950 = vpop.permute.xlu0 %3949
    %v3952 = vsel %vm551, %v3925, 0
    %v3955 = vsel %vm603, %v3950, 0
    %3957 = vmatpush.bf16.msra.mxu0 0
    %3958 = vmatpush.bf16.msra.mxu0 0
    %3959 = vmatpush.bf16.msra.mxu0 0
    %3960 = vmatpush.bf16.msra.mxu0 0
    %3961 = vmatpush.bf16.msra.mxu0 0
    %3962 = vmatpush.bf16.msra.mxu0 0
    %3963 = vmatpush.bf16.msra.mxu0 0
    %3964 = vmatpush.bf16.msra.mxu0 %v3955
    %3965 = vmatmul.bf16.gmra.mxu0 %v3952
    %v3966 = vpop.f32.mrf.mxu0
    %v3967 = vadd.f32 0.0, %v3966
    %v3968 = vpop.f32.mrf.mxu0
    %3969 = vdwg.mxu0
    %3970 = vrot.lane.b32.xlu0 %v3738, 96
    %v3971 = vpop.permute.xlu0 %3970
    %v3973 = vsel %vm551, %v3926, 0
    %v3976 = vsel %vm603, %v3971, 0
    %3978 = vmatpush.bf16.msra.mxu0 0
    %3979 = vmatpush.bf16.msra.mxu0 0
    %3980 = vmatpush.bf16.msra.mxu0 0
    %3981 = vmatpush.bf16.msra.mxu0 0
    %3982 = vmatpush.bf16.msra.mxu0 0
    %3983 = vmatpush.bf16.msra.mxu0 0
    %3984 = vmatpush.bf16.msra.mxu0 0
    %3985 = vmatpush.bf16.msra.mxu0 %v3976
    %3986 = vmatmul.bf16.gmra.mxu0 %v3973
    %v3987 = vpop.f32.mrf.mxu0
    %v3988 = vadd.f32 0.0, %v3987
    %v3989 = vpop.f32.mrf.mxu0
    %3990 = vdwg.mxu0
    %3991 = vrot.lane.b32.xlu0 %v3762, 96
    %v3992 = vpop.permute.xlu0 %3991
    %v3994 = vsel %vm551, %v3927, 0
    %v3997 = vsel %vm603, %v3992, 0
    %3999 = vmatpush.bf16.msra.mxu0 0
    %4000 = vmatpush.bf16.msra.mxu0 0
    %4001 = vmatpush.bf16.msra.mxu0 0
    %4002 = vmatpush.bf16.msra.mxu0 0
    %4003 = vmatpush.bf16.msra.mxu0 0
    %4004 = vmatpush.bf16.msra.mxu0 0
    %4005 = vmatpush.bf16.msra.mxu0 0
    %4006 = vmatpush.bf16.msra.mxu0 %v3997
    %4007 = vmatmul.bf16.gmra.mxu0 %v3994
    %v4008 = vpop.f32.mrf.mxu0
    %v4009 = vadd.f32 0.0, %v4008
    %v4010 = vpop.f32.mrf.mxu0
    %4011 = vdwg.mxu0
    %4012 = vrot.lane.b32.xlu0 %v3522, 80
    %v4013 = vpop.permute.xlu0 %4012
    %4014 = vrot.lane.b32.xlu0 %v3527, 80
    %v4015 = vpop.permute.xlu0 %4014
    %v4017 = vsel %vm470, %v4013, 0
    %v4020 = vsel %vm470, %v4015, 0
    %4022 = vmatpush.bf16.xpose.msra.mxu0 0
    %4023 = vmatpush.bf16.xpose.msra.mxu0 0
    %4024 = vmatpush.bf16.xpose.msra.mxu0 0
    %4025 = vmatpush.bf16.xpose.msra.mxu0 0
    %4026 = vmatpush.bf16.xpose.msra.mxu0 0
    %4027 = vmatpush.bf16.xpose.msra.mxu0 0
    %4028 = vmatpush.bf16.xpose.msra.mxu0 0
    %4029 = vmatpush.bf16.xpose.msra.mxu0 %v4020
    %4030 = vmatmul.bf16.gmra.mxu0 %v4017
    %v4031 = vpop.f32.mrf.mxu0
    %v4032 = vadd.f32 0.0, %v4031
    %v4033 = vpop.f32.mrf.mxu0
    %4034 = vdwg.mxu0
    %4035 = vrot.lane.b32.xlu0 %v3551, 80
    %v4036 = vpop.permute.xlu0 %4035
    %4037 = vrot.lane.b32.xlu0 %v3556, 80
    %v4038 = vpop.permute.xlu0 %4037
    %v4040 = vsel %vm470, %v4036, 0
    %v4043 = vsel %vm470, %v4038, 0
    %4045 = vmatpush.bf16.xpose.msra.mxu0 0
    %4046 = vmatpush.bf16.xpose.msra.mxu0 0
    %4047 = vmatpush.bf16.xpose.msra.mxu0 0
    %4048 = vmatpush.bf16.xpose.msra.mxu0 0
    %4049 = vmatpush.bf16.xpose.msra.mxu0 0
    %4050 = vmatpush.bf16.xpose.msra.mxu0 0
    %4051 = vmatpush.bf16.xpose.msra.mxu0 0
    %4052 = vmatpush.bf16.xpose.msra.mxu0 %v4043
    %4053 = vmatmul.bf16.gmra.mxu0 %v4040
    %v4054 = vpop.f32.mrf.mxu0
    %v4055 = vadd.f32 0.0, %v4054
    %v4056 = vpop.f32.mrf.mxu0
    %4057 = vdwg.mxu0
    %4058 = vrot.lane.b32.xlu0 %v3580, 80
    %v4059 = vpop.permute.xlu0 %4058
    %4060 = vrot.lane.b32.xlu0 %v3585, 80
    %v4061 = vpop.permute.xlu0 %4060
    %v4063 = vsel %vm470, %v4059, 0
    %v4066 = vsel %vm470, %v4061, 0
    %4068 = vmatpush.bf16.xpose.msra.mxu0 0
    %4069 = vmatpush.bf16.xpose.msra.mxu0 0
    %4070 = vmatpush.bf16.xpose.msra.mxu0 0
    %4071 = vmatpush.bf16.xpose.msra.mxu0 0
    %4072 = vmatpush.bf16.xpose.msra.mxu0 0
    %4073 = vmatpush.bf16.xpose.msra.mxu0 0
    %4074 = vmatpush.bf16.xpose.msra.mxu0 0
    %4075 = vmatpush.bf16.xpose.msra.mxu0 %v4066
    %4076 = vmatmul.bf16.gmra.mxu0 %v4063
    %v4077 = vpop.f32.mrf.mxu0
    %v4078 = vadd.f32 0.0, %v4077
    %v4079 = vpop.f32.mrf.mxu0
    %4080 = vdwg.mxu0
    %4081 = vrot.lane.b32.xlu0 %v3609, 80
    %v4082 = vpop.permute.xlu0 %4081
    %4083 = vrot.lane.b32.xlu0 %v3614, 80
    %v4084 = vpop.permute.xlu0 %4083
    %v4086 = vsel %vm470, %v4082, 0
    %v4089 = vsel %vm470, %v4084, 0
    %4091 = vmatpush.bf16.xpose.msra.mxu0 0
    %4092 = vmatpush.bf16.xpose.msra.mxu0 0
    %4093 = vmatpush.bf16.xpose.msra.mxu0 0
    %4094 = vmatpush.bf16.xpose.msra.mxu0 0
    %4095 = vmatpush.bf16.xpose.msra.mxu0 0
    %4096 = vmatpush.bf16.xpose.msra.mxu0 0
    %4097 = vmatpush.bf16.xpose.msra.mxu0 0
    %4098 = vmatpush.bf16.xpose.msra.mxu0 %v4089
    %4099 = vmatmul.bf16.gmra.mxu0 %v4086
    %v4100 = vpop.f32.mrf.mxu0
    %v4101 = vadd.f32 0.0, %v4100
    %v4102 = vpop.f32.mrf.mxu0
    %4103 = vdwg.mxu0
    %v4104 = vmul.f32 %v4032, 0.25
    %v4105 = vmul.f32 %v4055, 0.25
    %v4106 = vmul.f32 %v4078, 0.25
    %v4107 = vmul.f32 %v4101, 0.25
    %v4108 = vsel %vm551, %v4104, -inf
    %4109 = vmax.xlane.f32.xlu0 %v4108
    %v4110 = vpop.xlane.xlu0 %4109
    %v4111 = vsel %vm551, %v4105, -inf
    %4112 = vmax.xlane.f32.xlu0 %v4111
    %v4113 = vpop.xlane.xlu0 %4112
    %v4114 = vsel %vm551, %v4106, -inf
    %4115 = vmax.xlane.f32.xlu0 %v4114
    %v4116 = vpop.xlane.xlu0 %4115
    %v4117 = vsel %vm551, %v4107, -inf
    %4118 = vmax.xlane.f32.xlu0 %v4117
    %v4119 = vpop.xlane.xlu0 %4118
    %v4120 = vsub.f32 %v4104, %v4110
    %v4121 = vsub.f32 %v4105, %v4113
    %v4122 = vsub.f32 %v4106, %v4116
    %v4123 = vsub.f32 %v4107, %v4119
    %v4124 = vmul.f32 %v4120, 1.442695
    %v4125 = vpow.pop %v4124
    %v4126 = vmul.f32 %v4121, 1.442695
    %v4127 = vpow.pop %v4126
    %v4128 = vmul.f32 %v4122, 1.442695
    %v4129 = vpow.pop %v4128
    %v4130 = vmul.f32 %v4123, 1.442695
    %v4131 = vpow.pop %v4130
    %v4132 = vsel %vm551, %v4125, 0.0
    %4133 = vadd.xlane.f32.xlu0 %v4132
    %v4134 = vpop.xlane.xlu0 %4133
    %v4135 = vsel %vm551, %v4127, 0.0
    %4136 = vadd.xlane.f32.xlu0 %v4135
    %v4137 = vpop.xlane.xlu0 %4136
    %v4138 = vsel %vm551, %v4129, 0.0
    %4139 = vadd.xlane.f32.xlu0 %v4138
    %v4140 = vpop.xlane.xlu0 %4139
    %v4141 = vsel %vm551, %v4131, 0.0
    %4142 = vadd.xlane.f32.xlu0 %v4141
    %v4143 = vpop.xlane.xlu0 %4142
    %v4144 = vrcp.pop %v4134
    %v4145 = vrcp.pop %v4137
    %v4146 = vrcp.pop %v4140
    %v4147 = vrcp.pop %v4143
    %v4148 = vmul.f32 %v4125, %v4144
    %v4149 = vmul.f32 %v4127, %v4145
    %v4150 = vmul.f32 %v4129, %v4146
    %v4151 = vmul.f32 %v4131, %v4147
    %v4152 = vpack.c.bf16 %v4148, %v4148
    %v4153 = vpack.c.bf16 %v4149, %v4149
    %v4154 = vpack.c.bf16 %v4150, %v4150
    %v4155 = vpack.c.bf16 %v4151, %v4151
    %4156 = vrot.lane.b32.xlu0 %v3690, 80
    %v4157 = vpop.permute.xlu0 %4156
    %v4159 = vsel %vm551, %v4152, 0
    %v4162 = vsel %vm603, %v4157, 0
    %4164 = vmatpush.bf16.msra.mxu0 0
    %4165 = vmatpush.bf16.msra.mxu0 0
    %4166 = vmatpush.bf16.msra.mxu0 0
    %4167 = vmatpush.bf16.msra.mxu0 0
    %4168 = vmatpush.bf16.msra.mxu0 0
    %4169 = vmatpush.bf16.msra.mxu0 0
    %4170 = vmatpush.bf16.msra.mxu0 0
    %4171 = vmatpush.bf16.msra.mxu0 %v4162
    %4172 = vmatmul.bf16.gmra.mxu0 %v4159
    %v4173 = vpop.f32.mrf.mxu0
    %v4174 = vadd.f32 0.0, %v4173
    %v4175 = vpop.f32.mrf.mxu0
    %4176 = vdwg.mxu0
    %4177 = vrot.lane.b32.xlu0 %v3714, 80
    %v4178 = vpop.permute.xlu0 %4177
    %v4180 = vsel %vm551, %v4153, 0
    %v4183 = vsel %vm603, %v4178, 0
    %4185 = vmatpush.bf16.msra.mxu0 0
    %4186 = vmatpush.bf16.msra.mxu0 0
    %4187 = vmatpush.bf16.msra.mxu0 0
    %4188 = vmatpush.bf16.msra.mxu0 0
    %4189 = vmatpush.bf16.msra.mxu0 0
    %4190 = vmatpush.bf16.msra.mxu0 0
    %4191 = vmatpush.bf16.msra.mxu0 0
    %4192 = vmatpush.bf16.msra.mxu0 %v4183
    %4193 = vmatmul.bf16.gmra.mxu0 %v4180
    %v4194 = vpop.f32.mrf.mxu0
    %v4195 = vadd.f32 0.0, %v4194
    %v4196 = vpop.f32.mrf.mxu0
    %4197 = vdwg.mxu0
    %4198 = vrot.lane.b32.xlu0 %v3738, 80
    %v4199 = vpop.permute.xlu0 %4198
    %v4201 = vsel %vm551, %v4154, 0
    %v4204 = vsel %vm603, %v4199, 0
    %4206 = vmatpush.bf16.msra.mxu0 0
    %4207 = vmatpush.bf16.msra.mxu0 0
    %4208 = vmatpush.bf16.msra.mxu0 0
    %4209 = vmatpush.bf16.msra.mxu0 0
    %4210 = vmatpush.bf16.msra.mxu0 0
    %4211 = vmatpush.bf16.msra.mxu0 0
    %4212 = vmatpush.bf16.msra.mxu0 0
    %4213 = vmatpush.bf16.msra.mxu0 %v4204
    %4214 = vmatmul.bf16.gmra.mxu0 %v4201
    %v4215 = vpop.f32.mrf.mxu0
    %v4216 = vadd.f32 0.0, %v4215
    %v4217 = vpop.f32.mrf.mxu0
    %4218 = vdwg.mxu0
    %4219 = vrot.lane.b32.xlu0 %v3762, 80
    %v4220 = vpop.permute.xlu0 %4219
    %v4222 = vsel %vm551, %v4155, 0
    %v4225 = vsel %vm603, %v4220, 0
    %4227 = vmatpush.bf16.msra.mxu0 0
    %4228 = vmatpush.bf16.msra.mxu0 0
    %4229 = vmatpush.bf16.msra.mxu0 0
    %4230 = vmatpush.bf16.msra.mxu0 0
    %4231 = vmatpush.bf16.msra.mxu0 0
    %4232 = vmatpush.bf16.msra.mxu0 0
    %4233 = vmatpush.bf16.msra.mxu0 0
    %4234 = vmatpush.bf16.msra.mxu0 %v4225
    %4235 = vmatmul.bf16.gmra.mxu0 %v4222
    %v4236 = vpop.f32.mrf.mxu0
    %v4237 = vadd.f32 0.0, %v4236
    %v4238 = vpop.f32.mrf.mxu0
    %4239 = vdwg.mxu0
    %4240 = vrot.lane.b32.xlu0 %v3522, 64
    %v4241 = vpop.permute.xlu0 %4240
    %4242 = vrot.lane.b32.xlu0 %v3527, 64
    %v4243 = vpop.permute.xlu0 %4242
    %v4245 = vsel %vm470, %v4241, 0
    %v4248 = vsel %vm470, %v4243, 0
    %4250 = vmatpush.bf16.xpose.msra.mxu0 0
    %4251 = vmatpush.bf16.xpose.msra.mxu0 0
    %4252 = vmatpush.bf16.xpose.msra.mxu0 0
    %4253 = vmatpush.bf16.xpose.msra.mxu0 0
    %4254 = vmatpush.bf16.xpose.msra.mxu0 0
    %4255 = vmatpush.bf16.xpose.msra.mxu0 0
    %4256 = vmatpush.bf16.xpose.msra.mxu0 0
    %4257 = vmatpush.bf16.xpose.msra.mxu0 %v4248
    %4258 = vmatmul.bf16.gmra.mxu0 %v4245
    %v4259 = vpop.f32.mrf.mxu0
    %v4260 = vadd.f32 0.0, %v4259
    %v4261 = vpop.f32.mrf.mxu0
    %4262 = vdwg.mxu0
    %4263 = vrot.lane.b32.xlu0 %v3551, 64
    %v4264 = vpop.permute.xlu0 %4263
    %4265 = vrot.lane.b32.xlu0 %v3556, 64
    %v4266 = vpop.permute.xlu0 %4265
    %v4268 = vsel %vm470, %v4264, 0
    %v4271 = vsel %vm470, %v4266, 0
    %4273 = vmatpush.bf16.xpose.msra.mxu0 0
    %4274 = vmatpush.bf16.xpose.msra.mxu0 0
    %4275 = vmatpush.bf16.xpose.msra.mxu0 0
    %4276 = vmatpush.bf16.xpose.msra.mxu0 0
    %4277 = vmatpush.bf16.xpose.msra.mxu0 0
    %4278 = vmatpush.bf16.xpose.msra.mxu0 0
    %4279 = vmatpush.bf16.xpose.msra.mxu0 0
    %4280 = vmatpush.bf16.xpose.msra.mxu0 %v4271
    %4281 = vmatmul.bf16.gmra.mxu0 %v4268
    %v4282 = vpop.f32.mrf.mxu0
    %v4283 = vadd.f32 0.0, %v4282
    %v4284 = vpop.f32.mrf.mxu0
    %4285 = vdwg.mxu0
    %4286 = vrot.lane.b32.xlu0 %v3580, 64
    %v4287 = vpop.permute.xlu0 %4286
    %4288 = vrot.lane.b32.xlu0 %v3585, 64
    %v4289 = vpop.permute.xlu0 %4288
    %v4291 = vsel %vm470, %v4287, 0
    %v4294 = vsel %vm470, %v4289, 0
    %4296 = vmatpush.bf16.xpose.msra.mxu0 0
    %4297 = vmatpush.bf16.xpose.msra.mxu0 0
    %4298 = vmatpush.bf16.xpose.msra.mxu0 0
    %4299 = vmatpush.bf16.xpose.msra.mxu0 0
    %4300 = vmatpush.bf16.xpose.msra.mxu0 0
    %4301 = vmatpush.bf16.xpose.msra.mxu0 0
    %4302 = vmatpush.bf16.xpose.msra.mxu0 0
    %4303 = vmatpush.bf16.xpose.msra.mxu0 %v4294
    %4304 = vmatmul.bf16.gmra.mxu0 %v4291
    %v4305 = vpop.f32.mrf.mxu0
    %v4306 = vadd.f32 0.0, %v4305
    %v4307 = vpop.f32.mrf.mxu0
    %4308 = vdwg.mxu0
    %4309 = vrot.lane.b32.xlu0 %v3609, 64
    %v4310 = vpop.permute.xlu0 %4309
    %4311 = vrot.lane.b32.xlu0 %v3614, 64
    %v4312 = vpop.permute.xlu0 %4311
    %v4314 = vsel %vm470, %v4310, 0
    %v4317 = vsel %vm470, %v4312, 0
    %4319 = vmatpush.bf16.xpose.msra.mxu0 0
    %4320 = vmatpush.bf16.xpose.msra.mxu0 0
    %4321 = vmatpush.bf16.xpose.msra.mxu0 0
    %4322 = vmatpush.bf16.xpose.msra.mxu0 0
    %4323 = vmatpush.bf16.xpose.msra.mxu0 0
    %4324 = vmatpush.bf16.xpose.msra.mxu0 0
    %4325 = vmatpush.bf16.xpose.msra.mxu0 0
    %4326 = vmatpush.bf16.xpose.msra.mxu0 %v4317
    %4327 = vmatmul.bf16.gmra.mxu0 %v4314
    %v4328 = vpop.f32.mrf.mxu0
    %v4329 = vadd.f32 0.0, %v4328
    %v4330 = vpop.f32.mrf.mxu0
    %4331 = vdwg.mxu0
    %v4332 = vmul.f32 %v4260, 0.25
    %v4333 = vmul.f32 %v4283, 0.25
    %v4334 = vmul.f32 %v4306, 0.25
    %v4335 = vmul.f32 %v4329, 0.25
    %v4336 = vsel %vm551, %v4332, -inf
    %4337 = vmax.xlane.f32.xlu0 %v4336
    %v4338 = vpop.xlane.xlu0 %4337
    %v4339 = vsel %vm551, %v4333, -inf
    %4340 = vmax.xlane.f32.xlu0 %v4339
    %v4341 = vpop.xlane.xlu0 %4340
    %v4342 = vsel %vm551, %v4334, -inf
    %4343 = vmax.xlane.f32.xlu0 %v4342
    %v4344 = vpop.xlane.xlu0 %4343
    %v4345 = vsel %vm551, %v4335, -inf
    %4346 = vmax.xlane.f32.xlu0 %v4345
    %v4347 = vpop.xlane.xlu0 %4346
    %v4348 = vsub.f32 %v4332, %v4338
    %v4349 = vsub.f32 %v4333, %v4341
    %v4350 = vsub.f32 %v4334, %v4344
    %v4351 = vsub.f32 %v4335, %v4347
    %v4352 = vmul.f32 %v4348, 1.442695
    %v4353 = vpow.pop %v4352
    %v4354 = vmul.f32 %v4349, 1.442695
    %v4355 = vpow.pop %v4354
    %v4356 = vmul.f32 %v4350, 1.442695
    %v4357 = vpow.pop %v4356
    %v4358 = vmul.f32 %v4351, 1.442695
    %v4359 = vpow.pop %v4358
    %v4360 = vsel %vm551, %v4353, 0.0
    %4361 = vadd.xlane.f32.xlu0 %v4360
    %v4362 = vpop.xlane.xlu0 %4361
    %v4363 = vsel %vm551, %v4355, 0.0
    %4364 = vadd.xlane.f32.xlu0 %v4363
    %v4365 = vpop.xlane.xlu0 %4364
    %v4366 = vsel %vm551, %v4357, 0.0
    %4367 = vadd.xlane.f32.xlu0 %v4366
    %v4368 = vpop.xlane.xlu0 %4367
    %v4369 = vsel %vm551, %v4359, 0.0
    %4370 = vadd.xlane.f32.xlu0 %v4369
    %v4371 = vpop.xlane.xlu0 %4370
    %v4372 = vrcp.pop %v4362
    %v4373 = vrcp.pop %v4365
    %v4374 = vrcp.pop %v4368
    %v4375 = vrcp.pop %v4371
    %v4376 = vmul.f32 %v4353, %v4372
    %v4377 = vmul.f32 %v4355, %v4373
    %v4378 = vmul.f32 %v4357, %v4374
    %v4379 = vmul.f32 %v4359, %v4375
    %v4380 = vpack.c.bf16 %v4376, %v4376
    %v4381 = vpack.c.bf16 %v4377, %v4377
    %v4382 = vpack.c.bf16 %v4378, %v4378
    %v4383 = vpack.c.bf16 %v4379, %v4379
    %4384 = vrot.lane.b32.xlu0 %v3690, 64
    %v4385 = vpop.permute.xlu0 %4384
    %v4387 = vsel %vm551, %v4380, 0
    %v4390 = vsel %vm603, %v4385, 0
    %4392 = vmatpush.bf16.msra.mxu0 0
    %4393 = vmatpush.bf16.msra.mxu0 0
    %4394 = vmatpush.bf16.msra.mxu0 0
    %4395 = vmatpush.bf16.msra.mxu0 0
    %4396 = vmatpush.bf16.msra.mxu0 0
    %4397 = vmatpush.bf16.msra.mxu0 0
    %4398 = vmatpush.bf16.msra.mxu0 0
    %4399 = vmatpush.bf16.msra.mxu0 %v4390
    %4400 = vmatmul.bf16.gmra.mxu0 %v4387
    %v4401 = vpop.f32.mrf.mxu0
    %v4402 = vadd.f32 0.0, %v4401
    %v4403 = vpop.f32.mrf.mxu0
    %4404 = vdwg.mxu0
    %4405 = vrot.lane.b32.xlu0 %v3714, 64
    %v4406 = vpop.permute.xlu0 %4405
    %v4408 = vsel %vm551, %v4381, 0
    %v4411 = vsel %vm603, %v4406, 0
    %4413 = vmatpush.bf16.msra.mxu0 0
    %4414 = vmatpush.bf16.msra.mxu0 0
    %4415 = vmatpush.bf16.msra.mxu0 0
    %4416 = vmatpush.bf16.msra.mxu0 0
    %4417 = vmatpush.bf16.msra.mxu0 0
    %4418 = vmatpush.bf16.msra.mxu0 0
    %4419 = vmatpush.bf16.msra.mxu0 0
    %4420 = vmatpush.bf16.msra.mxu0 %v4411
    %4421 = vmatmul.bf16.gmra.mxu0 %v4408
    %v4422 = vpop.f32.mrf.mxu0
    %v4423 = vadd.f32 0.0, %v4422
    %v4424 = vpop.f32.mrf.mxu0
    %4425 = vdwg.mxu0
    %4426 = vrot.lane.b32.xlu0 %v3738, 64
    %v4427 = vpop.permute.xlu0 %4426
    %v4429 = vsel %vm551, %v4382, 0
    %v4432 = vsel %vm603, %v4427, 0
    %4434 = vmatpush.bf16.msra.mxu0 0
    %4435 = vmatpush.bf16.msra.mxu0 0
    %4436 = vmatpush.bf16.msra.mxu0 0
    %4437 = vmatpush.bf16.msra.mxu0 0
    %4438 = vmatpush.bf16.msra.mxu0 0
    %4439 = vmatpush.bf16.msra.mxu0 0
    %4440 = vmatpush.bf16.msra.mxu0 0
    %4441 = vmatpush.bf16.msra.mxu0 %v4432
    %4442 = vmatmul.bf16.gmra.mxu0 %v4429
    %v4443 = vpop.f32.mrf.mxu0
    %v4444 = vadd.f32 0.0, %v4443
    %v4445 = vpop.f32.mrf.mxu0
    %4446 = vdwg.mxu0
    %4447 = vrot.lane.b32.xlu0 %v3762, 64
    %v4448 = vpop.permute.xlu0 %4447
    %v4450 = vsel %vm551, %v4383, 0
    %v4453 = vsel %vm603, %v4448, 0
    %4455 = vmatpush.bf16.msra.mxu0 0
    %4456 = vmatpush.bf16.msra.mxu0 0
    %4457 = vmatpush.bf16.msra.mxu0 0
    %4458 = vmatpush.bf16.msra.mxu0 0
    %4459 = vmatpush.bf16.msra.mxu0 0
    %4460 = vmatpush.bf16.msra.mxu0 0
    %4461 = vmatpush.bf16.msra.mxu0 0
    %4462 = vmatpush.bf16.msra.mxu0 %v4453
    %4463 = vmatmul.bf16.gmra.mxu0 %v4450
    %v4464 = vpop.f32.mrf.mxu0
    %v4465 = vadd.f32 0.0, %v4464
    %v4466 = vpop.f32.mrf.mxu0
    %4467 = vdwg.mxu0
    %4468 = vrot.lane.b32.xlu0 %v3522, 48
    %v4469 = vpop.permute.xlu0 %4468
    %4470 = vrot.lane.b32.xlu0 %v3527, 48
    %v4471 = vpop.permute.xlu0 %4470
    %v4473 = vsel %vm470, %v4469, 0
    %v4476 = vsel %vm470, %v4471, 0
    %4478 = vmatpush.bf16.xpose.msra.mxu0 0
    %4479 = vmatpush.bf16.xpose.msra.mxu0 0
    %4480 = vmatpush.bf16.xpose.msra.mxu0 0
    %4481 = vmatpush.bf16.xpose.msra.mxu0 0
    %4482 = vmatpush.bf16.xpose.msra.mxu0 0
    %4483 = vmatpush.bf16.xpose.msra.mxu0 0
    %4484 = vmatpush.bf16.xpose.msra.mxu0 0
    %4485 = vmatpush.bf16.xpose.msra.mxu0 %v4476
    %4486 = vmatmul.bf16.gmra.mxu0 %v4473
    %v4487 = vpop.f32.mrf.mxu0
    %v4488 = vadd.f32 0.0, %v4487
    %v4489 = vpop.f32.mrf.mxu0
    %4490 = vdwg.mxu0
    %4491 = vrot.lane.b32.xlu0 %v3551, 48
    %v4492 = vpop.permute.xlu0 %4491
    %4493 = vrot.lane.b32.xlu0 %v3556, 48
    %v4494 = vpop.permute.xlu0 %4493
    %v4496 = vsel %vm470, %v4492, 0
    %v4499 = vsel %vm470, %v4494, 0
    %4501 = vmatpush.bf16.xpose.msra.mxu0 0
    %4502 = vmatpush.bf16.xpose.msra.mxu0 0
    %4503 = vmatpush.bf16.xpose.msra.mxu0 0
    %4504 = vmatpush.bf16.xpose.msra.mxu0 0
    %4505 = vmatpush.bf16.xpose.msra.mxu0 0
    %4506 = vmatpush.bf16.xpose.msra.mxu0 0
    %4507 = vmatpush.bf16.xpose.msra.mxu0 0
    %4508 = vmatpush.bf16.xpose.msra.mxu0 %v4499
    %4509 = vmatmul.bf16.gmra.mxu0 %v4496
    %v4510 = vpop.f32.mrf.mxu0
    %v4511 = vadd.f32 0.0, %v4510
    %v4512 = vpop.f32.mrf.mxu0
    %4513 = vdwg.mxu0
    %4514 = vrot.lane.b32.xlu0 %v3580, 48
    %v4515 = vpop.permute.xlu0 %4514
    %4516 = vrot.lane.b32.xlu0 %v3585, 48
    %v4517 = vpop.permute.xlu0 %4516
    %v4519 = vsel %vm470, %v4515, 0
    %v4522 = vsel %vm470, %v4517, 0
    %4524 = vmatpush.bf16.xpose.msra.mxu0 0
    %4525 = vmatpush.bf16.xpose.msra.mxu0 0
    %4526 = vmatpush.bf16.xpose.msra.mxu0 0
    %4527 = vmatpush.bf16.xpose.msra.mxu0 0
    %4528 = vmatpush.bf16.xpose.msra.mxu0 0
    %4529 = vmatpush.bf16.xpose.msra.mxu0 0
    %4530 = vmatpush.bf16.xpose.msra.mxu0 0
    %4531 = vmatpush.bf16.xpose.msra.mxu0 %v4522
    %4532 = vmatmul.bf16.gmra.mxu0 %v4519
    %v4533 = vpop.f32.mrf.mxu0
    %v4534 = vadd.f32 0.0, %v4533
    %v4535 = vpop.f32.mrf.mxu0
    %4536 = vdwg.mxu0
    %4537 = vrot.lane.b32.xlu0 %v3609, 48
    %v4538 = vpop.permute.xlu0 %4537
    %4539 = vrot.lane.b32.xlu0 %v3614, 48
    %v4540 = vpop.permute.xlu0 %4539
    %v4542 = vsel %vm470, %v4538, 0
    %v4545 = vsel %vm470, %v4540, 0
    %4547 = vmatpush.bf16.xpose.msra.mxu0 0
    %4548 = vmatpush.bf16.xpose.msra.mxu0 0
    %4549 = vmatpush.bf16.xpose.msra.mxu0 0
    %4550 = vmatpush.bf16.xpose.msra.mxu0 0
    %4551 = vmatpush.bf16.xpose.msra.mxu0 0
    %4552 = vmatpush.bf16.xpose.msra.mxu0 0
    %4553 = vmatpush.bf16.xpose.msra.mxu0 0
    %4554 = vmatpush.bf16.xpose.msra.mxu0 %v4545
    %4555 = vmatmul.bf16.gmra.mxu0 %v4542
    %v4556 = vpop.f32.mrf.mxu0
    %v4557 = vadd.f32 0.0, %v4556
    %v4558 = vpop.f32.mrf.mxu0
    %4559 = vdwg.mxu0
    %v4560 = vmul.f32 %v4488, 0.25
    %v4561 = vmul.f32 %v4511, 0.25
    %v4562 = vmul.f32 %v4534, 0.25
    %v4563 = vmul.f32 %v4557, 0.25
    %v4564 = vsel %vm551, %v4560, -inf
    %4565 = vmax.xlane.f32.xlu0 %v4564
    %v4566 = vpop.xlane.xlu0 %4565
    %v4567 = vsel %vm551, %v4561, -inf
    %4568 = vmax.xlane.f32.xlu0 %v4567
    %v4569 = vpop.xlane.xlu0 %4568
    %v4570 = vsel %vm551, %v4562, -inf
    %4571 = vmax.xlane.f32.xlu0 %v4570
    %v4572 = vpop.xlane.xlu0 %4571
    %v4573 = vsel %vm551, %v4563, -inf
    %4574 = vmax.xlane.f32.xlu0 %v4573
    %v4575 = vpop.xlane.xlu0 %4574
    %v4576 = vsub.f32 %v4560, %v4566
    %v4577 = vsub.f32 %v4561, %v4569
    %v4578 = vsub.f32 %v4562, %v4572
    %v4579 = vsub.f32 %v4563, %v4575
    %v4580 = vmul.f32 %v4576, 1.442695
    %v4581 = vpow.pop %v4580
    %v4582 = vmul.f32 %v4577, 1.442695
    %v4583 = vpow.pop %v4582
    %v4584 = vmul.f32 %v4578, 1.442695
    %v4585 = vpow.pop %v4584
    %v4586 = vmul.f32 %v4579, 1.442695
    %v4587 = vpow.pop %v4586
    %v4588 = vsel %vm551, %v4581, 0.0
    %4589 = vadd.xlane.f32.xlu0 %v4588
    %v4590 = vpop.xlane.xlu0 %4589
    %v4591 = vsel %vm551, %v4583, 0.0
    %4592 = vadd.xlane.f32.xlu0 %v4591
    %v4593 = vpop.xlane.xlu0 %4592
    %v4594 = vsel %vm551, %v4585, 0.0
    %4595 = vadd.xlane.f32.xlu0 %v4594
    %v4596 = vpop.xlane.xlu0 %4595
    %v4597 = vsel %vm551, %v4587, 0.0
    %4598 = vadd.xlane.f32.xlu0 %v4597
    %v4599 = vpop.xlane.xlu0 %4598
    %v4600 = vrcp.pop %v4590
    %v4601 = vrcp.pop %v4593
    %v4602 = vrcp.pop %v4596
    %v4603 = vrcp.pop %v4599
    %v4604 = vmul.f32 %v4581, %v4600
    %v4605 = vmul.f32 %v4583, %v4601
    %v4606 = vmul.f32 %v4585, %v4602
    %v4607 = vmul.f32 %v4587, %v4603
    %v4608 = vpack.c.bf16 %v4604, %v4604
    %v4609 = vpack.c.bf16 %v4605, %v4605
    %v4610 = vpack.c.bf16 %v4606, %v4606
    %v4611 = vpack.c.bf16 %v4607, %v4607
    %4612 = vrot.lane.b32.xlu0 %v3690, 48
    %v4613 = vpop.permute.xlu0 %4612
    %v4615 = vsel %vm551, %v4608, 0
    %v4618 = vsel %vm603, %v4613, 0
    %4620 = vmatpush.bf16.msra.mxu0 0
    %4621 = vmatpush.bf16.msra.mxu0 0
    %4622 = vmatpush.bf16.msra.mxu0 0
    %4623 = vmatpush.bf16.msra.mxu0 0
    %4624 = vmatpush.bf16.msra.mxu0 0
    %4625 = vmatpush.bf16.msra.mxu0 0
    %4626 = vmatpush.bf16.msra.mxu0 0
    %4627 = vmatpush.bf16.msra.mxu0 %v4618
    %4628 = vmatmul.bf16.gmra.mxu0 %v4615
    %v4629 = vpop.f32.mrf.mxu0
    %v4630 = vadd.f32 0.0, %v4629
    %v4631 = vpop.f32.mrf.mxu0
    %4632 = vdwg.mxu0
    %4633 = vrot.lane.b32.xlu0 %v3714, 48
    %v4634 = vpop.permute.xlu0 %4633
    %v4636 = vsel %vm551, %v4609, 0
    %v4639 = vsel %vm603, %v4634, 0
    %4641 = vmatpush.bf16.msra.mxu0 0
    %4642 = vmatpush.bf16.msra.mxu0 0
    %4643 = vmatpush.bf16.msra.mxu0 0
    %4644 = vmatpush.bf16.msra.mxu0 0
    %4645 = vmatpush.bf16.msra.mxu0 0
    %4646 = vmatpush.bf16.msra.mxu0 0
    %4647 = vmatpush.bf16.msra.mxu0 0
    %4648 = vmatpush.bf16.msra.mxu0 %v4639
    %4649 = vmatmul.bf16.gmra.mxu0 %v4636
    %v4650 = vpop.f32.mrf.mxu0
    %v4651 = vadd.f32 0.0, %v4650
    %v4652 = vpop.f32.mrf.mxu0
    %4653 = vdwg.mxu0
    %4654 = vrot.lane.b32.xlu0 %v3738, 48
    %v4655 = vpop.permute.xlu0 %4654
    %v4657 = vsel %vm551, %v4610, 0
    %v4660 = vsel %vm603, %v4655, 0
    %4662 = vmatpush.bf16.msra.mxu0 0
    %4663 = vmatpush.bf16.msra.mxu0 0
    %4664 = vmatpush.bf16.msra.mxu0 0
    %4665 = vmatpush.bf16.msra.mxu0 0
    %4666 = vmatpush.bf16.msra.mxu0 0
    %4667 = vmatpush.bf16.msra.mxu0 0
    %4668 = vmatpush.bf16.msra.mxu0 0
    %4669 = vmatpush.bf16.msra.mxu0 %v4660
    %4670 = vmatmul.bf16.gmra.mxu0 %v4657
    %v4671 = vpop.f32.mrf.mxu0
    %v4672 = vadd.f32 0.0, %v4671
    %v4673 = vpop.f32.mrf.mxu0
    %4674 = vdwg.mxu0
    %4675 = vrot.lane.b32.xlu0 %v3762, 48
    %v4676 = vpop.permute.xlu0 %4675
    %v4678 = vsel %vm551, %v4611, 0
    %v4681 = vsel %vm603, %v4676, 0
    %4683 = vmatpush.bf16.msra.mxu0 0
    %4684 = vmatpush.bf16.msra.mxu0 0
    %4685 = vmatpush.bf16.msra.mxu0 0
    %4686 = vmatpush.bf16.msra.mxu0 0
    %4687 = vmatpush.bf16.msra.mxu0 0
    %4688 = vmatpush.bf16.msra.mxu0 0
    %4689 = vmatpush.bf16.msra.mxu0 0
    %4690 = vmatpush.bf16.msra.mxu0 %v4681
    %4691 = vmatmul.bf16.gmra.mxu0 %v4678
    %v4692 = vpop.f32.mrf.mxu0
    %v4693 = vadd.f32 0.0, %v4692
    %v4694 = vpop.f32.mrf.mxu0
    %4695 = vdwg.mxu0
    %4696 = vrot.lane.b32.xlu0 %v3522, 32
    %v4697 = vpop.permute.xlu0 %4696
    %4698 = vrot.lane.b32.xlu0 %v3527, 32
    %v4699 = vpop.permute.xlu0 %4698
    %v4701 = vsel %vm470, %v4697, 0
    %v4704 = vsel %vm470, %v4699, 0
    %4706 = vmatpush.bf16.xpose.msra.mxu0 0
    %4707 = vmatpush.bf16.xpose.msra.mxu0 0
    %4708 = vmatpush.bf16.xpose.msra.mxu0 0
    %4709 = vmatpush.bf16.xpose.msra.mxu0 0
    %4710 = vmatpush.bf16.xpose.msra.mxu0 0
    %4711 = vmatpush.bf16.xpose.msra.mxu0 0
    %4712 = vmatpush.bf16.xpose.msra.mxu0 0
    %4713 = vmatpush.bf16.xpose.msra.mxu0 %v4704
    %4714 = vmatmul.bf16.gmra.mxu0 %v4701
    %v4715 = vpop.f32.mrf.mxu0
    %v4716 = vadd.f32 0.0, %v4715
    %v4717 = vpop.f32.mrf.mxu0
    %4718 = vdwg.mxu0
    %4719 = vrot.lane.b32.xlu0 %v3551, 32
    %v4720 = vpop.permute.xlu0 %4719
    %4721 = vrot.lane.b32.xlu0 %v3556, 32
    %v4722 = vpop.permute.xlu0 %4721
    %v4724 = vsel %vm470, %v4720, 0
    %v4727 = vsel %vm470, %v4722, 0
    %4729 = vmatpush.bf16.xpose.msra.mxu0 0
    %4730 = vmatpush.bf16.xpose.msra.mxu0 0
    %4731 = vmatpush.bf16.xpose.msra.mxu0 0
    %4732 = vmatpush.bf16.xpose.msra.mxu0 0
    %4733 = vmatpush.bf16.xpose.msra.mxu0 0
    %4734 = vmatpush.bf16.xpose.msra.mxu0 0
    %4735 = vmatpush.bf16.xpose.msra.mxu0 0
    %4736 = vmatpush.bf16.xpose.msra.mxu0 %v4727
    %4737 = vmatmul.bf16.gmra.mxu0 %v4724
    %v4738 = vpop.f32.mrf.mxu0
    %v4739 = vadd.f32 0.0, %v4738
    %v4740 = vpop.f32.mrf.mxu0
    %4741 = vdwg.mxu0
    %4742 = vrot.lane.b32.xlu0 %v3580, 32
    %v4743 = vpop.permute.xlu0 %4742
    %4744 = vrot.lane.b32.xlu0 %v3585, 32
    %v4745 = vpop.permute.xlu0 %4744
    %v4747 = vsel %vm470, %v4743, 0
    %v4750 = vsel %vm470, %v4745, 0
    %4752 = vmatpush.bf16.xpose.msra.mxu0 0
    %4753 = vmatpush.bf16.xpose.msra.mxu0 0
    %4754 = vmatpush.bf16.xpose.msra.mxu0 0
    %4755 = vmatpush.bf16.xpose.msra.mxu0 0
    %4756 = vmatpush.bf16.xpose.msra.mxu0 0
    %4757 = vmatpush.bf16.xpose.msra.mxu0 0
    %4758 = vmatpush.bf16.xpose.msra.mxu0 0
    %4759 = vmatpush.bf16.xpose.msra.mxu0 %v4750
    %4760 = vmatmul.bf16.gmra.mxu0 %v4747
    %v4761 = vpop.f32.mrf.mxu0
    %v4762 = vadd.f32 0.0, %v4761
    %v4763 = vpop.f32.mrf.mxu0
    %4764 = vdwg.mxu0
    %4765 = vrot.lane.b32.xlu0 %v3609, 32
    %v4766 = vpop.permute.xlu0 %4765
    %4767 = vrot.lane.b32.xlu0 %v3614, 32
    %v4768 = vpop.permute.xlu0 %4767
    %v4770 = vsel %vm470, %v4766, 0
    %v4773 = vsel %vm470, %v4768, 0
    %4775 = vmatpush.bf16.xpose.msra.mxu0 0
    %4776 = vmatpush.bf16.xpose.msra.mxu0 0
    %4777 = vmatpush.bf16.xpose.msra.mxu0 0
    %4778 = vmatpush.bf16.xpose.msra.mxu0 0
    %4779 = vmatpush.bf16.xpose.msra.mxu0 0
    %4780 = vmatpush.bf16.xpose.msra.mxu0 0
    %4781 = vmatpush.bf16.xpose.msra.mxu0 0
    %4782 = vmatpush.bf16.xpose.msra.mxu0 %v4773
    %4783 = vmatmul.bf16.gmra.mxu0 %v4770
    %v4784 = vpop.f32.mrf.mxu0
    %v4785 = vadd.f32 0.0, %v4784
    %v4786 = vpop.f32.mrf.mxu0
    %4787 = vdwg.mxu0
    %v4788 = vmul.f32 %v4716, 0.25
    %v4789 = vmul.f32 %v4739, 0.25
    %v4790 = vmul.f32 %v4762, 0.25
    %v4791 = vmul.f32 %v4785, 0.25
    %v4792 = vsel %vm551, %v4788, -inf
    %4793 = vmax.xlane.f32.xlu0 %v4792
    %v4794 = vpop.xlane.xlu0 %4793
    %v4795 = vsel %vm551, %v4789, -inf
    %4796 = vmax.xlane.f32.xlu0 %v4795
    %v4797 = vpop.xlane.xlu0 %4796
    %v4798 = vsel %vm551, %v4790, -inf
    %4799 = vmax.xlane.f32.xlu0 %v4798
    %v4800 = vpop.xlane.xlu0 %4799
    %v4801 = vsel %vm551, %v4791, -inf
    %4802 = vmax.xlane.f32.xlu0 %v4801
    %v4803 = vpop.xlane.xlu0 %4802
    %v4804 = vsub.f32 %v4788, %v4794
    %v4805 = vsub.f32 %v4789, %v4797
    %v4806 = vsub.f32 %v4790, %v4800
    %v4807 = vsub.f32 %v4791, %v4803
    %v4808 = vmul.f32 %v4804, 1.442695
    %v4809 = vpow.pop %v4808
    %v4810 = vmul.f32 %v4805, 1.442695
    %v4811 = vpow.pop %v4810
    %v4812 = vmul.f32 %v4806, 1.442695
    %v4813 = vpow.pop %v4812
    %v4814 = vmul.f32 %v4807, 1.442695
    %v4815 = vpow.pop %v4814
    %v4816 = vsel %vm551, %v4809, 0.0
    %4817 = vadd.xlane.f32.xlu0 %v4816
    %v4818 = vpop.xlane.xlu0 %4817
    %v4819 = vsel %vm551, %v4811, 0.0
    %4820 = vadd.xlane.f32.xlu0 %v4819
    %v4821 = vpop.xlane.xlu0 %4820
    %v4822 = vsel %vm551, %v4813, 0.0
    %4823 = vadd.xlane.f32.xlu0 %v4822
    %v4824 = vpop.xlane.xlu0 %4823
    %v4825 = vsel %vm551, %v4815, 0.0
    %4826 = vadd.xlane.f32.xlu0 %v4825
    %v4827 = vpop.xlane.xlu0 %4826
    %v4828 = vrcp.pop %v4818
    %v4829 = vrcp.pop %v4821
    %v4830 = vrcp.pop %v4824
    %v4831 = vrcp.pop %v4827
    %v4832 = vmul.f32 %v4809, %v4828
    %v4833 = vmul.f32 %v4811, %v4829
    %v4834 = vmul.f32 %v4813, %v4830
    %v4835 = vmul.f32 %v4815, %v4831
    %v4836 = vpack.c.bf16 %v4832, %v4832
    %v4837 = vpack.c.bf16 %v4833, %v4833
    %v4838 = vpack.c.bf16 %v4834, %v4834
    %v4839 = vpack.c.bf16 %v4835, %v4835
    %4840 = vrot.lane.b32.xlu0 %v3690, 32
    %v4841 = vpop.permute.xlu0 %4840
    %v4843 = vsel %vm551, %v4836, 0
    %v4846 = vsel %vm603, %v4841, 0
    %4848 = vmatpush.bf16.msra.mxu0 0
    %4849 = vmatpush.bf16.msra.mxu0 0
    %4850 = vmatpush.bf16.msra.mxu0 0
    %4851 = vmatpush.bf16.msra.mxu0 0
    %4852 = vmatpush.bf16.msra.mxu0 0
    %4853 = vmatpush.bf16.msra.mxu0 0
    %4854 = vmatpush.bf16.msra.mxu0 0
    %4855 = vmatpush.bf16.msra.mxu0 %v4846
    %4856 = vmatmul.bf16.gmra.mxu0 %v4843
    %v4857 = vpop.f32.mrf.mxu0
    %v4858 = vadd.f32 0.0, %v4857
    %v4859 = vpop.f32.mrf.mxu0
    %4860 = vdwg.mxu0
    %4861 = vrot.lane.b32.xlu0 %v3714, 32
    %v4862 = vpop.permute.xlu0 %4861
    %v4864 = vsel %vm551, %v4837, 0
    %v4867 = vsel %vm603, %v4862, 0
    %4869 = vmatpush.bf16.msra.mxu0 0
    %4870 = vmatpush.bf16.msra.mxu0 0
    %4871 = vmatpush.bf16.msra.mxu0 0
    %4872 = vmatpush.bf16.msra.mxu0 0
    %4873 = vmatpush.bf16.msra.mxu0 0
    %4874 = vmatpush.bf16.msra.mxu0 0
    %4875 = vmatpush.bf16.msra.mxu0 0
    %4876 = vmatpush.bf16.msra.mxu0 %v4867
    %4877 = vmatmul.bf16.gmra.mxu0 %v4864
    %v4878 = vpop.f32.mrf.mxu0
    %v4879 = vadd.f32 0.0, %v4878
    %v4880 = vpop.f32.mrf.mxu0
    %4881 = vdwg.mxu0
    %4882 = vrot.lane.b32.xlu0 %v3738, 32
    %v4883 = vpop.permute.xlu0 %4882
    %v4885 = vsel %vm551, %v4838, 0
    %v4888 = vsel %vm603, %v4883, 0
    %4890 = vmatpush.bf16.msra.mxu0 0
    %4891 = vmatpush.bf16.msra.mxu0 0
    %4892 = vmatpush.bf16.msra.mxu0 0
    %4893 = vmatpush.bf16.msra.mxu0 0
    %4894 = vmatpush.bf16.msra.mxu0 0
    %4895 = vmatpush.bf16.msra.mxu0 0
    %4896 = vmatpush.bf16.msra.mxu0 0
    %4897 = vmatpush.bf16.msra.mxu0 %v4888
    %4898 = vmatmul.bf16.gmra.mxu0 %v4885
    %v4899 = vpop.f32.mrf.mxu0
    %v4900 = vadd.f32 0.0, %v4899
    %v4901 = vpop.f32.mrf.mxu0
    %4902 = vdwg.mxu0
    %4903 = vrot.lane.b32.xlu0 %v3762, 32
    %v4904 = vpop.permute.xlu0 %4903
    %v4906 = vsel %vm551, %v4839, 0
    %v4909 = vsel %vm603, %v4904, 0
    %4911 = vmatpush.bf16.msra.mxu0 0
    %4912 = vmatpush.bf16.msra.mxu0 0
    %4913 = vmatpush.bf16.msra.mxu0 0
    %4914 = vmatpush.bf16.msra.mxu0 0
    %4915 = vmatpush.bf16.msra.mxu0 0
    %4916 = vmatpush.bf16.msra.mxu0 0
    %4917 = vmatpush.bf16.msra.mxu0 0
    %4918 = vmatpush.bf16.msra.mxu0 %v4909
    %4919 = vmatmul.bf16.gmra.mxu0 %v4906
    %v4920 = vpop.f32.mrf.mxu0
    %v4921 = vadd.f32 0.0, %v4920
    %v4922 = vpop.f32.mrf.mxu0
    %4923 = vdwg.mxu0
    %4924 = vrot.lane.b32.xlu0 %v3522, 16
    %v4925 = vpop.permute.xlu0 %4924
    %4926 = vrot.lane.b32.xlu0 %v3527, 16
    %v4927 = vpop.permute.xlu0 %4926
    %v4929 = vsel %vm470, %v4925, 0
    %v4932 = vsel %vm470, %v4927, 0
    %4934 = vmatpush.bf16.xpose.msra.mxu0 0
    %4935 = vmatpush.bf16.xpose.msra.mxu0 0
    %4936 = vmatpush.bf16.xpose.msra.mxu0 0
    %4937 = vmatpush.bf16.xpose.msra.mxu0 0
    %4938 = vmatpush.bf16.xpose.msra.mxu0 0
    %4939 = vmatpush.bf16.xpose.msra.mxu0 0
    %4940 = vmatpush.bf16.xpose.msra.mxu0 0
    %4941 = vmatpush.bf16.xpose.msra.mxu0 %v4932
    %4942 = vmatmul.bf16.gmra.mxu0 %v4929
    %v4943 = vpop.f32.mrf.mxu0
    %v4944 = vadd.f32 0.0, %v4943
    %v4945 = vpop.f32.mrf.mxu0
    %4946 = vdwg.mxu0
    %4947 = vrot.lane.b32.xlu0 %v3551, 16
    %v4948 = vpop.permute.xlu0 %4947
    %4949 = vrot.lane.b32.xlu0 %v3556, 16
    %v4950 = vpop.permute.xlu0 %4949
    %v4952 = vsel %vm470, %v4948, 0
    %v4955 = vsel %vm470, %v4950, 0
    %4957 = vmatpush.bf16.xpose.msra.mxu0 0
    %4958 = vmatpush.bf16.xpose.msra.mxu0 0
    %4959 = vmatpush.bf16.xpose.msra.mxu0 0
    %4960 = vmatpush.bf16.xpose.msra.mxu0 0
    %4961 = vmatpush.bf16.xpose.msra.mxu0 0
    %4962 = vmatpush.bf16.xpose.msra.mxu0 0
    %4963 = vmatpush.bf16.xpose.msra.mxu0 0
    %4964 = vmatpush.bf16.xpose.msra.mxu0 %v4955
    %4965 = vmatmul.bf16.gmra.mxu0 %v4952
    %v4966 = vpop.f32.mrf.mxu0
    %v4967 = vadd.f32 0.0, %v4966
    %v4968 = vpop.f32.mrf.mxu0
    %4969 = vdwg.mxu0
    %4970 = vrot.lane.b32.xlu0 %v3580, 16
    %v4971 = vpop.permute.xlu0 %4970
    %4972 = vrot.lane.b32.xlu0 %v3585, 16
    %v4973 = vpop.permute.xlu0 %4972
    %v4975 = vsel %vm470, %v4971, 0
    %v4978 = vsel %vm470, %v4973, 0
    %4980 = vmatpush.bf16.xpose.msra.mxu0 0
    %4981 = vmatpush.bf16.xpose.msra.mxu0 0
    %4982 = vmatpush.bf16.xpose.msra.mxu0 0
    %4983 = vmatpush.bf16.xpose.msra.mxu0 0
    %4984 = vmatpush.bf16.xpose.msra.mxu0 0
    %4985 = vmatpush.bf16.xpose.msra.mxu0 0
    %4986 = vmatpush.bf16.xpose.msra.mxu0 0
    %4987 = vmatpush.bf16.xpose.msra.mxu0 %v4978
    %4988 = vmatmul.bf16.gmra.mxu0 %v4975
    %v4989 = vpop.f32.mrf.mxu0
    %v4990 = vadd.f32 0.0, %v4989
    %v4991 = vpop.f32.mrf.mxu0
    %4992 = vdwg.mxu0
    %4993 = vrot.lane.b32.xlu0 %v3609, 16
    %v4994 = vpop.permute.xlu0 %4993
    %4995 = vrot.lane.b32.xlu0 %v3614, 16
    %v4996 = vpop.permute.xlu0 %4995
    %v4998 = vsel %vm470, %v4994, 0
    %v5001 = vsel %vm470, %v4996, 0
    %5003 = vmatpush.bf16.xpose.msra.mxu0 0
    %5004 = vmatpush.bf16.xpose.msra.mxu0 0
    %5005 = vmatpush.bf16.xpose.msra.mxu0 0
    %5006 = vmatpush.bf16.xpose.msra.mxu0 0
    %5007 = vmatpush.bf16.xpose.msra.mxu0 0
    %5008 = vmatpush.bf16.xpose.msra.mxu0 0
    %5009 = vmatpush.bf16.xpose.msra.mxu0 0
    %5010 = vmatpush.bf16.xpose.msra.mxu0 %v5001
    %5011 = vmatmul.bf16.gmra.mxu0 %v4998
    %v5012 = vpop.f32.mrf.mxu0
    %v5013 = vadd.f32 0.0, %v5012
    %v5014 = vpop.f32.mrf.mxu0
    %5015 = vdwg.mxu0
    %v5016 = vmul.f32 %v4944, 0.25
    %v5017 = vmul.f32 %v4967, 0.25
    %v5018 = vmul.f32 %v4990, 0.25
    %v5019 = vmul.f32 %v5013, 0.25
    %v5020 = vsel %vm551, %v5016, -inf
    %5021 = vmax.xlane.f32.xlu0 %v5020
    %v5022 = vpop.xlane.xlu0 %5021
    %v5023 = vsel %vm551, %v5017, -inf
    %5024 = vmax.xlane.f32.xlu0 %v5023
    %v5025 = vpop.xlane.xlu0 %5024
    %v5026 = vsel %vm551, %v5018, -inf
    %5027 = vmax.xlane.f32.xlu0 %v5026
    %v5028 = vpop.xlane.xlu0 %5027
    %v5029 = vsel %vm551, %v5019, -inf
    %5030 = vmax.xlane.f32.xlu0 %v5029
    %v5031 = vpop.xlane.xlu0 %5030
    %v5032 = vsub.f32 %v5016, %v5022
    %v5033 = vsub.f32 %v5017, %v5025
    %v5034 = vsub.f32 %v5018, %v5028
    %v5035 = vsub.f32 %v5019, %v5031
    %v5036 = vmul.f32 %v5032, 1.442695
    %v5037 = vpow.pop %v5036
    %v5038 = vmul.f32 %v5033, 1.442695
    %v5039 = vpow.pop %v5038
    %v5040 = vmul.f32 %v5034, 1.442695
    %v5041 = vpow.pop %v5040
    %v5042 = vmul.f32 %v5035, 1.442695
    %v5043 = vpow.pop %v5042
    %v5044 = vsel %vm551, %v5037, 0.0
    %5045 = vadd.xlane.f32.xlu0 %v5044
    %v5046 = vpop.xlane.xlu0 %5045
    %v5047 = vsel %vm551, %v5039, 0.0
    %5048 = vadd.xlane.f32.xlu0 %v5047
    %v5049 = vpop.xlane.xlu0 %5048
    %v5050 = vsel %vm551, %v5041, 0.0
    %5051 = vadd.xlane.f32.xlu0 %v5050
    %v5052 = vpop.xlane.xlu0 %5051
    %v5053 = vsel %vm551, %v5043, 0.0
    %5054 = vadd.xlane.f32.xlu0 %v5053
    %v5055 = vpop.xlane.xlu0 %5054
    %v5056 = vrcp.pop %v5046
    %v5057 = vrcp.pop %v5049
    %v5058 = vrcp.pop %v5052
    %v5059 = vrcp.pop %v5055
    %v5060 = vmul.f32 %v5037, %v5056
    %v5061 = vmul.f32 %v5039, %v5057
    %v5062 = vmul.f32 %v5041, %v5058
    %v5063 = vmul.f32 %v5043, %v5059
    %v5064 = vpack.c.bf16 %v5060, %v5060
    %v5065 = vpack.c.bf16 %v5061, %v5061
    %v5066 = vpack.c.bf16 %v5062, %v5062
    %v5067 = vpack.c.bf16 %v5063, %v5063
    %5068 = vrot.lane.b32.xlu0 %v3690, 16
    %v5069 = vpop.permute.xlu0 %5068
    %v5071 = vsel %vm551, %v5064, 0
    %v5074 = vsel %vm603, %v5069, 0
    %5076 = vmatpush.bf16.msra.mxu0 0
    %5077 = vmatpush.bf16.msra.mxu0 0
    %5078 = vmatpush.bf16.msra.mxu0 0
    %5079 = vmatpush.bf16.msra.mxu0 0
    %5080 = vmatpush.bf16.msra.mxu0 0
    %5081 = vmatpush.bf16.msra.mxu0 0
    %5082 = vmatpush.bf16.msra.mxu0 0
    %5083 = vmatpush.bf16.msra.mxu0 %v5074
    %5084 = vmatmul.bf16.gmra.mxu0 %v5071
    %v5085 = vpop.f32.mrf.mxu0
    %v5086 = vadd.f32 0.0, %v5085
    %v5087 = vpop.f32.mrf.mxu0
    %5088 = vdwg.mxu0
    %5089 = vrot.lane.b32.xlu0 %v3714, 16
    %v5090 = vpop.permute.xlu0 %5089
    %v5092 = vsel %vm551, %v5065, 0
    %v5095 = vsel %vm603, %v5090, 0
    %5097 = vmatpush.bf16.msra.mxu0 0
    %5098 = vmatpush.bf16.msra.mxu0 0
    %5099 = vmatpush.bf16.msra.mxu0 0
    %5100 = vmatpush.bf16.msra.mxu0 0
    %5101 = vmatpush.bf16.msra.mxu0 0
    %5102 = vmatpush.bf16.msra.mxu0 0
    %5103 = vmatpush.bf16.msra.mxu0 0
    %5104 = vmatpush.bf16.msra.mxu0 %v5095
    %5105 = vmatmul.bf16.gmra.mxu0 %v5092
    %v5106 = vpop.f32.mrf.mxu0
    %v5107 = vadd.f32 0.0, %v5106
    %v5108 = vpop.f32.mrf.mxu0
    %5109 = vdwg.mxu0
    %5110 = vrot.lane.b32.xlu0 %v3738, 16
    %v5111 = vpop.permute.xlu0 %5110
    %v5113 = vsel %vm551, %v5066, 0
    %v5116 = vsel %vm603, %v5111, 0
    %5118 = vmatpush.bf16.msra.mxu0 0
    %5119 = vmatpush.bf16.msra.mxu0 0
    %5120 = vmatpush.bf16.msra.mxu0 0
    %5121 = vmatpush.bf16.msra.mxu0 0
    %5122 = vmatpush.bf16.msra.mxu0 0
    %5123 = vmatpush.bf16.msra.mxu0 0
    %5124 = vmatpush.bf16.msra.mxu0 0
    %5125 = vmatpush.bf16.msra.mxu0 %v5116
    %5126 = vmatmul.bf16.gmra.mxu0 %v5113
    %v5127 = vpop.f32.mrf.mxu0
    %v5128 = vadd.f32 0.0, %v5127
    %v5129 = vpop.f32.mrf.mxu0
    %5130 = vdwg.mxu0
    %5131 = vrot.lane.b32.xlu0 %v3762, 16
    %v5132 = vpop.permute.xlu0 %5131
    %v5134 = vsel %vm551, %v5067, 0
    %v5137 = vsel %vm603, %v5132, 0
    %5139 = vmatpush.bf16.msra.mxu0 0
    %5140 = vmatpush.bf16.msra.mxu0 0
    %5141 = vmatpush.bf16.msra.mxu0 0
    %5142 = vmatpush.bf16.msra.mxu0 0
    %5143 = vmatpush.bf16.msra.mxu0 0
    %5144 = vmatpush.bf16.msra.mxu0 0
    %5145 = vmatpush.bf16.msra.mxu0 0
    %5146 = vmatpush.bf16.msra.mxu0 %v5137
    %5147 = vmatmul.bf16.gmra.mxu0 %v5134
    %v5148 = vpop.f32.mrf.mxu0
    %v5149 = vadd.f32 0.0, %v5148
    %v5150 = vpop.f32.mrf.mxu0
    %5151 = vdwg.mxu0
    %5156 = vrot.lane.b32.xlu0 %v3709, 16
    %v5157 = vpop.permute.xlu0 %5156
    %5158 = vrot.lane.b32.xlu0 %v3733, 16
    %v5159 = vpop.permute.xlu0 %5158
    %5160 = vrot.lane.b32.xlu0 %v3757, 16
    %v5161 = vpop.permute.xlu0 %5160
    %5162 = vrot.lane.b32.xlu0 %v3781, 16
    %v5163 = vpop.permute.xlu0 %5162
    %5172 = vrot.lane.b32.xlu0 %v3946, 32
    %v5173 = vpop.permute.xlu0 %5172
    %5174 = vrot.lane.b32.xlu0 %v3967, 32
    %v5175 = vpop.permute.xlu0 %5174
    %5176 = vrot.lane.b32.xlu0 %v3988, 32
    %v5177 = vpop.permute.xlu0 %5176
    %5178 = vrot.lane.b32.xlu0 %v4009, 32
    %v5179 = vpop.permute.xlu0 %5178
    %5188 = vrot.lane.b32.xlu0 %v4174, 48
    %v5189 = vpop.permute.xlu0 %5188
    %5190 = vrot.lane.b32.xlu0 %v4195, 48
    %v5191 = vpop.permute.xlu0 %5190
    %5192 = vrot.lane.b32.xlu0 %v4216, 48
    %v5193 = vpop.permute.xlu0 %5192
    %5194 = vrot.lane.b32.xlu0 %v4237, 48
    %v5195 = vpop.permute.xlu0 %5194
    %5204 = vrot.lane.b32.xlu0 %v4402, 64
    %v5205 = vpop.permute.xlu0 %5204
    %5206 = vrot.lane.b32.xlu0 %v4423, 64
    %v5207 = vpop.permute.xlu0 %5206
    %5208 = vrot.lane.b32.xlu0 %v4444, 64
    %v5209 = vpop.permute.xlu0 %5208
    %5210 = vrot.lane.b32.xlu0 %v4465, 64
    %v5211 = vpop.permute.xlu0 %5210
    %5220 = vrot.lane.b32.xlu0 %v4630, 80
    %v5221 = vpop.permute.xlu0 %5220
    %5222 = vrot.lane.b32.xlu0 %v4651, 80
    %v5223 = vpop.permute.xlu0 %5222
    %5224 = vrot.lane.b32.xlu0 %v4672, 80
    %v5225 = vpop.permute.xlu0 %5224
    %5226 = vrot.lane.b32.xlu0 %v4693, 80
    %v5227 = vpop.permute.xlu0 %5226
    %5236 = vrot.lane.b32.xlu0 %v4858, 96
    %v5237 = vpop.permute.xlu0 %5236
    %5238 = vrot.lane.b32.xlu0 %v4879, 96
    %v5239 = vpop.permute.xlu0 %5238
    %5240 = vrot.lane.b32.xlu0 %v4900, 96
    %v5241 = vpop.permute.xlu0 %5240
    %5242 = vrot.lane.b32.xlu0 %v4921, 96
    %v5243 = vpop.permute.xlu0 %5242
    %5252 = vrot.lane.b32.xlu0 %v5086, 112
    %v5253 = vpop.permute.xlu0 %5252
    %5254 = vrot.lane.b32.xlu0 %v5107, 112
    %v5255 = vpop.permute.xlu0 %5254
    %5256 = vrot.lane.b32.xlu0 %v5128, 112
    %v5257 = vpop.permute.xlu0 %5256
    %5258 = vrot.lane.b32.xlu0 %v5149, 112
    %v5259 = vpop.permute.xlu0 %5258
    %v5264 = vsel %vm470, %v3460, %v5157
    %v5265 = vsel %vm470, %v3479, %v5159
    %v5266 = vsel %vm470, %v3498, %v5161
    %v5267 = vsel %vm470, %v3517, %v5163
    %v5268 = vsel %vm2425, %v5264, %v5173
    %v5269 = vsel %vm2425, %v5265, %v5175
    %v5270 = vsel %vm2425, %v5266, %v5177
    %v5271 = vsel %vm2425, %v5267, %v5179
    %v5272 = vsel %vm2430, %v5268, %v5189
    %v5273 = vsel %vm2430, %v5269, %v5191
    %v5274 = vsel %vm2430, %v5270, %v5193
    %v5275 = vsel %vm2430, %v5271, %v5195
    %v5276 = vsel %vm2435, %v5272, %v5205
    %v5277 = vsel %vm2435, %v5273, %v5207
    %v5278 = vsel %vm2435, %v5274, %v5209
    %v5279 = vsel %vm2435, %v5275, %v5211
    %v5280 = vsel %vm2440, %v5276, %v5221
    %v5281 = vsel %vm2440, %v5277, %v5223
    %v5282 = vsel %vm2440, %v5278, %v5225
    %v5283 = vsel %vm2440, %v5279, %v5227
    %v5284 = vsel %vm2445, %v5280, %v5237
    %v5285 = vsel %vm2445, %v5281, %v5239
    %v5286 = vsel %vm2445, %v5282, %v5241
    %v5287 = vsel %vm2445, %v5283, %v5243
    %v5288 = vsel %vm2450, %v5284, %v5253
    %v5289 = vsel %vm2450, %v5285, %v5255
    %v5290 = vsel %vm2450, %v5286, %v5257
    %v5291 = vsel %vm2450, %v5287, %v5259
    %s5292 = scalar_lea.vmem [#allocation5], 64
    %v5293 = vld [vmem:[%s5292] sm:$0xf]
    %v5294 = vld [vmem:[%s5292 + $0x4] sm:$0xf]
    %v5295 = vld [vmem:[%s5292 + $0x8] sm:$0xf]
    %v5296 = vld [vmem:[%s5292 + $0xc] sm:$0xf]
    %v5297 = vld [vmem:[%s5292 + $0x10] sm:$0xf]
    %v5298 = vld [vmem:[%s5292 + $0x14] sm:$0xf]
    %v5299 = vld [vmem:[%s5292 + $0x18] sm:$0xf]
    %v5300 = vld [vmem:[%s5292 + $0x1c] sm:$0xf]
    %v5301 = vld [vmem:[%s5292 + $0x20] sm:$0xf]
    %v5302 = vld [vmem:[%s5292 + $0x24] sm:$0xf]
    %v5303 = vld [vmem:[%s5292 + $0x28] sm:$0xf]
    %v5304 = vld [vmem:[%s5292 + $0x2c] sm:$0xf]
    %v5305 = vld [vmem:[%s5292 + $0x30] sm:$0xf]
    %v5306 = vld [vmem:[%s5292 + $0x34] sm:$0xf]
    %v5307 = vld [vmem:[%s5292 + $0x38] sm:$0xf]
    %v5308 = vld [vmem:[%s5292 + $0x3c] sm:$0xf]
    %s5309 = scalar_lea.vmem %s5, 1
    %v5310 = vld [vmem:[%s5309] sm:$0x1]
    %v5311 = vpack.c.bf16 %v5289, %v5288
    %v5312 = vpack.c.bf16 %v5291, %v5290
    %v5314 = vperm.slane %v5310, 0
    %v5332 = vunpack.c.l.b16 %v5293
    %v5333 = vunpack.c.l.b16 %v5294
    %v5334 = vunpack.c.l.b16 %v5295
    %v5335 = vunpack.c.l.b16 %v5296
    %v5336 = vunpack.c.l.b16 %v5297
    %v5337 = vunpack.c.l.b16 %v5298
    %v5338 = vunpack.c.l.b16 %v5299
    %v5339 = vunpack.c.l.b16 %v5300
    %v5340 = vunpack.c.l.b16 %v5301
    %v5341 = vunpack.c.l.b16 %v5302
    %v5342 = vunpack.c.l.b16 %v5303
    %v5343 = vunpack.c.l.b16 %v5304
    %v5344 = vunpack.c.l.b16 %v5305
    %v5345 = vunpack.c.l.b16 %v5306
    %v5346 = vunpack.c.l.b16 %v5307
    %v5347 = vunpack.c.l.b16 %v5308
    %v5348 = vpack.c.b16 %v5333, %v5332
    %v5349 = vpack.c.b16 %v5335, %v5334
    %v5350 = vpack.c.b16 %v5337, %v5336
    %v5351 = vpack.c.b16 %v5339, %v5338
    %v5352 = vpack.c.b16 %v5341, %v5340
    %v5353 = vpack.c.b16 %v5343, %v5342
    %v5354 = vpack.c.b16 %v5345, %v5344
    %v5355 = vpack.c.b16 %v5347, %v5346
    %5364 = vmatpush.bf16.msra.mxu0 %v5355
    %5365 = vmatpush.bf16.msra.mxu0 %v5354
    %5366 = vmatpush.bf16.msra.mxu0 %v5353
    %5367 = vmatpush.bf16.msra.mxu0 %v5352
    %5368 = vmatpush.bf16.msra.mxu0 %v5351
    %5369 = vmatpush.bf16.msra.mxu0 %v5350
    %5370 = vmatpush.bf16.msra.mxu0 %v5349
    %5371 = vmatpush.bf16.msra.mxu0 %v5348
    %5372 = vmatmul.bf16.gmra.mxu0 %v5311
    %v5373 = vpop.f32.mrf.mxu0
    %v5374 = vadd.f32 %v5314, %v5373
    %v5375 = vpop.f32.mrf.mxu0
    %v5376 = vadd.f32 %v5314, %v5375
    %5377 = vmatmul.bf16.gmra.mxu0 %v5312
    %v5378 = vpop.f32.mrf.mxu0
    %v5379 = vadd.f32 %v5314, %v5378
    %v5380 = vpop.f32.mrf.mxu0
    %v5381 = vadd.f32 %v5314, %v5380
    %5382 = vdwg.mxu0
    %v5383 = vadd.f32 %v3071, %v5374
    %v5384 = vadd.f32 %v3072, %v5376
    %v5385 = vadd.f32 %v3073, %v5379
    %v5386 = vadd.f32 %v3074, %v5381
    %s5387 = scalar_lea.vmem %s10, 1
    %v5388 = vld [vmem:[%s5387] sm:$0x1]
    %s5389 = scalar_lea.vmem %s11, 1
    %v5390 = vld [vmem:[%s5389] sm:$0x1]
    %5391 = vadd.xlane.f32.xlu0 %v5383
    %v5392 = vpop.xlane.xlu0 %5391
    %5393 = vadd.xlane.f32.xlu0 %v5384
    %v5394 = vpop.xlane.xlu0 %5393
    %5395 = vadd.xlane.f32.xlu0 %v5385
    %v5396 = vpop.xlane.xlu0 %5395
    %5397 = vadd.xlane.f32.xlu0 %v5386
    %v5398 = vpop.xlane.xlu0 %5397
    %v5399 = vmul.f32 %v5392, %v2564
    %v5400 = vmul.f32 %v5394, %v2564
    %v5401 = vmul.f32 %v5396, %v2564
    %v5402 = vmul.f32 %v5398, %v2564
    %v5403 = vsub.f32 %v5383, %v5399
    %v5404 = vsub.f32 %v5384, %v5400
    %v5405 = vsub.f32 %v5385, %v5401
    %v5406 = vsub.f32 %v5386, %v5402
    %v5407 = vmul.f32 %v5403, %v5403
    %v5408 = vmul.f32 %v5404, %v5404
    %v5409 = vmul.f32 %v5405, %v5405
    %v5410 = vmul.f32 %v5406, %v5406
    %5411 = vadd.xlane.f32.xlu0 %v5407
    %v5412 = vpop.xlane.xlu0 %5411
    %5413 = vadd.xlane.f32.xlu0 %v5408
    %v5414 = vpop.xlane.xlu0 %5413
    %5415 = vadd.xlane.f32.xlu0 %v5409
    %v5416 = vpop.xlane.xlu0 %5415
    %5417 = vadd.xlane.f32.xlu0 %v5410
    %v5418 = vpop.xlane.xlu0 %5417
    %v5419 = vmul.f32 %v5412, %v2564
    %v5420 = vmul.f32 %v5414, %v2564
    %v5421 = vmul.f32 %v5416, %v2564
    %v5422 = vmul.f32 %v5418, %v2564
    %v5423 = vadd.f32 %v5419, 1e-05
    %v5424 = vadd.f32 %v5420, 1e-05
    %v5425 = vadd.f32 %v5421, 1e-05
    %v5426 = vadd.f32 %v5422, 1e-05
    %v5427 = vrsqrt.pop %v5423
    %v5428 = vmul.f32 %v5427, %v5423
    %v5429 = vmul.f32 %v5428, %v5427
    %v5430 = vmul.f32 0.5, %v5429
    %v5431 = vsub.f32 1.5, %v5430
    %v5432 = vmul.f32 %v5427, %v5431
    %vm5433 = vweird.f32 %v5423
    %vm5434 = vweird.f32 %v5427
    %vm5435 = vmor %vm5433, %vm5434
    %v5436 = vsel %vm5435, %v5427, %v5432
    %v5437 = vrsqrt.pop %v5424
    %v5438 = vmul.f32 %v5437, %v5424
    %v5439 = vmul.f32 %v5438, %v5437
    %v5440 = vmul.f32 0.5, %v5439
    %v5441 = vsub.f32 1.5, %v5440
    %v5442 = vmul.f32 %v5437, %v5441
    %vm5443 = vweird.f32 %v5424
    %vm5444 = vweird.f32 %v5437
    %vm5445 = vmor %vm5443, %vm5444
    %v5446 = vsel %vm5445, %v5437, %v5442
    %v5447 = vrsqrt.pop %v5425
    %v5448 = vmul.f32 %v5447, %v5425
    %v5449 = vmul.f32 %v5448, %v5447
    %v5450 = vmul.f32 0.5, %v5449
    %v5451 = vsub.f32 1.5, %v5450
    %v5452 = vmul.f32 %v5447, %v5451
    %vm5453 = vweird.f32 %v5425
    %vm5454 = vweird.f32 %v5447
    %vm5455 = vmor %vm5453, %vm5454
    %v5456 = vsel %vm5455, %v5447, %v5452
    %v5457 = vrsqrt.pop %v5426
    %v5458 = vmul.f32 %v5457, %v5426
    %v5459 = vmul.f32 %v5458, %v5457
    %v5460 = vmul.f32 0.5, %v5459
    %v5461 = vsub.f32 1.5, %v5460
    %v5462 = vmul.f32 %v5457, %v5461
    %vm5463 = vweird.f32 %v5426
    %vm5464 = vweird.f32 %v5457
    %vm5465 = vmor %vm5463, %vm5464
    %v5466 = vsel %vm5465, %v5457, %v5462
    %v5467 = vmul.f32 %v5403, %v5436
    %v5468 = vmul.f32 %v5404, %v5446
    %v5469 = vmul.f32 %v5405, %v5456
    %v5470 = vmul.f32 %v5406, %v5466
    %v5472 = vperm.slane %v5388, 0
    %v5474 = vmul.f32 %v5467, %v5472
    %v5475 = vmul.f32 %v5468, %v5472
    %v5476 = vmul.f32 %v5469, %v5472
    %v5477 = vmul.f32 %v5470, %v5472
    %v5479 = vperm.slane %v5390, 0
    %v5481 = vadd.f32 %v5474, %v5479
    %v5482 = vadd.f32 %v5475, %v5479
    %v5483 = vadd.f32 %v5476, %v5479
    %v5484 = vadd.f32 %v5477, %v5479
    %s5485 = scalar_lea.vmem [#allocation7], 128
    %v5486 = vld [vmem:[%s5485] sm:$0xff]
    %v5487 = vld [vmem:[%s5485 + $0x8] sm:$0xff]
    %v5488 = vld [vmem:[%s5485 + $0x10] sm:$0xff]
    %v5489 = vld [vmem:[%s5485 + $0x18] sm:$0xff]
    %v5490 = vld [vmem:[%s5485 + $0x20] sm:$0xff]
    %v5491 = vld [vmem:[%s5485 + $0x28] sm:$0xff]
    %v5492 = vld [vmem:[%s5485 + $0x30] sm:$0xff]
    %v5493 = vld [vmem:[%s5485 + $0x38] sm:$0xff]
    %v5494 = vld [vmem:[%s5485 + $0x40] sm:$0xff]
    %v5495 = vld [vmem:[%s5485 + $0x48] sm:$0xff]
    %v5496 = vld [vmem:[%s5485 + $0x50] sm:$0xff]
    %v5497 = vld [vmem:[%s5485 + $0x58] sm:$0xff]
    %v5498 = vld [vmem:[%s5485 + $0x60] sm:$0xff]
    %v5499 = vld [vmem:[%s5485 + $0x68] sm:$0xff]
    %v5500 = vld [vmem:[%s5485 + $0x70] sm:$0xff]
    %v5501 = vld [vmem:[%s5485 + $0x78] sm:$0xff]
    %s5502 = scalar_lea.vmem %s7, 2
    %v5503 = vld [vmem:[%s5502] sm:$0x3]
    %v5504 = vpack.c.bf16 %v5482, %v5481
    %v5505 = vpack.c.bf16 %v5484, %v5483
    %v5507 = vperm.slane %v5503, 0
    %v5508 = vperm.slane %v5503, 1
    %v5527 = vunpack.c.l.b16 %v5486
    %v5528 = vunpack.c.h.b16 %v5486
    %v5529 = vunpack.c.l.b16 %v5487
    %v5530 = vunpack.c.h.b16 %v5487
    %v5531 = vunpack.c.l.b16 %v5488
    %v5532 = vunpack.c.h.b16 %v5488
    %v5533 = vunpack.c.l.b16 %v5489
    %v5534 = vunpack.c.h.b16 %v5489
    %v5535 = vunpack.c.l.b16 %v5490
    %v5536 = vunpack.c.h.b16 %v5490
    %v5537 = vunpack.c.l.b16 %v5491
    %v5538 = vunpack.c.h.b16 %v5491
    %v5539 = vunpack.c.l.b16 %v5492
    %v5540 = vunpack.c.h.b16 %v5492
    %v5541 = vunpack.c.l.b16 %v5493
    %v5542 = vunpack.c.h.b16 %v5493
    %v5543 = vunpack.c.l.b16 %v5494
    %v5544 = vunpack.c.h.b16 %v5494
    %v5545 = vunpack.c.l.b16 %v5495
    %v5546 = vunpack.c.h.b16 %v5495
    %v5547 = vunpack.c.l.b16 %v5496
    %v5548 = vunpack.c.h.b16 %v5496
    %v5549 = vunpack.c.l.b16 %v5497
    %v5550 = vunpack.c.h.b16 %v5497
    %v5551 = vunpack.c.l.b16 %v5498
    %v5552 = vunpack.c.h.b16 %v5498
    %v5553 = vunpack.c.l.b16 %v5499
    %v5554 = vunpack.c.h.b16 %v5499
    %v5555 = vunpack.c.l.b16 %v5500
    %v5556 = vunpack.c.h.b16 %v5500
    %v5557 = vunpack.c.l.b16 %v5501
    %v5558 = vunpack.c.h.b16 %v5501
    %v5559 = vpack.c.b16 %v5529, %v5527
    %v5560 = vpack.c.b16 %v5530, %v5528
    %v5561 = vpack.c.b16 %v5533, %v5531
    %v5562 = vpack.c.b16 %v5534, %v5532
    %v5563 = vpack.c.b16 %v5537, %v5535
    %v5564 = vpack.c.b16 %v5538, %v5536
    %v5565 = vpack.c.b16 %v5541, %v5539
    %v5566 = vpack.c.b16 %v5542, %v5540
    %v5567 = vpack.c.b16 %v5545, %v5543
    %v5568 = vpack.c.b16 %v5546, %v5544
    %v5569 = vpack.c.b16 %v5549, %v5547
    %v5570 = vpack.c.b16 %v5550, %v5548
    %v5571 = vpack.c.b16 %v5553, %v5551
    %v5572 = vpack.c.b16 %v5554, %v5552
    %v5573 = vpack.c.b16 %v5557, %v5555
    %v5574 = vpack.c.b16 %v5558, %v5556
    %5591 = vmatpush.bf16.msra.mxu0 %v5573
    %5592 = vmatpush.bf16.msra.mxu0 %v5571
    %5593 = vmatpush.bf16.msra.mxu0 %v5569
    %5594 = vmatpush.bf16.msra.mxu0 %v5567
    %5595 = vmatpush.bf16.msra.mxu0 %v5565
    %5596 = vmatpush.bf16.msra.mxu0 %v5563
    %5597 = vmatpush.bf16.msra.mxu0 %v5561
    %5598 = vmatpush.bf16.msra.mxu0 %v5559
    %5599 = vmatmul.bf16.gmra.mxu0 %v5504
    %v5600 = vpop.f32.mrf.mxu0
    %v5601 = vadd.f32 %v5507, %v5600
    %v5602 = vpop.f32.mrf.mxu0
    %v5603 = vadd.f32 %v5507, %v5602
    %5604 = vmatmul.bf16.gmra.mxu0 %v5505
    %v5605 = vpop.f32.mrf.mxu0
    %v5606 = vadd.f32 %v5507, %v5605
    %v5607 = vpop.f32.mrf.mxu0
    %v5608 = vadd.f32 %v5507, %v5607
    %5609 = vdwg.mxu0
    %5610 = vmatpush.bf16.msra.mxu0 %v5574
    %5611 = vmatpush.bf16.msra.mxu0 %v5572
    %5612 = vmatpush.bf16.msra.mxu0 %v5570
    %5613 = vmatpush.bf16.msra.mxu0 %v5568
    %5614 = vmatpush.bf16.msra.mxu0 %v5566
    %5615 = vmatpush.bf16.msra.mxu0 %v5564
    %5616 = vmatpush.bf16.msra.mxu0 %v5562
    %5617 = vmatpush.bf16.msra.mxu0 %v5560
    %5618 = vmatmul.bf16.gmra.mxu0 %v5504
    %v5619 = vpop.f32.mrf.mxu0
    %v5620 = vadd.f32 %v5508, %v5619
    %v5621 = vpop.f32.mrf.mxu0
    %v5622 = vadd.f32 %v5508, %v5621
    %5623 = vmatmul.bf16.gmra.mxu0 %v5505
    %v5624 = vpop.f32.mrf.mxu0
    %v5625 = vadd.f32 %v5508, %v5624
    %v5626 = vpop.f32.mrf.mxu0
    %v5627 = vadd.f32 %v5508, %v5626
    %5628 = vdwg.mxu0
    %v5629 = vmax.f32 %v5601, 0.0
    %v5630 = vmax.f32 %v5620, 0.0
    %v5631 = vmax.f32 %v5603, 0.0
    %v5632 = vmax.f32 %v5622, 0.0
    %v5633 = vmax.f32 %v5606, 0.0
    %v5634 = vmax.f32 %v5625, 0.0
    %v5635 = vmax.f32 %v5608, 0.0
    %v5636 = vmax.f32 %v5627, 0.0
    %s5637 = scalar_lea.vmem [#allocation8], 128
    %v5638 = vld [vmem:[%s5637] sm:$0xf]
    %v5639 = vld [vmem:[%s5637 + $0x4] sm:$0xf]
    %v5640 = vld [vmem:[%s5637 + $0x8] sm:$0xf]
    %v5641 = vld [vmem:[%s5637 + $0xc] sm:$0xf]
    %v5642 = vld [vmem:[%s5637 + $0x10] sm:$0xf]
    %v5643 = vld [vmem:[%s5637 + $0x14] sm:$0xf]
    %v5644 = vld [vmem:[%s5637 + $0x18] sm:$0xf]
    %v5645 = vld [vmem:[%s5637 + $0x1c] sm:$0xf]
    %v5646 = vld [vmem:[%s5637 + $0x20] sm:$0xf]
    %v5647 = vld [vmem:[%s5637 + $0x24] sm:$0xf]
    %v5648 = vld [vmem:[%s5637 + $0x28] sm:$0xf]
    %v5649 = vld [vmem:[%s5637 + $0x2c] sm:$0xf]
    %v5650 = vld [vmem:[%s5637 + $0x30] sm:$0xf]
    %v5651 = vld [vmem:[%s5637 + $0x34] sm:$0xf]
    %v5652 = vld [vmem:[%s5637 + $0x38] sm:$0xf]
    %v5653 = vld [vmem:[%s5637 + $0x3c] sm:$0xf]
    %v5654 = vld [vmem:[%s5637 + $0x40] sm:$0xf]
    %v5655 = vld [vmem:[%s5637 + $0x44] sm:$0xf]
    %v5656 = vld [vmem:[%s5637 + $0x48] sm:$0xf]
    %v5657 = vld [vmem:[%s5637 + $0x4c] sm:$0xf]
    %v5658 = vld [vmem:[%s5637 + $0x50] sm:$0xf]
    %v5659 = vld [vmem:[%s5637 + $0x54] sm:$0xf]
    %v5660 = vld [vmem:[%s5637 + $0x58] sm:$0xf]
    %v5661 = vld [vmem:[%s5637 + $0x5c] sm:$0xf]
    %v5662 = vld [vmem:[%s5637 + $0x60] sm:$0xf]
    %v5663 = vld [vmem:[%s5637 + $0x64] sm:$0xf]
    %v5664 = vld [vmem:[%s5637 + $0x68] sm:$0xf]
    %v5665 = vld [vmem:[%s5637 + $0x6c] sm:$0xf]
    %v5666 = vld [vmem:[%s5637 + $0x70] sm:$0xf]
    %v5667 = vld [vmem:[%s5637 + $0x74] sm:$0xf]
    %v5668 = vld [vmem:[%s5637 + $0x78] sm:$0xf]
    %v5669 = vld [vmem:[%s5637 + $0x7c] sm:$0xf]
    %s5670 = scalar_lea.vmem %s9, 1
    %v5671 = vld [vmem:[%s5670] sm:$0x1]
    %v5672 = vpack.c.bf16 %v5631, %v5629
    %v5673 = vpack.c.bf16 %v5632, %v5630
    %v5674 = vpack.c.bf16 %v5635, %v5633
    %v5675 = vpack.c.bf16 %v5636, %v5634
    %v5677 = vperm.slane %v5671, 0
    %v5711 = vunpack.c.l.b16 %v5638
    %v5712 = vunpack.c.l.b16 %v5639
    %v5713 = vunpack.c.l.b16 %v5640
    %v5714 = vunpack.c.l.b16 %v5641
    %v5715 = vunpack.c.l.b16 %v5642
    %v5716 = vunpack.c.l.b16 %v5643
    %v5717 = vunpack.c.l.b16 %v5644
    %v5718 = vunpack.c.l.b16 %v5645
    %v5719 = vunpack.c.l.b16 %v5646
    %v5720 = vunpack.c.l.b16 %v5647
    %v5721 = vunpack.c.l.b16 %v5648
    %v5722 = vunpack.c.l.b16 %v5649
    %v5723 = vunpack.c.l.b16 %v5650
    %v5724 = vunpack.c.l.b16 %v5651
    %v5725 = vunpack.c.l.b16 %v5652
    %v5726 = vunpack.c.l.b16 %v5653
    %v5727 = vunpack.c.l.b16 %v5654
    %v5728 = vunpack.c.l.b16 %v5655
    %v5729 = vunpack.c.l.b16 %v5656
    %v5730 = vunpack.c.l.b16 %v5657
    %v5731 = vunpack.c.l.b16 %v5658
    %v5732 = vunpack.c.l.b16 %v5659
    %v5733 = vunpack.c.l.b16 %v5660
    %v5734 = vunpack.c.l.b16 %v5661
    %v5735 = vunpack.c.l.b16 %v5662
    %v5736 = vunpack.c.l.b16 %v5663
    %v5737 = vunpack.c.l.b16 %v5664
    %v5738 = vunpack.c.l.b16 %v5665
    %v5739 = vunpack.c.l.b16 %v5666
    %v5740 = vunpack.c.l.b16 %v5667
    %v5741 = vunpack.c.l.b16 %v5668
    %v5742 = vunpack.c.l.b16 %v5669
    %v5743 = vpack.c.b16 %v5712, %v5711
    %v5744 = vpack.c.b16 %v5714, %v5713
    %v5745 = vpack.c.b16 %v5716, %v5715
    %v5746 = vpack.c.b16 %v5718, %v5717
    %v5747 = vpack.c.b16 %v5720, %v5719
    %v5748 = vpack.c.b16 %v5722, %v5721
    %v5749 = vpack.c.b16 %v5724, %v5723
    %v5750 = vpack.c.b16 %v5726, %v5725
    %v5751 = vpack.c.b16 %v5728, %v5727
    %v5752 = vpack.c.b16 %v5730, %v5729
    %v5753 = vpack.c.b16 %v5732, %v5731
    %v5754 = vpack.c.b16 %v5734, %v5733
    %v5755 = vpack.c.b16 %v5736, %v5735
    %v5756 = vpack.c.b16 %v5738, %v5737
    %v5757 = vpack.c.b16 %v5740, %v5739
    %v5758 = vpack.c.b16 %v5742, %v5741
    %5775 = vmatpush.bf16.msra.mxu0 %v5750
    %5776 = vmatpush.bf16.msra.mxu0 %v5749
    %5777 = vmatpush.bf16.msra.mxu0 %v5748
    %5778 = vmatpush.bf16.msra.mxu0 %v5747
    %5779 = vmatpush.bf16.msra.mxu0 %v5746
    %5780 = vmatpush.bf16.msra.mxu0 %v5745
    %5781 = vmatpush.bf16.msra.mxu0 %v5744
    %5782 = vmatpush.bf16.msra.mxu0 %v5743
    %5783 = vmatmul.bf16.gmra.mxu0 %v5672
    %v5784 = vpop.f32.mrf.mxu0
    %v5785 = vadd.f32 %v5677, %v5784
    %v5786 = vpop.f32.mrf.mxu0
    %v5787 = vadd.f32 %v5677, %v5786
    %5788 = vmatmul.bf16.gmra.mxu0 %v5674
    %v5789 = vpop.f32.mrf.mxu0
    %v5790 = vadd.f32 %v5677, %v5789
    %v5791 = vpop.f32.mrf.mxu0
    %v5792 = vadd.f32 %v5677, %v5791
    %5793 = vdwg.mxu0
    %5794 = vmatpush.bf16.msra.mxu0 %v5758
    %5795 = vmatpush.bf16.msra.mxu0 %v5757
    %5796 = vmatpush.bf16.msra.mxu0 %v5756
    %5797 = vmatpush.bf16.msra.mxu0 %v5755
    %5798 = vmatpush.bf16.msra.mxu0 %v5754
    %5799 = vmatpush.bf16.msra.mxu0 %v5753
    %5800 = vmatpush.bf16.msra.mxu0 %v5752
    %5801 = vmatpush.bf16.msra.mxu0 %v5751
    %5802 = vmatmul.bf16.gmra.mxu0 %v5673
    %v5803 = vpop.f32.mrf.mxu0
    %v5804 = vadd.f32 %v5785, %v5803
    %v5805 = vpop.f32.mrf.mxu0
    %v5806 = vadd.f32 %v5787, %v5805
    %5807 = vmatmul.bf16.gmra.mxu0 %v5675
    %v5808 = vpop.f32.mrf.mxu0
    %v5809 = vadd.f32 %v5790, %v5808
    %v5810 = vpop.f32.mrf.mxu0
    %v5811 = vadd.f32 %v5792, %v5810
    %5812 = vdwg.mxu0
    %v5813 = vadd.f32 %v5481, %v5804
    %v5814 = vadd.f32 %v5482, %v5806
    %v5815 = vadd.f32 %v5483, %v5809
    %v5816 = vadd.f32 %v5484, %v5811
    %s5817 = scalar_lea.vmem %s12, 1
    %v5818 = vld [vmem:[%s5817] sm:$0x1]
    %s5819 = scalar_lea.vmem %s13, 1
    %v5820 = vld [vmem:[%s5819] sm:$0x1]
    %5821 = vadd.xlane.f32.xlu0 %v5813
    %v5822 = vpop.xlane.xlu0 %5821
    %5823 = vadd.xlane.f32.xlu0 %v5814
    %v5824 = vpop.xlane.xlu0 %5823
    %5825 = vadd.xlane.f32.xlu0 %v5815
    %v5826 = vpop.xlane.xlu0 %5825
    %5827 = vadd.xlane.f32.xlu0 %v5816
    %v5828 = vpop.xlane.xlu0 %5827
    %v5829 = vmul.f32 %v5822, %v2564
    %v5830 = vmul.f32 %v5824, %v2564
    %v5831 = vmul.f32 %v5826, %v2564
    %v5832 = vmul.f32 %v5828, %v2564
    %v5833 = vsub.f32 %v5813, %v5829
    %v5834 = vsub.f32 %v5814, %v5830
    %v5835 = vsub.f32 %v5815, %v5831
    %v5836 = vsub.f32 %v5816, %v5832
    %v5837 = vmul.f32 %v5833, %v5833
    %v5838 = vmul.f32 %v5834, %v5834
    %v5839 = vmul.f32 %v5835, %v5835
    %v5840 = vmul.f32 %v5836, %v5836
    %5841 = vadd.xlane.f32.xlu0 %v5837
    %v5842 = vpop.xlane.xlu0 %5841
    %5843 = vadd.xlane.f32.xlu0 %v5838
    %v5844 = vpop.xlane.xlu0 %5843
    %5845 = vadd.xlane.f32.xlu0 %v5839
    %v5846 = vpop.xlane.xlu0 %5845
    %5847 = vadd.xlane.f32.xlu0 %v5840
    %v5848 = vpop.xlane.xlu0 %5847
    %v5849 = vmul.f32 %v5842, %v2564
    %v5850 = vmul.f32 %v5844, %v2564
    %v5851 = vmul.f32 %v5846, %v2564
    %v5852 = vmul.f32 %v5848, %v2564
    %v5853 = vadd.f32 %v5849, 1e-05
    %v5854 = vadd.f32 %v5850, 1e-05
    %v5855 = vadd.f32 %v5851, 1e-05
    %v5856 = vadd.f32 %v5852, 1e-05
    %v5857 = vrsqrt.pop %v5853
    %v5858 = vmul.f32 %v5857, %v5853
    %v5859 = vmul.f32 %v5858, %v5857
    %v5860 = vmul.f32 0.5, %v5859
    %v5861 = vsub.f32 1.5, %v5860
    %v5862 = vmul.f32 %v5857, %v5861
    %vm5863 = vweird.f32 %v5853
    %vm5864 = vweird.f32 %v5857
    %vm5865 = vmor %vm5863, %vm5864
    %v5866 = vsel %vm5865, %v5857, %v5862
    %v5867 = vrsqrt.pop %v5854
    %v5868 = vmul.f32 %v5867, %v5854
    %v5869 = vmul.f32 %v5868, %v5867
    %v5870 = vmul.f32 0.5, %v5869
    %v5871 = vsub.f32 1.5, %v5870
    %v5872 = vmul.f32 %v5867, %v5871
    %vm5873 = vweird.f32 %v5854
    %vm5874 = vweird.f32 %v5867
    %vm5875 = vmor %vm5873, %vm5874
    %v5876 = vsel %vm5875, %v5867, %v5872
    %v5877 = vrsqrt.pop %v5855
    %v5878 = vmul.f32 %v5877, %v5855
    %v5879 = vmul.f32 %v5878, %v5877
    %v5880 = vmul.f32 0.5, %v5879
    %v5881 = vsub.f32 1.5, %v5880
    %v5882 = vmul.f32 %v5877, %v5881
    %vm5883 = vweird.f32 %v5855
    %vm5884 = vweird.f32 %v5877
    %vm5885 = vmor %vm5883, %vm5884
    %v5886 = vsel %vm5885, %v5877, %v5882
    %v5887 = vrsqrt.pop %v5856
    %v5888 = vmul.f32 %v5887, %v5856
    %v5889 = vmul.f32 %v5888, %v5887
    %v5890 = vmul.f32 0.5, %v5889
    %v5891 = vsub.f32 1.5, %v5890
    %v5892 = vmul.f32 %v5887, %v5891
    %vm5893 = vweird.f32 %v5856
    %vm5894 = vweird.f32 %v5887
    %vm5895 = vmor %vm5893, %vm5894
    %v5896 = vsel %vm5895, %v5887, %v5892
    %v5897 = vmul.f32 %v5833, %v5866
    %v5898 = vmul.f32 %v5834, %v5876
    %v5899 = vmul.f32 %v5835, %v5886
    %v5900 = vmul.f32 %v5836, %v5896
    %v5902 = vperm.slane %v5818, 0
    %v5904 = vmul.f32 %v5897, %v5902
    %v5905 = vmul.f32 %v5898, %v5902
    %v5906 = vmul.f32 %v5899, %v5902
    %v5907 = vmul.f32 %v5900, %v5902
    %v5909 = vperm.slane %v5820, 0
    %v5911 = vadd.f32 %v5904, %v5909
    %v5912 = vadd.f32 %v5905, %v5909
    %v5913 = vadd.f32 %v5906, %v5909
    %v5914 = vadd.f32 %v5907, %v5909
    %v5915 = vrot.slane %v5913, 4
    %vm5916 = vcmask 1047556
    %v5917 = vsel %vm5916, %v5915, %v5911
    %v5918 = vrot.slane %v5911, 4
    %v5919 = vsel %vm5916, %v5913, %v5918
    %v5921 = vunpack.c.l.s4 1983009808
    %v5922 = vunpack.c.0.s8 %v5921
    %v5923 = vperm.slane %v5917, %v5922
    %v5925 = vunpack.c.l.s4 1983009808
    %v5926 = vunpack.c.0.s8 %v5925
    %v5927 = vperm.slane %v5919, %v5926
    %v5928 = vrot.slane %v5914, 4
    %v5929 = vsel %vm5916, %v5928, %v5912
    %v5930 = vrot.slane %v5912, 4
    %v5931 = vsel %vm5916, %v5914, %v5930
    %v5933 = vunpack.c.l.s4 1983009808
    %v5934 = vunpack.c.0.s8 %v5933
    %v5935 = vperm.slane %v5929, %v5934
    %v5937 = vunpack.c.l.s4 1983009808
    %v5938 = vunpack.c.0.s8 %v5937
    %v5939 = vperm.slane %v5931, %v5938
    %v5940 = vrot.slane %v5935, 4
    %v5941 = vsel %vm5916, %v5940, %v5923
    %v5942 = vrot.slane %v5923, 4
    %v5943 = vsel %vm5916, %v5935, %v5942
    %v5945 = vunpack.c.l.s4 1934713408
    %v5946 = vunpack.c.0.s8 %v5945
    %v5947 = vperm.slane %v5941, %v5946
    %v5949 = vunpack.c.l.s4 1934713408
    %v5950 = vunpack.c.0.s8 %v5949
    %v5951 = vperm.slane %v5943, %v5950
    %v5952 = vrot.slane %v5939, 4
    %v5953 = vsel %vm5916, %v5952, %v5927
    %v5954 = vrot.slane %v5927, 4
    %v5955 = vsel %vm5916, %v5939, %v5954
    %v5957 = vunpack.c.l.s4 1934713408
    %v5958 = vunpack.c.0.s8 %v5957
    %v5959 = vperm.slane %v5953, %v5958
    %v5961 = vunpack.c.l.s4 1934713408
    %v5962 = vunpack.c.0.s8 %v5961
    %v5963 = vperm.slane %v5955, %v5962
    %v5964 = vrot.slane %v5947, 4
    %v5965 = vsel %vm5916, 0.0, %v5964
    %v5966 = vrot.slane %v5951, 4
    %v5967 = vsel %vm5916, 0.0, %v5966
    %v5968 = vrot.slane %v5959, 4
    %v5969 = vsel %vm5916, 0.0, %v5968
    %v5970 = vrot.slane %v5963, 4
    %v5971 = vsel %vm5916, 0.0, %v5970
    %5980 = vst [vmem:[#allocation1] ss:$2 sm:$0xff] %v5947
    %s5981 = scalar_lea.vmem [#allocation1], 1
    %5982 = vst [vmem:[%s5981] ss:$2 sm:$0xff] %v5965
    %s5983 = scalar_lea.vmem [#allocation1], 16
    %5984 = vst [vmem:[%s5983] ss:$2 sm:$0xff] %v5951
    %s5985 = scalar_lea.vmem [#allocation1], 17
    %5986 = vst [vmem:[%s5985] ss:$2 sm:$0xff] %v5967
    %s5987 = scalar_lea.vmem [#allocation1], 32
    %5988 = vst [vmem:[%s5987] ss:$2 sm:$0xff] %v5959
    %s5989 = scalar_lea.vmem [#allocation1], 33
    %5990 = vst [vmem:[%s5989] ss:$2 sm:$0xff] %v5969
    %s5991 = scalar_lea.vmem [#allocation1], 48
    %5992 = vst [vmem:[%s5991] ss:$2 sm:$0xff] %v5963
    %s5993 = scalar_lea.vmem [#allocation1], 49
    %5994 = vst [vmem:[%s5993] ss:$2 sm:$0xff] %v5971
    %v5995 = vld.sshfl [vmem:[#allocation1] sm:$0xff pattern:$0x75316420]
    %v5996 = vld.sshfl [vmem:[#allocation1 + $0x10] sm:$0xff pattern:$0x75316420]
    %v5997 = vld.sshfl [vmem:[#allocation1 + $0x20] sm:$0xff pattern:$0x75316420]
    %v5998 = vld.sshfl [vmem:[#allocation1 + $0x30] sm:$0xff pattern:$0x75316420]
    %6003 = vst [vmem:[#allocation18] sm:$0xff] %v5995
    %6004 = vst [vmem:[#allocation18 + $0x8] sm:$0xff] %v5996
    %6005 = vst [vmem:[#allocation18 + $0x10] sm:$0xff] %v5997
    %6006 = vst [vmem:[#allocation18 + $0x18] sm:$0xff] %v5998
    %v6007 = vld [vmem:[#allocation10] sm:$0xf]
    %v6008 = vld [vmem:[#allocation10 + $0x4] sm:$0xf]
    %v6009 = vld [vmem:[#allocation10 + $0x8] sm:$0xf]
    %v6010 = vld [vmem:[#allocation10 + $0xc] sm:$0xf]
    %v6011 = vld [vmem:[#allocation10 + $0x10] sm:$0xf]
    %v6012 = vld [vmem:[#allocation10 + $0x14] sm:$0xf]
    %v6013 = vld [vmem:[#allocation10 + $0x18] sm:$0xf]
    %v6014 = vld [vmem:[#allocation10 + $0x1c] sm:$0xf]
    %v6015 = vld [vmem:[#allocation10 + $0x20] sm:$0xf]
    %v6016 = vld [vmem:[#allocation10 + $0x24] sm:$0xf]
    %v6017 = vld [vmem:[#allocation10 + $0x28] sm:$0xf]
    %v6018 = vld [vmem:[#allocation10 + $0x2c] sm:$0xf]
    %v6019 = vld [vmem:[#allocation10 + $0x30] sm:$0xf]
    %v6020 = vld [vmem:[#allocation10 + $0x34] sm:$0xf]
    %v6021 = vld [vmem:[#allocation10 + $0x38] sm:$0xf]
    %v6022 = vld [vmem:[#allocation10 + $0x3c] sm:$0xf]
    %v6023 = vld [vmem:[%s15] sm:$0x1]
    %6024 = vst [vmem:[#allocation1] ss:$2 sm:$0xff] %v5947
    %s6025 = scalar_lea.vmem [#allocation1], 1
    %6026 = vst [vmem:[%s6025] ss:$2 sm:$0xff] %v5965
    %s6027 = scalar_lea.vmem [#allocation1], 16
    %6028 = vst [vmem:[%s6027] ss:$2 sm:$0xff] %v5951
    %s6029 = scalar_lea.vmem [#allocation1], 17
    %6030 = vst [vmem:[%s6029] ss:$2 sm:$0xff] %v5967
    %s6031 = scalar_lea.vmem [#allocation1], 32
    %6032 = vst [vmem:[%s6031] ss:$2 sm:$0xff] %v5959
    %s6033 = scalar_lea.vmem [#allocation1], 33
    %6034 = vst [vmem:[%s6033] ss:$2 sm:$0xff] %v5969
    %s6035 = scalar_lea.vmem [#allocation1], 48
    %6036 = vst [vmem:[%s6035] ss:$2 sm:$0xff] %v5963
    %s6037 = scalar_lea.vmem [#allocation1], 49
    %6038 = vst [vmem:[%s6037] ss:$2 sm:$0xff] %v5971
    %v6039 = vld.sshfl [vmem:[#allocation1] sm:$0xff pattern:$0x75316420]
    %v6040 = vld.sshfl [vmem:[#allocation1 + $0x10] sm:$0xff pattern:$0x75316420]
    %v6041 = vld.sshfl [vmem:[#allocation1 + $0x20] sm:$0xff pattern:$0x75316420]
    %v6042 = vld.sshfl [vmem:[#allocation1 + $0x30] sm:$0xff pattern:$0x75316420]
    %v6047 = vpack.c.bf16 %v6040, %v6039
    %v6048 = vpack.c.bf16 %v6042, %v6041
    %v6050 = vperm.slane %v6023, 0
    %v6068 = vunpack.c.l.b16 %v6007
    %v6069 = vunpack.c.l.b16 %v6008
    %v6070 = vunpack.c.l.b16 %v6009
    %v6071 = vunpack.c.l.b16 %v6010
    %v6072 = vunpack.c.l.b16 %v6011
    %v6073 = vunpack.c.l.b16 %v6012
    %v6074 = vunpack.c.l.b16 %v6013
    %v6075 = vunpack.c.l.b16 %v6014
    %v6076 = vunpack.c.l.b16 %v6015
    %v6077 = vunpack.c.l.b16 %v6016
    %v6078 = vunpack.c.l.b16 %v6017
    %v6079 = vunpack.c.l.b16 %v6018
    %v6080 = vunpack.c.l.b16 %v6019
    %v6081 = vunpack.c.l.b16 %v6020
    %v6082 = vunpack.c.l.b16 %v6021
    %v6083 = vunpack.c.l.b16 %v6022
    %v6084 = vpack.c.b16 %v6069, %v6068
    %v6085 = vpack.c.b16 %v6071, %v6070
    %v6086 = vpack.c.b16 %v6073, %v6072
    %v6087 = vpack.c.b16 %v6075, %v6074
    %v6088 = vpack.c.b16 %v6077, %v6076
    %v6089 = vpack.c.b16 %v6079, %v6078
    %v6090 = vpack.c.b16 %v6081, %v6080
    %v6091 = vpack.c.b16 %v6083, %v6082
    %6100 = vmatpush.bf16.msra.mxu0 %v6091
    %6101 = vmatpush.bf16.msra.mxu0 %v6090
    %6102 = vmatpush.bf16.msra.mxu0 %v6089
    %6103 = vmatpush.bf16.msra.mxu0 %v6088
    %6104 = vmatpush.bf16.msra.mxu0 %v6087
    %6105 = vmatpush.bf16.msra.mxu0 %v6086
    %6106 = vmatpush.bf16.msra.mxu0 %v6085
    %6107 = vmatpush.bf16.msra.mxu0 %v6084
    %6108 = vmatmul.bf16.gmra.mxu0 %v6047
    %v6109 = vpop.f32.mrf.mxu0
    %v6110 = vadd.f32 %v6050, %v6109
    %v6111 = vpop.f32.mrf.mxu0
    %v6112 = vadd.f32 %v6050, %v6111
    %6113 = vmatmul.bf16.gmra.mxu0 %v6048
    %v6114 = vpop.f32.mrf.mxu0
    %v6115 = vadd.f32 %v6050, %v6114
    %v6116 = vpop.f32.mrf.mxu0
    %v6117 = vadd.f32 %v6050, %v6116
    %6118 = vdwg.mxu0
    %v6119 = vld [vmem:[#allocation11] sm:$0xf]
    %v6120 = vld [vmem:[#allocation11 + $0x4] sm:$0xf]
    %v6121 = vld [vmem:[#allocation11 + $0x8] sm:$0xf]
    %v6122 = vld [vmem:[#allocation11 + $0xc] sm:$0xf]
    %v6123 = vld [vmem:[#allocation11 + $0x10] sm:$0xf]
    %v6124 = vld [vmem:[#allocation11 + $0x14] sm:$0xf]
    %v6125 = vld [vmem:[#allocation11 + $0x18] sm:$0xf]
    %v6126 = vld [vmem:[#allocation11 + $0x1c] sm:$0xf]
    %v6127 = vld [vmem:[#allocation11 + $0x20] sm:$0xf]
    %v6128 = vld [vmem:[#allocation11 + $0x24] sm:$0xf]
    %v6129 = vld [vmem:[#allocation11 + $0x28] sm:$0xf]
    %v6130 = vld [vmem:[#allocation11 + $0x2c] sm:$0xf]
    %v6131 = vld [vmem:[#allocation11 + $0x30] sm:$0xf]
    %v6132 = vld [vmem:[#allocation11 + $0x34] sm:$0xf]
    %v6133 = vld [vmem:[#allocation11 + $0x38] sm:$0xf]
    %v6134 = vld [vmem:[#allocation11 + $0x3c] sm:$0xf]
    %v6135 = vld [vmem:[%s17] sm:$0x1]
    %v6136 = vpack.c.bf16 %v228, %v227
    %v6137 = vpack.c.bf16 %v230, %v229
    %v6139 = vperm.slane %v6135, 0
    %v6157 = vunpack.c.l.b16 %v6119
    %v6158 = vunpack.c.l.b16 %v6120
    %v6159 = vunpack.c.l.b16 %v6121
    %v6160 = vunpack.c.l.b16 %v6122
    %v6161 = vunpack.c.l.b16 %v6123
    %v6162 = vunpack.c.l.b16 %v6124
    %v6163 = vunpack.c.l.b16 %v6125
    %v6164 = vunpack.c.l.b16 %v6126
    %v6165 = vunpack.c.l.b16 %v6127
    %v6166 = vunpack.c.l.b16 %v6128
    %v6167 = vunpack.c.l.b16 %v6129
    %v6168 = vunpack.c.l.b16 %v6130
    %v6169 = vunpack.c.l.b16 %v6131
    %v6170 = vunpack.c.l.b16 %v6132
    %v6171 = vunpack.c.l.b16 %v6133
    %v6172 = vunpack.c.l.b16 %v6134
    %v6173 = vpack.c.b16 %v6158, %v6157
    %v6174 = vpack.c.b16 %v6160, %v6159
    %v6175 = vpack.c.b16 %v6162, %v6161
    %v6176 = vpack.c.b16 %v6164, %v6163
    %v6177 = vpack.c.b16 %v6166, %v6165
    %v6178 = vpack.c.b16 %v6168, %v6167
    %v6179 = vpack.c.b16 %v6170, %v6169
    %v6180 = vpack.c.b16 %v6172, %v6171
    %6189 = vmatpush.bf16.msra.mxu0 %v6180
    %6190 = vmatpush.bf16.msra.mxu0 %v6179
    %6191 = vmatpush.bf16.msra.mxu0 %v6178
    %6192 = vmatpush.bf16.msra.mxu0 %v6177
    %6193 = vmatpush.bf16.msra.mxu0 %v6176
    %6194 = vmatpush.bf16.msra.mxu0 %v6175
    %6195 = vmatpush.bf16.msra.mxu0 %v6174
    %6196 = vmatpush.bf16.msra.mxu0 %v6173
    %6197 = vmatmul.bf16.gmra.mxu0 %v6136
    %v6198 = vpop.f32.mrf.mxu0
    %v6199 = vadd.f32 %v6139, %v6198
    %v6200 = vpop.f32.mrf.mxu0
    %v6201 = vadd.f32 %v6139, %v6200
    %6202 = vmatmul.bf16.gmra.mxu0 %v6137
    %v6203 = vpop.f32.mrf.mxu0
    %v6204 = vadd.f32 %v6139, %v6203
    %v6205 = vpop.f32.mrf.mxu0
    %v6206 = vadd.f32 %v6139, %v6205
    %6207 = vdwg.mxu0
    %v6212 = vrot.slane %v6110, 4
    %v6213 = vrot.slane %v6112, 4
    %v6214 = vrot.slane %v6115, 4
    %v6215 = vrot.slane %v6117, 4
    %v6220 = vpack.c.bf16 %v6110, %v6110
    %v6221 = vpack.c.bf16 %v6212, %v6212
    %v6222 = vpack.c.bf16 %v6112, %v6112
    %v6223 = vpack.c.bf16 %v6213, %v6213
    %v6224 = vpack.c.bf16 %v6115, %v6115
    %v6225 = vpack.c.bf16 %v6214, %v6214
    %v6226 = vpack.c.bf16 %v6117, %v6117
    %v6227 = vpack.c.bf16 %v6215, %v6215
    %v6232 = vrot.slane %v6199, 4
    %v6233 = vrot.slane %v6201, 4
    %v6234 = vrot.slane %v6204, 4
    %v6235 = vrot.slane %v6206, 4
    %v6240 = vpack.c.bf16 %v6199, %v6199
    %v6241 = vpack.c.bf16 %v6232, %v6232
    %v6242 = vpack.c.bf16 %v6201, %v6201
    %v6243 = vpack.c.bf16 %v6233, %v6233
    %v6244 = vpack.c.bf16 %v6204, %v6204
    %v6245 = vpack.c.bf16 %v6234, %v6234
    %v6246 = vpack.c.bf16 %v6206, %v6206
    %v6247 = vpack.c.bf16 %v6235, %v6235
    %v6252 = vrot.slane %v227, 4
    %v6253 = vrot.slane %v228, 4
    %v6254 = vrot.slane %v229, 4
    %v6255 = vrot.slane %v230, 4
    %v6260 = vpack.c.bf16 %v227, %v227
    %v6261 = vpack.c.bf16 %v6252, %v6252
    %v6262 = vpack.c.bf16 %v228, %v228
    %v6263 = vpack.c.bf16 %v6253, %v6253
    %v6264 = vpack.c.bf16 %v229, %v229
    %v6265 = vpack.c.bf16 %v6254, %v6254
    %v6266 = vpack.c.bf16 %v230, %v230
    %v6267 = vpack.c.bf16 %v6255, %v6255
    %6268 = vmatpush.bf16.xpose.msra.mxu0 0
    %6269 = vmatpush.bf16.xpose.msra.mxu0 0
    %6270 = vmatpush.bf16.xpose.msra.mxu0 0
    %6271 = vmatpush.bf16.xpose.msra.mxu0 0
    %6272 = vmatpush.bf16.xpose.msra.mxu0 0
    %6273 = vmatpush.bf16.xpose.msra.mxu0 0
    %6274 = vmatpush.bf16.xpose.msra.mxu0 0
    %6275 = vmatpush.bf16.xpose.msra.mxu0 %v6240
    %6276 = vmatmul.bf16.gmra.mxu0 %v6220
    %v6277 = vpop.f32.mrf.mxu0
    %v6278 = vadd.f32 0.0, %v6277
    %v6279 = vpop.f32.mrf.mxu0
    %6280 = vdwg.mxu0
    %6281 = vmatpush.bf16.xpose.msra.mxu0 0
    %6282 = vmatpush.bf16.xpose.msra.mxu0 0
    %6283 = vmatpush.bf16.xpose.msra.mxu0 0
    %6284 = vmatpush.bf16.xpose.msra.mxu0 0
    %6285 = vmatpush.bf16.xpose.msra.mxu0 0
    %6286 = vmatpush.bf16.xpose.msra.mxu0 0
    %6287 = vmatpush.bf16.xpose.msra.mxu0 0
    %6288 = vmatpush.bf16.xpose.msra.mxu0 %v6241
    %6289 = vmatmul.bf16.gmra.mxu0 %v6221
    %v6290 = vpop.f32.mrf.mxu0
    %v6291 = vadd.f32 0.0, %v6290
    %v6292 = vpop.f32.mrf.mxu0
    %6293 = vdwg.mxu0
    %6294 = vmatpush.bf16.xpose.msra.mxu0 0
    %6295 = vmatpush.bf16.xpose.msra.mxu0 0
    %6296 = vmatpush.bf16.xpose.msra.mxu0 0
    %6297 = vmatpush.bf16.xpose.msra.mxu0 0
    %6298 = vmatpush.bf16.xpose.msra.mxu0 0
    %6299 = vmatpush.bf16.xpose.msra.mxu0 0
    %6300 = vmatpush.bf16.xpose.msra.mxu0 0
    %6301 = vmatpush.bf16.xpose.msra.mxu0 %v6242
    %6302 = vmatmul.bf16.gmra.mxu0 %v6222
    %v6303 = vpop.f32.mrf.mxu0
    %v6304 = vadd.f32 0.0, %v6303
    %v6305 = vpop.f32.mrf.mxu0
    %6306 = vdwg.mxu0
    %6307 = vmatpush.bf16.xpose.msra.mxu0 0
    %6308 = vmatpush.bf16.xpose.msra.mxu0 0
    %6309 = vmatpush.bf16.xpose.msra.mxu0 0
    %6310 = vmatpush.bf16.xpose.msra.mxu0 0
    %6311 = vmatpush.bf16.xpose.msra.mxu0 0
    %6312 = vmatpush.bf16.xpose.msra.mxu0 0
    %6313 = vmatpush.bf16.xpose.msra.mxu0 0
    %6314 = vmatpush.bf16.xpose.msra.mxu0 %v6243
    %6315 = vmatmul.bf16.gmra.mxu0 %v6223
    %v6316 = vpop.f32.mrf.mxu0
    %v6317 = vadd.f32 0.0, %v6316
    %v6318 = vpop.f32.mrf.mxu0
    %6319 = vdwg.mxu0
    %6320 = vmatpush.bf16.xpose.msra.mxu0 0
    %6321 = vmatpush.bf16.xpose.msra.mxu0 0
    %6322 = vmatpush.bf16.xpose.msra.mxu0 0
    %6323 = vmatpush.bf16.xpose.msra.mxu0 0
    %6324 = vmatpush.bf16.xpose.msra.mxu0 0
    %6325 = vmatpush.bf16.xpose.msra.mxu0 0
    %6326 = vmatpush.bf16.xpose.msra.mxu0 0
    %6327 = vmatpush.bf16.xpose.msra.mxu0 %v6244
    %6328 = vmatmul.bf16.gmra.mxu0 %v6224
    %v6329 = vpop.f32.mrf.mxu0
    %v6330 = vadd.f32 0.0, %v6329
    %v6331 = vpop.f32.mrf.mxu0
    %6332 = vdwg.mxu0
    %6333 = vmatpush.bf16.xpose.msra.mxu0 0
    %6334 = vmatpush.bf16.xpose.msra.mxu0 0
    %6335 = vmatpush.bf16.xpose.msra.mxu0 0
    %6336 = vmatpush.bf16.xpose.msra.mxu0 0
    %6337 = vmatpush.bf16.xpose.msra.mxu0 0
    %6338 = vmatpush.bf16.xpose.msra.mxu0 0
    %6339 = vmatpush.bf16.xpose.msra.mxu0 0
    %6340 = vmatpush.bf16.xpose.msra.mxu0 %v6245
    %6341 = vmatmul.bf16.gmra.mxu0 %v6225
    %v6342 = vpop.f32.mrf.mxu0
    %v6343 = vadd.f32 0.0, %v6342
    %v6344 = vpop.f32.mrf.mxu0
    %6345 = vdwg.mxu0
    %6346 = vmatpush.bf16.xpose.msra.mxu0 0
    %6347 = vmatpush.bf16.xpose.msra.mxu0 0
    %6348 = vmatpush.bf16.xpose.msra.mxu0 0
    %6349 = vmatpush.bf16.xpose.msra.mxu0 0
    %6350 = vmatpush.bf16.xpose.msra.mxu0 0
    %6351 = vmatpush.bf16.xpose.msra.mxu0 0
    %6352 = vmatpush.bf16.xpose.msra.mxu0 0
    %6353 = vmatpush.bf16.xpose.msra.mxu0 %v6246
    %6354 = vmatmul.bf16.gmra.mxu0 %v6226
    %v6355 = vpop.f32.mrf.mxu0
    %v6356 = vadd.f32 0.0, %v6355
    %v6357 = vpop.f32.mrf.mxu0
    %6358 = vdwg.mxu0
    %6359 = vmatpush.bf16.xpose.msra.mxu0 0
    %6360 = vmatpush.bf16.xpose.msra.mxu0 0
    %6361 = vmatpush.bf16.xpose.msra.mxu0 0
    %6362 = vmatpush.bf16.xpose.msra.mxu0 0
    %6363 = vmatpush.bf16.xpose.msra.mxu0 0
    %6364 = vmatpush.bf16.xpose.msra.mxu0 0
    %6365 = vmatpush.bf16.xpose.msra.mxu0 0
    %6366 = vmatpush.bf16.xpose.msra.mxu0 %v6247
    %6367 = vmatmul.bf16.gmra.mxu0 %v6227
    %v6368 = vpop.f32.mrf.mxu0
    %v6369 = vadd.f32 0.0, %v6368
    %v6370 = vpop.f32.mrf.mxu0
    %6371 = vdwg.mxu0
    %v6372 = vmul.f32 %v6278, 0.088388346
    %v6373 = vmul.f32 %v6291, 0.088388346
    %v6374 = vmul.f32 %v6304, 0.088388346
    %v6375 = vmul.f32 %v6317, 0.088388346
    %v6376 = vmul.f32 %v6330, 0.088388346
    %v6377 = vmul.f32 %v6343, 0.088388346
    %v6378 = vmul.f32 %v6356, 0.088388346
    %v6379 = vmul.f32 %v6369, 0.088388346
    %vm6380 = vcmask 27648
    %v6381 = vsel %vm6380, %v6372, -inf
    %6382 = vmax.xlane.f32.xlu0 %v6381
    %v6383 = vpop.xlane.xlu0 %6382
    %v6384 = vsel %vm6380, %v6373, -inf
    %6385 = vmax.xlane.f32.xlu0 %v6384
    %v6386 = vpop.xlane.xlu0 %6385
    %v6387 = vsel %vm6380, %v6374, -inf
    %6388 = vmax.xlane.f32.xlu0 %v6387
    %v6389 = vpop.xlane.xlu0 %6388
    %v6390 = vsel %vm6380, %v6375, -inf
    %6391 = vmax.xlane.f32.xlu0 %v6390
    %v6392 = vpop.xlane.xlu0 %6391
    %v6393 = vsel %vm6380, %v6376, -inf
    %6394 = vmax.xlane.f32.xlu0 %v6393
    %v6395 = vpop.xlane.xlu0 %6394
    %v6396 = vsel %vm6380, %v6377, -inf
    %6397 = vmax.xlane.f32.xlu0 %v6396
    %v6398 = vpop.xlane.xlu0 %6397
    %v6399 = vsel %vm6380, %v6378, -inf
    %6400 = vmax.xlane.f32.xlu0 %v6399
    %v6401 = vpop.xlane.xlu0 %6400
    %v6402 = vsel %vm6380, %v6379, -inf
    %6403 = vmax.xlane.f32.xlu0 %v6402
    %v6404 = vpop.xlane.xlu0 %6403
    %v6405 = vsub.f32 %v6372, %v6383
    %v6406 = vsub.f32 %v6373, %v6386
    %v6407 = vsub.f32 %v6374, %v6389
    %v6408 = vsub.f32 %v6375, %v6392
    %v6409 = vsub.f32 %v6376, %v6395
    %v6410 = vsub.f32 %v6377, %v6398
    %v6411 = vsub.f32 %v6378, %v6401
    %v6412 = vsub.f32 %v6379, %v6404
    %v6413 = vmul.f32 %v6405, 1.442695
    %v6414 = vpow.pop %v6413
    %v6415 = vmul.f32 %v6406, 1.442695
    %v6416 = vpow.pop %v6415
    %v6417 = vmul.f32 %v6407, 1.442695
    %v6418 = vpow.pop %v6417
    %v6419 = vmul.f32 %v6408, 1.442695
    %v6420 = vpow.pop %v6419
    %v6421 = vmul.f32 %v6409, 1.442695
    %v6422 = vpow.pop %v6421
    %v6423 = vmul.f32 %v6410, 1.442695
    %v6424 = vpow.pop %v6423
    %v6425 = vmul.f32 %v6411, 1.442695
    %v6426 = vpow.pop %v6425
    %v6427 = vmul.f32 %v6412, 1.442695
    %v6428 = vpow.pop %v6427
    %v6429 = vsel %vm6380, %v6414, 0.0
    %6430 = vadd.xlane.f32.xlu0 %v6429
    %v6431 = vpop.xlane.xlu0 %6430
    %v6432 = vsel %vm6380, %v6416, 0.0
    %6433 = vadd.xlane.f32.xlu0 %v6432
    %v6434 = vpop.xlane.xlu0 %6433
    %v6435 = vsel %vm6380, %v6418, 0.0
    %6436 = vadd.xlane.f32.xlu0 %v6435
    %v6437 = vpop.xlane.xlu0 %6436
    %v6438 = vsel %vm6380, %v6420, 0.0
    %6439 = vadd.xlane.f32.xlu0 %v6438
    %v6440 = vpop.xlane.xlu0 %6439
    %v6441 = vsel %vm6380, %v6422, 0.0
    %6442 = vadd.xlane.f32.xlu0 %v6441
    %v6443 = vpop.xlane.xlu0 %6442
    %v6444 = vsel %vm6380, %v6424, 0.0
    %6445 = vadd.xlane.f32.xlu0 %v6444
    %v6446 = vpop.xlane.xlu0 %6445
    %v6447 = vsel %vm6380, %v6426, 0.0
    %6448 = vadd.xlane.f32.xlu0 %v6447
    %v6449 = vpop.xlane.xlu0 %6448
    %v6450 = vsel %vm6380, %v6428, 0.0
    %6451 = vadd.xlane.f32.xlu0 %v6450
    %v6452 = vpop.xlane.xlu0 %6451
    %v6453 = vrcp.pop %v6431
    %v6454 = vrcp.pop %v6434
    %v6455 = vrcp.pop %v6437
    %v6456 = vrcp.pop %v6440
    %v6457 = vrcp.pop %v6443
    %v6458 = vrcp.pop %v6446
    %v6459 = vrcp.pop %v6449
    %v6460 = vrcp.pop %v6452
    %v6461 = vmul.f32 %v6414, %v6453
    %v6462 = vmul.f32 %v6416, %v6454
    %v6463 = vmul.f32 %v6418, %v6455
    %v6464 = vmul.f32 %v6420, %v6456
    %v6465 = vmul.f32 %v6422, %v6457
    %v6466 = vmul.f32 %v6424, %v6458
    %v6467 = vmul.f32 %v6426, %v6459
    %v6468 = vmul.f32 %v6428, %v6460
    %v6469 = vpack.c.bf16 %v6461, %v6461
    %v6470 = vpack.c.bf16 %v6462, %v6462
    %v6471 = vpack.c.bf16 %v6463, %v6463
    %v6472 = vpack.c.bf16 %v6464, %v6464
    %v6473 = vpack.c.bf16 %v6465, %v6465
    %v6474 = vpack.c.bf16 %v6466, %v6466
    %v6475 = vpack.c.bf16 %v6467, %v6467
    %v6476 = vpack.c.bf16 %v6468, %v6468
    %vm6477 = vcmask 31744
    %v6479 = vsel %vm6477, %v6469, 0
    %vm6481 = vcmask 1041408
    %v6483 = vsel %vm6481, %v6260, 0
    %6485 = vmatpush.bf16.msra.mxu0 0
    %6486 = vmatpush.bf16.msra.mxu0 0
    %6487 = vmatpush.bf16.msra.mxu0 0
    %6488 = vmatpush.bf16.msra.mxu0 0
    %6489 = vmatpush.bf16.msra.mxu0 0
    %6490 = vmatpush.bf16.msra.mxu0 0
    %6491 = vmatpush.bf16.msra.mxu0 0
    %6492 = vmatpush.bf16.msra.mxu0 %v6483
    %6493 = vmatmul.bf16.gmra.mxu0 %v6479
    %v6494 = vpop.f32.mrf.mxu0
    %v6495 = vadd.f32 0.0, %v6494
    %v6496 = vpop.f32.mrf.mxu0
    %6497 = vdwg.mxu0
    %v6499 = vsel %vm6477, %v6470, 0
    %v6502 = vsel %vm6481, %v6261, 0
    %6504 = vmatpush.bf16.msra.mxu0 0
    %6505 = vmatpush.bf16.msra.mxu0 0
    %6506 = vmatpush.bf16.msra.mxu0 0
    %6507 = vmatpush.bf16.msra.mxu0 0
    %6508 = vmatpush.bf16.msra.mxu0 0
    %6509 = vmatpush.bf16.msra.mxu0 0
    %6510 = vmatpush.bf16.msra.mxu0 0
    %6511 = vmatpush.bf16.msra.mxu0 %v6502
    %6512 = vmatmul.bf16.gmra.mxu0 %v6499
    %v6513 = vpop.f32.mrf.mxu0
    %v6514 = vadd.f32 0.0, %v6513
    %v6515 = vpop.f32.mrf.mxu0
    %6516 = vdwg.mxu0
    %v6518 = vsel %vm6477, %v6471, 0
    %v6521 = vsel %vm6481, %v6262, 0
    %6523 = vmatpush.bf16.msra.mxu0 0
    %6524 = vmatpush.bf16.msra.mxu0 0
    %6525 = vmatpush.bf16.msra.mxu0 0
    %6526 = vmatpush.bf16.msra.mxu0 0
    %6527 = vmatpush.bf16.msra.mxu0 0
    %6528 = vmatpush.bf16.msra.mxu0 0
    %6529 = vmatpush.bf16.msra.mxu0 0
    %6530 = vmatpush.bf16.msra.mxu0 %v6521
    %6531 = vmatmul.bf16.gmra.mxu0 %v6518
    %v6532 = vpop.f32.mrf.mxu0
    %v6533 = vadd.f32 0.0, %v6532
    %v6534 = vpop.f32.mrf.mxu0
    %6535 = vdwg.mxu0
    %v6537 = vsel %vm6477, %v6472, 0
    %v6540 = vsel %vm6481, %v6263, 0
    %6542 = vmatpush.bf16.msra.mxu0 0
    %6543 = vmatpush.bf16.msra.mxu0 0
    %6544 = vmatpush.bf16.msra.mxu0 0
    %6545 = vmatpush.bf16.msra.mxu0 0
    %6546 = vmatpush.bf16.msra.mxu0 0
    %6547 = vmatpush.bf16.msra.mxu0 0
    %6548 = vmatpush.bf16.msra.mxu0 0
    %6549 = vmatpush.bf16.msra.mxu0 %v6540
    %6550 = vmatmul.bf16.gmra.mxu0 %v6537
    %v6551 = vpop.f32.mrf.mxu0
    %v6552 = vadd.f32 0.0, %v6551
    %v6553 = vpop.f32.mrf.mxu0
    %6554 = vdwg.mxu0
    %v6556 = vsel %vm6477, %v6473, 0
    %v6559 = vsel %vm6481, %v6264, 0
    %6561 = vmatpush.bf16.msra.mxu0 0
    %6562 = vmatpush.bf16.msra.mxu0 0
    %6563 = vmatpush.bf16.msra.mxu0 0
    %6564 = vmatpush.bf16.msra.mxu0 0
    %6565 = vmatpush.bf16.msra.mxu0 0
    %6566 = vmatpush.bf16.msra.mxu0 0
    %6567 = vmatpush.bf16.msra.mxu0 0
    %6568 = vmatpush.bf16.msra.mxu0 %v6559
    %6569 = vmatmul.bf16.gmra.mxu0 %v6556
    %v6570 = vpop.f32.mrf.mxu0
    %v6571 = vadd.f32 0.0, %v6570
    %v6572 = vpop.f32.mrf.mxu0
    %6573 = vdwg.mxu0
    %v6575 = vsel %vm6477, %v6474, 0
    %v6578 = vsel %vm6481, %v6265, 0
    %6580 = vmatpush.bf16.msra.mxu0 0
    %6581 = vmatpush.bf16.msra.mxu0 0
    %6582 = vmatpush.bf16.msra.mxu0 0
    %6583 = vmatpush.bf16.msra.mxu0 0
    %6584 = vmatpush.bf16.msra.mxu0 0
    %6585 = vmatpush.bf16.msra.mxu0 0
    %6586 = vmatpush.bf16.msra.mxu0 0
    %6587 = vmatpush.bf16.msra.mxu0 %v6578
    %6588 = vmatmul.bf16.gmra.mxu0 %v6575
    %v6589 = vpop.f32.mrf.mxu0
    %v6590 = vadd.f32 0.0, %v6589
    %v6591 = vpop.f32.mrf.mxu0
    %6592 = vdwg.mxu0
    %v6594 = vsel %vm6477, %v6475, 0
    %v6597 = vsel %vm6481, %v6266, 0
    %6599 = vmatpush.bf16.msra.mxu0 0
    %6600 = vmatpush.bf16.msra.mxu0 0
    %6601 = vmatpush.bf16.msra.mxu0 0
    %6602 = vmatpush.bf16.msra.mxu0 0
    %6603 = vmatpush.bf16.msra.mxu0 0
    %6604 = vmatpush.bf16.msra.mxu0 0
    %6605 = vmatpush.bf16.msra.mxu0 0
    %6606 = vmatpush.bf16.msra.mxu0 %v6597
    %6607 = vmatmul.bf16.gmra.mxu0 %v6594
    %v6608 = vpop.f32.mrf.mxu0
    %v6609 = vadd.f32 0.0, %v6608
    %v6610 = vpop.f32.mrf.mxu0
    %6611 = vdwg.mxu0
    %v6613 = vsel %vm6477, %v6476, 0
    %v6616 = vsel %vm6481, %v6267, 0
    %6618 = vmatpush.bf16.msra.mxu0 0
    %6619 = vmatpush.bf16.msra.mxu0 0
    %6620 = vmatpush.bf16.msra.mxu0 0
    %6621 = vmatpush.bf16.msra.mxu0 0
    %6622 = vmatpush.bf16.msra.mxu0 0
    %6623 = vmatpush.bf16.msra.mxu0 0
    %6624 = vmatpush.bf16.msra.mxu0 0
    %6625 = vmatpush.bf16.msra.mxu0 %v6616
    %6626 = vmatmul.bf16.gmra.mxu0 %v6613
    %v6627 = vpop.f32.mrf.mxu0
    %v6628 = vadd.f32 0.0, %v6627
    %v6629 = vpop.f32.mrf.mxu0
    %6630 = vdwg.mxu0
    %v6631 = vadd.f32 %v6495, %v227
    %v6632 = vadd.f32 %v6514, %v6252
    %v6633 = vadd.f32 %v6533, %v228
    %v6634 = vadd.f32 %v6552, %v6253
    %v6635 = vadd.f32 %v6571, %v229
    %v6636 = vadd.f32 %v6590, %v6254
    %v6637 = vadd.f32 %v6609, %v230
    %v6638 = vadd.f32 %v6628, %v6255
    %v6639 = vld [vmem:[#allocation13] sm:$0xf]
    %v6640 = vld [vmem:[#allocation13 + $0x4] sm:$0xf]
    %v6641 = vld [vmem:[#allocation13 + $0x8] sm:$0xf]
    %v6642 = vld [vmem:[#allocation13 + $0xc] sm:$0xf]
    %v6643 = vld [vmem:[#allocation13 + $0x10] sm:$0xf]
    %v6644 = vld [vmem:[#allocation13 + $0x14] sm:$0xf]
    %v6645 = vld [vmem:[#allocation13 + $0x18] sm:$0xf]
    %v6646 = vld [vmem:[#allocation13 + $0x1c] sm:$0xf]
    %v6647 = vld [vmem:[#allocation13 + $0x20] sm:$0xf]
    %v6648 = vld [vmem:[#allocation13 + $0x24] sm:$0xf]
    %v6649 = vld [vmem:[#allocation13 + $0x28] sm:$0xf]
    %v6650 = vld [vmem:[#allocation13 + $0x2c] sm:$0xf]
    %v6651 = vld [vmem:[#allocation13 + $0x30] sm:$0xf]
    %v6652 = vld [vmem:[#allocation13 + $0x34] sm:$0xf]
    %v6653 = vld [vmem:[#allocation13 + $0x38] sm:$0xf]
    %v6654 = vld [vmem:[#allocation13 + $0x3c] sm:$0xf]
    %v6655 = vld [vmem:[%s19] sm:$0x1]
    %6664 = vst [vmem:[#allocation1] ss:$2 sm:$0xff] %v6631
    %s6665 = scalar_lea.vmem [#allocation1], 1
    %6666 = vst [vmem:[%s6665] ss:$2 sm:$0xff] %v6632
    %s6667 = scalar_lea.vmem [#allocation1], 16
    %6668 = vst [vmem:[%s6667] ss:$2 sm:$0xff] %v6633
    %s6669 = scalar_lea.vmem [#allocation1], 17
    %6670 = vst [vmem:[%s6669] ss:$2 sm:$0xff] %v6634
    %s6671 = scalar_lea.vmem [#allocation1], 32
    %6672 = vst [vmem:[%s6671] ss:$2 sm:$0xff] %v6635
    %s6673 = scalar_lea.vmem [#allocation1], 33
    %6674 = vst [vmem:[%s6673] ss:$2 sm:$0xff] %v6636
    %s6675 = scalar_lea.vmem [#allocation1], 48
    %6676 = vst [vmem:[%s6675] ss:$2 sm:$0xff] %v6637
    %s6677 = scalar_lea.vmem [#allocation1], 49
    %6678 = vst [vmem:[%s6677] ss:$2 sm:$0xff] %v6638
    %v6679 = vld.sshfl [vmem:[#allocation1] sm:$0xff pattern:$0x75316420]
    %v6680 = vld.sshfl [vmem:[#allocation1 + $0x10] sm:$0xff pattern:$0x75316420]
    %v6681 = vld.sshfl [vmem:[#allocation1 + $0x20] sm:$0xff pattern:$0x75316420]
    %v6682 = vld.sshfl [vmem:[#allocation1 + $0x30] sm:$0xff pattern:$0x75316420]
    %v6687 = vpack.c.bf16 %v6680, %v6679
    %v6688 = vpack.c.bf16 %v6682, %v6681
    %v6690 = vperm.slane %v6655, 0
    %v6708 = vunpack.c.l.b16 %v6639
    %v6709 = vunpack.c.l.b16 %v6640
    %v6710 = vunpack.c.l.b16 %v6641
    %v6711 = vunpack.c.l.b16 %v6642
    %v6712 = vunpack.c.l.b16 %v6643
    %v6713 = vunpack.c.l.b16 %v6644
    %v6714 = vunpack.c.l.b16 %v6645
    %v6715 = vunpack.c.l.b16 %v6646
    %v6716 = vunpack.c.l.b16 %v6647
    %v6717 = vunpack.c.l.b16 %v6648
    %v6718 = vunpack.c.l.b16 %v6649
    %v6719 = vunpack.c.l.b16 %v6650
    %v6720 = vunpack.c.l.b16 %v6651
    %v6721 = vunpack.c.l.b16 %v6652
    %v6722 = vunpack.c.l.b16 %v6653
    %v6723 = vunpack.c.l.b16 %v6654
    %v6724 = vpack.c.b16 %v6709, %v6708
    %v6725 = vpack.c.b16 %v6711, %v6710
    %v6726 = vpack.c.b16 %v6713, %v6712
    %v6727 = vpack.c.b16 %v6715, %v6714
    %v6728 = vpack.c.b16 %v6717, %v6716
    %v6729 = vpack.c.b16 %v6719, %v6718
    %v6730 = vpack.c.b16 %v6721, %v6720
    %v6731 = vpack.c.b16 %v6723, %v6722
    %6740 = vmatpush.bf16.msra.mxu0 %v6731
    %6741 = vmatpush.bf16.msra.mxu0 %v6730
    %6742 = vmatpush.bf16.msra.mxu0 %v6729
    %6743 = vmatpush.bf16.msra.mxu0 %v6728
    %6744 = vmatpush.bf16.msra.mxu0 %v6727
    %6745 = vmatpush.bf16.msra.mxu0 %v6726
    %6746 = vmatpush.bf16.msra.mxu0 %v6725
    %6747 = vmatpush.bf16.msra.mxu0 %v6724
    %6748 = vmatmul.bf16.gmra.mxu0 %v6687
    %v6749 = vpop.f32.mrf.mxu0
    %v6750 = vadd.f32 %v6690, %v6749
    %v6751 = vpop.f32.mrf.mxu0
    %v6752 = vadd.f32 %v6690, %v6751
    %6753 = vmatmul.bf16.gmra.mxu0 %v6688
    %v6754 = vpop.f32.mrf.mxu0
    %v6755 = vadd.f32 %v6690, %v6754
    %v6756 = vpop.f32.mrf.mxu0
    %v6757 = vadd.f32 %v6690, %v6756
    %6758 = vdwg.mxu0
    %v6759 = vmax.f32 %v6750, 0.0
    %v6760 = vmax.f32 %v6752, 0.0
    %v6761 = vmax.f32 %v6755, 0.0
    %v6762 = vmax.f32 %v6757, 0.0
    %v6763 = vld [vmem:[#allocation14] sm:$0xf]
    %v6764 = vld [vmem:[#allocation14 + $0x4] sm:$0xf]
    %v6765 = vld [vmem:[#allocation14 + $0x8] sm:$0xf]
    %v6766 = vld [vmem:[#allocation14 + $0xc] sm:$0xf]
    %v6767 = vld [vmem:[#allocation14 + $0x10] sm:$0xf]
    %v6768 = vld [vmem:[#allocation14 + $0x14] sm:$0xf]
    %v6769 = vld [vmem:[#allocation14 + $0x18] sm:$0xf]
    %v6770 = vld [vmem:[#allocation14 + $0x1c] sm:$0xf]
    %v6771 = vld [vmem:[#allocation14 + $0x20] sm:$0xf]
    %v6772 = vld [vmem:[#allocation14 + $0x24] sm:$0xf]
    %v6773 = vld [vmem:[#allocation14 + $0x28] sm:$0xf]
    %v6774 = vld [vmem:[#allocation14 + $0x2c] sm:$0xf]
    %v6775 = vld [vmem:[#allocation14 + $0x30] sm:$0xf]
    %v6776 = vld [vmem:[#allocation14 + $0x34] sm:$0xf]
    %v6777 = vld [vmem:[#allocation14 + $0x38] sm:$0xf]
    %v6778 = vld [vmem:[#allocation14 + $0x3c] sm:$0xf]
    %v6779 = vld [vmem:[%s21] sm:$0x1]
    %v6780 = vpack.c.bf16 %v6760, %v6759
    %v6781 = vpack.c.bf16 %v6762, %v6761
    %v6783 = vperm.slane %v6779, 0
    %v6801 = vunpack.c.l.b16 %v6763
    %v6802 = vunpack.c.l.b16 %v6764
    %v6803 = vunpack.c.l.b16 %v6765
    %v6804 = vunpack.c.l.b16 %v6766
    %v6805 = vunpack.c.l.b16 %v6767
    %v6806 = vunpack.c.l.b16 %v6768
    %v6807 = vunpack.c.l.b16 %v6769
    %v6808 = vunpack.c.l.b16 %v6770
    %v6809 = vunpack.c.l.b16 %v6771
    %v6810 = vunpack.c.l.b16 %v6772
    %v6811 = vunpack.c.l.b16 %v6773
    %v6812 = vunpack.c.l.b16 %v6774
    %v6813 = vunpack.c.l.b16 %v6775
    %v6814 = vunpack.c.l.b16 %v6776
    %v6815 = vunpack.c.l.b16 %v6777
    %v6816 = vunpack.c.l.b16 %v6778
    %v6817 = vpack.c.b16 %v6802, %v6801
    %v6818 = vpack.c.b16 %v6804, %v6803
    %v6819 = vpack.c.b16 %v6806, %v6805
    %v6820 = vpack.c.b16 %v6808, %v6807
    %v6821 = vpack.c.b16 %v6810, %v6809
    %v6822 = vpack.c.b16 %v6812, %v6811
    %v6823 = vpack.c.b16 %v6814, %v6813
    %v6824 = vpack.c.b16 %v6816, %v6815
    %6833 = vmatpush.bf16.msra.mxu0 %v6824
    %6834 = vmatpush.bf16.msra.mxu0 %v6823
    %6835 = vmatpush.bf16.msra.mxu0 %v6822
    %6836 = vmatpush.bf16.msra.mxu0 %v6821
    %6837 = vmatpush.bf16.msra.mxu0 %v6820
    %6838 = vmatpush.bf16.msra.mxu0 %v6819
    %6839 = vmatpush.bf16.msra.mxu0 %v6818
    %6840 = vmatpush.bf16.msra.mxu0 %v6817
    %6841 = vmatmul.bf16.gmra.mxu0 %v6780
    %v6842 = vpop.f32.mrf.mxu0
    %v6843 = vadd.f32 %v6783, %v6842
    %v6844 = vpop.f32.mrf.mxu0
    %v6845 = vadd.f32 %v6783, %v6844
    %6846 = vmatmul.bf16.gmra.mxu0 %v6781
    %v6847 = vpop.f32.mrf.mxu0
    %v6848 = vadd.f32 %v6783, %v6847
    %v6849 = vpop.f32.mrf.mxu0
    %v6850 = vadd.f32 %v6783, %v6849
    %6851 = vdwg.mxu0
    %6852 = vst [vmem:[#allocation1] ss:$2 sm:$0xff] %v6631
    %s6853 = scalar_lea.vmem [#allocation1], 1
    %6854 = vst [vmem:[%s6853] ss:$2 sm:$0xff] %v6632
    %s6855 = scalar_lea.vmem [#allocation1], 16
    %6856 = vst [vmem:[%s6855] ss:$2 sm:$0xff] %v6633
    %s6857 = scalar_lea.vmem [#allocation1], 17
    %6858 = vst [vmem:[%s6857] ss:$2 sm:$0xff] %v6634
    %s6859 = scalar_lea.vmem [#allocation1], 32
    %6860 = vst [vmem:[%s6859] ss:$2 sm:$0xff] %v6635
    %s6861 = scalar_lea.vmem [#allocation1], 33
    %6862 = vst [vmem:[%s6861] ss:$2 sm:$0xff] %v6636
    %s6863 = scalar_lea.vmem [#allocation1], 48
    %6864 = vst [vmem:[%s6863] ss:$2 sm:$0xff] %v6637
    %s6865 = scalar_lea.vmem [#allocation1], 49
    %6866 = vst [vmem:[%s6865] ss:$2 sm:$0xff] %v6638
    %v6867 = vld.sshfl [vmem:[#allocation1] sm:$0xff pattern:$0x75316420]
    %v6868 = vld.sshfl [vmem:[#allocation1 + $0x10] sm:$0xff pattern:$0x75316420]
    %v6869 = vld.sshfl [vmem:[#allocation1 + $0x20] sm:$0xff pattern:$0x75316420]
    %v6870 = vld.sshfl [vmem:[#allocation1 + $0x30] sm:$0xff pattern:$0x75316420]
    %v6875 = vadd.f32 %v6843, %v6867
    %v6876 = vadd.f32 %v6845, %v6868
    %v6877 = vadd.f32 %v6848, %v6869
    %v6878 = vadd.f32 %v6850, %v6870
    %v6879 = vld [vmem:[#allocation16] sm:$0xf]
    %v6880 = vld [vmem:[#allocation16 + $0x4] sm:$0xf]
    %v6881 = vld [vmem:[#allocation16 + $0x8] sm:$0xf]
    %v6882 = vld [vmem:[#allocation16 + $0xc] sm:$0xf]
    %v6883 = vld [vmem:[#allocation16 + $0x10] sm:$0xf]
    %v6884 = vld [vmem:[#allocation16 + $0x14] sm:$0xf]
    %v6885 = vld [vmem:[#allocation16 + $0x18] sm:$0xf]
    %v6886 = vld [vmem:[#allocation16 + $0x1c] sm:$0xf]
    %v6887 = vld [vmem:[#allocation16 + $0x20] sm:$0xf]
    %v6888 = vld [vmem:[#allocation16 + $0x24] sm:$0xf]
    %v6889 = vld [vmem:[#allocation16 + $0x28] sm:$0xf]
    %v6890 = vld [vmem:[#allocation16 + $0x2c] sm:$0xf]
    %v6891 = vld [vmem:[#allocation16 + $0x30] sm:$0xf]
    %v6892 = vld [vmem:[#allocation16 + $0x34] sm:$0xf]
    %v6893 = vld [vmem:[#allocation16 + $0x38] sm:$0xf]
    %v6894 = vld [vmem:[#allocation16 + $0x3c] sm:$0xf]
    %v6895 = vld [vmem:[%s23] sm:$0x1]
    %v6896 = vpack.c.bf16 %v6876, %v6875
    %v6897 = vpack.c.bf16 %v6878, %v6877
    %v6899 = vperm.slane %v6895, 0
    %v6917 = vunpack.c.l.b16 %v6879
    %v6918 = vunpack.c.l.b16 %v6880
    %v6919 = vunpack.c.l.b16 %v6881
    %v6920 = vunpack.c.l.b16 %v6882
    %v6921 = vunpack.c.l.b16 %v6883
    %v6922 = vunpack.c.l.b16 %v6884
    %v6923 = vunpack.c.l.b16 %v6885
    %v6924 = vunpack.c.l.b16 %v6886
    %v6925 = vunpack.c.l.b16 %v6887
    %v6926 = vunpack.c.l.b16 %v6888
    %v6927 = vunpack.c.l.b16 %v6889
    %v6928 = vunpack.c.l.b16 %v6890
    %v6929 = vunpack.c.l.b16 %v6891
    %v6930 = vunpack.c.l.b16 %v6892
    %v6931 = vunpack.c.l.b16 %v6893
    %v6932 = vunpack.c.l.b16 %v6894
    %v6933 = vpack.c.b16 %v6918, %v6917
    %v6934 = vpack.c.b16 %v6920, %v6919
    %v6935 = vpack.c.b16 %v6922, %v6921
    %v6936 = vpack.c.b16 %v6924, %v6923
    %v6937 = vpack.c.b16 %v6926, %v6925
    %v6938 = vpack.c.b16 %v6928, %v6927
    %v6939 = vpack.c.b16 %v6930, %v6929
    %v6940 = vpack.c.b16 %v6932, %v6931
    %6949 = vmatpush.bf16.msra.mxu0 %v6940
    %6950 = vmatpush.bf16.msra.mxu0 %v6939
    %6951 = vmatpush.bf16.msra.mxu0 %v6938
    %6952 = vmatpush.bf16.msra.mxu0 %v6937
    %6953 = vmatpush.bf16.msra.mxu0 %v6936
    %6954 = vmatpush.bf16.msra.mxu0 %v6935
    %6955 = vmatpush.bf16.msra.mxu0 %v6934
    %6956 = vmatpush.bf16.msra.mxu0 %v6933
    %6957 = vmatmul.bf16.gmra.mxu0 %v6896
    %v6958 = vpop.f32.mrf.mxu0
    %v6959 = vadd.f32 %v6899, %v6958
    %v6960 = vpop.f32.mrf.mxu0
    %v6961 = vadd.f32 %v6899, %v6960
    %6962 = vmatmul.bf16.gmra.mxu0 %v6897
    %v6963 = vpop.f32.mrf.mxu0
    %v6964 = vadd.f32 %v6899, %v6963
    %v6965 = vpop.f32.mrf.mxu0
    %v6966 = vadd.f32 %v6899, %v6965
    %6967 = vdwg.mxu0
    %6968 = vst [vmem:[#allocation20] sm:$0xff] %v6959
    %6969 = vst [vmem:[#allocation20 + $0x8] sm:$0xff] %v6961
    %6970 = vst [vmem:[#allocation20 + $0x10] sm:$0xff] %v6964
    %6971 = vst [vmem:[#allocation20 + $0x18] sm:$0xff] %v6966
    %v6972 = vmul.f32 %v6959, 0.01
    %v6973 = vmul.f32 %v6961, 0.01
    %v6974 = vmul.f32 %v6964, 0.01
    %v6975 = vmul.f32 %v6966, 0.01
    %v6976 = vmul.f32 %v227, 0.99
    %v6977 = vmul.f32 %v228, 0.99
    %v6978 = vmul.f32 %v229, 0.99
    %v6979 = vmul.f32 %v230, 0.99
    %v6980 = vadd.f32 %v6972, %v6976
    %v6981 = vadd.f32 %v6973, %v6977
    %v6982 = vadd.f32 %v6974, %v6978
    %v6983 = vadd.f32 %v6975, %v6979
    %6984 = vst [vmem:[#allocation17] sm:$0xff] %v6980
    %6985 = vst [vmem:[#allocation17 + $0x8] sm:$0xff] %v6981
    %6986 = vst [vmem:[#allocation17 + $0x10] sm:$0xff] %v6982
    %6987 = vst [vmem:[#allocation17 + $0x18] sm:$0xff] %v6983
    // Predicated region
    $region134: #{adapter_forward.1} parent=1 // pred_check
      _
    $region135: #{adapter_forward.1} parent=1 // pred_check_branch
      %6989 = sbr.rel (0) target = $region137
    $region136: #{adapter_forward.1} parent=1 // pred_region
      %6991 = vsyncadd [#allocation4], 0
      %s6992 = sshll.u32 [#allocation17], 4
      %s6993 = int_to_ptr.vmem [resolvable:$true] %s6992
      %s6994 = sshll.u32 %s24, 4
      %s6995 = int_to_ptr.hbm [resolvable:$true] %s6994
      %7000 = dma.vmem_to_hbm [thread:$0]  %s6993, 512, %s6995, [#allocation4], 128, 128, 8
    $region137: #{adapter_forward.1} parent=1 // pred_fallthru
      _
    // Predicated region
    $region138: #{adapter_forward.1} parent=1 // pred_check
      _
    $region139: #{adapter_forward.1} parent=1 // pred_check_branch
      %7002 = sbr.rel (0) target = $region141
    $region140: #{adapter_forward.1} parent=1 // pred_region
      %7004 = vsyncadd [#allocation19], 0
      %s7005 = sshll.u32 [#allocation18], 4
      %s7006 = int_to_ptr.vmem [resolvable:$true] %s7005
      %s7007 = sshll.u32 %s25, 4
      %s7008 = int_to_ptr.hbm [resolvable:$true] %s7007
      %7013 = dma.vmem_to_hbm [thread:$0]  %s7006, 512, %s7008, [#allocation19], 128, 128, 8
    $region141: #{adapter_forward.1} parent=1 // pred_fallthru
      _
    // Predicated region
    $region142: #{adapter_forward.1} parent=1 // pred_check
      _
    $region143: #{adapter_forward.1} parent=1 // pred_check_branch
      %7015 = sbr.rel (0) target = $region145
    $region144: #{adapter_forward.1} parent=1 // pred_region
      %7017 = vsyncadd [#allocation19], 0
      %s7018 = sshll.u32 [#allocation20], 4
      %s7019 = int_to_ptr.vmem [resolvable:$true] %s7018
      %s7020 = sshll.u32 %s26, 4
      %s7021 = int_to_ptr.hbm [resolvable:$true] %s7020
      %7026 = dma.vmem_to_hbm [thread:$0]  %s7019, 512, %s7021, [#allocation19], 128, 128, 8
    $region145: #{adapter_forward.1} parent=1 // pred_fallthru
      _
    // Predicated region
    $region146: #{adapter_forward.1} parent=1 // pred_check
      _
    $region147: #{adapter_forward.1} parent=1 // pred_check_branch
      %7028 = sbr.rel (0) target = $region149
    $region148: #{adapter_forward.1} parent=1 // pred_region
      %7030 = dma.done [#allocation4], 512
    $region149: #{adapter_forward.1} parent=1 // pred_fallthru
      _
    // Predicated region
    $region150: #{adapter_forward.1} parent=1 // pred_check
      _
    $region151: #{adapter_forward.1} parent=1 // pred_check_branch
      %7032 = sbr.rel (0) target = $region153
    $region152: #{adapter_forward.1} parent=1 // pred_region
      %7034 = dma.done [#allocation19], 512
    $region153: #{adapter_forward.1} parent=1 // pred_fallthru
      _
    // Predicated region
    $region154: #{adapter_forward.1} parent=1 // pred_check
      _
    $region155: #{adapter_forward.1} parent=1 // pred_check_branch
      %7036 = sbr.rel (0) target = $region157
    $region156: #{adapter_forward.1} parent=1 // pred_region
      %7038 = dma.done [#allocation19], 512
    $region157: #{adapter_forward.1} parent=1 // pred_fallthru
      _
    %7039 = vsyncpa [#allocation3], 1
    %7040 = vsyncpa [#allocation6], 1
    %7041 = vsyncpa [#allocation9], 1
    %7042 = vsyncpa [#allocation12], 1
    %7043 = vsyncpa [#allocation15], 1
    %7044 = vsyncpa [#allocation4], 1
    %7045 = vsyncpa [#allocation19], 1

</llo_original>
